<compile_context>
chip_gen: v5e
topology: v5e:2x2
jax: 0.10.0
libtpu: 0.0.40
codegen_flags: <defaults>
</compile_context>

<pallas_src>
import functools
import math

import jax
import jax.numpy as jnp
from jax.experimental import pallas as pl
from jax.experimental.pallas import tpu as pltpu


def _layernorm(v, w, b, eps=1e-5):
    mu = jnp.mean(v, axis=-1, keepdims=True)
    var = jnp.mean((v - mu) ** 2, axis=-1, keepdims=True)
    return (v - mu) * jax.lax.rsqrt(var + eps) * w + b


def _decoder_layer_kernel(
    # inputs
    x_ref, y_ref,
    n1w_ref, n1b_ref, nkvw_ref, nkvb_ref,
    wq_ref, bq_ref, wkv_ref, bkv_ref, wp_ref, bp_ref, ls1_ref,
    n2w_ref, n2b_ref, w1_ref, b1_ref, w2_ref, b2_ref, ls2_ref,
    # outputs
    o_ref,
    # scratch (persists across grid steps)
    k_scr, v_scr,
    *, num_heads: int, head_dim: int, exact_gelu: bool,
):
    qi = pl.program_id(1)            # query-tile index (innermost, sequential grid axis)
    H, dh = num_heads, head_dim
    C = H * dh
    bf16 = jnp.bfloat16

    # ---- K/V: computed once per batch element (first query tile), cached in VMEM ----
    @pl.when(qi == 0)
    def _compute_kv():
        yn = _layernorm(y_ref[...].astype(jnp.float32), nkvw_ref[...], nkvb_ref[...])
        # fused K/V projection: one (Ny, C) x (C, 2C) bf16 matmul on the MXU
        kv = jnp.dot(yn.astype(bf16), wkv_ref[...],
                     preferred_element_type=jnp.float32) + bkv_ref[...]
        kvb = kv.astype(bf16)
        # head split at the value level (lane slices + major-axis stack), then one
        # whole-array store per tensor — no per-head masked stores / reload round trips.
        k_scr[...] = jnp.stack([kvb[:, h * dh:(h + 1) * dh] for h in range(H)], axis=0)
        v_scr[...] = jnp.stack([kvb[:, C + h * dh:C + (h + 1) * dh] for h in range(H)],
                               axis=0)

    x = x_ref[...].astype(jnp.float32)                          # (TQ, C)

    # ---- attention residual branch: ls1(attn(norm1(x), norm_kv(y))) ----
    xn = _layernorm(x, n1w_ref[...], n1b_ref[...])
    # 1/sqrt(dh) and the Q bias are already folded into wq/bq (wrapper-side).
    q2d = jnp.dot(xn.astype(bf16), wq_ref[...],
                  preferred_element_type=jnp.float32) + bq_ref[...]
    q2db = q2d.astype(bf16)
    q_h = jnp.stack([q2db[:, h * dh:(h + 1) * dh] for h in range(H)], axis=0)  # (H,TQ,dh)

    # batched-over-heads attention, f32 accumulation
    scores = jnp.einsum("hqd,hkd->hqk", q_h, k_scr[...],
                        preferred_element_type=jnp.float32)     # (H, TQ, Ny)
    m = jnp.max(scores, axis=-1, keepdims=True)
    p = jnp.exp(scores - m)
    denom = jnp.sum(p, axis=-1, keepdims=True)
    o_h = jnp.einsum("hqk,hkd->hqd", p.astype(bf16), v_scr[...],
                     preferred_element_type=jnp.float32)        # (H, TQ, dh)
    # normalize AFTER P@V: H*TQ*dh multiplies instead of H*TQ*Ny; reciprocal on the EUP
    o_h = o_h * pl.reciprocal(denom, approx=True)

    # inverse head-merge back to lane-dense (TQ, C), then ONE (TQ,C)@(C,C) matmul
    o2d = jnp.concatenate([o_h[h].astype(bf16) for h in range(H)], axis=-1)
    proj = jnp.dot(o2d, wp_ref[...], preferred_element_type=jnp.float32) + bp_ref[...]
    x = x + proj * ls1_ref[...]

    # ---- MLP residual branch: ls2(mlp(norm2(x))) ----
    xn2 = _layernorm(x, n2w_ref[...], n2b_ref[...])
    hdn = jnp.dot(xn2.astype(bf16), w1_ref[...],
                  preferred_element_type=jnp.float32) + b1_ref[...]
    if exact_gelu:
        # exact-erf GELU (PyTorch nn.GELU default); f32 on the VPU
        hdn = 0.5 * hdn * (1.0 + jax.lax.erf(hdn * (1.0 / math.sqrt(2.0))))
    else:
        # tanh approximation: transcendental goes to the EUP slot (v5e-friendly)
        hdn = jax.nn.gelu(hdn, approximate=True)
    mlp = jnp.dot(hdn.astype(bf16), w2_ref[...],
                  preferred_element_type=jnp.float32) + b2_ref[...]
    x = x + mlp * ls2_ref[...]

    o_ref[...] = x.astype(o_ref.dtype)


def _padded_bytes(shape, itemsize):
    """Rough VMEM footprint of an array, padding the last two dims to (8, 128)."""
    s = list(shape)
    if len(s) == 1:
        s = [1] + s
    s[-1] = -(-s[-1] // 128) * 128
    s[-2] = -(-s[-2] // 8) * 8
    n = 1
    for d in s:
        n *= d
    return n * itemsize


def _vmem_capacity_bytes():
    try:
        return int(pltpu.get_tpu_info().vmem_capacity_bytes)
    except Exception:
        return 64 << 20   # conservative fallback: assume v7x-sized (64 MiB) VMEM


def mem_eff_decoder_layer(x, y, params, num_heads, q_tile=None, exact_gelu=True):
    B, Nx, C = x.shape
    _, Ny, _ = y.shape
    assert C % num_heads == 0
    dh = C // num_heads
    scale = dh ** -0.5
    bf16 = jnp.bfloat16
    out_dtype = x.dtype

    # ---- generation-aware VMEM budget ----
    phys_vmem = _vmem_capacity_bytes()
    vmem_cap = min(phys_vmem - (8 << 20), 110 << 20)   # ~56 MiB on v7x, ~110 MiB on v5e/v6e

    # ---- query tile: 256 on roomy-VMEM parts (v5e/v6e), 128 on v7x; always bounded ----
    if q_tile is None:
        q_tile = 256 if phys_vmem >= (96 << 20) else 128
    TQ = min(q_tile, -(-Nx // 128) * 128)
    Nx_pad = -(-Nx // TQ) * TQ
    NQ = Nx_pad // TQ

    # activations to bf16 at the boundary (halves HBM traffic & VMEM tiles);
    # the kernel upcasts to f32 for LayerNorm/softmax.
    x_in = x.astype(bf16)
    y_in = y.astype(bf16)
    if Nx_pad != Nx:
        x_in = jnp.pad(x_in, ((0, 0), (0, Nx_pad - Nx), (0, 0)))

    # ---- weight preprocessing (done once outside the kernel) ----
    #   * matmul weights cast to bf16 (MXU operands),
    #   * 1/sqrt(dh) folded into wq and bq,
    #   * K/V projections fused into a single (C, 2C) weight,
    #   * output projection kept as a single (C, C) weight.
    wq = (params["wq"] * scale).astype(bf16)
    bq = params["bq"] * scale
    wkv = jnp.concatenate([params["wk"], params["wv"]], axis=1).astype(bf16)
    bkv = jnp.concatenate([params["bk"], params["bv"]], axis=1)
    wp = params["wp"].astype(bf16)
    w1 = params["w1"].astype(bf16)
    w2 = params["w2"].astype(bf16)
    hidden = w1.shape[1]

    weights = [params["n1w"], params["n1b"], params["nkvw"], params["nkvb"],
               wq, bq, wkv, bkv, wp, params["bp"], params["ls1"],
               params["n2w"], params["n2b"], w1, params["b1"], w2, params["b2"],
               params["ls2"]]

    # grid-invariant weights: whole-array resident in VMEM, no double-buffering
    w_spec = pl.BlockSpec(memory_space=pltpu.MemorySpace.VMEM)

    # ---- explicit VMEM accounting; fail loudly instead of silently clamping ----
    weight_bytes = sum(_padded_bytes(w.shape, w.dtype.itemsize) for w in weights)
    act_bytes = 2 * (_padded_bytes((TQ, C), 2)                       # x tile (bf16)
                     + _padded_bytes((Ny, C), 2)                     # y block (bf16)
                     + _padded_bytes((TQ, C), jnp.dtype(out_dtype).itemsize))  # out tile
    scr_bytes = 2 * _padded_bytes((num_heads, Ny, dh), 2)            # K/V caches
    live_bytes = (2 * num_heads * TQ * (-(-Ny // 128) * 128) * 4     # scores + exp(p)
                  + TQ * (-(-hidden // 128) * 128) * 4)              # MLP hidden
    required = weight_bytes + act_bytes + scr_bytes + live_bytes + (4 << 20)
    if required > vmem_cap:
        raise ValueError(
            f"MemEffDecoderLayer Pallas kernel does not fit in VMEM: needs ~{required >> 20} MiB, "
            f"per-core budget is {vmem_cap >> 20} MiB (physical {phys_vmem >> 20} MiB). "
            f"Reduce q_tile (currently TQ={TQ}) / Ny, or add a flash-style KV-tile loop.")
    vmem_limit = int(min(max(required, 32 << 20), vmem_cap))

    kernel = functools.partial(_decoder_layer_kernel, num_heads=num_heads,
                               head_dim=dh, exact_gelu=exact_gelu)

    out = pl.pallas_call(
        kernel,
        out_shape=jax.ShapeDtypeStruct((B, Nx_pad, C), out_dtype),
        grid=(B, NQ),
        in_specs=[pl.BlockSpec((None, TQ, C), lambda b, i: (b, i, 0)),
                  pl.BlockSpec((None, Ny, C), lambda b, i: (b, 0, 0))]
                 + [w_spec] * len(weights),
        out_specs=pl.BlockSpec((None, TQ, C), lambda b, i: (b, i, 0)),
        scratch_shapes=[pltpu.VMEM((num_heads, Ny, dh), jnp.bfloat16),   # K cache
                        pltpu.VMEM((num_heads, Ny, dh), jnp.bfloat16)],  # V cache
        compiler_params=pltpu.CompilerParams(
            # NOTE: the q-tile axis MUST stay "arbitrary" — K/V are cached in scratch
            # under pl.when(qi == 0) and consumed by later q tiles on the same core.
            dimension_semantics=("parallel", "arbitrary"),
            vmem_limit_bytes=vmem_limit),
    )(x_in, y_in, *weights)

    if Nx_pad != Nx:
        out = out[:, :Nx]
    return out


def reference(x, y, p, num_heads):
    """Pure-JAX f32 reference mirroring the PyTorch eval forward pass."""
    def ln(v, w, b):
        mu = v.mean(-1, keepdims=True)
        var = ((v - mu) ** 2).mean(-1, keepdims=True)
        return (v - mu) / jnp.sqrt(var + 1e-5) * w + b

    B, Nx, C = x.shape
    Ny = y.shape[1]
    dh = C // num_heads

    xn = ln(x, p["n1w"][0], p["n1b"][0])
    yn = ln(y, p["nkvw"][0], p["nkvb"][0])
    q = (xn @ p["wq"] + p["bq"][0]).reshape(B, Nx, num_heads, dh)
    k = (yn @ p["wk"] + p["bk"][0]).reshape(B, Ny, num_heads, dh)
    v = (yn @ p["wv"] + p["bv"][0]).reshape(B, Ny, num_heads, dh)
    attn = jnp.einsum("bqhd,bkhd->bhqk", q, k) * (dh ** -0.5)
    attn = jax.nn.softmax(attn, axis=-1)
    o = jnp.einsum("bhqk,bkhd->bqhd", attn, v).reshape(B, Nx, C)
    o = o @ p["wp"] + p["bp"][0]
    x = x + o * p["ls1"][0]

    xn2 = ln(x, p["n2w"][0], p["n2b"][0])
    h = xn2 @ p["w1"] + p["b1"][0]
    h = jax.nn.gelu(h, approximate=False)
    m = h @ p["w2"] + p["b2"][0]
    x = x + m * p["ls2"][0]
    return x


def make_params(key, dim, num_heads, mlp_ratio=4.0):
    hidden = int(dim * mlp_ratio)
    ks = jax.random.split(key, 20)
    f32 = jnp.float32

    def w(k, shape, s=0.02):
        return (s * jax.random.normal(k, shape)).astype(f32)

    return {
        "n1w": 1.0 + w(ks[0], (1, dim), 0.1), "n1b": w(ks[1], (1, dim), 0.1),
        "nkvw": 1.0 + w(ks[2], (1, dim), 0.1), "nkvb": w(ks[3], (1, dim), 0.1),
        # attention linears stored as (in, out) = W^T
        "wq": w(ks[4], (dim, dim)), "bq": w(ks[5], (1, dim), 0.01),
        "wk": w(ks[6], (dim, dim)), "bk": w(ks[7], (1, dim), 0.01),
        "wv": w(ks[8], (dim, dim)), "bv": w(ks[9], (1, dim), 0.01),
        "wp": w(ks[10], (dim, dim)), "bp": w(ks[11], (1, dim), 0.01),
        "ls1": jnp.ones((1, dim), f32),             # LayerScale init_values = 1.0
        "n2w": 1.0 + w(ks[12], (1, dim), 0.1), "n2b": w(ks[13], (1, dim), 0.1),
        "w1": w(ks[14], (dim, hidden)), "b1": w(ks[15], (1, hidden), 0.01),
        "w2": w(ks[16], (hidden, dim)), "b2": w(ks[17], (1, dim), 0.01),
        "ls2": jnp.ones((1, dim), f32),
    }


if __name__ == "__main__":
    # small but lane-dense shapes: C = 128 (one full lane tile), 256 query positions
    B, Nx, Ny = 2, 256, 128
    dim, num_heads = 128, 4

    key = jax.random.PRNGKey(0)
    kx, ky, kp = jax.random.split(key, 3)
    x = jax.random.normal(kx, (B, Nx, dim), dtype=jnp.float32)
    y = jax.random.normal(ky, (B, Ny, dim), dtype=jnp.float32)
    params = make_params(kp, dim, num_heads)

    out = jax.block_until_ready(mem_eff_decoder_layer(x, y, params, num_heads))
    ref = reference(x, y, params, num_heads)

    assert out.shape == (B, Nx, dim), out.shape
    # bf16 activations + bf16 MXU operands + approx softmax reciprocal => relaxed
    # tolerance vs the f32 reference
    max_err = float(jnp.max(jnp.abs(out - ref)))
    assert max_err < 3e-2, max_err

    print("KERNEL_OK")
</pallas_src>

<mosaic_0001>
module attributes {stable_mosaic.version = 11 : i64} {
  func.func @_decoder_layer_kernel(%arg0: i32, %arg1: i32, %arg2: memref<1x128x128xbf16, #tpu.memory_space<vmem>>, %arg3: memref<1x128x128xbf16, #tpu.memory_space<vmem>>, %arg4: memref<1x128xf32, #tpu.memory_space<vmem>>, %arg5: memref<1x128xf32, #tpu.memory_space<vmem>>, %arg6: memref<1x128xf32, #tpu.memory_space<vmem>>, %arg7: memref<1x128xf32, #tpu.memory_space<vmem>>, %arg8: memref<128x128xbf16, #tpu.memory_space<vmem>>, %arg9: memref<1x128xf32, #tpu.memory_space<vmem>>, %arg10: memref<128x256xbf16, #tpu.memory_space<vmem>>, %arg11: memref<1x256xf32, #tpu.memory_space<vmem>>, %arg12: memref<128x128xbf16, #tpu.memory_space<vmem>>, %arg13: memref<1x128xf32, #tpu.memory_space<vmem>>, %arg14: memref<1x128xf32, #tpu.memory_space<vmem>>, %arg15: memref<1x128xf32, #tpu.memory_space<vmem>>, %arg16: memref<1x128xf32, #tpu.memory_space<vmem>>, %arg17: memref<128x512xbf16, #tpu.memory_space<vmem>>, %arg18: memref<1x512xf32, #tpu.memory_space<vmem>>, %arg19: memref<512x128xbf16, #tpu.memory_space<vmem>>, %arg20: memref<1x128xf32, #tpu.memory_space<vmem>>, %arg21: memref<1x128xf32, #tpu.memory_space<vmem>>, %arg22: memref<1x128x128xf32, #tpu.memory_space<vmem>>, %arg23: memref<4x128x32xbf16, #tpu.memory_space<vmem>>, %arg24: memref<4x128x32xbf16, #tpu.memory_space<vmem>>) attributes {dimension_semantics = [#tpu.dimension_semantics<parallel>, #tpu.dimension_semantics<arbitrary>], iteration_bounds = array<i64: 2, 2>, scalar_prefetch = 0 : i64, scratch_operands = 2 : i64, tpu.core_type = #tpu.core_type<tc>, window_params = [{transform_indices = @transform_0, window_bounds = array<i64: 1, 128, 128>}, {transform_indices = @transform_1, window_bounds = array<i64: 1, 128, 128>}, {pipeline_mode = #tpu.pipeline_mode<synchronous>, transform_indices = @transform_2, window_bounds = array<i64: 1, 128>}, {pipeline_mode = #tpu.pipeline_mode<synchronous>, transform_indices = @transform_3, window_bounds = array<i64: 1, 128>}, {pipeline_mode = #tpu.pipeline_mode<synchronous>, transform_indices = @transform_4, window_bounds = array<i64: 1, 128>}, {pipeline_mode = #tpu.pipeline_mode<synchronous>, transform_indices = @transform_5, window_bounds = array<i64: 1, 128>}, {pipeline_mode = #tpu.pipeline_mode<synchronous>, transform_indices = @transform_6, window_bounds = array<i64: 128, 128>}, {pipeline_mode = #tpu.pipeline_mode<synchronous>, transform_indices = @transform_7, window_bounds = array<i64: 1, 128>}, {pipeline_mode = #tpu.pipeline_mode<synchronous>, transform_indices = @transform_8, window_bounds = array<i64: 128, 256>}, {pipeline_mode = #tpu.pipeline_mode<synchronous>, transform_indices = @transform_9, window_bounds = array<i64: 1, 256>}, {pipeline_mode = #tpu.pipeline_mode<synchronous>, transform_indices = @transform_10, window_bounds = array<i64: 128, 128>}, {pipeline_mode = #tpu.pipeline_mode<synchronous>, transform_indices = @transform_11, window_bounds = array<i64: 1, 128>}, {pipeline_mode = #tpu.pipeline_mode<synchronous>, transform_indices = @transform_12, window_bounds = array<i64: 1, 128>}, {pipeline_mode = #tpu.pipeline_mode<synchronous>, transform_indices = @transform_13, window_bounds = array<i64: 1, 128>}, {pipeline_mode = #tpu.pipeline_mode<synchronous>, transform_indices = @transform_14, window_bounds = array<i64: 1, 128>}, {pipeline_mode = #tpu.pipeline_mode<synchronous>, transform_indices = @transform_15, window_bounds = array<i64: 128, 512>}, {pipeline_mode = #tpu.pipeline_mode<synchronous>, transform_indices = @transform_16, window_bounds = array<i64: 1, 512>}, {pipeline_mode = #tpu.pipeline_mode<synchronous>, transform_indices = @transform_17, window_bounds = array<i64: 512, 128>}, {pipeline_mode = #tpu.pipeline_mode<synchronous>, transform_indices = @transform_18, window_bounds = array<i64: 1, 128>}, {pipeline_mode = #tpu.pipeline_mode<synchronous>, transform_indices = @transform_19, window_bounds = array<i64: 1, 128>}, {transform_indices = @transform_20, window_bounds = array<i64: 1, 128, 128>}]} {
    %c0_i32 = arith.constant 0 : i32
    %0 = arith.cmpi eq, %arg1, %c0_i32 : i32
    %1 = arith.extui %0 : i1 to i32
    %c0_i32_0 = arith.constant 0 : i32
    %2 = arith.cmpi ne, %1, %c0_i32_0 : i32
    scf.if %2 {
      %c0_60 = arith.constant 0 : index
      %c0_61 = arith.constant 0 : index
      %c0_62 = arith.constant 0 : index
      %134 = vector.load %arg3[%c0_60, %c0_61, %c0_62] : memref<1x128x128xbf16, #tpu.memory_space<vmem>>, vector<1x128x128xbf16>
      %135 = vector.shape_cast %134 : vector<1x128x128xbf16> to vector<128x128xbf16>
      %136 = arith.extf %135 : vector<128x128xbf16> to vector<128x128xf32>
      %c0_63 = arith.constant 0 : index
      %c0_64 = arith.constant 0 : index
      %137 = vector.load %arg6[%c0_63, %c0_64] : memref<1x128xf32, #tpu.memory_space<vmem>>, vector<1x128xf32>
      %c0_65 = arith.constant 0 : index
      %c0_66 = arith.constant 0 : index
      %138 = vector.load %arg7[%c0_65, %c0_66] : memref<1x128xf32, #tpu.memory_space<vmem>>, vector<1x128xf32>
      %cst_67 = arith.constant dense<0.000000e+00> : vector<128xf32>
      %139 = vector.multi_reduction <add>, %136, %cst_67 [1] : vector<128x128xf32> to vector<128xf32>
      %140 = vector.shape_cast %139 : vector<128xf32> to vector<128x1xf32>
      %cst_68 = arith.constant 1.280000e+02 : f32
      %141 = vector.broadcast %cst_68 : f32 to vector<128x1xf32>
      %142 = arith.divf %140, %141 : vector<128x1xf32>
      %143 = vector.broadcast %142 : vector<128x1xf32> to vector<128x128xf32>
      %144 = arith.subf %136, %143 : vector<128x128xf32>
      %145 = arith.mulf %144, %144 : vector<128x128xf32>
      %cst_69 = arith.constant dense<0.000000e+00> : vector<128xf32>
      %146 = vector.multi_reduction <add>, %145, %cst_69 [1] : vector<128x128xf32> to vector<128xf32>
      %147 = vector.shape_cast %146 : vector<128xf32> to vector<128x1xf32>
      %cst_70 = arith.constant 1.280000e+02 : f32
      %148 = vector.broadcast %cst_70 : f32 to vector<128x1xf32>
      %149 = arith.divf %147, %148 : vector<128x1xf32>
      %150 = vector.broadcast %142 : vector<128x1xf32> to vector<128x128xf32>
      %151 = arith.subf %136, %150 : vector<128x128xf32>
      %cst_71 = arith.constant 9.99999974E-6 : f32
      %152 = vector.broadcast %cst_71 : f32 to vector<128x1xf32>
      %153 = arith.addf %149, %152 : vector<128x1xf32>
      %154 = math.rsqrt %153 : vector<128x1xf32>
      %155 = vector.broadcast %154 : vector<128x1xf32> to vector<128x128xf32>
      %156 = arith.mulf %151, %155 : vector<128x128xf32>
      %157 = vector.broadcast %137 : vector<1x128xf32> to vector<128x128xf32>
      %158 = arith.mulf %156, %157 : vector<128x128xf32>
      %159 = vector.broadcast %138 : vector<1x128xf32> to vector<128x128xf32>
      %160 = arith.addf %158, %159 : vector<128x128xf32>
      %161 = arith.truncf %160 : vector<128x128xf32> to vector<128x128xbf16>
      %c0_72 = arith.constant 0 : index
      %c0_73 = arith.constant 0 : index
      %162 = vector.load %arg10[%c0_72, %c0_73] : memref<128x256xbf16, #tpu.memory_space<vmem>>, vector<128x256xbf16>
      %cst_74 = arith.constant dense<0.000000e+00> : vector<128x256xf32>
      %163 = tpu.matmul %161, %162, %cst_74 {dimension_numbers = #tpu.dot_dimension_numbers<[1], [0], [0], [1], [0, 0, 1, 1], [], []>} : vector<128x128xbf16>, vector<128x256xbf16>, vector<128x256xf32> -> vector<128x256xf32>
      %c0_75 = arith.constant 0 : index
      %c0_76 = arith.constant 0 : index
      %164 = vector.load %arg11[%c0_75, %c0_76] : memref<1x256xf32, #tpu.memory_space<vmem>>, vector<1x256xf32>
      %165 = vector.broadcast %164 : vector<1x256xf32> to vector<128x256xf32>
      %166 = arith.addf %163, %165 : vector<128x256xf32>
      %167 = arith.truncf %166 : vector<128x256xf32> to vector<128x256xbf16>
      %168 = vector.extract_strided_slice %167 {offsets = [0, 0], sizes = [128, 32], strides = [1, 1]} : vector<128x256xbf16> to vector<128x32xbf16>
      %169 = vector.extract_strided_slice %167 {offsets = [0, 32], sizes = [128, 32], strides = [1, 1]} : vector<128x256xbf16> to vector<128x32xbf16>
      %170 = vector.extract_strided_slice %167 {offsets = [0, 64], sizes = [128, 32], strides = [1, 1]} : vector<128x256xbf16> to vector<128x32xbf16>
      %171 = vector.extract_strided_slice %167 {offsets = [0, 96], sizes = [128, 32], strides = [1, 1]} : vector<128x256xbf16> to vector<128x32xbf16>
      %172 = vector.shape_cast %168 : vector<128x32xbf16> to vector<1x128x32xbf16>
      %173 = vector.shape_cast %169 : vector<128x32xbf16> to vector<1x128x32xbf16>
      %174 = vector.shape_cast %170 : vector<128x32xbf16> to vector<1x128x32xbf16>
      %175 = vector.shape_cast %171 : vector<128x32xbf16> to vector<1x128x32xbf16>
      %176 = tpu.concatenate %172, %173, %174, %175 in 0 : vector<1x128x32xbf16>, vector<1x128x32xbf16>, vector<1x128x32xbf16>, vector<1x128x32xbf16> -> vector<4x128x32xbf16>
      %c0_77 = arith.constant 0 : index
      %c0_78 = arith.constant 0 : index
      %c0_79 = arith.constant 0 : index
      %177 = vector.load %arg23[%c0_77, %c0_78, %c0_79] : memref<4x128x32xbf16, #tpu.memory_space<vmem>>, vector<4x128x32xbf16>
      tpu.vector_store %arg23[%c0_77, %c0_78, %c0_79], %176 {strides = array<i32>} : memref<4x128x32xbf16, #tpu.memory_space<vmem>>, vector<4x128x32xbf16>,
      %178 = vector.extract_strided_slice %167 {offsets = [0, 128], sizes = [128, 32], strides = [1, 1]} : vector<128x256xbf16> to vector<128x32xbf16>
      %179 = vector.extract_strided_slice %167 {offsets = [0, 160], sizes = [128, 32], strides = [1, 1]} : vector<128x256xbf16> to vector<128x32xbf16>
      %180 = vector.extract_strided_slice %167 {offsets = [0, 192], sizes = [128, 32], strides = [1, 1]} : vector<128x256xbf16> to vector<128x32xbf16>
      %181 = vector.extract_strided_slice %167 {offsets = [0, 224], sizes = [128, 32], strides = [1, 1]} : vector<128x256xbf16> to vector<128x32xbf16>
      %182 = vector.shape_cast %178 : vector<128x32xbf16> to vector<1x128x32xbf16>
      %183 = vector.shape_cast %179 : vector<128x32xbf16> to vector<1x128x32xbf16>
      %184 = vector.shape_cast %180 : vector<128x32xbf16> to vector<1x128x32xbf16>
      %185 = vector.shape_cast %181 : vector<128x32xbf16> to vector<1x128x32xbf16>
      %186 = tpu.concatenate %182, %183, %184, %185 in 0 : vector<1x128x32xbf16>, vector<1x128x32xbf16>, vector<1x128x32xbf16>, vector<1x128x32xbf16> -> vector<4x128x32xbf16>
      %c0_80 = arith.constant 0 : index
      %c0_81 = arith.constant 0 : index
      %c0_82 = arith.constant 0 : index
      %187 = vector.load %arg24[%c0_80, %c0_81, %c0_82] : memref<4x128x32xbf16, #tpu.memory_space<vmem>>, vector<4x128x32xbf16>
      tpu.vector_store %arg24[%c0_80, %c0_81, %c0_82], %186 {strides = array<i32>} : memref<4x128x32xbf16, #tpu.memory_space<vmem>>, vector<4x128x32xbf16>,
    } else {
    }
    %c0 = arith.constant 0 : index
    %c0_1 = arith.constant 0 : index
    %c0_2 = arith.constant 0 : index
    %3 = vector.load %arg2[%c0, %c0_1, %c0_2] : memref<1x128x128xbf16, #tpu.memory_space<vmem>>, vector<1x128x128xbf16>
    %4 = vector.shape_cast %3 : vector<1x128x128xbf16> to vector<128x128xbf16>
    %5 = arith.extf %4 : vector<128x128xbf16> to vector<128x128xf32>
    %c0_3 = arith.constant 0 : index
    %c0_4 = arith.constant 0 : index
    %6 = vector.load %arg4[%c0_3, %c0_4] : memref<1x128xf32, #tpu.memory_space<vmem>>, vector<1x128xf32>
    %c0_5 = arith.constant 0 : index
    %c0_6 = arith.constant 0 : index
    %7 = vector.load %arg5[%c0_5, %c0_6] : memref<1x128xf32, #tpu.memory_space<vmem>>, vector<1x128xf32>
    %cst = arith.constant dense<0.000000e+00> : vector<128xf32>
    %8 = vector.multi_reduction <add>, %5, %cst [1] : vector<128x128xf32> to vector<128xf32>
    %9 = vector.shape_cast %8 : vector<128xf32> to vector<128x1xf32>
    %cst_7 = arith.constant 1.280000e+02 : f32
    %10 = vector.broadcast %cst_7 : f32 to vector<128x1xf32>
    %11 = arith.divf %9, %10 : vector<128x1xf32>
    %12 = vector.broadcast %11 : vector<128x1xf32> to vector<128x128xf32>
    %13 = arith.subf %5, %12 : vector<128x128xf32>
    %14 = arith.mulf %13, %13 : vector<128x128xf32>
    %cst_8 = arith.constant dense<0.000000e+00> : vector<128xf32>
    %15 = vector.multi_reduction <add>, %14, %cst_8 [1] : vector<128x128xf32> to vector<128xf32>
    %16 = vector.shape_cast %15 : vector<128xf32> to vector<128x1xf32>
    %cst_9 = arith.constant 1.280000e+02 : f32
    %17 = vector.broadcast %cst_9 : f32 to vector<128x1xf32>
    %18 = arith.divf %16, %17 : vector<128x1xf32>
    %19 = vector.broadcast %11 : vector<128x1xf32> to vector<128x128xf32>
    %20 = arith.subf %5, %19 : vector<128x128xf32>
    %cst_10 = arith.constant 9.99999974E-6 : f32
    %21 = vector.broadcast %cst_10 : f32 to vector<128x1xf32>
    %22 = arith.addf %18, %21 : vector<128x1xf32>
    %23 = math.rsqrt %22 : vector<128x1xf32>
    %24 = vector.broadcast %23 : vector<128x1xf32> to vector<128x128xf32>
    %25 = arith.mulf %20, %24 : vector<128x128xf32>
    %26 = vector.broadcast %6 : vector<1x128xf32> to vector<128x128xf32>
    %27 = arith.mulf %25, %26 : vector<128x128xf32>
    %28 = vector.broadcast %7 : vector<1x128xf32> to vector<128x128xf32>
    %29 = arith.addf %27, %28 : vector<128x128xf32>
    %30 = arith.truncf %29 : vector<128x128xf32> to vector<128x128xbf16>
    %c0_11 = arith.constant 0 : index
    %c0_12 = arith.constant 0 : index
    %31 = vector.load %arg8[%c0_11, %c0_12] : memref<128x128xbf16, #tpu.memory_space<vmem>>, vector<128x128xbf16>
    %cst_13 = arith.constant dense<0.000000e+00> : vector<128x128xf32>
    %32 = tpu.matmul %30, %31, %cst_13 {dimension_numbers = #tpu.dot_dimension_numbers<[1], [0], [0], [1], [0, 0, 1, 1], [], []>} : vector<128x128xbf16>, vector<128x128xbf16>, vector<128x128xf32> -> vector<128x128xf32>
    %c0_14 = arith.constant 0 : index
    %c0_15 = arith.constant 0 : index
    %33 = vector.load %arg9[%c0_14, %c0_15] : memref<1x128xf32, #tpu.memory_space<vmem>>, vector<1x128xf32>
    %34 = vector.broadcast %33 : vector<1x128xf32> to vector<128x128xf32>
    %35 = arith.addf %32, %34 : vector<128x128xf32>
    %36 = arith.truncf %35 : vector<128x128xf32> to vector<128x128xbf16>
    %37 = vector.extract_strided_slice %36 {offsets = [0, 0], sizes = [128, 32], strides = [1, 1]} : vector<128x128xbf16> to vector<128x32xbf16>
    %38 = vector.extract_strided_slice %36 {offsets = [0, 32], sizes = [128, 32], strides = [1, 1]} : vector<128x128xbf16> to vector<128x32xbf16>
    %39 = vector.extract_strided_slice %36 {offsets = [0, 64], sizes = [128, 32], strides = [1, 1]} : vector<128x128xbf16> to vector<128x32xbf16>
    %40 = vector.extract_strided_slice %36 {offsets = [0, 96], sizes = [128, 32], strides = [1, 1]} : vector<128x128xbf16> to vector<128x32xbf16>
    %41 = vector.shape_cast %37 : vector<128x32xbf16> to vector<1x128x32xbf16>
    %42 = vector.shape_cast %38 : vector<128x32xbf16> to vector<1x128x32xbf16>
    %43 = vector.shape_cast %39 : vector<128x32xbf16> to vector<1x128x32xbf16>
    %44 = vector.shape_cast %40 : vector<128x32xbf16> to vector<1x128x32xbf16>
    %45 = tpu.concatenate %41, %42, %43, %44 in 0 : vector<1x128x32xbf16>, vector<1x128x32xbf16>, vector<1x128x32xbf16>, vector<1x128x32xbf16> -> vector<4x128x32xbf16>
    %c0_16 = arith.constant 0 : index
    %c0_17 = arith.constant 0 : index
    %c0_18 = arith.constant 0 : index
    %46 = vector.load %arg23[%c0_16, %c0_17, %c0_18] : memref<4x128x32xbf16, #tpu.memory_space<vmem>>, vector<4x128x32xbf16>
    "tpu.trace_start"() <{level = 10 : i32, message = "hqd,hkd->hqk"}> : () -> ()
    %cst_19 = arith.constant dense<0.000000e+00> : vector<4x128x128xf32>
    %47 = tpu.matmul %45, %46, %cst_19 {dimension_numbers = #tpu.dot_dimension_numbers<[2], [2], [1], [1], [0, 0, 0, 1, 1, 1], [0], [0]>} : vector<4x128x32xbf16>, vector<4x128x32xbf16>, vector<4x128x128xf32> -> vector<4x128x128xf32>
    "tpu.trace_stop"() : () -> ()
    %cst_20 = arith.constant dense<0xFF800000> : vector<4x128xf32>
    %48 = vector.multi_reduction <maximumf>, %47, %cst_20 [2] : vector<4x128x128xf32> to vector<4x128xf32>
    %49 = vector.shape_cast %48 : vector<4x128xf32> to vector<4x128x1xf32>
    %50 = vector.broadcast %49 : vector<4x128x1xf32> to vector<4x128x128xf32>
    %51 = arith.subf %47, %50 : vector<4x128x128xf32>
    %52 = math.exp %51 : vector<4x128x128xf32>
    %cst_21 = arith.constant dense<0.000000e+00> : vector<4x128xf32>
    %53 = vector.multi_reduction <add>, %52, %cst_21 [2] : vector<4x128x128xf32> to vector<4x128xf32>
    %54 = vector.shape_cast %53 : vector<4x128xf32> to vector<4x128x1xf32>
    %55 = arith.truncf %52 : vector<4x128x128xf32> to vector<4x128x128xbf16>
    %c0_22 = arith.constant 0 : index
    %c0_23 = arith.constant 0 : index
    %c0_24 = arith.constant 0 : index
    %56 = vector.load %arg24[%c0_22, %c0_23, %c0_24] : memref<4x128x32xbf16, #tpu.memory_space<vmem>>, vector<4x128x32xbf16>
    "tpu.trace_start"() <{level = 10 : i32, message = "hqk,hkd->hqd"}> : () -> ()
    %cst_25 = arith.constant dense<0.000000e+00> : vector<4x128x32xf32>
    %57 = tpu.matmul %55, %56, %cst_25 {dimension_numbers = #tpu.dot_dimension_numbers<[2], [1], [1], [2], [0, 0, 0, 1, 1, 2], [0], [0]>} : vector<4x128x128xbf16>, vector<4x128x32xbf16>, vector<4x128x32xf32> -> vector<4x128x32xf32>
    "tpu.trace_stop"() : () -> ()
    %58 = tpu.reciprocal %54 {approx = true} : vector<4x128x1xf32> -> vector<4x128x1xf32>
    %59 = vector.broadcast %58 : vector<4x128x1xf32> to vector<4x128x32xf32>
    %60 = arith.mulf %57, %59 : vector<4x128x32xf32>
    %61 = vector.extract_strided_slice %60 {offsets = [0, 0, 0], sizes = [1, 128, 32], strides = [1, 1, 1]} : vector<4x128x32xf32> to vector<1x128x32xf32>
    %62 = vector.shape_cast %61 : vector<1x128x32xf32> to vector<128x32xf32>
    %63 = arith.truncf %62 : vector<128x32xf32> to vector<128x32xbf16>
    %64 = vector.extract_strided_slice %60 {offsets = [1, 0, 0], sizes = [1, 128, 32], strides = [1, 1, 1]} : vector<4x128x32xf32> to vector<1x128x32xf32>
    %65 = vector.shape_cast %64 : vector<1x128x32xf32> to vector<128x32xf32>
    %66 = arith.truncf %65 : vector<128x32xf32> to vector<128x32xbf16>
    %67 = vector.extract_strided_slice %60 {offsets = [2, 0, 0], sizes = [1, 128, 32], strides = [1, 1, 1]} : vector<4x128x32xf32> to vector<1x128x32xf32>
    %68 = vector.shape_cast %67 : vector<1x128x32xf32> to vector<128x32xf32>
    %69 = arith.truncf %68 : vector<128x32xf32> to vector<128x32xbf16>
    %70 = vector.extract_strided_slice %60 {offsets = [3, 0, 0], sizes = [1, 128, 32], strides = [1, 1, 1]} : vector<4x128x32xf32> to vector<1x128x32xf32>
    %71 = vector.shape_cast %70 : vector<1x128x32xf32> to vector<128x32xf32>
    %72 = arith.truncf %71 : vector<128x32xf32> to vector<128x32xbf16>
    %73 = tpu.concatenate %63, %66, %69, %72 in 1 : vector<128x32xbf16>, vector<128x32xbf16>, vector<128x32xbf16>, vector<128x32xbf16> -> vector<128x128xbf16>
    %c0_26 = arith.constant 0 : index
    %c0_27 = arith.constant 0 : index
    %74 = vector.load %arg12[%c0_26, %c0_27] : memref<128x128xbf16, #tpu.memory_space<vmem>>, vector<128x128xbf16>
    %cst_28 = arith.constant dense<0.000000e+00> : vector<128x128xf32>
    %75 = tpu.matmul %73, %74, %cst_28 {dimension_numbers = #tpu.dot_dimension_numbers<[1], [0], [0], [1], [0, 0, 1, 1], [], []>} : vector<128x128xbf16>, vector<128x128xbf16>, vector<128x128xf32> -> vector<128x128xf32>
    %c0_29 = arith.constant 0 : index
    %c0_30 = arith.constant 0 : index
    %76 = vector.load %arg13[%c0_29, %c0_30] : memref<1x128xf32, #tpu.memory_space<vmem>>, vector<1x128xf32>
    %77 = vector.broadcast %76 : vector<1x128xf32> to vector<128x128xf32>
    %78 = arith.addf %75, %77 : vector<128x128xf32>
    %c0_31 = arith.constant 0 : index
    %c0_32 = arith.constant 0 : index
    %79 = vector.load %arg14[%c0_31, %c0_32] : memref<1x128xf32, #tpu.memory_space<vmem>>, vector<1x128xf32>
    %80 = vector.broadcast %79 : vector<1x128xf32> to vector<128x128xf32>
    %81 = arith.mulf %78, %80 : vector<128x128xf32>
    %82 = arith.addf %5, %81 : vector<128x128xf32>
    %c0_33 = arith.constant 0 : index
    %c0_34 = arith.constant 0 : index
    %83 = vector.load %arg15[%c0_33, %c0_34] : memref<1x128xf32, #tpu.memory_space<vmem>>, vector<1x128xf32>
    %c0_35 = arith.constant 0 : index
    %c0_36 = arith.constant 0 : index
    %84 = vector.load %arg16[%c0_35, %c0_36] : memref<1x128xf32, #tpu.memory_space<vmem>>, vector<1x128xf32>
    %cst_37 = arith.constant dense<0.000000e+00> : vector<128xf32>
    %85 = vector.multi_reduction <add>, %82, %cst_37 [1] : vector<128x128xf32> to vector<128xf32>
    %86 = vector.shape_cast %85 : vector<128xf32> to vector<128x1xf32>
    %cst_38 = arith.constant 1.280000e+02 : f32
    %87 = vector.broadcast %cst_38 : f32 to vector<128x1xf32>
    %88 = arith.divf %86, %87 : vector<128x1xf32>
    %89 = vector.broadcast %88 : vector<128x1xf32> to vector<128x128xf32>
    %90 = arith.subf %82, %89 : vector<128x128xf32>
    %91 = arith.mulf %90, %90 : vector<128x128xf32>
    %cst_39 = arith.constant dense<0.000000e+00> : vector<128xf32>
    %92 = vector.multi_reduction <add>, %91, %cst_39 [1] : vector<128x128xf32> to vector<128xf32>
    %93 = vector.shape_cast %92 : vector<128xf32> to vector<128x1xf32>
    %cst_40 = arith.constant 1.280000e+02 : f32
    %94 = vector.broadcast %cst_40 : f32 to vector<128x1xf32>
    %95 = arith.divf %93, %94 : vector<128x1xf32>
    %96 = vector.broadcast %88 : vector<128x1xf32> to vector<128x128xf32>
    %97 = arith.subf %82, %96 : vector<128x128xf32>
    %cst_41 = arith.constant 9.99999974E-6 : f32
    %98 = vector.broadcast %cst_41 : f32 to vector<128x1xf32>
    %99 = arith.addf %95, %98 : vector<128x1xf32>
    %100 = math.rsqrt %99 : vector<128x1xf32>
    %101 = vector.broadcast %100 : vector<128x1xf32> to vector<128x128xf32>
    %102 = arith.mulf %97, %101 : vector<128x128xf32>
    %103 = vector.broadcast %83 : vector<1x128xf32> to vector<128x128xf32>
    %104 = arith.mulf %102, %103 : vector<128x128xf32>
    %105 = vector.broadcast %84 : vector<1x128xf32> to vector<128x128xf32>
    %106 = arith.addf %104, %105 : vector<128x128xf32>
    %107 = arith.truncf %106 : vector<128x128xf32> to vector<128x128xbf16>
    %c0_42 = arith.constant 0 : index
    %c0_43 = arith.constant 0 : index
    %108 = vector.load %arg17[%c0_42, %c0_43] : memref<128x512xbf16, #tpu.memory_space<vmem>>, vector<128x512xbf16>
    %cst_44 = arith.constant dense<0.000000e+00> : vector<128x512xf32>
    %109 = tpu.matmul %107, %108, %cst_44 {dimension_numbers = #tpu.dot_dimension_numbers<[1], [0], [0], [1], [0, 0, 1, 1], [], []>} : vector<128x128xbf16>, vector<128x512xbf16>, vector<128x512xf32> -> vector<128x512xf32>
    %c0_45 = arith.constant 0 : index
    %c0_46 = arith.constant 0 : index
    %110 = vector.load %arg18[%c0_45, %c0_46] : memref<1x512xf32, #tpu.memory_space<vmem>>, vector<1x512xf32>
    %111 = vector.broadcast %110 : vector<1x512xf32> to vector<128x512xf32>
    %112 = arith.addf %109, %111 : vector<128x512xf32>
    %cst_47 = arith.constant 5.000000e-01 : f32
    %113 = vector.broadcast %cst_47 : f32 to vector<128x512xf32>
    %114 = arith.mulf %113, %112 : vector<128x512xf32>
    %cst_48 = arith.constant 0.707106769 : f32
    %115 = vector.broadcast %cst_48 : f32 to vector<128x512xf32>
    %116 = arith.mulf %112, %115 : vector<128x512xf32>
    %117 = math.erf %116 : vector<128x512xf32>
    %cst_49 = arith.constant 1.000000e+00 : f32
    %118 = vector.broadcast %cst_49 : f32 to vector<128x512xf32>
    %119 = arith.addf %118, %117 : vector<128x512xf32>
    %120 = arith.mulf %114, %119 : vector<128x512xf32>
    %121 = arith.truncf %120 : vector<128x512xf32> to vector<128x512xbf16>
    %c0_50 = arith.constant 0 : index
    %c0_51 = arith.constant 0 : index
    %122 = vector.load %arg19[%c0_50, %c0_51] : memref<512x128xbf16, #tpu.memory_space<vmem>>, vector<512x128xbf16>
    %cst_52 = arith.constant dense<0.000000e+00> : vector<128x128xf32>
    %123 = tpu.matmul %121, %122, %cst_52 {dimension_numbers = #tpu.dot_dimension_numbers<[1], [0], [0], [1], [0, 0, 1, 1], [], []>} : vector<128x512xbf16>, vector<512x128xbf16>, vector<128x128xf32> -> vector<128x128xf32>
    %c0_53 = arith.constant 0 : index
    %c0_54 = arith.constant 0 : index
    %124 = vector.load %arg20[%c0_53, %c0_54] : memref<1x128xf32, #tpu.memory_space<vmem>>, vector<1x128xf32>
    %125 = vector.broadcast %124 : vector<1x128xf32> to vector<128x128xf32>
    %126 = arith.addf %123, %125 : vector<128x128xf32>
    %c0_55 = arith.constant 0 : index
    %c0_56 = arith.constant 0 : index
    %127 = vector.load %arg21[%c0_55, %c0_56] : memref<1x128xf32, #tpu.memory_space<vmem>>, vector<1x128xf32>
    %128 = vector.broadcast %127 : vector<1x128xf32> to vector<128x128xf32>
    %129 = arith.mulf %126, %128 : vector<128x128xf32>
    %130 = arith.addf %82, %129 : vector<128x128xf32>
    %c0_57 = arith.constant 0 : index
    %c0_58 = arith.constant 0 : index
    %c0_59 = arith.constant 0 : index
    %131 = vector.load %arg22[%c0_57, %c0_58, %c0_59] : memref<1x128x128xf32, #tpu.memory_space<vmem>>, vector<1x128x128xf32>
    %132 = vector.shape_cast %131 : vector<1x128x128xf32> to vector<128x128xf32>
    %133 = vector.shape_cast %130 : vector<128x128xf32> to vector<1x128x128xf32>
    tpu.vector_store %arg22[%c0_57, %c0_58, %c0_59], %133 {strides = array<i32>} : memref<1x128x128xf32, #tpu.memory_space<vmem>>, vector<1x128x128xf32>,
    return
  }
  func.func @transform_0(%arg0: i32, %arg1: i32) -> (i32, i32, i32) {
    %c0_i32 = arith.constant 0 : i32
    %c0_i32_0 = arith.constant 0 : i32
    return %arg0, %arg1, %c0_i32 : i32, i32, i32
  }
  func.func @transform_1(%arg0: i32, %arg1: i32) -> (i32, i32, i32) {
    %c0_i32 = arith.constant 0 : i32
    %c0_i32_0 = arith.constant 0 : i32
    %c0_i32_1 = arith.constant 0 : i32
    return %arg0, %c0_i32, %c0_i32_0 : i32, i32, i32
  }
  func.func @transform_2(%arg0: i32, %arg1: i32) -> (i32, i32) {
    %c0_i32 = arith.constant 0 : i32
    %c0_i32_0 = arith.constant 0 : i32
    %c0_i32_1 = arith.constant 0 : i32
    return %c0_i32, %c0_i32_0 : i32, i32
  }
  func.func @transform_3(%arg0: i32, %arg1: i32) -> (i32, i32) {
    %c0_i32 = arith.constant 0 : i32
    %c0_i32_0 = arith.constant 0 : i32
    %c0_i32_1 = arith.constant 0 : i32
    return %c0_i32, %c0_i32_0 : i32, i32
  }
  func.func @transform_4(%arg0: i32, %arg1: i32) -> (i32, i32) {
    %c0_i32 = arith.constant 0 : i32
    %c0_i32_0 = arith.constant 0 : i32
    %c0_i32_1 = arith.constant 0 : i32
    return %c0_i32, %c0_i32_0 : i32, i32
  }
  func.func @transform_5(%arg0: i32, %arg1: i32) -> (i32, i32) {
    %c0_i32 = arith.constant 0 : i32
    %c0_i32_0 = arith.constant 0 : i32
    %c0_i32_1 = arith.constant 0 : i32
    return %c0_i32, %c0_i32_0 : i32, i32
  }
  func.func @transform_6(%arg0: i32, %arg1: i32) -> (i32, i32) {
    %c0_i32 = arith.constant 0 : i32
    %c0_i32_0 = arith.constant 0 : i32
    %c0_i32_1 = arith.constant 0 : i32
    return %c0_i32, %c0_i32_0 : i32, i32
  }
  func.func @transform_7(%arg0: i32, %arg1: i32) -> (i32, i32) {
    %c0_i32 = arith.constant 0 : i32
    %c0_i32_0 = arith.constant 0 : i32
    %c0_i32_1 = arith.constant 0 : i32
    return %c0_i32, %c0_i32_0 : i32, i32
  }
  func.func @transform_8(%arg0: i32, %arg1: i32) -> (i32, i32) {
    %c0_i32 = arith.constant 0 : i32
    %c0_i32_0 = arith.constant 0 : i32
    %c0_i32_1 = arith.constant 0 : i32
    return %c0_i32, %c0_i32_0 : i32, i32
  }
  func.func @transform_9(%arg0: i32, %arg1: i32) -> (i32, i32) {
    %c0_i32 = arith.constant 0 : i32
    %c0_i32_0 = arith.constant 0 : i32
    %c0_i32_1 = arith.constant 0 : i32
    return %c0_i32, %c0_i32_0 : i32, i32
  }
  func.func @transform_10(%arg0: i32, %arg1: i32) -> (i32, i32) {
    %c0_i32 = arith.constant 0 : i32
    %c0_i32_0 = arith.constant 0 : i32
    %c0_i32_1 = arith.constant 0 : i32
    return %c0_i32, %c0_i32_0 : i32, i32
  }
  func.func @transform_11(%arg0: i32, %arg1: i32) -> (i32, i32) {
    %c0_i32 = arith.constant 0 : i32
    %c0_i32_0 = arith.constant 0 : i32
    %c0_i32_1 = arith.constant 0 : i32
    return %c0_i32, %c0_i32_0 : i32, i32
  }
  func.func @transform_12(%arg0: i32, %arg1: i32) -> (i32, i32) {
    %c0_i32 = arith.constant 0 : i32
    %c0_i32_0 = arith.constant 0 : i32
    %c0_i32_1 = arith.constant 0 : i32
    return %c0_i32, %c0_i32_0 : i32, i32
  }
  func.func @transform_13(%arg0: i32, %arg1: i32) -> (i32, i32) {
    %c0_i32 = arith.constant 0 : i32
    %c0_i32_0 = arith.constant 0 : i32
    %c0_i32_1 = arith.constant 0 : i32
    return %c0_i32, %c0_i32_0 : i32, i32
  }
  func.func @transform_14(%arg0: i32, %arg1: i32) -> (i32, i32) {
    %c0_i32 = arith.constant 0 : i32
    %c0_i32_0 = arith.constant 0 : i32
    %c0_i32_1 = arith.constant 0 : i32
    return %c0_i32, %c0_i32_0 : i32, i32
  }
  func.func @transform_15(%arg0: i32, %arg1: i32) -> (i32, i32) {
    %c0_i32 = arith.constant 0 : i32
    %c0_i32_0 = arith.constant 0 : i32
    %c0_i32_1 = arith.constant 0 : i32
    return %c0_i32, %c0_i32_0 : i32, i32
  }
  func.func @transform_16(%arg0: i32, %arg1: i32) -> (i32, i32) {
    %c0_i32 = arith.constant 0 : i32
    %c0_i32_0 = arith.constant 0 : i32
    %c0_i32_1 = arith.constant 0 : i32
    return %c0_i32, %c0_i32_0 : i32, i32
  }
  func.func @transform_17(%arg0: i32, %arg1: i32) -> (i32, i32) {
    %c0_i32 = arith.constant 0 : i32
    %c0_i32_0 = arith.constant 0 : i32
    %c0_i32_1 = arith.constant 0 : i32
    return %c0_i32, %c0_i32_0 : i32, i32
  }
  func.func @transform_18(%arg0: i32, %arg1: i32) -> (i32, i32) {
    %c0_i32 = arith.constant 0 : i32
    %c0_i32_0 = arith.constant 0 : i32
    %c0_i32_1 = arith.constant 0 : i32
    return %c0_i32, %c0_i32_0 : i32, i32
  }
  func.func @transform_19(%arg0: i32, %arg1: i32) -> (i32, i32) {
    %c0_i32 = arith.constant 0 : i32
    %c0_i32_0 = arith.constant 0 : i32
    %c0_i32_1 = arith.constant 0 : i32
    return %c0_i32, %c0_i32_0 : i32, i32
  }
  func.func @transform_20(%arg0: i32, %arg1: i32) -> (i32, i32, i32) {
    %c0_i32 = arith.constant 0 : i32
    %c0_i32_0 = arith.constant 0 : i32
    return %arg0, %arg1, %c0_i32 : i32, i32, i32
  }
}

</mosaic_0001>

<llo_original>
// kernel: tpu_custom_call.1
$region0: #{tpu_custom_call.1}
  #allocation0 [shape = 'u32[]', space=smem, size = 0x4, offset = 0x4, fixed_abs, tag = 'smem constant byte address 0x4 - core index']
  #allocation1 [shape = 'u32[72,128]{1,0:T(1,128)}', space=vmem, size = 0x9000, scoped, tag = 'internal scratch']
  #allocation2 [shape = 'bf16[4,128,32]{2,1,0:T(8,128)(2,1)}', space=vmem, size = 0x20000, scoped, tag = 'scratch operand']
  #allocation3 [shape = 'bf16[4,128,32]{2,1,0:T(8,128)(2,1)}', space=vmem, size = 0x20000, scoped, tag = 'scratch operand']
  %s0 = inlined_call_operand.hbm [shape: bf16[2,256,128], index: 0, kind: input, shape index: {}]
  %s1 = inlined_call_operand.hbm [shape: bf16[2,128,128], index: 1, kind: input, shape index: {}]
  %s2 = inlined_call_operand.vmem [shape: f32[1,128], index: 2, kind: input, shape index: {}]
  %s3 = inlined_call_operand.hbm [shape: f32[1,128], index: 3, kind: input, shape index: {}]
  %s4 = inlined_call_operand.hbm [shape: f32[1,128], index: 4, kind: input, shape index: {}]
  %s5 = inlined_call_operand.hbm [shape: f32[1,128], index: 5, kind: input, shape index: {}]
  %s6 = inlined_call_operand.hbm [shape: bf16[128,128], index: 6, kind: input, shape index: {}]
  %s7 = inlined_call_operand.hbm [shape: f32[1,128], index: 7, kind: input, shape index: {}]
  %s8 = inlined_call_operand.hbm [shape: bf16[128,256], index: 8, kind: input, shape index: {}]
  %s9 = inlined_call_operand.vmem [shape: f32[1,256], index: 9, kind: input, shape index: {}]
  %s10 = inlined_call_operand.hbm [shape: bf16[128,128], index: 10, kind: input, shape index: {}]
  %s11 = inlined_call_operand.vmem [shape: f32[1,128], index: 11, kind: input, shape index: {}]
  %s12 = inlined_call_operand.vmem [shape: f32[1,128], index: 12, kind: input, shape index: {}]
  %s13 = inlined_call_operand.vmem [shape: f32[1,128], index: 13, kind: input, shape index: {}]
  %s14 = inlined_call_operand.vmem [shape: f32[1,128], index: 14, kind: input, shape index: {}]
  %s15 = inlined_call_operand.hbm [shape: bf16[128,512], index: 15, kind: input, shape index: {}]
  %s16 = inlined_call_operand.vmem [shape: f32[1,512], index: 16, kind: input, shape index: {}]
  %s17 = inlined_call_operand.hbm [shape: bf16[512,128], index: 17, kind: input, shape index: {}]
  %s18 = inlined_call_operand.vmem [shape: f32[1,128], index: 18, kind: input, shape index: {}]
  %s19 = inlined_call_operand.vmem [shape: f32[1,128], index: 19, kind: input, shape index: {}]
  %s20 = inlined_call_operand.hbm [shape: f32[2,256,128], index: 20, kind: output, shape index: {}]
  %s21 = sld [smem:[#allocation0]]
  $region161: #{tpu_custom_call.1} parent=0
    _
  %s23 = ssub.s32 1, %s21
  %s24 = scalar_select 0, %s23, %s21
  $region1: #{tpu_custom_call.1} parent=0
    #allocation4 [shape = 'u8[65536]{0}', space=vmem, size = 0x10000, scoped, tag = 'input window, operand 0']
    #allocation5 [shape = 's32[2]{0}', space=sflag, size = 0x8, scoped, tag = 'scoped memory for tpu_custom_call.1']
    #allocation6 [shape = 's32[2]{0}', space=sflag, size = 0x8, scoped, tag = 'scoped memory for tpu_custom_call.1']
    #allocation7 [shape = 'u8[65536]{0}', space=vmem, size = 0x10000, scoped, tag = 'input window, operand 1']
    #allocation8 [shape = 's32[2]{0}', space=sflag, size = 0x8, scoped, tag = 'scoped memory for tpu_custom_call.1']
    #allocation9 [shape = 'u8[512]{0}', space=vmem, size = 0x400, scoped, tag = 'input window, operand 3, single buffered']
    #allocation10 [shape = 'u8[512]{0}', space=vmem, size = 0x400, scoped, tag = 'input window, operand 4, single buffered']
    #allocation11 [shape = 's32[1]{0}', space=sflag, size = 0x4, scoped, tag = 'scoped memory for tpu_custom_call.1']
    #allocation12 [shape = 'u8[512]{0}', space=vmem, size = 0x400, scoped, tag = 'input window, operand 5, single buffered']
    #allocation13 [shape = 'u8[32768]{0}', space=vmem, size = 0x8000, scoped, tag = 'input window, operand 6, single buffered']
    #allocation14 [shape = 's32[1]{0}', space=sflag, size = 0x4, scoped, tag = 'scoped memory for tpu_custom_call.1']
    #allocation15 [shape = 'u8[512]{0}', space=vmem, size = 0x400, scoped, tag = 'input window, operand 7, single buffered']
    #allocation16 [shape = 'u8[65536]{0}', space=vmem, size = 0x10000, scoped, tag = 'input window, operand 8, single buffered']
    #allocation17 [shape = 's32[1]{0}', space=sflag, size = 0x4, scoped, tag = 'scoped memory for tpu_custom_call.1']
    #allocation18 [shape = 'u8[32768]{0}', space=vmem, size = 0x8000, scoped, tag = 'input window, operand 10, single buffered']
    #allocation19 [shape = 'u8[131072]{0}', space=vmem, size = 0x20000, scoped, tag = 'input window, operand 15, single buffered']
    #allocation20 [shape = 's32[1]{0}', space=sflag, size = 0x4, scoped, tag = 'scoped memory for tpu_custom_call.1']
    #allocation21 [shape = 'u8[131072]{0}', space=vmem, size = 0x20000, scoped, tag = 'input window, operand 17, single buffered']
    #allocation22 [shape = 'u8[131072]{0}', space=vmem, size = 0x20000, scoped, tag = 'output window, operand 0']
    %25 = vsyncpa [#allocation5], 0
    %s26 = scalar_lea.sflag [#allocation5], 1
    %27 = vsyncpa %s26, 0
    %28 = vsyncpa [#allocation8], 0
    %s29 = scalar_lea.sflag [#allocation8], 1
    %30 = vsyncpa %s29, 0
    %31 = vsyncpa [#allocation11], 0
    %32 = vsyncpa [#allocation14], 0
    %33 = vsyncpa [#allocation17], 0
    %34 = vsyncpa [#allocation20], 0
    %35 = vsyncpa [#allocation6], 0
    %s36 = scalar_lea.sflag [#allocation6], 1
    %37 = vsyncpa %s36, 0
    loop: start=0, step=1, limit=6
    $region2: #{tpu_custom_call.1} parent=1 // loop_pre_header
      _
    $region3: #{tpu_custom_call.1} parent=1 // loop_header
      %s39 = sphi 0, %s43
      %p40 = scmp.ge.s32.totalorder %s39, 6
      %s46 = sphi 0, %s58
      %s47 = sphi 0, %s54
      %s48 = sphi 0, %s46
      %s49 = sphi 0, %s47
      %s50 = sphi 0, %s48
      %s51 = sphi 0, %s49
      %s63 = sphi 0, %s65
      %s66 = sphi 0, %s63
      %s67 = sphi 0, %s66
      %s83 = sphi 0, %s67
      %s89 = sphi 0, %s91
      %s92 = sphi 0, %s89
      %s93 = sphi 0, %s92
      %s109 = sphi 0, %s93
      %s113 = sphi 0, %s113
      %s115 = sphi 0, %s113
      %s116 = sphi 0, %s115
      %s130 = sphi 0, %s116
      %s134 = sphi 0, %s134
      %s136 = sphi 0, %s134
      %s137 = sphi 0, %s136
      %s151 = sphi 0, %s137
      %s155 = sphi 0, %s155
      %s157 = sphi 0, %s155
      %s158 = sphi 0, %s157
      %s172 = sphi 0, %s158
      %s176 = sphi 0, %s176
      %s178 = sphi 0, %s176
      %s179 = sphi 0, %s178
      %s193 = sphi 0, %s179
      %s197 = sphi 0, %s197
      %s199 = sphi 0, %s197
      %s200 = sphi 0, %s199
      %s214 = sphi 0, %s200
      %s218 = sphi 0, %s218
      %s220 = sphi 0, %s218
      %s221 = sphi 0, %s220
      %s235 = sphi 0, %s221
      %s239 = sphi 0, %s239
      %s241 = sphi 0, %s239
      %s242 = sphi 0, %s241
      %s256 = sphi 0, %s242
      %s260 = sphi 0, %s260
      %s262 = sphi 0, %s260
      %s263 = sphi 0, %s262
      %s277 = sphi 0, %s263
      %s281 = sphi 0, %s281
      %s283 = sphi 0, %s281
      %s284 = sphi 0, %s283
      %s298 = sphi 0, %s284
      %s302 = sphi 0, %s302
      %s304 = sphi 0, %s302
      %s305 = sphi 0, %s304
      %s319 = sphi 0, %s305
      %s323 = sphi 0, %s323
      %s325 = sphi 0, %s323
      %s326 = sphi 0, %s325
      %s340 = sphi 0, %s326
      %s344 = sphi 0, %s344
      %s346 = sphi 0, %s344
      %s347 = sphi 0, %s346
      %s361 = sphi 0, %s347
      %s365 = sphi 0, %s365
      %s367 = sphi 0, %s365
      %s368 = sphi 0, %s367
      %s382 = sphi 0, %s368
      %s386 = sphi 0, %s386
      %s388 = sphi 0, %s386
      %s389 = sphi 0, %s388
      %s403 = sphi 0, %s389
      %s407 = sphi 0, %s407
      %s409 = sphi 0, %s407
      %s410 = sphi 0, %s409
      %s424 = sphi 0, %s410
      %s428 = sphi 0, %s428
      %s430 = sphi 0, %s428
      %s431 = sphi 0, %s430
      %s445 = sphi 0, %s431
      %s449 = sphi 0, %s449
      %s451 = sphi 0, %s449
      %s452 = sphi 0, %s451
      %s466 = sphi 0, %s452
      %s470 = sphi 0, %s470
      %s472 = sphi 0, %s470
      %s473 = sphi 0, %s472
      %s487 = sphi 0, %s473
      %s495 = sphi 0, %s497
      %s498 = sphi 0, %s495
      %s499 = sphi 0, %s498
      %s515 = sphi 0, %s499
    $region4: #{tpu_custom_call.1} parent=1 // loop_header_branch
      %42 = sbr.rel (%p40) target = $region8
    $region5: #{tpu_custom_call.1} parent=1 // loop_body
      %s44 = ssub.s32 %s39, 1
      %s45 = ssub.s32 %s39, 2
      %s52 = sadd.s32 1, %s47
      %p53 = scmp.ge.s32.totalorder %s52, 2
      %s54 = scalar_select %p53, 0, %s52
      %s55 = sadd.s32 1, %s46
      %s56 = scalar_select %p53, %s55, %s46
      %p57 = scmp.ge.s32.totalorder %s56, 2
      %s58 = scalar_select %p57, 0, %s56
      %s59 = ssub.s32 %s46, %s58
      %s60 = ssub.s32 %s47, %s54
      %s61 = sor.u32 %s59, %s60
      %p62 = scmp.eq.s32.totalorder %s61, 0
      %s64 = sadd.s32 %s63, 1
      %s65 = scalar_select %p62, %s63, %s64
      %p68 = pneg %p62
      %p69 = scmp.eq.s32.totalorder %s39, 3
      %p70 = por %p68, %p69
      %p71 = scmp.ne.s32.totalorder %s63, %s66
      %p72 = scmp.eq.s32.totalorder %s39, 0
      %p73 = por %p71, %p72
      %p74 = scmp.ne.s32.totalorder %s63, %s66
      %p75 = scmp.eq.s32.totalorder %s44, 3
      %p76 = por %p74, %p75
      %p77 = scmp.ne.s32.totalorder %s66, %s67
      %p78 = scmp.eq.s32.totalorder %s44, 0
      %p79 = por %p77, %p78
      %p80 = scmp.ne.s32.totalorder %s66, %s67
      %p81 = scmp.eq.s32.totalorder %s45, 3
      %p82 = por %p80, %p81
      %p84 = scmp.ne.s32.totalorder %s67, %s83
      %p85 = scmp.eq.s32.totalorder %s45, 0
      %p86 = por %p84, %p85
      %s87 = ssub.s32 %s46, %s58
      %p88 = scmp.eq.s32.totalorder %s87, 0
      %s90 = sadd.s32 %s89, 1
      %s91 = scalar_select %p88, %s89, %s90
      %p94 = pneg %p88
      %p95 = scmp.eq.s32.totalorder %s39, 3
      %p96 = por %p94, %p95
      %p97 = scmp.ne.s32.totalorder %s89, %s92
      %p98 = scmp.eq.s32.totalorder %s39, 0
      %p99 = por %p97, %p98
      %p100 = scmp.ne.s32.totalorder %s89, %s92
      %p101 = scmp.eq.s32.totalorder %s44, 3
      %p102 = por %p100, %p101
      %p103 = scmp.ne.s32.totalorder %s92, %s93
      %p104 = scmp.eq.s32.totalorder %s44, 0
      %p105 = por %p103, %p104
      %p106 = scmp.ne.s32.totalorder %s92, %s93
      %p107 = scmp.eq.s32.totalorder %s45, 3
      %p108 = por %p106, %p107
      %p110 = scmp.ne.s32.totalorder %s93, %s109
      %p111 = scmp.eq.s32.totalorder %s45, 0
      %p112 = por %p110, %p111
      %s114 = sadd.s32 %s113, 1
      %p117 = scmp.eq.s32.totalorder %s39, 3
      %p118 = scmp.ne.s32.totalorder %s113, %s115
      %p119 = scmp.eq.s32.totalorder %s39, 0
      %p120 = por %p118, %p119
      %p121 = scmp.ne.s32.totalorder %s113, %s115
      %p122 = scmp.eq.s32.totalorder %s44, 3
      %p123 = por %p121, %p122
      %p124 = scmp.ne.s32.totalorder %s115, %s116
      %p125 = scmp.eq.s32.totalorder %s44, 0
      %p126 = por %p124, %p125
      %p127 = scmp.ne.s32.totalorder %s115, %s116
      %p128 = scmp.eq.s32.totalorder %s45, 3
      %p129 = por %p127, %p128
      %p131 = scmp.ne.s32.totalorder %s116, %s130
      %p132 = scmp.eq.s32.totalorder %s45, 0
      %p133 = por %p131, %p132
      %s135 = sadd.s32 %s134, 1
      %p138 = scmp.eq.s32.totalorder %s39, 3
      %p139 = scmp.ne.s32.totalorder %s134, %s136
      %p140 = scmp.eq.s32.totalorder %s39, 0
      %p141 = por %p139, %p140
      %p142 = scmp.ne.s32.totalorder %s134, %s136
      %p143 = scmp.eq.s32.totalorder %s44, 3
      %p144 = por %p142, %p143
      %p145 = scmp.ne.s32.totalorder %s136, %s137
      %p146 = scmp.eq.s32.totalorder %s44, 0
      %p147 = por %p145, %p146
      %p148 = scmp.ne.s32.totalorder %s136, %s137
      %p149 = scmp.eq.s32.totalorder %s45, 3
      %p150 = por %p148, %p149
      %p152 = scmp.ne.s32.totalorder %s137, %s151
      %p153 = scmp.eq.s32.totalorder %s45, 0
      %p154 = por %p152, %p153
      %s156 = sadd.s32 %s155, 1
      %p159 = scmp.eq.s32.totalorder %s39, 3
      %p160 = scmp.ne.s32.totalorder %s155, %s157
      %p161 = scmp.eq.s32.totalorder %s39, 0
      %p162 = por %p160, %p161
      %p163 = scmp.ne.s32.totalorder %s155, %s157
      %p164 = scmp.eq.s32.totalorder %s44, 3
      %p165 = por %p163, %p164
      %p166 = scmp.ne.s32.totalorder %s157, %s158
      %p167 = scmp.eq.s32.totalorder %s44, 0
      %p168 = por %p166, %p167
      %p169 = scmp.ne.s32.totalorder %s157, %s158
      %p170 = scmp.eq.s32.totalorder %s45, 3
      %p171 = por %p169, %p170
      %p173 = scmp.ne.s32.totalorder %s158, %s172
      %p174 = scmp.eq.s32.totalorder %s45, 0
      %p175 = por %p173, %p174
      %s177 = sadd.s32 %s176, 1
      %p180 = scmp.eq.s32.totalorder %s39, 3
      %p181 = scmp.ne.s32.totalorder %s176, %s178
      %p182 = scmp.eq.s32.totalorder %s39, 0
      %p183 = por %p181, %p182
      %p184 = scmp.ne.s32.totalorder %s176, %s178
      %p185 = scmp.eq.s32.totalorder %s44, 3
      %p186 = por %p184, %p185
      %p187 = scmp.ne.s32.totalorder %s178, %s179
      %p188 = scmp.eq.s32.totalorder %s44, 0
      %p189 = por %p187, %p188
      %p190 = scmp.ne.s32.totalorder %s178, %s179
      %p191 = scmp.eq.s32.totalorder %s45, 3
      %p192 = por %p190, %p191
      %p194 = scmp.ne.s32.totalorder %s179, %s193
      %p195 = scmp.eq.s32.totalorder %s45, 0
      %p196 = por %p194, %p195
      %s198 = sadd.s32 %s197, 1
      %p201 = scmp.eq.s32.totalorder %s39, 3
      %p202 = scmp.ne.s32.totalorder %s197, %s199
      %p203 = scmp.eq.s32.totalorder %s39, 0
      %p204 = por %p202, %p203
      %p205 = scmp.ne.s32.totalorder %s197, %s199
      %p206 = scmp.eq.s32.totalorder %s44, 3
      %p207 = por %p205, %p206
      %p208 = scmp.ne.s32.totalorder %s199, %s200
      %p209 = scmp.eq.s32.totalorder %s44, 0
      %p210 = por %p208, %p209
      %p211 = scmp.ne.s32.totalorder %s199, %s200
      %p212 = scmp.eq.s32.totalorder %s45, 3
      %p213 = por %p211, %p212
      %p215 = scmp.ne.s32.totalorder %s200, %s214
      %p216 = scmp.eq.s32.totalorder %s45, 0
      %p217 = por %p215, %p216
      %s219 = sadd.s32 %s218, 1
      %p222 = scmp.eq.s32.totalorder %s39, 3
      %p223 = scmp.ne.s32.totalorder %s218, %s220
      %p224 = scmp.eq.s32.totalorder %s39, 0
      %p225 = por %p223, %p224
      %p226 = scmp.ne.s32.totalorder %s218, %s220
      %p227 = scmp.eq.s32.totalorder %s44, 3
      %p228 = por %p226, %p227
      %p229 = scmp.ne.s32.totalorder %s220, %s221
      %p230 = scmp.eq.s32.totalorder %s44, 0
      %p231 = por %p229, %p230
      %p232 = scmp.ne.s32.totalorder %s220, %s221
      %p233 = scmp.eq.s32.totalorder %s45, 3
      %p234 = por %p232, %p233
      %p236 = scmp.ne.s32.totalorder %s221, %s235
      %p237 = scmp.eq.s32.totalorder %s45, 0
      %p238 = por %p236, %p237
      %s240 = sadd.s32 %s239, 1
      %p243 = scmp.eq.s32.totalorder %s39, 3
      %p244 = scmp.ne.s32.totalorder %s239, %s241
      %p245 = scmp.eq.s32.totalorder %s39, 0
      %p246 = por %p244, %p245
      %p247 = scmp.ne.s32.totalorder %s239, %s241
      %p248 = scmp.eq.s32.totalorder %s44, 3
      %p249 = por %p247, %p248
      %p250 = scmp.ne.s32.totalorder %s241, %s242
      %p251 = scmp.eq.s32.totalorder %s44, 0
      %p252 = por %p250, %p251
      %p253 = scmp.ne.s32.totalorder %s241, %s242
      %p254 = scmp.eq.s32.totalorder %s45, 3
      %p255 = por %p253, %p254
      %p257 = scmp.ne.s32.totalorder %s242, %s256
      %p258 = scmp.eq.s32.totalorder %s45, 0
      %p259 = por %p257, %p258
      %s261 = sadd.s32 %s260, 1
      %p264 = scmp.eq.s32.totalorder %s39, 3
      %p265 = scmp.ne.s32.totalorder %s260, %s262
      %p266 = scmp.eq.s32.totalorder %s39, 0
      %p267 = por %p265, %p266
      %p268 = scmp.ne.s32.totalorder %s260, %s262
      %p269 = scmp.eq.s32.totalorder %s44, 3
      %p270 = por %p268, %p269
      %p271 = scmp.ne.s32.totalorder %s262, %s263
      %p272 = scmp.eq.s32.totalorder %s44, 0
      %p273 = por %p271, %p272
      %p274 = scmp.ne.s32.totalorder %s262, %s263
      %p275 = scmp.eq.s32.totalorder %s45, 3
      %p276 = por %p274, %p275
      %p278 = scmp.ne.s32.totalorder %s263, %s277
      %p279 = scmp.eq.s32.totalorder %s45, 0
      %p280 = por %p278, %p279
      %s282 = sadd.s32 %s281, 1
      %p285 = scmp.eq.s32.totalorder %s39, 3
      %p286 = scmp.ne.s32.totalorder %s281, %s283
      %p287 = scmp.eq.s32.totalorder %s39, 0
      %p288 = por %p286, %p287
      %p289 = scmp.ne.s32.totalorder %s281, %s283
      %p290 = scmp.eq.s32.totalorder %s44, 3
      %p291 = por %p289, %p290
      %p292 = scmp.ne.s32.totalorder %s283, %s284
      %p293 = scmp.eq.s32.totalorder %s44, 0
      %p294 = por %p292, %p293
      %p295 = scmp.ne.s32.totalorder %s283, %s284
      %p296 = scmp.eq.s32.totalorder %s45, 3
      %p297 = por %p295, %p296
      %p299 = scmp.ne.s32.totalorder %s284, %s298
      %p300 = scmp.eq.s32.totalorder %s45, 0
      %p301 = por %p299, %p300
      %s303 = sadd.s32 %s302, 1
      %p306 = scmp.eq.s32.totalorder %s39, 3
      %p307 = scmp.ne.s32.totalorder %s302, %s304
      %p308 = scmp.eq.s32.totalorder %s39, 0
      %p309 = por %p307, %p308
      %p310 = scmp.ne.s32.totalorder %s302, %s304
      %p311 = scmp.eq.s32.totalorder %s44, 3
      %p312 = por %p310, %p311
      %p313 = scmp.ne.s32.totalorder %s304, %s305
      %p314 = scmp.eq.s32.totalorder %s44, 0
      %p315 = por %p313, %p314
      %p316 = scmp.ne.s32.totalorder %s304, %s305
      %p317 = scmp.eq.s32.totalorder %s45, 3
      %p318 = por %p316, %p317
      %p320 = scmp.ne.s32.totalorder %s305, %s319
      %p321 = scmp.eq.s32.totalorder %s45, 0
      %p322 = por %p320, %p321
      %s324 = sadd.s32 %s323, 1
      %p327 = scmp.eq.s32.totalorder %s39, 3
      %p328 = scmp.ne.s32.totalorder %s323, %s325
      %p329 = scmp.eq.s32.totalorder %s39, 0
      %p330 = por %p328, %p329
      %p331 = scmp.ne.s32.totalorder %s323, %s325
      %p332 = scmp.eq.s32.totalorder %s44, 3
      %p333 = por %p331, %p332
      %p334 = scmp.ne.s32.totalorder %s325, %s326
      %p335 = scmp.eq.s32.totalorder %s44, 0
      %p336 = por %p334, %p335
      %p337 = scmp.ne.s32.totalorder %s325, %s326
      %p338 = scmp.eq.s32.totalorder %s45, 3
      %p339 = por %p337, %p338
      %p341 = scmp.ne.s32.totalorder %s326, %s340
      %p342 = scmp.eq.s32.totalorder %s45, 0
      %p343 = por %p341, %p342
      %s345 = sadd.s32 %s344, 1
      %p348 = scmp.eq.s32.totalorder %s39, 3
      %p349 = scmp.ne.s32.totalorder %s344, %s346
      %p350 = scmp.eq.s32.totalorder %s39, 0
      %p351 = por %p349, %p350
      %p352 = scmp.ne.s32.totalorder %s344, %s346
      %p353 = scmp.eq.s32.totalorder %s44, 3
      %p354 = por %p352, %p353
      %p355 = scmp.ne.s32.totalorder %s346, %s347
      %p356 = scmp.eq.s32.totalorder %s44, 0
      %p357 = por %p355, %p356
      %p358 = scmp.ne.s32.totalorder %s346, %s347
      %p359 = scmp.eq.s32.totalorder %s45, 3
      %p360 = por %p358, %p359
      %p362 = scmp.ne.s32.totalorder %s347, %s361
      %p363 = scmp.eq.s32.totalorder %s45, 0
      %p364 = por %p362, %p363
      %s366 = sadd.s32 %s365, 1
      %p369 = scmp.eq.s32.totalorder %s39, 3
      %p370 = scmp.ne.s32.totalorder %s365, %s367
      %p371 = scmp.eq.s32.totalorder %s39, 0
      %p372 = por %p370, %p371
      %p373 = scmp.ne.s32.totalorder %s365, %s367
      %p374 = scmp.eq.s32.totalorder %s44, 3
      %p375 = por %p373, %p374
      %p376 = scmp.ne.s32.totalorder %s367, %s368
      %p377 = scmp.eq.s32.totalorder %s44, 0
      %p378 = por %p376, %p377
      %p379 = scmp.ne.s32.totalorder %s367, %s368
      %p380 = scmp.eq.s32.totalorder %s45, 3
      %p381 = por %p379, %p380
      %p383 = scmp.ne.s32.totalorder %s368, %s382
      %p384 = scmp.eq.s32.totalorder %s45, 0
      %p385 = por %p383, %p384
      %s387 = sadd.s32 %s386, 1
      %p390 = scmp.eq.s32.totalorder %s39, 3
      %p391 = scmp.ne.s32.totalorder %s386, %s388
      %p392 = scmp.eq.s32.totalorder %s39, 0
      %p393 = por %p391, %p392
      %p394 = scmp.ne.s32.totalorder %s386, %s388
      %p395 = scmp.eq.s32.totalorder %s44, 3
      %p396 = por %p394, %p395
      %p397 = scmp.ne.s32.totalorder %s388, %s389
      %p398 = scmp.eq.s32.totalorder %s44, 0
      %p399 = por %p397, %p398
      %p400 = scmp.ne.s32.totalorder %s388, %s389
      %p401 = scmp.eq.s32.totalorder %s45, 3
      %p402 = por %p400, %p401
      %p404 = scmp.ne.s32.totalorder %s389, %s403
      %p405 = scmp.eq.s32.totalorder %s45, 0
      %p406 = por %p404, %p405
      %s408 = sadd.s32 %s407, 1
      %p411 = scmp.eq.s32.totalorder %s39, 3
      %p412 = scmp.ne.s32.totalorder %s407, %s409
      %p413 = scmp.eq.s32.totalorder %s39, 0
      %p414 = por %p412, %p413
      %p415 = scmp.ne.s32.totalorder %s407, %s409
      %p416 = scmp.eq.s32.totalorder %s44, 3
      %p417 = por %p415, %p416
      %p418 = scmp.ne.s32.totalorder %s409, %s410
      %p419 = scmp.eq.s32.totalorder %s44, 0
      %p420 = por %p418, %p419
      %p421 = scmp.ne.s32.totalorder %s409, %s410
      %p422 = scmp.eq.s32.totalorder %s45, 3
      %p423 = por %p421, %p422
      %p425 = scmp.ne.s32.totalorder %s410, %s424
      %p426 = scmp.eq.s32.totalorder %s45, 0
      %p427 = por %p425, %p426
      %s429 = sadd.s32 %s428, 1
      %p432 = scmp.eq.s32.totalorder %s39, 3
      %p433 = scmp.ne.s32.totalorder %s428, %s430
      %p434 = scmp.eq.s32.totalorder %s39, 0
      %p435 = por %p433, %p434
      %p436 = scmp.ne.s32.totalorder %s428, %s430
      %p437 = scmp.eq.s32.totalorder %s44, 3
      %p438 = por %p436, %p437
      %p439 = scmp.ne.s32.totalorder %s430, %s431
      %p440 = scmp.eq.s32.totalorder %s44, 0
      %p441 = por %p439, %p440
      %p442 = scmp.ne.s32.totalorder %s430, %s431
      %p443 = scmp.eq.s32.totalorder %s45, 3
      %p444 = por %p442, %p443
      %p446 = scmp.ne.s32.totalorder %s431, %s445
      %p447 = scmp.eq.s32.totalorder %s45, 0
      %p448 = por %p446, %p447
      %s450 = sadd.s32 %s449, 1
      %p453 = scmp.eq.s32.totalorder %s39, 3
      %p454 = scmp.ne.s32.totalorder %s449, %s451
      %p455 = scmp.eq.s32.totalorder %s39, 0
      %p456 = por %p454, %p455
      %p457 = scmp.ne.s32.totalorder %s449, %s451
      %p458 = scmp.eq.s32.totalorder %s44, 3
      %p459 = por %p457, %p458
      %p460 = scmp.ne.s32.totalorder %s451, %s452
      %p461 = scmp.eq.s32.totalorder %s44, 0
      %p462 = por %p460, %p461
      %p463 = scmp.ne.s32.totalorder %s451, %s452
      %p464 = scmp.eq.s32.totalorder %s45, 3
      %p465 = por %p463, %p464
      %p467 = scmp.ne.s32.totalorder %s452, %s466
      %p468 = scmp.eq.s32.totalorder %s45, 0
      %p469 = por %p467, %p468
      %s471 = sadd.s32 %s470, 1
      %p474 = scmp.eq.s32.totalorder %s39, 3
      %p475 = scmp.ne.s32.totalorder %s470, %s472
      %p476 = scmp.eq.s32.totalorder %s39, 0
      %p477 = por %p475, %p476
      %p478 = scmp.ne.s32.totalorder %s470, %s472
      %p479 = scmp.eq.s32.totalorder %s44, 3
      %p480 = por %p478, %p479
      %p481 = scmp.ne.s32.totalorder %s472, %s473
      %p482 = scmp.eq.s32.totalorder %s44, 0
      %p483 = por %p481, %p482
      %p484 = scmp.ne.s32.totalorder %s472, %s473
      %p485 = scmp.eq.s32.totalorder %s45, 3
      %p486 = por %p484, %p485
      %p488 = scmp.ne.s32.totalorder %s473, %s487
      %p489 = scmp.eq.s32.totalorder %s45, 0
      %p490 = por %p488, %p489
      %s491 = ssub.s32 %s46, %s58
      %s492 = ssub.s32 %s47, %s54
      %s493 = sor.u32 %s491, %s492
      %p494 = scmp.eq.s32.totalorder %s493, 0
      %s496 = sadd.s32 %s495, 1
      %s497 = scalar_select %p494, %s495, %s496
      %p500 = pneg %p494
      %p501 = scmp.eq.s32.totalorder %s39, 3
      %p502 = por %p500, %p501
      %p503 = scmp.ne.s32.totalorder %s495, %s498
      %p504 = scmp.eq.s32.totalorder %s39, 0
      %p505 = por %p503, %p504
      %p506 = scmp.ne.s32.totalorder %s495, %s498
      %p507 = scmp.eq.s32.totalorder %s44, 3
      %p508 = por %p506, %p507
      %p509 = scmp.ne.s32.totalorder %s498, %s499
      %p510 = scmp.eq.s32.totalorder %s44, 0
      %p511 = por %p509, %p510
      %p512 = scmp.ne.s32.totalorder %s498, %s499
      %p513 = scmp.eq.s32.totalorder %s45, 3
      %p514 = por %p512, %p513
      %p516 = scmp.ne.s32.totalorder %s499, %s515
      %p517 = scmp.eq.s32.totalorder %s45, 0
      %p518 = por %p516, %p517
      %p519 = scmp.le.s32.totalorder 1, %s39
      %p520 = scmp.lt.s32.totalorder %s39, 5
      %p521 = pnand %p519, %p520
      %p522 = pneg %p521
      // Predicated region
      $region9: #{tpu_custom_call.1} parent=5 // pred_check
        _
      $region10: #{tpu_custom_call.1} parent=5 // pred_check_branch
        %524 = sbr.rel (%p521) target = $region12
      $region11: #{tpu_custom_call.1} parent=5 // pred_region
        %s525 = ssub.s32 %s39, 1
        // Predicated region
        $region13: #{tpu_custom_call.1} parent=11 // pred_check
          %p526 = pneg %p126
        $region14: #{tpu_custom_call.1} parent=11 // pred_check_branch
          %528 = sbr.rel (%p526) target = $region16
        $region15: #{tpu_custom_call.1} parent=11 // pred_region
          _
        $region16: #{tpu_custom_call.1} parent=11 // pred_fallthru
          _
        // Predicated region
        $region17: #{tpu_custom_call.1} parent=11 // pred_check
          %p529 = pneg %p147
        $region18: #{tpu_custom_call.1} parent=11 // pred_check_branch
          %531 = sbr.rel (%p529) target = $region20
        $region19: #{tpu_custom_call.1} parent=11 // pred_region
          %533 = vsyncadd [#allocation8], 0
          %s535 = sshll.u32 %s3, 4
          %s536 = int_to_ptr.hbm [resolvable:$true] %s535
          %s537 = sshll.u32 [#allocation9], 4
          %s538 = int_to_ptr.vmem [resolvable:$true] %s537
          %540 = dma.hbm_to_vmem [thread:$0]  %s536, 16, %s538, [#allocation8]
        $region20: #{tpu_custom_call.1} parent=11 // pred_fallthru
          _
        // Predicated region
        $region21: #{tpu_custom_call.1} parent=11 // pred_check
          %p541 = pneg %p168
        $region22: #{tpu_custom_call.1} parent=11 // pred_check_branch
          %543 = sbr.rel (%p541) target = $region24
        $region23: #{tpu_custom_call.1} parent=11 // pred_region
          %545 = vsyncadd [#allocation11], 0
          %s547 = sshll.u32 %s4, 4
          %s548 = int_to_ptr.hbm [resolvable:$true] %s547
          %s549 = sshll.u32 [#allocation10], 4
          %s550 = int_to_ptr.vmem [resolvable:$true] %s549
          %552 = dma.hbm_to_vmem [thread:$0]  %s548, 16, %s550, [#allocation11]
        $region24: #{tpu_custom_call.1} parent=11 // pred_fallthru
          _
        // Predicated region
        $region25: #{tpu_custom_call.1} parent=11 // pred_check
          %p553 = pneg %p189
        $region26: #{tpu_custom_call.1} parent=11 // pred_check_branch
          %555 = sbr.rel (%p553) target = $region28
        $region27: #{tpu_custom_call.1} parent=11 // pred_region
          %557 = vsyncadd [#allocation11], 0
          %s559 = sshll.u32 %s5, 4
          %s560 = int_to_ptr.hbm [resolvable:$true] %s559
          %s561 = sshll.u32 [#allocation12], 4
          %s562 = int_to_ptr.vmem [resolvable:$true] %s561
          %564 = dma.hbm_to_vmem [thread:$0]  %s560, 16, %s562, [#allocation11]
        $region28: #{tpu_custom_call.1} parent=11 // pred_fallthru
          _
        // Predicated region
        $region29: #{tpu_custom_call.1} parent=11 // pred_check
          %p565 = pneg %p210
        $region30: #{tpu_custom_call.1} parent=11 // pred_check_branch
          %567 = sbr.rel (%p565) target = $region32
        $region31: #{tpu_custom_call.1} parent=11 // pred_region
          %569 = vsyncadd [#allocation14], 0
          %s570 = sshll.u32 %s6, 4
          %s571 = int_to_ptr.hbm [resolvable:$true] %s570
          %s572 = sshll.u32 [#allocation13], 4
          %s573 = int_to_ptr.vmem [resolvable:$true] %s572
          %578 = dma.hbm_to_vmem [thread:$0]  %s571, 1024, %s573, [#allocation14], 64, 64, 4
        $region32: #{tpu_custom_call.1} parent=11 // pred_fallthru
          _
        // Predicated region
        $region33: #{tpu_custom_call.1} parent=11 // pred_check
          %p579 = pneg %p231
        $region34: #{tpu_custom_call.1} parent=11 // pred_check_branch
          %581 = sbr.rel (%p579) target = $region36
        $region35: #{tpu_custom_call.1} parent=11 // pred_region
          %583 = vsyncadd [#allocation14], 0
          %s585 = sshll.u32 %s7, 4
          %s586 = int_to_ptr.hbm [resolvable:$true] %s585
          %s587 = sshll.u32 [#allocation15], 4
          %s588 = int_to_ptr.vmem [resolvable:$true] %s587
          %590 = dma.hbm_to_vmem [thread:$0]  %s586, 16, %s588, [#allocation14]
        $region36: #{tpu_custom_call.1} parent=11 // pred_fallthru
          _
        // Predicated region
        $region37: #{tpu_custom_call.1} parent=11 // pred_check
          %p591 = pneg %p252
        $region38: #{tpu_custom_call.1} parent=11 // pred_check_branch
          %593 = sbr.rel (%p591) target = $region40
        $region39: #{tpu_custom_call.1} parent=11 // pred_region
          %595 = vsyncadd [#allocation17], 0
          %s596 = sshll.u32 %s8, 4
          %s597 = int_to_ptr.hbm [resolvable:$true] %s596
          %s598 = sshll.u32 [#allocation16], 4
          %s599 = int_to_ptr.vmem [resolvable:$true] %s598
          %604 = dma.hbm_to_vmem [thread:$0]  %s597, 2048, %s599, [#allocation17], 128, 128, 8
        $region40: #{tpu_custom_call.1} parent=11 // pred_fallthru
          _
        // Predicated region
        $region41: #{tpu_custom_call.1} parent=11 // pred_check
          %p605 = pneg %p273
        $region42: #{tpu_custom_call.1} parent=11 // pred_check_branch
          %607 = sbr.rel (%p605) target = $region44
        $region43: #{tpu_custom_call.1} parent=11 // pred_region
          _
        $region44: #{tpu_custom_call.1} parent=11 // pred_fallthru
          _
        // Predicated region
        $region45: #{tpu_custom_call.1} parent=11 // pred_check
          %p608 = pneg %p294
        $region46: #{tpu_custom_call.1} parent=11 // pred_check_branch
          %610 = sbr.rel (%p608) target = $region48
        $region47: #{tpu_custom_call.1} parent=11 // pred_region
          %612 = vsyncadd [#allocation17], 0
          %s613 = sshll.u32 %s10, 4
          %s614 = int_to_ptr.hbm [resolvable:$true] %s613
          %s615 = sshll.u32 [#allocation18], 4
          %s616 = int_to_ptr.vmem [resolvable:$true] %s615
          %621 = dma.hbm_to_vmem [thread:$0]  %s614, 1024, %s616, [#allocation17], 64, 64, 4
        $region48: #{tpu_custom_call.1} parent=11 // pred_fallthru
          _
        // Predicated region
        $region49: #{tpu_custom_call.1} parent=11 // pred_check
          %p622 = pneg %p315
        $region50: #{tpu_custom_call.1} parent=11 // pred_check_branch
          %624 = sbr.rel (%p622) target = $region52
        $region51: #{tpu_custom_call.1} parent=11 // pred_region
          _
        $region52: #{tpu_custom_call.1} parent=11 // pred_fallthru
          _
        // Predicated region
        $region53: #{tpu_custom_call.1} parent=11 // pred_check
          %p625 = pneg %p336
        $region54: #{tpu_custom_call.1} parent=11 // pred_check_branch
          %627 = sbr.rel (%p625) target = $region56
        $region55: #{tpu_custom_call.1} parent=11 // pred_region
          _
        $region56: #{tpu_custom_call.1} parent=11 // pred_fallthru
          _
        // Predicated region
        $region57: #{tpu_custom_call.1} parent=11 // pred_check
          %p628 = pneg %p357
        $region58: #{tpu_custom_call.1} parent=11 // pred_check_branch
          %630 = sbr.rel (%p628) target = $region60
        $region59: #{tpu_custom_call.1} parent=11 // pred_region
          _
        $region60: #{tpu_custom_call.1} parent=11 // pred_fallthru
          _
        // Predicated region
        $region61: #{tpu_custom_call.1} parent=11 // pred_check
          %p631 = pneg %p378
        $region62: #{tpu_custom_call.1} parent=11 // pred_check_branch
          %633 = sbr.rel (%p631) target = $region64
        $region63: #{tpu_custom_call.1} parent=11 // pred_region
          _
        $region64: #{tpu_custom_call.1} parent=11 // pred_fallthru
          _
        // Predicated region
        $region65: #{tpu_custom_call.1} parent=11 // pred_check
          %p634 = pneg %p399
        $region66: #{tpu_custom_call.1} parent=11 // pred_check_branch
          %636 = sbr.rel (%p634) target = $region68
        $region67: #{tpu_custom_call.1} parent=11 // pred_region
          %638 = vsyncadd [#allocation20], 0
          %s639 = sshll.u32 %s15, 4
          %s640 = int_to_ptr.hbm [resolvable:$true] %s639
          %s641 = sshll.u32 [#allocation19], 4
          %s642 = int_to_ptr.vmem [resolvable:$true] %s641
          %647 = dma.hbm_to_vmem [thread:$0]  %s640, 4096, %s642, [#allocation20], 256, 256, 16
        $region68: #{tpu_custom_call.1} parent=11 // pred_fallthru
          _
        // Predicated region
        $region69: #{tpu_custom_call.1} parent=11 // pred_check
          %p648 = pneg %p420
        $region70: #{tpu_custom_call.1} parent=11 // pred_check_branch
          %650 = sbr.rel (%p648) target = $region72
        $region71: #{tpu_custom_call.1} parent=11 // pred_region
          _
        $region72: #{tpu_custom_call.1} parent=11 // pred_fallthru
          _
        // Predicated region
        $region73: #{tpu_custom_call.1} parent=11 // pred_check
          %p651 = pneg %p441
        $region74: #{tpu_custom_call.1} parent=11 // pred_check_branch
          %653 = sbr.rel (%p651) target = $region76
        $region75: #{tpu_custom_call.1} parent=11 // pred_region
          %655 = vsyncadd [#allocation20], 0
          %s656 = sshll.u32 %s17, 4
          %s657 = int_to_ptr.hbm [resolvable:$true] %s656
          %s658 = sshll.u32 [#allocation21], 4
          %s659 = int_to_ptr.vmem [resolvable:$true] %s658
          %664 = dma.hbm_to_vmem [thread:$0]  %s657, 4096, %s659, [#allocation20], 64, 64, 4
        $region76: #{tpu_custom_call.1} parent=11 // pred_fallthru
          _
        // Predicated region
        $region77: #{tpu_custom_call.1} parent=11 // pred_check
          %p665 = pneg %p462
        $region78: #{tpu_custom_call.1} parent=11 // pred_check_branch
          %667 = sbr.rel (%p665) target = $region80
        $region79: #{tpu_custom_call.1} parent=11 // pred_region
          _
        $region80: #{tpu_custom_call.1} parent=11 // pred_fallthru
          _
        // Predicated region
        $region81: #{tpu_custom_call.1} parent=11 // pred_check
          %p668 = pneg %p483
        $region82: #{tpu_custom_call.1} parent=11 // pred_check_branch
          %670 = sbr.rel (%p668) target = $region84
        $region83: #{tpu_custom_call.1} parent=11 // pred_region
          _
        $region84: #{tpu_custom_call.1} parent=11 // pred_fallthru
          _
      $region12: #{tpu_custom_call.1} parent=5 // pred_fallthru
        _
      %p671 = scmp.lt.s32.totalorder %s39, 4
      // Predicated region
      $region85: #{tpu_custom_call.1} parent=5 // pred_check
        %p672 = pneg %p671
      $region86: #{tpu_custom_call.1} parent=5 // pred_check_branch
        %674 = sbr.rel (%p672) target = $region88
      $region87: #{tpu_custom_call.1} parent=5 // pred_region
        // Predicated region
        $region89: #{tpu_custom_call.1} parent=87 // pred_check
          %p675 = pneg %p73
        $region90: #{tpu_custom_call.1} parent=87 // pred_check_branch
          %677 = sbr.rel (%p675) target = $region92
        $region91: #{tpu_custom_call.1} parent=87 // pred_region
          %s678 = sand.u32 %s63, 1
          %s679 = scalar_lea.sflag [#allocation5], %s678
          %s680 = sand.u32 %s63, 1
          %s681 = smul.addr %s680, 64
          %s682 = scalar_lea.vmem [#allocation4], %s681
          %s683 = smul.u32 16, %s47
          %685 = vsyncadd %s679, 0
          %s686 = smul.addr %s46, 32
          %s687 = sadd.s32 %s683, %s686
          %s688 = smul.addr %s687, 4
          %s689 = scalar_lea.hbm %s0, %s688
          %s690 = sshll.u32 %s689, 4
          %s691 = int_to_ptr.hbm [resolvable:$true] %s690
          %s692 = sshll.u32 %s682, 4
          %s693 = int_to_ptr.vmem [resolvable:$true] %s692
          %698 = dma.hbm_to_vmem [thread:$0]  %s691, 1024, %s693, %s679, 64, 64, 4
        $region92: #{tpu_custom_call.1} parent=87 // pred_fallthru
          _
        // Predicated region
        $region93: #{tpu_custom_call.1} parent=87 // pred_check
          %p699 = pneg %p99
        $region94: #{tpu_custom_call.1} parent=87 // pred_check_branch
          %701 = sbr.rel (%p699) target = $region96
        $region95: #{tpu_custom_call.1} parent=87 // pred_region
          %s702 = sand.u32 %s39, 1
          %s703 = scalar_lea.sflag [#allocation8], %s702
          %s704 = sand.u32 %s89, 1
          %s705 = smul.addr %s704, 64
          %s706 = scalar_lea.vmem [#allocation7], %s705
          %708 = vsyncadd %s703, 0
          %s709 = smul.addr %s46, 16
          %s710 = smul.addr %s709, 4
          %s711 = scalar_lea.hbm %s1, %s710
          %s712 = sshll.u32 %s711, 4
          %s713 = int_to_ptr.hbm [resolvable:$true] %s712
          %s714 = sshll.u32 %s706, 4
          %s715 = int_to_ptr.vmem [resolvable:$true] %s714
          %720 = dma.hbm_to_vmem [thread:$0]  %s713, 1024, %s715, %s703, 64, 64, 4
        $region96: #{tpu_custom_call.1} parent=87 // pred_fallthru
          _
      $region88: #{tpu_custom_call.1} parent=5 // pred_fallthru
        _
      %p721 = scmp.le.s32.totalorder 1, %s39
      %p722 = scmp.lt.s32.totalorder %s39, 5
      %p723 = pnand %p721, %p722
      %p724 = pneg %p723
      // Predicated region
      $region97: #{tpu_custom_call.1} parent=5 // pred_check
        _
      $region98: #{tpu_custom_call.1} parent=5 // pred_check_branch
        %726 = sbr.rel (%p723) target = $region100
      $region99: #{tpu_custom_call.1} parent=5 // pred_region
        %s727 = ssub.s32 %s39, 1
        %s728 = sand.u32 %s66, 1
        %s729 = scalar_lea.sflag [#allocation5], %s728
        %s730 = sand.u32 %s66, 1
        %s731 = smul.addr %s730, 64
        %s732 = scalar_lea.vmem [#allocation4], %s731
        // Predicated region
        $region101: #{tpu_custom_call.1} parent=99 // pred_check
          %p733 = pneg %p79
        $region102: #{tpu_custom_call.1} parent=99 // pred_check_branch
          %735 = sbr.rel (%p733) target = $region104
        $region103: #{tpu_custom_call.1} parent=99 // pred_region
          %737 = dma.done %s729, 1024
        $region104: #{tpu_custom_call.1} parent=99 // pred_fallthru
          _
        %s738 = sand.u32 %s44, 1
        %s739 = scalar_lea.sflag [#allocation8], %s738
        %s740 = sand.u32 %s92, 1
        %s741 = smul.addr %s740, 64
        %s742 = scalar_lea.vmem [#allocation7], %s741
        // Predicated region
        $region105: #{tpu_custom_call.1} parent=99 // pred_check
          %p743 = pneg %p105
        $region106: #{tpu_custom_call.1} parent=99 // pred_check_branch
          %745 = sbr.rel (%p743) target = $region108
        $region107: #{tpu_custom_call.1} parent=99 // pred_region
          %747 = dma.done %s739, 1024
        $region108: #{tpu_custom_call.1} parent=99 // pred_fallthru
          _
        // Predicated region
        $region109: #{tpu_custom_call.1} parent=99 // pred_check
          %p748 = pneg %p147
        $region110: #{tpu_custom_call.1} parent=99 // pred_check_branch
          %750 = sbr.rel (%p748) target = $region112
        $region111: #{tpu_custom_call.1} parent=99 // pred_region
          %752 = dma.done [#allocation8], 16
        $region112: #{tpu_custom_call.1} parent=99 // pred_fallthru
          _
        // Predicated region
        $region113: #{tpu_custom_call.1} parent=99 // pred_check
          %p753 = pneg %p168
        $region114: #{tpu_custom_call.1} parent=99 // pred_check_branch
          %755 = sbr.rel (%p753) target = $region116
        $region115: #{tpu_custom_call.1} parent=99 // pred_region
          %757 = dma.done [#allocation11], 16
        $region116: #{tpu_custom_call.1} parent=99 // pred_fallthru
          _
        // Predicated region
        $region117: #{tpu_custom_call.1} parent=99 // pred_check
          %p758 = pneg %p189
        $region118: #{tpu_custom_call.1} parent=99 // pred_check_branch
          %760 = sbr.rel (%p758) target = $region120
        $region119: #{tpu_custom_call.1} parent=99 // pred_region
          %762 = dma.done [#allocation11], 16
        $region120: #{tpu_custom_call.1} parent=99 // pred_fallthru
          _
        // Predicated region
        $region121: #{tpu_custom_call.1} parent=99 // pred_check
          %p763 = pneg %p210
        $region122: #{tpu_custom_call.1} parent=99 // pred_check_branch
          %765 = sbr.rel (%p763) target = $region124
        $region123: #{tpu_custom_call.1} parent=99 // pred_region
          %767 = dma.done [#allocation14], 1024
        $region124: #{tpu_custom_call.1} parent=99 // pred_fallthru
          _
        // Predicated region
        $region125: #{tpu_custom_call.1} parent=99 // pred_check
          %p768 = pneg %p231
        $region126: #{tpu_custom_call.1} parent=99 // pred_check_branch
          %770 = sbr.rel (%p768) target = $region128
        $region127: #{tpu_custom_call.1} parent=99 // pred_region
          %772 = dma.done [#allocation14], 16
        $region128: #{tpu_custom_call.1} parent=99 // pred_fallthru
          _
        // Predicated region
        $region129: #{tpu_custom_call.1} parent=99 // pred_check
          %p773 = pneg %p252
        $region130: #{tpu_custom_call.1} parent=99 // pred_check_branch
          %775 = sbr.rel (%p773) target = $region132
        $region131: #{tpu_custom_call.1} parent=99 // pred_region
          %777 = dma.done [#allocation17], 2048
        $region132: #{tpu_custom_call.1} parent=99 // pred_fallthru
          _
        // Predicated region
        $region133: #{tpu_custom_call.1} parent=99 // pred_check
          %p778 = pneg %p294
        $region134: #{tpu_custom_call.1} parent=99 // pred_check_branch
          %780 = sbr.rel (%p778) target = $region136
        $region135: #{tpu_custom_call.1} parent=99 // pred_region
          %782 = dma.done [#allocation17], 1024
        $region136: #{tpu_custom_call.1} parent=99 // pred_fallthru
          _
        // Predicated region
        $region137: #{tpu_custom_call.1} parent=99 // pred_check
          %p783 = pneg %p399
        $region138: #{tpu_custom_call.1} parent=99 // pred_check_branch
          %785 = sbr.rel (%p783) target = $region140
        $region139: #{tpu_custom_call.1} parent=99 // pred_region
          %787 = dma.done [#allocation20], 4096
        $region140: #{tpu_custom_call.1} parent=99 // pred_fallthru
          _
        // Predicated region
        $region141: #{tpu_custom_call.1} parent=99 // pred_check
          %p788 = pneg %p441
        $region142: #{tpu_custom_call.1} parent=99 // pred_check_branch
          %790 = sbr.rel (%p788) target = $region144
        $region143: #{tpu_custom_call.1} parent=99 // pred_region
          %792 = dma.done [#allocation20], 4096
        $region144: #{tpu_custom_call.1} parent=99 // pred_fallthru
          _
        %s793 = sand.u32 %s66, 1
        %s794 = scalar_lea.sflag [#allocation5], %s793
        %s795 = sand.u32 %s66, 1
        %s796 = smul.addr %s795, 64
        %s797 = scalar_lea.vmem [#allocation4], %s796
        %p798 = pneg %p79
        %p799 = pneg %p76
        %s800 = sand.u32 %s44, 1
        %s801 = scalar_lea.sflag [#allocation8], %s800
        %s802 = sand.u32 %s92, 1
        %s803 = smul.addr %s802, 64
        %s804 = scalar_lea.vmem [#allocation7], %s803
        %p805 = pneg %p105
        %p806 = pneg %p102
        %p807 = pneg %p126
        %p808 = pneg %p123
        %p809 = pneg %p147
        %p810 = pneg %p144
        %p811 = pneg %p168
        %p812 = pneg %p165
        %p813 = pneg %p189
        %p814 = pneg %p186
        %p815 = pneg %p210
        %p816 = pneg %p207
        %p817 = pneg %p231
        %p818 = pneg %p228
        %p819 = pneg %p252
        %p820 = pneg %p249
        %p821 = pneg %p273
        %p822 = pneg %p270
        %p823 = pneg %p294
        %p824 = pneg %p291
        %p825 = pneg %p315
        %p826 = pneg %p312
        %p827 = pneg %p336
        %p828 = pneg %p333
        %p829 = pneg %p357
        %p830 = pneg %p354
        %p831 = pneg %p378
        %p832 = pneg %p375
        %p833 = pneg %p399
        %p834 = pneg %p396
        %p835 = pneg %p420
        %p836 = pneg %p417
        %p837 = pneg %p441
        %p838 = pneg %p438
        %p839 = pneg %p462
        %p840 = pneg %p459
        %p841 = pneg %p483
        %p842 = pneg %p480
        %p843 = pneg %p511
        %p844 = pneg %p508
        %s845 = sand.u32 %s498, 1
        %s846 = scalar_lea.sflag [#allocation6], %s845
        %s847 = sand.u32 %s498, 1
        %s848 = smul.addr %s847, 128
        %s849 = scalar_lea.vmem [#allocation22], %s848
        %s850 = smul.u32 16, %s49
        %s851 = smul.u32 16, %s49
        %p852 = scmp.eq.s32.totalorder %s49, 0
        // Predicated region
        $region145: #{tpu_custom_call.1} parent=99 // pred_check
          %p853 = pneg %p852
        $region146: #{tpu_custom_call.1} parent=99 // pred_check_branch
          %855 = sbr.rel (%p853) target = $region148
        $region147: #{tpu_custom_call.1} parent=99 // pred_region
          %v856 = vld [vmem:[%s742] sm:$0xf]
          %v857 = vld [vmem:[%s742 + $0x4] sm:$0xf]
          %v858 = vld [vmem:[%s742 + $0x8] sm:$0xf]
          %v859 = vld [vmem:[%s742 + $0xc] sm:$0xf]
          %v860 = vld [vmem:[%s742 + $0x10] sm:$0xf]
          %v861 = vld [vmem:[%s742 + $0x14] sm:$0xf]
          %v862 = vld [vmem:[%s742 + $0x18] sm:$0xf]
          %v863 = vld [vmem:[%s742 + $0x1c] sm:$0xf]
          %v864 = vld [vmem:[%s742 + $0x20] sm:$0xf]
          %v865 = vld [vmem:[%s742 + $0x24] sm:$0xf]
          %v866 = vld [vmem:[%s742 + $0x28] sm:$0xf]
          %v867 = vld [vmem:[%s742 + $0x2c] sm:$0xf]
          %v868 = vld [vmem:[%s742 + $0x30] sm:$0xf]
          %v869 = vld [vmem:[%s742 + $0x34] sm:$0xf]
          %v870 = vld [vmem:[%s742 + $0x38] sm:$0xf]
          %v871 = vld [vmem:[%s742 + $0x3c] sm:$0xf]
          %v872 = vunpack.c.l.bf16 %v856
          %v873 = vunpack.c.l.bf16 %v857
          %v874 = vunpack.c.l.bf16 %v858
          %v875 = vunpack.c.l.bf16 %v859
          %v876 = vunpack.c.l.bf16 %v860
          %v877 = vunpack.c.l.bf16 %v861
          %v878 = vunpack.c.l.bf16 %v862
          %v879 = vunpack.c.l.bf16 %v863
          %v880 = vunpack.c.l.bf16 %v864
          %v881 = vunpack.c.l.bf16 %v865
          %v882 = vunpack.c.l.bf16 %v866
          %v883 = vunpack.c.l.bf16 %v867
          %v884 = vunpack.c.l.bf16 %v868
          %v885 = vunpack.c.l.bf16 %v869
          %v886 = vunpack.c.l.bf16 %v870
          %v887 = vunpack.c.l.bf16 %v871
          %v888 = vld [vmem:[#allocation10] sm:$0x1]
          %v889 = vld [vmem:[#allocation12] sm:$0x1]
          %890 = vadd.xlane.f32.xlu0 %v872
          %v891 = vpop.xlane.xlu0 %890
          %892 = vadd.xlane.f32.xlu0 %v873
          %v893 = vpop.xlane.xlu0 %892
          %894 = vadd.xlane.f32.xlu0 %v874
          %v895 = vpop.xlane.xlu0 %894
          %896 = vadd.xlane.f32.xlu0 %v875
          %v897 = vpop.xlane.xlu0 %896
          %898 = vadd.xlane.f32.xlu0 %v876
          %v899 = vpop.xlane.xlu0 %898
          %900 = vadd.xlane.f32.xlu0 %v877
          %v901 = vpop.xlane.xlu0 %900
          %902 = vadd.xlane.f32.xlu0 %v878
          %v903 = vpop.xlane.xlu0 %902
          %904 = vadd.xlane.f32.xlu0 %v879
          %v905 = vpop.xlane.xlu0 %904
          %906 = vadd.xlane.f32.xlu0 %v880
          %v907 = vpop.xlane.xlu0 %906
          %908 = vadd.xlane.f32.xlu0 %v881
          %v909 = vpop.xlane.xlu0 %908
          %910 = vadd.xlane.f32.xlu0 %v882
          %v911 = vpop.xlane.xlu0 %910
          %912 = vadd.xlane.f32.xlu0 %v883
          %v913 = vpop.xlane.xlu0 %912
          %914 = vadd.xlane.f32.xlu0 %v884
          %v915 = vpop.xlane.xlu0 %914
          %916 = vadd.xlane.f32.xlu0 %v885
          %v917 = vpop.xlane.xlu0 %916
          %918 = vadd.xlane.f32.xlu0 %v886
          %v919 = vpop.xlane.xlu0 %918
          %920 = vadd.xlane.f32.xlu0 %v887
          %v921 = vpop.xlane.xlu0 %920
          %v922 = vrcp.pop 128.0
          %v923 = vmul.f32 128.0, %v922
          %v924 = vsub.f32 1.0, %v923
          %v925 = vmul.f32 %v922, %v924
          %v926 = vadd.f32 %v922, %v925
          %vm927 = vweird.f32 %v922
          %v928 = vsel %vm927, %v922, %v926
          %v929 = vmul.f32 %v891, %v928
          %v930 = vmul.f32 %v893, %v928
          %v931 = vmul.f32 %v895, %v928
          %v932 = vmul.f32 %v897, %v928
          %v933 = vmul.f32 %v899, %v928
          %v934 = vmul.f32 %v901, %v928
          %v935 = vmul.f32 %v903, %v928
          %v936 = vmul.f32 %v905, %v928
          %v937 = vmul.f32 %v907, %v928
          %v938 = vmul.f32 %v909, %v928
          %v939 = vmul.f32 %v911, %v928
          %v940 = vmul.f32 %v913, %v928
          %v941 = vmul.f32 %v915, %v928
          %v942 = vmul.f32 %v917, %v928
          %v943 = vmul.f32 %v919, %v928
          %v944 = vmul.f32 %v921, %v928
          %v945 = vsub.f32 %v872, %v929
          %v946 = vsub.f32 %v873, %v930
          %v947 = vsub.f32 %v874, %v931
          %v948 = vsub.f32 %v875, %v932
          %v949 = vsub.f32 %v876, %v933
          %v950 = vsub.f32 %v877, %v934
          %v951 = vsub.f32 %v878, %v935
          %v952 = vsub.f32 %v879, %v936
          %v953 = vsub.f32 %v880, %v937
          %v954 = vsub.f32 %v881, %v938
          %v955 = vsub.f32 %v882, %v939
          %v956 = vsub.f32 %v883, %v940
          %v957 = vsub.f32 %v884, %v941
          %v958 = vsub.f32 %v885, %v942
          %v959 = vsub.f32 %v886, %v943
          %v960 = vsub.f32 %v887, %v944
          %v961 = vmul.f32 %v945, %v945
          %v962 = vmul.f32 %v946, %v946
          %v963 = vmul.f32 %v947, %v947
          %v964 = vmul.f32 %v948, %v948
          %v965 = vmul.f32 %v949, %v949
          %v966 = vmul.f32 %v950, %v950
          %v967 = vmul.f32 %v951, %v951
          %v968 = vmul.f32 %v952, %v952
          %v969 = vmul.f32 %v953, %v953
          %v970 = vmul.f32 %v954, %v954
          %v971 = vmul.f32 %v955, %v955
          %v972 = vmul.f32 %v956, %v956
          %v973 = vmul.f32 %v957, %v957
          %v974 = vmul.f32 %v958, %v958
          %v975 = vmul.f32 %v959, %v959
          %v976 = vmul.f32 %v960, %v960
          %977 = vadd.xlane.f32.xlu0 %v961
          %v978 = vpop.xlane.xlu0 %977
          %979 = vadd.xlane.f32.xlu0 %v962
          %v980 = vpop.xlane.xlu0 %979
          %981 = vadd.xlane.f32.xlu0 %v963
          %v982 = vpop.xlane.xlu0 %981
          %983 = vadd.xlane.f32.xlu0 %v964
          %v984 = vpop.xlane.xlu0 %983
          %985 = vadd.xlane.f32.xlu0 %v965
          %v986 = vpop.xlane.xlu0 %985
          %987 = vadd.xlane.f32.xlu0 %v966
          %v988 = vpop.xlane.xlu0 %987
          %989 = vadd.xlane.f32.xlu0 %v967
          %v990 = vpop.xlane.xlu0 %989
          %991 = vadd.xlane.f32.xlu0 %v968
          %v992 = vpop.xlane.xlu0 %991
          %993 = vadd.xlane.f32.xlu0 %v969
          %v994 = vpop.xlane.xlu0 %993
          %995 = vadd.xlane.f32.xlu0 %v970
          %v996 = vpop.xlane.xlu0 %995
          %997 = vadd.xlane.f32.xlu0 %v971
          %v998 = vpop.xlane.xlu0 %997
          %999 = vadd.xlane.f32.xlu0 %v972
          %v1000 = vpop.xlane.xlu0 %999
          %1001 = vadd.xlane.f32.xlu0 %v973
          %v1002 = vpop.xlane.xlu0 %1001
          %1003 = vadd.xlane.f32.xlu0 %v974
          %v1004 = vpop.xlane.xlu0 %1003
          %1005 = vadd.xlane.f32.xlu0 %v975
          %v1006 = vpop.xlane.xlu0 %1005
          %1007 = vadd.xlane.f32.xlu0 %v976
          %v1008 = vpop.xlane.xlu0 %1007
          %v1009 = vmul.f32 %v978, %v928
          %v1010 = vmul.f32 %v980, %v928
          %v1011 = vmul.f32 %v982, %v928
          %v1012 = vmul.f32 %v984, %v928
          %v1013 = vmul.f32 %v986, %v928
          %v1014 = vmul.f32 %v988, %v928
          %v1015 = vmul.f32 %v990, %v928
          %v1016 = vmul.f32 %v992, %v928
          %v1017 = vmul.f32 %v994, %v928
          %v1018 = vmul.f32 %v996, %v928
          %v1019 = vmul.f32 %v998, %v928
          %v1020 = vmul.f32 %v1000, %v928
          %v1021 = vmul.f32 %v1002, %v928
          %v1022 = vmul.f32 %v1004, %v928
          %v1023 = vmul.f32 %v1006, %v928
          %v1024 = vmul.f32 %v1008, %v928
          %v1025 = vadd.f32 %v1009, 1e-05
          %v1026 = vadd.f32 %v1010, 1e-05
          %v1027 = vadd.f32 %v1011, 1e-05
          %v1028 = vadd.f32 %v1012, 1e-05
          %v1029 = vadd.f32 %v1013, 1e-05
          %v1030 = vadd.f32 %v1014, 1e-05
          %v1031 = vadd.f32 %v1015, 1e-05
          %v1032 = vadd.f32 %v1016, 1e-05
          %v1033 = vadd.f32 %v1017, 1e-05
          %v1034 = vadd.f32 %v1018, 1e-05
          %v1035 = vadd.f32 %v1019, 1e-05
          %v1036 = vadd.f32 %v1020, 1e-05
          %v1037 = vadd.f32 %v1021, 1e-05
          %v1038 = vadd.f32 %v1022, 1e-05
          %v1039 = vadd.f32 %v1023, 1e-05
          %v1040 = vadd.f32 %v1024, 1e-05
          %v1041 = vrsqrt.pop %v1025
          %v1042 = vmul.f32 %v1041, %v1025
          %v1043 = vmul.f32 %v1042, %v1041
          %v1044 = vmul.f32 0.5, %v1043
          %v1045 = vsub.f32 1.5, %v1044
          %v1046 = vmul.f32 %v1041, %v1045
          %vm1047 = vweird.f32 %v1025
          %vm1048 = vweird.f32 %v1041
          %vm1049 = vmor %vm1047, %vm1048
          %v1050 = vsel %vm1049, %v1041, %v1046
          %v1051 = vrsqrt.pop %v1026
          %v1052 = vmul.f32 %v1051, %v1026
          %v1053 = vmul.f32 %v1052, %v1051
          %v1054 = vmul.f32 0.5, %v1053
          %v1055 = vsub.f32 1.5, %v1054
          %v1056 = vmul.f32 %v1051, %v1055
          %vm1057 = vweird.f32 %v1026
          %vm1058 = vweird.f32 %v1051
          %vm1059 = vmor %vm1057, %vm1058
          %v1060 = vsel %vm1059, %v1051, %v1056
          %v1061 = vrsqrt.pop %v1027
          %v1062 = vmul.f32 %v1061, %v1027
          %v1063 = vmul.f32 %v1062, %v1061
          %v1064 = vmul.f32 0.5, %v1063
          %v1065 = vsub.f32 1.5, %v1064
          %v1066 = vmul.f32 %v1061, %v1065
          %vm1067 = vweird.f32 %v1027
          %vm1068 = vweird.f32 %v1061
          %vm1069 = vmor %vm1067, %vm1068
          %v1070 = vsel %vm1069, %v1061, %v1066
          %v1071 = vrsqrt.pop %v1028
          %v1072 = vmul.f32 %v1071, %v1028
          %v1073 = vmul.f32 %v1072, %v1071
          %v1074 = vmul.f32 0.5, %v1073
          %v1075 = vsub.f32 1.5, %v1074
          %v1076 = vmul.f32 %v1071, %v1075
          %vm1077 = vweird.f32 %v1028
          %vm1078 = vweird.f32 %v1071
          %vm1079 = vmor %vm1077, %vm1078
          %v1080 = vsel %vm1079, %v1071, %v1076
          %v1081 = vrsqrt.pop %v1029
          %v1082 = vmul.f32 %v1081, %v1029
          %v1083 = vmul.f32 %v1082, %v1081
          %v1084 = vmul.f32 0.5, %v1083
          %v1085 = vsub.f32 1.5, %v1084
          %v1086 = vmul.f32 %v1081, %v1085
          %vm1087 = vweird.f32 %v1029
          %vm1088 = vweird.f32 %v1081
          %vm1089 = vmor %vm1087, %vm1088
          %v1090 = vsel %vm1089, %v1081, %v1086
          %v1091 = vrsqrt.pop %v1030
          %v1092 = vmul.f32 %v1091, %v1030
          %v1093 = vmul.f32 %v1092, %v1091
          %v1094 = vmul.f32 0.5, %v1093
          %v1095 = vsub.f32 1.5, %v1094
          %v1096 = vmul.f32 %v1091, %v1095
          %vm1097 = vweird.f32 %v1030
          %vm1098 = vweird.f32 %v1091
          %vm1099 = vmor %vm1097, %vm1098
          %v1100 = vsel %vm1099, %v1091, %v1096
          %v1101 = vrsqrt.pop %v1031
          %v1102 = vmul.f32 %v1101, %v1031
          %v1103 = vmul.f32 %v1102, %v1101
          %v1104 = vmul.f32 0.5, %v1103
          %v1105 = vsub.f32 1.5, %v1104
          %v1106 = vmul.f32 %v1101, %v1105
          %vm1107 = vweird.f32 %v1031
          %vm1108 = vweird.f32 %v1101
          %vm1109 = vmor %vm1107, %vm1108
          %v1110 = vsel %vm1109, %v1101, %v1106
          %v1111 = vrsqrt.pop %v1032
          %v1112 = vmul.f32 %v1111, %v1032
          %v1113 = vmul.f32 %v1112, %v1111
          %v1114 = vmul.f32 0.5, %v1113
          %v1115 = vsub.f32 1.5, %v1114
          %v1116 = vmul.f32 %v1111, %v1115
          %vm1117 = vweird.f32 %v1032
          %vm1118 = vweird.f32 %v1111
          %vm1119 = vmor %vm1117, %vm1118
          %v1120 = vsel %vm1119, %v1111, %v1116
          %v1121 = vrsqrt.pop %v1033
          %v1122 = vmul.f32 %v1121, %v1033
          %v1123 = vmul.f32 %v1122, %v1121
          %v1124 = vmul.f32 0.5, %v1123
          %v1125 = vsub.f32 1.5, %v1124
          %v1126 = vmul.f32 %v1121, %v1125
          %vm1127 = vweird.f32 %v1033
          %vm1128 = vweird.f32 %v1121
          %vm1129 = vmor %vm1127, %vm1128
          %v1130 = vsel %vm1129, %v1121, %v1126
          %v1131 = vrsqrt.pop %v1034
          %v1132 = vmul.f32 %v1131, %v1034
          %v1133 = vmul.f32 %v1132, %v1131
          %v1134 = vmul.f32 0.5, %v1133
          %v1135 = vsub.f32 1.5, %v1134
          %v1136 = vmul.f32 %v1131, %v1135
          %vm1137 = vweird.f32 %v1034
          %vm1138 = vweird.f32 %v1131
          %vm1139 = vmor %vm1137, %vm1138
          %v1140 = vsel %vm1139, %v1131, %v1136
          %v1141 = vrsqrt.pop %v1035
          %v1142 = vmul.f32 %v1141, %v1035
          %v1143 = vmul.f32 %v1142, %v1141
          %v1144 = vmul.f32 0.5, %v1143
          %v1145 = vsub.f32 1.5, %v1144
          %v1146 = vmul.f32 %v1141, %v1145
          %vm1147 = vweird.f32 %v1035
          %vm1148 = vweird.f32 %v1141
          %vm1149 = vmor %vm1147, %vm1148
          %v1150 = vsel %vm1149, %v1141, %v1146
          %v1151 = vrsqrt.pop %v1036
          %v1152 = vmul.f32 %v1151, %v1036
          %v1153 = vmul.f32 %v1152, %v1151
          %v1154 = vmul.f32 0.5, %v1153
          %v1155 = vsub.f32 1.5, %v1154
          %v1156 = vmul.f32 %v1151, %v1155
          %vm1157 = vweird.f32 %v1036
          %vm1158 = vweird.f32 %v1151
          %vm1159 = vmor %vm1157, %vm1158
          %v1160 = vsel %vm1159, %v1151, %v1156
          %v1161 = vrsqrt.pop %v1037
          %v1162 = vmul.f32 %v1161, %v1037
          %v1163 = vmul.f32 %v1162, %v1161
          %v1164 = vmul.f32 0.5, %v1163
          %v1165 = vsub.f32 1.5, %v1164
          %v1166 = vmul.f32 %v1161, %v1165
          %vm1167 = vweird.f32 %v1037
          %vm1168 = vweird.f32 %v1161
          %vm1169 = vmor %vm1167, %vm1168
          %v1170 = vsel %vm1169, %v1161, %v1166
          %v1171 = vrsqrt.pop %v1038
          %v1172 = vmul.f32 %v1171, %v1038
          %v1173 = vmul.f32 %v1172, %v1171
          %v1174 = vmul.f32 0.5, %v1173
          %v1175 = vsub.f32 1.5, %v1174
          %v1176 = vmul.f32 %v1171, %v1175
          %vm1177 = vweird.f32 %v1038
          %vm1178 = vweird.f32 %v1171
          %vm1179 = vmor %vm1177, %vm1178
          %v1180 = vsel %vm1179, %v1171, %v1176
          %v1181 = vrsqrt.pop %v1039
          %v1182 = vmul.f32 %v1181, %v1039
          %v1183 = vmul.f32 %v1182, %v1181
          %v1184 = vmul.f32 0.5, %v1183
          %v1185 = vsub.f32 1.5, %v1184
          %v1186 = vmul.f32 %v1181, %v1185
          %vm1187 = vweird.f32 %v1039
          %vm1188 = vweird.f32 %v1181
          %vm1189 = vmor %vm1187, %vm1188
          %v1190 = vsel %vm1189, %v1181, %v1186
          %v1191 = vrsqrt.pop %v1040
          %v1192 = vmul.f32 %v1191, %v1040
          %v1193 = vmul.f32 %v1192, %v1191
          %v1194 = vmul.f32 0.5, %v1193
          %v1195 = vsub.f32 1.5, %v1194
          %v1196 = vmul.f32 %v1191, %v1195
          %vm1197 = vweird.f32 %v1040
          %vm1198 = vweird.f32 %v1191
          %vm1199 = vmor %vm1197, %vm1198
          %v1200 = vsel %vm1199, %v1191, %v1196
          %v1201 = vmul.f32 %v945, %v1050
          %v1202 = vmul.f32 %v946, %v1060
          %v1203 = vmul.f32 %v947, %v1070
          %v1204 = vmul.f32 %v948, %v1080
          %v1205 = vmul.f32 %v949, %v1090
          %v1206 = vmul.f32 %v950, %v1100
          %v1207 = vmul.f32 %v951, %v1110
          %v1208 = vmul.f32 %v952, %v1120
          %v1209 = vmul.f32 %v953, %v1130
          %v1210 = vmul.f32 %v954, %v1140
          %v1211 = vmul.f32 %v955, %v1150
          %v1212 = vmul.f32 %v956, %v1160
          %v1213 = vmul.f32 %v957, %v1170
          %v1214 = vmul.f32 %v958, %v1180
          %v1215 = vmul.f32 %v959, %v1190
          %v1216 = vmul.f32 %v960, %v1200
          %v1218 = vperm.slane %v888, 0
          %v1220 = vmul.f32 %v1201, %v1218
          %v1221 = vmul.f32 %v1202, %v1218
          %v1222 = vmul.f32 %v1203, %v1218
          %v1223 = vmul.f32 %v1204, %v1218
          %v1224 = vmul.f32 %v1205, %v1218
          %v1225 = vmul.f32 %v1206, %v1218
          %v1226 = vmul.f32 %v1207, %v1218
          %v1227 = vmul.f32 %v1208, %v1218
          %v1228 = vmul.f32 %v1209, %v1218
          %v1229 = vmul.f32 %v1210, %v1218
          %v1230 = vmul.f32 %v1211, %v1218
          %v1231 = vmul.f32 %v1212, %v1218
          %v1232 = vmul.f32 %v1213, %v1218
          %v1233 = vmul.f32 %v1214, %v1218
          %v1234 = vmul.f32 %v1215, %v1218
          %v1235 = vmul.f32 %v1216, %v1218
          %v1237 = vperm.slane %v889, 0
          %v1239 = vadd.f32 %v1220, %v1237
          %v1240 = vadd.f32 %v1221, %v1237
          %v1241 = vadd.f32 %v1222, %v1237
          %v1242 = vadd.f32 %v1223, %v1237
          %v1243 = vadd.f32 %v1224, %v1237
          %v1244 = vadd.f32 %v1225, %v1237
          %v1245 = vadd.f32 %v1226, %v1237
          %v1246 = vadd.f32 %v1227, %v1237
          %v1247 = vadd.f32 %v1228, %v1237
          %v1248 = vadd.f32 %v1229, %v1237
          %v1249 = vadd.f32 %v1230, %v1237
          %v1250 = vadd.f32 %v1231, %v1237
          %v1251 = vadd.f32 %v1232, %v1237
          %v1252 = vadd.f32 %v1233, %v1237
          %v1253 = vadd.f32 %v1234, %v1237
          %v1254 = vadd.f32 %v1235, %v1237
          %v1255 = vpack.c.bf16 %v1240, %v1239
          %v1256 = vpack.c.bf16 %v1242, %v1241
          %v1257 = vpack.c.bf16 %v1244, %v1243
          %v1258 = vpack.c.bf16 %v1246, %v1245
          %v1259 = vpack.c.bf16 %v1248, %v1247
          %v1260 = vpack.c.bf16 %v1250, %v1249
          %v1261 = vpack.c.bf16 %v1252, %v1251
          %v1262 = vpack.c.bf16 %v1254, %v1253
          %v1263 = vld [vmem:[#allocation16] sm:$0xff]
          %v1264 = vld [vmem:[#allocation16 + $0x8] sm:$0xff]
          %v1265 = vld [vmem:[#allocation16 + $0x10] sm:$0xff]
          %v1266 = vld [vmem:[#allocation16 + $0x18] sm:$0xff]
          %v1267 = vld [vmem:[#allocation16 + $0x20] sm:$0xff]
          %v1268 = vld [vmem:[#allocation16 + $0x28] sm:$0xff]
          %v1269 = vld [vmem:[#allocation16 + $0x30] sm:$0xff]
          %v1270 = vld [vmem:[#allocation16 + $0x38] sm:$0xff]
          %v1271 = vld [vmem:[#allocation16 + $0x40] sm:$0xff]
          %v1272 = vld [vmem:[#allocation16 + $0x48] sm:$0xff]
          %v1273 = vld [vmem:[#allocation16 + $0x50] sm:$0xff]
          %v1274 = vld [vmem:[#allocation16 + $0x58] sm:$0xff]
          %v1275 = vld [vmem:[#allocation16 + $0x60] sm:$0xff]
          %v1276 = vld [vmem:[#allocation16 + $0x68] sm:$0xff]
          %v1277 = vld [vmem:[#allocation16 + $0x70] sm:$0xff]
          %v1278 = vld [vmem:[#allocation16 + $0x78] sm:$0xff]
          %v1279 = vld [vmem:[%s9] sm:$0x3]
          %v1281 = vperm.slane %v1279, 0
          %v1282 = vperm.slane %v1279, 1
          %v1301 = vunpack.c.l.b16 %v1263
          %v1302 = vunpack.c.h.b16 %v1263
          %v1303 = vunpack.c.l.b16 %v1264
          %v1304 = vunpack.c.h.b16 %v1264
          %v1305 = vunpack.c.l.b16 %v1265
          %v1306 = vunpack.c.h.b16 %v1265
          %v1307 = vunpack.c.l.b16 %v1266
          %v1308 = vunpack.c.h.b16 %v1266
          %v1309 = vunpack.c.l.b16 %v1267
          %v1310 = vunpack.c.h.b16 %v1267
          %v1311 = vunpack.c.l.b16 %v1268
          %v1312 = vunpack.c.h.b16 %v1268
          %v1313 = vunpack.c.l.b16 %v1269
          %v1314 = vunpack.c.h.b16 %v1269
          %v1315 = vunpack.c.l.b16 %v1270
          %v1316 = vunpack.c.h.b16 %v1270
          %v1317 = vunpack.c.l.b16 %v1271
          %v1318 = vunpack.c.h.b16 %v1271
          %v1319 = vunpack.c.l.b16 %v1272
          %v1320 = vunpack.c.h.b16 %v1272
          %v1321 = vunpack.c.l.b16 %v1273
          %v1322 = vunpack.c.h.b16 %v1273
          %v1323 = vunpack.c.l.b16 %v1274
          %v1324 = vunpack.c.h.b16 %v1274
          %v1325 = vunpack.c.l.b16 %v1275
          %v1326 = vunpack.c.h.b16 %v1275
          %v1327 = vunpack.c.l.b16 %v1276
          %v1328 = vunpack.c.h.b16 %v1276
          %v1329 = vunpack.c.l.b16 %v1277
          %v1330 = vunpack.c.h.b16 %v1277
          %v1331 = vunpack.c.l.b16 %v1278
          %v1332 = vunpack.c.h.b16 %v1278
          %v1333 = vpack.c.b16 %v1303, %v1301
          %v1334 = vpack.c.b16 %v1304, %v1302
          %v1335 = vpack.c.b16 %v1307, %v1305
          %v1336 = vpack.c.b16 %v1308, %v1306
          %v1337 = vpack.c.b16 %v1311, %v1309
          %v1338 = vpack.c.b16 %v1312, %v1310
          %v1339 = vpack.c.b16 %v1315, %v1313
          %v1340 = vpack.c.b16 %v1316, %v1314
          %v1341 = vpack.c.b16 %v1319, %v1317
          %v1342 = vpack.c.b16 %v1320, %v1318
          %v1343 = vpack.c.b16 %v1323, %v1321
          %v1344 = vpack.c.b16 %v1324, %v1322
          %v1345 = vpack.c.b16 %v1327, %v1325
          %v1346 = vpack.c.b16 %v1328, %v1326
          %v1347 = vpack.c.b16 %v1331, %v1329
          %v1348 = vpack.c.b16 %v1332, %v1330
          %1365 = vmatpush.bf16.msra.mxu0 %v1347
          %1366 = vmatpush.bf16.msra.mxu0 %v1345
          %1367 = vmatpush.bf16.msra.mxu0 %v1343
          %1368 = vmatpush.bf16.msra.mxu0 %v1341
          %1369 = vmatpush.bf16.msra.mxu0 %v1339
          %1370 = vmatpush.bf16.msra.mxu0 %v1337
          %1371 = vmatpush.bf16.msra.mxu0 %v1335
          %1372 = vmatpush.bf16.msra.mxu0 %v1333
          %1373 = vmatmul.bf16.gmra.mxu0 %v1255
          %v1374 = vpop.f32.mrf.mxu0
          %v1375 = vadd.f32 %v1281, %v1374
          %v1376 = vpop.f32.mrf.mxu0
          %v1377 = vadd.f32 %v1281, %v1376
          %1378 = vmatmul.bf16.gmra.mxu0 %v1256
          %v1379 = vpop.f32.mrf.mxu0
          %v1380 = vadd.f32 %v1281, %v1379
          %v1381 = vpop.f32.mrf.mxu0
          %v1382 = vadd.f32 %v1281, %v1381
          %1383 = vmatmul.bf16.gmra.mxu0 %v1257
          %v1384 = vpop.f32.mrf.mxu0
          %v1385 = vadd.f32 %v1281, %v1384
          %v1386 = vpop.f32.mrf.mxu0
          %v1387 = vadd.f32 %v1281, %v1386
          %1388 = vmatmul.bf16.gmra.mxu0 %v1258
          %v1389 = vpop.f32.mrf.mxu0
          %v1390 = vadd.f32 %v1281, %v1389
          %v1391 = vpop.f32.mrf.mxu0
          %v1392 = vadd.f32 %v1281, %v1391
          %1393 = vmatmul.bf16.gmra.mxu0 %v1259
          %v1394 = vpop.f32.mrf.mxu0
          %v1395 = vadd.f32 %v1281, %v1394
          %v1396 = vpop.f32.mrf.mxu0
          %v1397 = vadd.f32 %v1281, %v1396
          %1398 = vmatmul.bf16.gmra.mxu0 %v1260
          %v1399 = vpop.f32.mrf.mxu0
          %v1400 = vadd.f32 %v1281, %v1399
          %v1401 = vpop.f32.mrf.mxu0
          %v1402 = vadd.f32 %v1281, %v1401
          %1403 = vmatmul.bf16.gmra.mxu0 %v1261
          %v1404 = vpop.f32.mrf.mxu0
          %v1405 = vadd.f32 %v1281, %v1404
          %v1406 = vpop.f32.mrf.mxu0
          %v1407 = vadd.f32 %v1281, %v1406
          %1408 = vmatmul.bf16.gmra.mxu0 %v1262
          %v1409 = vpop.f32.mrf.mxu0
          %v1410 = vadd.f32 %v1281, %v1409
          %v1411 = vpop.f32.mrf.mxu0
          %v1412 = vadd.f32 %v1281, %v1411
          %1413 = vdwg.mxu0
          %1414 = vmatpush.bf16.msra.mxu0 %v1348
          %1415 = vmatpush.bf16.msra.mxu0 %v1346
          %1416 = vmatpush.bf16.msra.mxu0 %v1344
          %1417 = vmatpush.bf16.msra.mxu0 %v1342
          %1418 = vmatpush.bf16.msra.mxu0 %v1340
          %1419 = vmatpush.bf16.msra.mxu0 %v1338
          %1420 = vmatpush.bf16.msra.mxu0 %v1336
          %1421 = vmatpush.bf16.msra.mxu0 %v1334
          %1422 = vmatmul.bf16.gmra.mxu0 %v1255
          %v1423 = vpop.f32.mrf.mxu0
          %v1424 = vadd.f32 %v1282, %v1423
          %v1425 = vpop.f32.mrf.mxu0
          %v1426 = vadd.f32 %v1282, %v1425
          %1427 = vmatmul.bf16.gmra.mxu0 %v1256
          %v1428 = vpop.f32.mrf.mxu0
          %v1429 = vadd.f32 %v1282, %v1428
          %v1430 = vpop.f32.mrf.mxu0
          %v1431 = vadd.f32 %v1282, %v1430
          %1432 = vmatmul.bf16.gmra.mxu0 %v1257
          %v1433 = vpop.f32.mrf.mxu0
          %v1434 = vadd.f32 %v1282, %v1433
          %v1435 = vpop.f32.mrf.mxu0
          %v1436 = vadd.f32 %v1282, %v1435
          %1437 = vmatmul.bf16.gmra.mxu0 %v1258
          %v1438 = vpop.f32.mrf.mxu0
          %v1439 = vadd.f32 %v1282, %v1438
          %v1440 = vpop.f32.mrf.mxu0
          %v1441 = vadd.f32 %v1282, %v1440
          %1442 = vmatmul.bf16.gmra.mxu0 %v1259
          %v1443 = vpop.f32.mrf.mxu0
          %v1444 = vadd.f32 %v1282, %v1443
          %v1445 = vpop.f32.mrf.mxu0
          %v1446 = vadd.f32 %v1282, %v1445
          %1447 = vmatmul.bf16.gmra.mxu0 %v1260
          %v1448 = vpop.f32.mrf.mxu0
          %v1449 = vadd.f32 %v1282, %v1448
          %v1450 = vpop.f32.mrf.mxu0
          %v1451 = vadd.f32 %v1282, %v1450
          %1452 = vmatmul.bf16.gmra.mxu0 %v1261
          %v1453 = vpop.f32.mrf.mxu0
          %v1454 = vadd.f32 %v1282, %v1453
          %v1455 = vpop.f32.mrf.mxu0
          %v1456 = vadd.f32 %v1282, %v1455
          %1457 = vmatmul.bf16.gmra.mxu0 %v1262
          %v1458 = vpop.f32.mrf.mxu0
          %v1459 = vadd.f32 %v1282, %v1458
          %v1460 = vpop.f32.mrf.mxu0
          %v1461 = vadd.f32 %v1282, %v1460
          %1462 = vdwg.mxu0
          %v1463 = vpack.c.bf16 %v1424, %v1375
          %v1464 = vpack.c.bf16 %v1426, %v1377
          %v1465 = vpack.c.bf16 %v1429, %v1380
          %v1466 = vpack.c.bf16 %v1431, %v1382
          %v1467 = vpack.c.bf16 %v1434, %v1385
          %v1468 = vpack.c.bf16 %v1436, %v1387
          %v1469 = vpack.c.bf16 %v1439, %v1390
          %v1470 = vpack.c.bf16 %v1441, %v1392
          %v1471 = vpack.c.bf16 %v1444, %v1395
          %v1472 = vpack.c.bf16 %v1446, %v1397
          %v1473 = vpack.c.bf16 %v1449, %v1400
          %v1474 = vpack.c.bf16 %v1451, %v1402
          %v1475 = vpack.c.bf16 %v1454, %v1405
          %v1476 = vpack.c.bf16 %v1456, %v1407
          %v1477 = vpack.c.bf16 %v1459, %v1410
          %v1478 = vpack.c.bf16 %v1461, %v1412
          %1495 = vrot.lane.b32.xlu0 %v1463, 96
          %v1496 = vpop.permute.xlu0 %1495
          %1497 = vrot.lane.b32.xlu0 %v1464, 96
          %v1498 = vpop.permute.xlu0 %1497
          %1499 = vrot.lane.b32.xlu0 %v1465, 96
          %v1500 = vpop.permute.xlu0 %1499
          %1501 = vrot.lane.b32.xlu0 %v1466, 96
          %v1502 = vpop.permute.xlu0 %1501
          %1503 = vrot.lane.b32.xlu0 %v1467, 96
          %v1504 = vpop.permute.xlu0 %1503
          %1505 = vrot.lane.b32.xlu0 %v1468, 96
          %v1506 = vpop.permute.xlu0 %1505
          %1507 = vrot.lane.b32.xlu0 %v1469, 96
          %v1508 = vpop.permute.xlu0 %1507
          %1509 = vrot.lane.b32.xlu0 %v1470, 96
          %v1510 = vpop.permute.xlu0 %1509
          %1511 = vrot.lane.b32.xlu0 %v1471, 96
          %v1512 = vpop.permute.xlu0 %1511
          %1513 = vrot.lane.b32.xlu0 %v1472, 96
          %v1514 = vpop.permute.xlu0 %1513
          %1515 = vrot.lane.b32.xlu0 %v1473, 96
          %v1516 = vpop.permute.xlu0 %1515
          %1517 = vrot.lane.b32.xlu0 %v1474, 96
          %v1518 = vpop.permute.xlu0 %1517
          %1519 = vrot.lane.b32.xlu0 %v1475, 96
          %v1520 = vpop.permute.xlu0 %1519
          %1521 = vrot.lane.b32.xlu0 %v1476, 96
          %v1522 = vpop.permute.xlu0 %1521
          %1523 = vrot.lane.b32.xlu0 %v1477, 96
          %v1524 = vpop.permute.xlu0 %1523
          %1525 = vrot.lane.b32.xlu0 %v1478, 96
          %v1526 = vpop.permute.xlu0 %1525
          %1543 = vrot.lane.b32.xlu0 %v1463, 64
          %v1544 = vpop.permute.xlu0 %1543
          %1545 = vrot.lane.b32.xlu0 %v1464, 64
          %v1546 = vpop.permute.xlu0 %1545
          %1547 = vrot.lane.b32.xlu0 %v1465, 64
          %v1548 = vpop.permute.xlu0 %1547
          %1549 = vrot.lane.b32.xlu0 %v1466, 64
          %v1550 = vpop.permute.xlu0 %1549
          %1551 = vrot.lane.b32.xlu0 %v1467, 64
          %v1552 = vpop.permute.xlu0 %1551
          %1553 = vrot.lane.b32.xlu0 %v1468, 64
          %v1554 = vpop.permute.xlu0 %1553
          %1555 = vrot.lane.b32.xlu0 %v1469, 64
          %v1556 = vpop.permute.xlu0 %1555
          %1557 = vrot.lane.b32.xlu0 %v1470, 64
          %v1558 = vpop.permute.xlu0 %1557
          %1559 = vrot.lane.b32.xlu0 %v1471, 64
          %v1560 = vpop.permute.xlu0 %1559
          %1561 = vrot.lane.b32.xlu0 %v1472, 64
          %v1562 = vpop.permute.xlu0 %1561
          %1563 = vrot.lane.b32.xlu0 %v1473, 64
          %v1564 = vpop.permute.xlu0 %1563
          %1565 = vrot.lane.b32.xlu0 %v1474, 64
          %v1566 = vpop.permute.xlu0 %1565
          %1567 = vrot.lane.b32.xlu0 %v1475, 64
          %v1568 = vpop.permute.xlu0 %1567
          %1569 = vrot.lane.b32.xlu0 %v1476, 64
          %v1570 = vpop.permute.xlu0 %1569
          %1571 = vrot.lane.b32.xlu0 %v1477, 64
          %v1572 = vpop.permute.xlu0 %1571
          %1573 = vrot.lane.b32.xlu0 %v1478, 64
          %v1574 = vpop.permute.xlu0 %1573
          %1591 = vrot.lane.b32.xlu0 %v1463, 32
          %v1592 = vpop.permute.xlu0 %1591
          %1593 = vrot.lane.b32.xlu0 %v1464, 32
          %v1594 = vpop.permute.xlu0 %1593
          %1595 = vrot.lane.b32.xlu0 %v1465, 32
          %v1596 = vpop.permute.xlu0 %1595
          %1597 = vrot.lane.b32.xlu0 %v1466, 32
          %v1598 = vpop.permute.xlu0 %1597
          %1599 = vrot.lane.b32.xlu0 %v1467, 32
          %v1600 = vpop.permute.xlu0 %1599
          %1601 = vrot.lane.b32.xlu0 %v1468, 32
          %v1602 = vpop.permute.xlu0 %1601
          %1603 = vrot.lane.b32.xlu0 %v1469, 32
          %v1604 = vpop.permute.xlu0 %1603
          %1605 = vrot.lane.b32.xlu0 %v1470, 32
          %v1606 = vpop.permute.xlu0 %1605
          %1607 = vrot.lane.b32.xlu0 %v1471, 32
          %v1608 = vpop.permute.xlu0 %1607
          %1609 = vrot.lane.b32.xlu0 %v1472, 32
          %v1610 = vpop.permute.xlu0 %1609
          %1611 = vrot.lane.b32.xlu0 %v1473, 32
          %v1612 = vpop.permute.xlu0 %1611
          %1613 = vrot.lane.b32.xlu0 %v1474, 32
          %v1614 = vpop.permute.xlu0 %1613
          %1615 = vrot.lane.b32.xlu0 %v1475, 32
          %v1616 = vpop.permute.xlu0 %1615
          %1617 = vrot.lane.b32.xlu0 %v1476, 32
          %v1618 = vpop.permute.xlu0 %1617
          %1619 = vrot.lane.b32.xlu0 %v1477, 32
          %v1620 = vpop.permute.xlu0 %1619
          %1621 = vrot.lane.b32.xlu0 %v1478, 32
          %v1622 = vpop.permute.xlu0 %1621
          %vm1639 = vcmask 257024
          %1640 = vst.msk [vmem:[#allocation2] sm:$0xf] %vm1639, %v1463
          %1641 = vst.msk [vmem:[#allocation2 + $0x4] sm:$0xf] %vm1639, %v1464
          %1642 = vst.msk [vmem:[#allocation2 + $0x8] sm:$0xf] %vm1639, %v1465
          %1643 = vst.msk [vmem:[#allocation2 + $0xc] sm:$0xf] %vm1639, %v1466
          %1644 = vst.msk [vmem:[#allocation2 + $0x10] sm:$0xf] %vm1639, %v1467
          %1645 = vst.msk [vmem:[#allocation2 + $0x14] sm:$0xf] %vm1639, %v1468
          %1646 = vst.msk [vmem:[#allocation2 + $0x18] sm:$0xf] %vm1639, %v1469
          %1647 = vst.msk [vmem:[#allocation2 + $0x1c] sm:$0xf] %vm1639, %v1470
          %1648 = vst.msk [vmem:[#allocation2 + $0x20] sm:$0xf] %vm1639, %v1471
          %1649 = vst.msk [vmem:[#allocation2 + $0x24] sm:$0xf] %vm1639, %v1472
          %1650 = vst.msk [vmem:[#allocation2 + $0x28] sm:$0xf] %vm1639, %v1473
          %1651 = vst.msk [vmem:[#allocation2 + $0x2c] sm:$0xf] %vm1639, %v1474
          %1652 = vst.msk [vmem:[#allocation2 + $0x30] sm:$0xf] %vm1639, %v1475
          %1653 = vst.msk [vmem:[#allocation2 + $0x34] sm:$0xf] %vm1639, %v1476
          %1654 = vst.msk [vmem:[#allocation2 + $0x38] sm:$0xf] %vm1639, %v1477
          %1655 = vst.msk [vmem:[#allocation2 + $0x3c] sm:$0xf] %vm1639, %v1478
          %1656 = vst.msk [vmem:[#allocation2 + $0x40] sm:$0xf] %vm1639, %v1496
          %1657 = vst.msk [vmem:[#allocation2 + $0x44] sm:$0xf] %vm1639, %v1498
          %1658 = vst.msk [vmem:[#allocation2 + $0x48] sm:$0xf] %vm1639, %v1500
          %1659 = vst.msk [vmem:[#allocation2 + $0x4c] sm:$0xf] %vm1639, %v1502
          %1660 = vst.msk [vmem:[#allocation2 + $0x50] sm:$0xf] %vm1639, %v1504
          %1661 = vst.msk [vmem:[#allocation2 + $0x54] sm:$0xf] %vm1639, %v1506
          %1662 = vst.msk [vmem:[#allocation2 + $0x58] sm:$0xf] %vm1639, %v1508
          %1663 = vst.msk [vmem:[#allocation2 + $0x5c] sm:$0xf] %vm1639, %v1510
          %1664 = vst.msk [vmem:[#allocation2 + $0x60] sm:$0xf] %vm1639, %v1512
          %1665 = vst.msk [vmem:[#allocation2 + $0x64] sm:$0xf] %vm1639, %v1514
          %1666 = vst.msk [vmem:[#allocation2 + $0x68] sm:$0xf] %vm1639, %v1516
          %1667 = vst.msk [vmem:[#allocation2 + $0x6c] sm:$0xf] %vm1639, %v1518
          %1668 = vst.msk [vmem:[#allocation2 + $0x70] sm:$0xf] %vm1639, %v1520
          %1669 = vst.msk [vmem:[#allocation2 + $0x74] sm:$0xf] %vm1639, %v1522
          %1670 = vst.msk [vmem:[#allocation2 + $0x78] sm:$0xf] %vm1639, %v1524
          %1671 = vst.msk [vmem:[#allocation2 + $0x7c] sm:$0xf] %vm1639, %v1526
          %1672 = vst.msk [vmem:[#allocation2 + $0x80] sm:$0xf] %vm1639, %v1544
          %1673 = vst.msk [vmem:[#allocation2 + $0x84] sm:$0xf] %vm1639, %v1546
          %1674 = vst.msk [vmem:[#allocation2 + $0x88] sm:$0xf] %vm1639, %v1548
          %1675 = vst.msk [vmem:[#allocation2 + $0x8c] sm:$0xf] %vm1639, %v1550
          %1676 = vst.msk [vmem:[#allocation2 + $0x90] sm:$0xf] %vm1639, %v1552
          %1677 = vst.msk [vmem:[#allocation2 + $0x94] sm:$0xf] %vm1639, %v1554
          %1678 = vst.msk [vmem:[#allocation2 + $0x98] sm:$0xf] %vm1639, %v1556
          %1679 = vst.msk [vmem:[#allocation2 + $0x9c] sm:$0xf] %vm1639, %v1558
          %1680 = vst.msk [vmem:[#allocation2 + $0xa0] sm:$0xf] %vm1639, %v1560
          %1681 = vst.msk [vmem:[#allocation2 + $0xa4] sm:$0xf] %vm1639, %v1562
          %1682 = vst.msk [vmem:[#allocation2 + $0xa8] sm:$0xf] %vm1639, %v1564
          %1683 = vst.msk [vmem:[#allocation2 + $0xac] sm:$0xf] %vm1639, %v1566
          %1684 = vst.msk [vmem:[#allocation2 + $0xb0] sm:$0xf] %vm1639, %v1568
          %1685 = vst.msk [vmem:[#allocation2 + $0xb4] sm:$0xf] %vm1639, %v1570
          %1686 = vst.msk [vmem:[#allocation2 + $0xb8] sm:$0xf] %vm1639, %v1572
          %1687 = vst.msk [vmem:[#allocation2 + $0xbc] sm:$0xf] %vm1639, %v1574
          %1688 = vst.msk [vmem:[#allocation2 + $0xc0] sm:$0xf] %vm1639, %v1592
          %1689 = vst.msk [vmem:[#allocation2 + $0xc4] sm:$0xf] %vm1639, %v1594
          %1690 = vst.msk [vmem:[#allocation2 + $0xc8] sm:$0xf] %vm1639, %v1596
          %1691 = vst.msk [vmem:[#allocation2 + $0xcc] sm:$0xf] %vm1639, %v1598
          %1692 = vst.msk [vmem:[#allocation2 + $0xd0] sm:$0xf] %vm1639, %v1600
          %1693 = vst.msk [vmem:[#allocation2 + $0xd4] sm:$0xf] %vm1639, %v1602
          %1694 = vst.msk [vmem:[#allocation2 + $0xd8] sm:$0xf] %vm1639, %v1604
          %1695 = vst.msk [vmem:[#allocation2 + $0xdc] sm:$0xf] %vm1639, %v1606
          %1696 = vst.msk [vmem:[#allocation2 + $0xe0] sm:$0xf] %vm1639, %v1608
          %1697 = vst.msk [vmem:[#allocation2 + $0xe4] sm:$0xf] %vm1639, %v1610
          %1698 = vst.msk [vmem:[#allocation2 + $0xe8] sm:$0xf] %vm1639, %v1612
          %1699 = vst.msk [vmem:[#allocation2 + $0xec] sm:$0xf] %vm1639, %v1614
          %1700 = vst.msk [vmem:[#allocation2 + $0xf0] sm:$0xf] %vm1639, %v1616
          %1701 = vst.msk [vmem:[#allocation2 + $0xf4] sm:$0xf] %vm1639, %v1618
          %1702 = vst.msk [vmem:[#allocation2 + $0xf8] sm:$0xf] %vm1639, %v1620
          %1703 = vst.msk [vmem:[#allocation2 + $0xfc] sm:$0xf] %vm1639, %v1622
          %v1704 = vrot.slane %v1463, 4
          %v1705 = vrot.slane %v1464, 4
          %v1706 = vrot.slane %v1465, 4
          %v1707 = vrot.slane %v1466, 4
          %v1708 = vrot.slane %v1467, 4
          %v1709 = vrot.slane %v1468, 4
          %v1710 = vrot.slane %v1469, 4
          %v1711 = vrot.slane %v1470, 4
          %v1712 = vrot.slane %v1471, 4
          %v1713 = vrot.slane %v1472, 4
          %v1714 = vrot.slane %v1473, 4
          %v1715 = vrot.slane %v1474, 4
          %v1716 = vrot.slane %v1475, 4
          %v1717 = vrot.slane %v1476, 4
          %v1718 = vrot.slane %v1477, 4
          %v1719 = vrot.slane %v1478, 4
          %v1736 = vrot.slane %v1496, 4
          %v1737 = vrot.slane %v1498, 4
          %v1738 = vrot.slane %v1500, 4
          %v1739 = vrot.slane %v1502, 4
          %v1740 = vrot.slane %v1504, 4
          %v1741 = vrot.slane %v1506, 4
          %v1742 = vrot.slane %v1508, 4
          %v1743 = vrot.slane %v1510, 4
          %v1744 = vrot.slane %v1512, 4
          %v1745 = vrot.slane %v1514, 4
          %v1746 = vrot.slane %v1516, 4
          %v1747 = vrot.slane %v1518, 4
          %v1748 = vrot.slane %v1520, 4
          %v1749 = vrot.slane %v1522, 4
          %v1750 = vrot.slane %v1524, 4
          %v1751 = vrot.slane %v1526, 4
          %v1768 = vrot.slane %v1544, 4
          %v1769 = vrot.slane %v1546, 4
          %v1770 = vrot.slane %v1548, 4
          %v1771 = vrot.slane %v1550, 4
          %v1772 = vrot.slane %v1552, 4
          %v1773 = vrot.slane %v1554, 4
          %v1774 = vrot.slane %v1556, 4
          %v1775 = vrot.slane %v1558, 4
          %v1776 = vrot.slane %v1560, 4
          %v1777 = vrot.slane %v1562, 4
          %v1778 = vrot.slane %v1564, 4
          %v1779 = vrot.slane %v1566, 4
          %v1780 = vrot.slane %v1568, 4
          %v1781 = vrot.slane %v1570, 4
          %v1782 = vrot.slane %v1572, 4
          %v1783 = vrot.slane %v1574, 4
          %v1800 = vrot.slane %v1592, 4
          %v1801 = vrot.slane %v1594, 4
          %v1802 = vrot.slane %v1596, 4
          %v1803 = vrot.slane %v1598, 4
          %v1804 = vrot.slane %v1600, 4
          %v1805 = vrot.slane %v1602, 4
          %v1806 = vrot.slane %v1604, 4
          %v1807 = vrot.slane %v1606, 4
          %v1808 = vrot.slane %v1608, 4
          %v1809 = vrot.slane %v1610, 4
          %v1810 = vrot.slane %v1612, 4
          %v1811 = vrot.slane %v1614, 4
          %v1812 = vrot.slane %v1616, 4
          %v1813 = vrot.slane %v1618, 4
          %v1814 = vrot.slane %v1620, 4
          %v1815 = vrot.slane %v1622, 4
          %1832 = vst.msk [vmem:[#allocation3] sm:$0xf] %vm1639, %v1704
          %1833 = vst.msk [vmem:[#allocation3 + $0x4] sm:$0xf] %vm1639, %v1705
          %1834 = vst.msk [vmem:[#allocation3 + $0x8] sm:$0xf] %vm1639, %v1706
          %1835 = vst.msk [vmem:[#allocation3 + $0xc] sm:$0xf] %vm1639, %v1707
          %1836 = vst.msk [vmem:[#allocation3 + $0x10] sm:$0xf] %vm1639, %v1708
          %1837 = vst.msk [vmem:[#allocation3 + $0x14] sm:$0xf] %vm1639, %v1709
          %1838 = vst.msk [vmem:[#allocation3 + $0x18] sm:$0xf] %vm1639, %v1710
          %1839 = vst.msk [vmem:[#allocation3 + $0x1c] sm:$0xf] %vm1639, %v1711
          %1840 = vst.msk [vmem:[#allocation3 + $0x20] sm:$0xf] %vm1639, %v1712
          %1841 = vst.msk [vmem:[#allocation3 + $0x24] sm:$0xf] %vm1639, %v1713
          %1842 = vst.msk [vmem:[#allocation3 + $0x28] sm:$0xf] %vm1639, %v1714
          %1843 = vst.msk [vmem:[#allocation3 + $0x2c] sm:$0xf] %vm1639, %v1715
          %1844 = vst.msk [vmem:[#allocation3 + $0x30] sm:$0xf] %vm1639, %v1716
          %1845 = vst.msk [vmem:[#allocation3 + $0x34] sm:$0xf] %vm1639, %v1717
          %1846 = vst.msk [vmem:[#allocation3 + $0x38] sm:$0xf] %vm1639, %v1718
          %1847 = vst.msk [vmem:[#allocation3 + $0x3c] sm:$0xf] %vm1639, %v1719
          %1848 = vst.msk [vmem:[#allocation3 + $0x40] sm:$0xf] %vm1639, %v1736
          %1849 = vst.msk [vmem:[#allocation3 + $0x44] sm:$0xf] %vm1639, %v1737
          %1850 = vst.msk [vmem:[#allocation3 + $0x48] sm:$0xf] %vm1639, %v1738
          %1851 = vst.msk [vmem:[#allocation3 + $0x4c] sm:$0xf] %vm1639, %v1739
          %1852 = vst.msk [vmem:[#allocation3 + $0x50] sm:$0xf] %vm1639, %v1740
          %1853 = vst.msk [vmem:[#allocation3 + $0x54] sm:$0xf] %vm1639, %v1741
          %1854 = vst.msk [vmem:[#allocation3 + $0x58] sm:$0xf] %vm1639, %v1742
          %1855 = vst.msk [vmem:[#allocation3 + $0x5c] sm:$0xf] %vm1639, %v1743
          %1856 = vst.msk [vmem:[#allocation3 + $0x60] sm:$0xf] %vm1639, %v1744
          %1857 = vst.msk [vmem:[#allocation3 + $0x64] sm:$0xf] %vm1639, %v1745
          %1858 = vst.msk [vmem:[#allocation3 + $0x68] sm:$0xf] %vm1639, %v1746
          %1859 = vst.msk [vmem:[#allocation3 + $0x6c] sm:$0xf] %vm1639, %v1747
          %1860 = vst.msk [vmem:[#allocation3 + $0x70] sm:$0xf] %vm1639, %v1748
          %1861 = vst.msk [vmem:[#allocation3 + $0x74] sm:$0xf] %vm1639, %v1749
          %1862 = vst.msk [vmem:[#allocation3 + $0x78] sm:$0xf] %vm1639, %v1750
          %1863 = vst.msk [vmem:[#allocation3 + $0x7c] sm:$0xf] %vm1639, %v1751
          %1864 = vst.msk [vmem:[#allocation3 + $0x80] sm:$0xf] %vm1639, %v1768
          %1865 = vst.msk [vmem:[#allocation3 + $0x84] sm:$0xf] %vm1639, %v1769
          %1866 = vst.msk [vmem:[#allocation3 + $0x88] sm:$0xf] %vm1639, %v1770
          %1867 = vst.msk [vmem:[#allocation3 + $0x8c] sm:$0xf] %vm1639, %v1771
          %1868 = vst.msk [vmem:[#allocation3 + $0x90] sm:$0xf] %vm1639, %v1772
          %1869 = vst.msk [vmem:[#allocation3 + $0x94] sm:$0xf] %vm1639, %v1773
          %1870 = vst.msk [vmem:[#allocation3 + $0x98] sm:$0xf] %vm1639, %v1774
          %1871 = vst.msk [vmem:[#allocation3 + $0x9c] sm:$0xf] %vm1639, %v1775
          %1872 = vst.msk [vmem:[#allocation3 + $0xa0] sm:$0xf] %vm1639, %v1776
          %1873 = vst.msk [vmem:[#allocation3 + $0xa4] sm:$0xf] %vm1639, %v1777
          %1874 = vst.msk [vmem:[#allocation3 + $0xa8] sm:$0xf] %vm1639, %v1778
          %1875 = vst.msk [vmem:[#allocation3 + $0xac] sm:$0xf] %vm1639, %v1779
          %1876 = vst.msk [vmem:[#allocation3 + $0xb0] sm:$0xf] %vm1639, %v1780
          %1877 = vst.msk [vmem:[#allocation3 + $0xb4] sm:$0xf] %vm1639, %v1781
          %1878 = vst.msk [vmem:[#allocation3 + $0xb8] sm:$0xf] %vm1639, %v1782
          %1879 = vst.msk [vmem:[#allocation3 + $0xbc] sm:$0xf] %vm1639, %v1783
          %1880 = vst.msk [vmem:[#allocation3 + $0xc0] sm:$0xf] %vm1639, %v1800
          %1881 = vst.msk [vmem:[#allocation3 + $0xc4] sm:$0xf] %vm1639, %v1801
          %1882 = vst.msk [vmem:[#allocation3 + $0xc8] sm:$0xf] %vm1639, %v1802
          %1883 = vst.msk [vmem:[#allocation3 + $0xcc] sm:$0xf] %vm1639, %v1803
          %1884 = vst.msk [vmem:[#allocation3 + $0xd0] sm:$0xf] %vm1639, %v1804
          %1885 = vst.msk [vmem:[#allocation3 + $0xd4] sm:$0xf] %vm1639, %v1805
          %1886 = vst.msk [vmem:[#allocation3 + $0xd8] sm:$0xf] %vm1639, %v1806
          %1887 = vst.msk [vmem:[#allocation3 + $0xdc] sm:$0xf] %vm1639, %v1807
          %1888 = vst.msk [vmem:[#allocation3 + $0xe0] sm:$0xf] %vm1639, %v1808
          %1889 = vst.msk [vmem:[#allocation3 + $0xe4] sm:$0xf] %vm1639, %v1809
          %1890 = vst.msk [vmem:[#allocation3 + $0xe8] sm:$0xf] %vm1639, %v1810
          %1891 = vst.msk [vmem:[#allocation3 + $0xec] sm:$0xf] %vm1639, %v1811
          %1892 = vst.msk [vmem:[#allocation3 + $0xf0] sm:$0xf] %vm1639, %v1812
          %1893 = vst.msk [vmem:[#allocation3 + $0xf4] sm:$0xf] %vm1639, %v1813
          %1894 = vst.msk [vmem:[#allocation3 + $0xf8] sm:$0xf] %vm1639, %v1814
          %1895 = vst.msk [vmem:[#allocation3 + $0xfc] sm:$0xf] %vm1639, %v1815
        $region148: #{tpu_custom_call.1} parent=99 // pred_fallthru
          _
        %v1896 = vld [vmem:[%s732] sm:$0xf]
        %v1897 = vld [vmem:[%s732 + $0x4] sm:$0xf]
        %v1898 = vld [vmem:[%s732 + $0x8] sm:$0xf]
        %v1899 = vld [vmem:[%s732 + $0xc] sm:$0xf]
        %v1900 = vld [vmem:[%s732 + $0x10] sm:$0xf]
        %v1901 = vld [vmem:[%s732 + $0x14] sm:$0xf]
        %v1902 = vld [vmem:[%s732 + $0x18] sm:$0xf]
        %v1903 = vld [vmem:[%s732 + $0x1c] sm:$0xf]
        %v1904 = vld [vmem:[%s732 + $0x20] sm:$0xf]
        %v1905 = vld [vmem:[%s732 + $0x24] sm:$0xf]
        %v1906 = vld [vmem:[%s732 + $0x28] sm:$0xf]
        %v1907 = vld [vmem:[%s732 + $0x2c] sm:$0xf]
        %v1908 = vld [vmem:[%s732 + $0x30] sm:$0xf]
        %v1909 = vld [vmem:[%s732 + $0x34] sm:$0xf]
        %v1910 = vld [vmem:[%s732 + $0x38] sm:$0xf]
        %v1911 = vld [vmem:[%s732 + $0x3c] sm:$0xf]
        %v1912 = vunpack.c.l.bf16 %v1896
        %v1913 = vunpack.c.l.bf16 %v1897
        %v1914 = vunpack.c.l.bf16 %v1898
        %v1915 = vunpack.c.l.bf16 %v1899
        %v1916 = vunpack.c.l.bf16 %v1900
        %v1917 = vunpack.c.l.bf16 %v1901
        %v1918 = vunpack.c.l.bf16 %v1902
        %v1919 = vunpack.c.l.bf16 %v1903
        %v1920 = vunpack.c.l.bf16 %v1904
        %v1921 = vunpack.c.l.bf16 %v1905
        %v1922 = vunpack.c.l.bf16 %v1906
        %v1923 = vunpack.c.l.bf16 %v1907
        %v1924 = vunpack.c.l.bf16 %v1908
        %v1925 = vunpack.c.l.bf16 %v1909
        %v1926 = vunpack.c.l.bf16 %v1910
        %v1927 = vunpack.c.l.bf16 %v1911
        %v1928 = vld [vmem:[%s2] sm:$0x1]
        %v1929 = vld [vmem:[#allocation9] sm:$0x1]
        %1930 = vadd.xlane.f32.xlu0 %v1912
        %v1931 = vpop.xlane.xlu0 %1930
        %1932 = vadd.xlane.f32.xlu0 %v1913
        %v1933 = vpop.xlane.xlu0 %1932
        %1934 = vadd.xlane.f32.xlu0 %v1914
        %v1935 = vpop.xlane.xlu0 %1934
        %1936 = vadd.xlane.f32.xlu0 %v1915
        %v1937 = vpop.xlane.xlu0 %1936
        %1938 = vadd.xlane.f32.xlu0 %v1916
        %v1939 = vpop.xlane.xlu0 %1938
        %1940 = vadd.xlane.f32.xlu0 %v1917
        %v1941 = vpop.xlane.xlu0 %1940
        %1942 = vadd.xlane.f32.xlu0 %v1918
        %v1943 = vpop.xlane.xlu0 %1942
        %1944 = vadd.xlane.f32.xlu0 %v1919
        %v1945 = vpop.xlane.xlu0 %1944
        %1946 = vadd.xlane.f32.xlu0 %v1920
        %v1947 = vpop.xlane.xlu0 %1946
        %1948 = vadd.xlane.f32.xlu0 %v1921
        %v1949 = vpop.xlane.xlu0 %1948
        %1950 = vadd.xlane.f32.xlu0 %v1922
        %v1951 = vpop.xlane.xlu0 %1950
        %1952 = vadd.xlane.f32.xlu0 %v1923
        %v1953 = vpop.xlane.xlu0 %1952
        %1954 = vadd.xlane.f32.xlu0 %v1924
        %v1955 = vpop.xlane.xlu0 %1954
        %1956 = vadd.xlane.f32.xlu0 %v1925
        %v1957 = vpop.xlane.xlu0 %1956
        %1958 = vadd.xlane.f32.xlu0 %v1926
        %v1959 = vpop.xlane.xlu0 %1958
        %1960 = vadd.xlane.f32.xlu0 %v1927
        %v1961 = vpop.xlane.xlu0 %1960
        %v1962 = vrcp.pop 128.0
        %v1963 = vmul.f32 128.0, %v1962
        %v1964 = vsub.f32 1.0, %v1963
        %v1965 = vmul.f32 %v1962, %v1964
        %v1966 = vadd.f32 %v1962, %v1965
        %vm1967 = vweird.f32 %v1962
        %v1968 = vsel %vm1967, %v1962, %v1966
        %v1969 = vmul.f32 %v1931, %v1968
        %v1970 = vmul.f32 %v1933, %v1968
        %v1971 = vmul.f32 %v1935, %v1968
        %v1972 = vmul.f32 %v1937, %v1968
        %v1973 = vmul.f32 %v1939, %v1968
        %v1974 = vmul.f32 %v1941, %v1968
        %v1975 = vmul.f32 %v1943, %v1968
        %v1976 = vmul.f32 %v1945, %v1968
        %v1977 = vmul.f32 %v1947, %v1968
        %v1978 = vmul.f32 %v1949, %v1968
        %v1979 = vmul.f32 %v1951, %v1968
        %v1980 = vmul.f32 %v1953, %v1968
        %v1981 = vmul.f32 %v1955, %v1968
        %v1982 = vmul.f32 %v1957, %v1968
        %v1983 = vmul.f32 %v1959, %v1968
        %v1984 = vmul.f32 %v1961, %v1968
        %v1985 = vsub.f32 %v1912, %v1969
        %v1986 = vsub.f32 %v1913, %v1970
        %v1987 = vsub.f32 %v1914, %v1971
        %v1988 = vsub.f32 %v1915, %v1972
        %v1989 = vsub.f32 %v1916, %v1973
        %v1990 = vsub.f32 %v1917, %v1974
        %v1991 = vsub.f32 %v1918, %v1975
        %v1992 = vsub.f32 %v1919, %v1976
        %v1993 = vsub.f32 %v1920, %v1977
        %v1994 = vsub.f32 %v1921, %v1978
        %v1995 = vsub.f32 %v1922, %v1979
        %v1996 = vsub.f32 %v1923, %v1980
        %v1997 = vsub.f32 %v1924, %v1981
        %v1998 = vsub.f32 %v1925, %v1982
        %v1999 = vsub.f32 %v1926, %v1983
        %v2000 = vsub.f32 %v1927, %v1984
        %v2001 = vmul.f32 %v1985, %v1985
        %v2002 = vmul.f32 %v1986, %v1986
        %v2003 = vmul.f32 %v1987, %v1987
        %v2004 = vmul.f32 %v1988, %v1988
        %v2005 = vmul.f32 %v1989, %v1989
        %v2006 = vmul.f32 %v1990, %v1990
        %v2007 = vmul.f32 %v1991, %v1991
        %v2008 = vmul.f32 %v1992, %v1992
        %v2009 = vmul.f32 %v1993, %v1993
        %v2010 = vmul.f32 %v1994, %v1994
        %v2011 = vmul.f32 %v1995, %v1995
        %v2012 = vmul.f32 %v1996, %v1996
        %v2013 = vmul.f32 %v1997, %v1997
        %v2014 = vmul.f32 %v1998, %v1998
        %v2015 = vmul.f32 %v1999, %v1999
        %v2016 = vmul.f32 %v2000, %v2000
        %2017 = vadd.xlane.f32.xlu0 %v2001
        %v2018 = vpop.xlane.xlu0 %2017
        %2019 = vadd.xlane.f32.xlu0 %v2002
        %v2020 = vpop.xlane.xlu0 %2019
        %2021 = vadd.xlane.f32.xlu0 %v2003
        %v2022 = vpop.xlane.xlu0 %2021
        %2023 = vadd.xlane.f32.xlu0 %v2004
        %v2024 = vpop.xlane.xlu0 %2023
        %2025 = vadd.xlane.f32.xlu0 %v2005
        %v2026 = vpop.xlane.xlu0 %2025
        %2027 = vadd.xlane.f32.xlu0 %v2006
        %v2028 = vpop.xlane.xlu0 %2027
        %2029 = vadd.xlane.f32.xlu0 %v2007
        %v2030 = vpop.xlane.xlu0 %2029
        %2031 = vadd.xlane.f32.xlu0 %v2008
        %v2032 = vpop.xlane.xlu0 %2031
        %2033 = vadd.xlane.f32.xlu0 %v2009
        %v2034 = vpop.xlane.xlu0 %2033
        %2035 = vadd.xlane.f32.xlu0 %v2010
        %v2036 = vpop.xlane.xlu0 %2035
        %2037 = vadd.xlane.f32.xlu0 %v2011
        %v2038 = vpop.xlane.xlu0 %2037
        %2039 = vadd.xlane.f32.xlu0 %v2012
        %v2040 = vpop.xlane.xlu0 %2039
        %2041 = vadd.xlane.f32.xlu0 %v2013
        %v2042 = vpop.xlane.xlu0 %2041
        %2043 = vadd.xlane.f32.xlu0 %v2014
        %v2044 = vpop.xlane.xlu0 %2043
        %2045 = vadd.xlane.f32.xlu0 %v2015
        %v2046 = vpop.xlane.xlu0 %2045
        %2047 = vadd.xlane.f32.xlu0 %v2016
        %v2048 = vpop.xlane.xlu0 %2047
        %v2049 = vmul.f32 %v2018, %v1968
        %v2050 = vmul.f32 %v2020, %v1968
        %v2051 = vmul.f32 %v2022, %v1968
        %v2052 = vmul.f32 %v2024, %v1968
        %v2053 = vmul.f32 %v2026, %v1968
        %v2054 = vmul.f32 %v2028, %v1968
        %v2055 = vmul.f32 %v2030, %v1968
        %v2056 = vmul.f32 %v2032, %v1968
        %v2057 = vmul.f32 %v2034, %v1968
        %v2058 = vmul.f32 %v2036, %v1968
        %v2059 = vmul.f32 %v2038, %v1968
        %v2060 = vmul.f32 %v2040, %v1968
        %v2061 = vmul.f32 %v2042, %v1968
        %v2062 = vmul.f32 %v2044, %v1968
        %v2063 = vmul.f32 %v2046, %v1968
        %v2064 = vmul.f32 %v2048, %v1968
        %v2065 = vadd.f32 %v2049, 1e-05
        %v2066 = vadd.f32 %v2050, 1e-05
        %v2067 = vadd.f32 %v2051, 1e-05
        %v2068 = vadd.f32 %v2052, 1e-05
        %v2069 = vadd.f32 %v2053, 1e-05
        %v2070 = vadd.f32 %v2054, 1e-05
        %v2071 = vadd.f32 %v2055, 1e-05
        %v2072 = vadd.f32 %v2056, 1e-05
        %v2073 = vadd.f32 %v2057, 1e-05
        %v2074 = vadd.f32 %v2058, 1e-05
        %v2075 = vadd.f32 %v2059, 1e-05
        %v2076 = vadd.f32 %v2060, 1e-05
        %v2077 = vadd.f32 %v2061, 1e-05
        %v2078 = vadd.f32 %v2062, 1e-05
        %v2079 = vadd.f32 %v2063, 1e-05
        %v2080 = vadd.f32 %v2064, 1e-05
        %v2081 = vrsqrt.pop %v2065
        %v2082 = vmul.f32 %v2081, %v2065
        %v2083 = vmul.f32 %v2082, %v2081
        %v2084 = vmul.f32 0.5, %v2083
        %v2085 = vsub.f32 1.5, %v2084
        %v2086 = vmul.f32 %v2081, %v2085
        %vm2087 = vweird.f32 %v2065
        %vm2088 = vweird.f32 %v2081
        %vm2089 = vmor %vm2087, %vm2088
        %v2090 = vsel %vm2089, %v2081, %v2086
        %v2091 = vrsqrt.pop %v2066
        %v2092 = vmul.f32 %v2091, %v2066
        %v2093 = vmul.f32 %v2092, %v2091
        %v2094 = vmul.f32 0.5, %v2093
        %v2095 = vsub.f32 1.5, %v2094
        %v2096 = vmul.f32 %v2091, %v2095
        %vm2097 = vweird.f32 %v2066
        %vm2098 = vweird.f32 %v2091
        %vm2099 = vmor %vm2097, %vm2098
        %v2100 = vsel %vm2099, %v2091, %v2096
        %v2101 = vrsqrt.pop %v2067
        %v2102 = vmul.f32 %v2101, %v2067
        %v2103 = vmul.f32 %v2102, %v2101
        %v2104 = vmul.f32 0.5, %v2103
        %v2105 = vsub.f32 1.5, %v2104
        %v2106 = vmul.f32 %v2101, %v2105
        %vm2107 = vweird.f32 %v2067
        %vm2108 = vweird.f32 %v2101
        %vm2109 = vmor %vm2107, %vm2108
        %v2110 = vsel %vm2109, %v2101, %v2106
        %v2111 = vrsqrt.pop %v2068
        %v2112 = vmul.f32 %v2111, %v2068
        %v2113 = vmul.f32 %v2112, %v2111
        %v2114 = vmul.f32 0.5, %v2113
        %v2115 = vsub.f32 1.5, %v2114
        %v2116 = vmul.f32 %v2111, %v2115
        %vm2117 = vweird.f32 %v2068
        %vm2118 = vweird.f32 %v2111
        %vm2119 = vmor %vm2117, %vm2118
        %v2120 = vsel %vm2119, %v2111, %v2116
        %v2121 = vrsqrt.pop %v2069
        %v2122 = vmul.f32 %v2121, %v2069
        %v2123 = vmul.f32 %v2122, %v2121
        %v2124 = vmul.f32 0.5, %v2123
        %v2125 = vsub.f32 1.5, %v2124
        %v2126 = vmul.f32 %v2121, %v2125
        %vm2127 = vweird.f32 %v2069
        %vm2128 = vweird.f32 %v2121
        %vm2129 = vmor %vm2127, %vm2128
        %v2130 = vsel %vm2129, %v2121, %v2126
        %v2131 = vrsqrt.pop %v2070
        %v2132 = vmul.f32 %v2131, %v2070
        %v2133 = vmul.f32 %v2132, %v2131
        %v2134 = vmul.f32 0.5, %v2133
        %v2135 = vsub.f32 1.5, %v2134
        %v2136 = vmul.f32 %v2131, %v2135
        %vm2137 = vweird.f32 %v2070
        %vm2138 = vweird.f32 %v2131
        %vm2139 = vmor %vm2137, %vm2138
        %v2140 = vsel %vm2139, %v2131, %v2136
        %v2141 = vrsqrt.pop %v2071
        %v2142 = vmul.f32 %v2141, %v2071
        %v2143 = vmul.f32 %v2142, %v2141
        %v2144 = vmul.f32 0.5, %v2143
        %v2145 = vsub.f32 1.5, %v2144
        %v2146 = vmul.f32 %v2141, %v2145
        %vm2147 = vweird.f32 %v2071
        %vm2148 = vweird.f32 %v2141
        %vm2149 = vmor %vm2147, %vm2148
        %v2150 = vsel %vm2149, %v2141, %v2146
        %v2151 = vrsqrt.pop %v2072
        %v2152 = vmul.f32 %v2151, %v2072
        %v2153 = vmul.f32 %v2152, %v2151
        %v2154 = vmul.f32 0.5, %v2153
        %v2155 = vsub.f32 1.5, %v2154
        %v2156 = vmul.f32 %v2151, %v2155
        %vm2157 = vweird.f32 %v2072
        %vm2158 = vweird.f32 %v2151
        %vm2159 = vmor %vm2157, %vm2158
        %v2160 = vsel %vm2159, %v2151, %v2156
        %v2161 = vrsqrt.pop %v2073
        %v2162 = vmul.f32 %v2161, %v2073
        %v2163 = vmul.f32 %v2162, %v2161
        %v2164 = vmul.f32 0.5, %v2163
        %v2165 = vsub.f32 1.5, %v2164
        %v2166 = vmul.f32 %v2161, %v2165
        %vm2167 = vweird.f32 %v2073
        %vm2168 = vweird.f32 %v2161
        %vm2169 = vmor %vm2167, %vm2168
        %v2170 = vsel %vm2169, %v2161, %v2166
        %v2171 = vrsqrt.pop %v2074
        %v2172 = vmul.f32 %v2171, %v2074
        %v2173 = vmul.f32 %v2172, %v2171
        %v2174 = vmul.f32 0.5, %v2173
        %v2175 = vsub.f32 1.5, %v2174
        %v2176 = vmul.f32 %v2171, %v2175
        %vm2177 = vweird.f32 %v2074
        %vm2178 = vweird.f32 %v2171
        %vm2179 = vmor %vm2177, %vm2178
        %v2180 = vsel %vm2179, %v2171, %v2176
        %v2181 = vrsqrt.pop %v2075
        %v2182 = vmul.f32 %v2181, %v2075
        %v2183 = vmul.f32 %v2182, %v2181
        %v2184 = vmul.f32 0.5, %v2183
        %v2185 = vsub.f32 1.5, %v2184
        %v2186 = vmul.f32 %v2181, %v2185
        %vm2187 = vweird.f32 %v2075
        %vm2188 = vweird.f32 %v2181
        %vm2189 = vmor %vm2187, %vm2188
        %v2190 = vsel %vm2189, %v2181, %v2186
        %v2191 = vrsqrt.pop %v2076
        %v2192 = vmul.f32 %v2191, %v2076
        %v2193 = vmul.f32 %v2192, %v2191
        %v2194 = vmul.f32 0.5, %v2193
        %v2195 = vsub.f32 1.5, %v2194
        %v2196 = vmul.f32 %v2191, %v2195
        %vm2197 = vweird.f32 %v2076
        %vm2198 = vweird.f32 %v2191
        %vm2199 = vmor %vm2197, %vm2198
        %v2200 = vsel %vm2199, %v2191, %v2196
        %v2201 = vrsqrt.pop %v2077
        %v2202 = vmul.f32 %v2201, %v2077
        %v2203 = vmul.f32 %v2202, %v2201
        %v2204 = vmul.f32 0.5, %v2203
        %v2205 = vsub.f32 1.5, %v2204
        %v2206 = vmul.f32 %v2201, %v2205
        %vm2207 = vweird.f32 %v2077
        %vm2208 = vweird.f32 %v2201
        %vm2209 = vmor %vm2207, %vm2208
        %v2210 = vsel %vm2209, %v2201, %v2206
        %v2211 = vrsqrt.pop %v2078
        %v2212 = vmul.f32 %v2211, %v2078
        %v2213 = vmul.f32 %v2212, %v2211
        %v2214 = vmul.f32 0.5, %v2213
        %v2215 = vsub.f32 1.5, %v2214
        %v2216 = vmul.f32 %v2211, %v2215
        %vm2217 = vweird.f32 %v2078
        %vm2218 = vweird.f32 %v2211
        %vm2219 = vmor %vm2217, %vm2218
        %v2220 = vsel %vm2219, %v2211, %v2216
        %v2221 = vrsqrt.pop %v2079
        %v2222 = vmul.f32 %v2221, %v2079
        %v2223 = vmul.f32 %v2222, %v2221
        %v2224 = vmul.f32 0.5, %v2223
        %v2225 = vsub.f32 1.5, %v2224
        %v2226 = vmul.f32 %v2221, %v2225
        %vm2227 = vweird.f32 %v2079
        %vm2228 = vweird.f32 %v2221
        %vm2229 = vmor %vm2227, %vm2228
        %v2230 = vsel %vm2229, %v2221, %v2226
        %v2231 = vrsqrt.pop %v2080
        %v2232 = vmul.f32 %v2231, %v2080
        %v2233 = vmul.f32 %v2232, %v2231
        %v2234 = vmul.f32 0.5, %v2233
        %v2235 = vsub.f32 1.5, %v2234
        %v2236 = vmul.f32 %v2231, %v2235
        %vm2237 = vweird.f32 %v2080
        %vm2238 = vweird.f32 %v2231
        %vm2239 = vmor %vm2237, %vm2238
        %v2240 = vsel %vm2239, %v2231, %v2236
        %v2241 = vmul.f32 %v1985, %v2090
        %v2242 = vmul.f32 %v1986, %v2100
        %v2243 = vmul.f32 %v1987, %v2110
        %v2244 = vmul.f32 %v1988, %v2120
        %v2245 = vmul.f32 %v1989, %v2130
        %v2246 = vmul.f32 %v1990, %v2140
        %v2247 = vmul.f32 %v1991, %v2150
        %v2248 = vmul.f32 %v1992, %v2160
        %v2249 = vmul.f32 %v1993, %v2170
        %v2250 = vmul.f32 %v1994, %v2180
        %v2251 = vmul.f32 %v1995, %v2190
        %v2252 = vmul.f32 %v1996, %v2200
        %v2253 = vmul.f32 %v1997, %v2210
        %v2254 = vmul.f32 %v1998, %v2220
        %v2255 = vmul.f32 %v1999, %v2230
        %v2256 = vmul.f32 %v2000, %v2240
        %v2258 = vperm.slane %v1928, 0
        %v2260 = vmul.f32 %v2241, %v2258
        %v2261 = vmul.f32 %v2242, %v2258
        %v2262 = vmul.f32 %v2243, %v2258
        %v2263 = vmul.f32 %v2244, %v2258
        %v2264 = vmul.f32 %v2245, %v2258
        %v2265 = vmul.f32 %v2246, %v2258
        %v2266 = vmul.f32 %v2247, %v2258
        %v2267 = vmul.f32 %v2248, %v2258
        %v2268 = vmul.f32 %v2249, %v2258
        %v2269 = vmul.f32 %v2250, %v2258
        %v2270 = vmul.f32 %v2251, %v2258
        %v2271 = vmul.f32 %v2252, %v2258
        %v2272 = vmul.f32 %v2253, %v2258
        %v2273 = vmul.f32 %v2254, %v2258
        %v2274 = vmul.f32 %v2255, %v2258
        %v2275 = vmul.f32 %v2256, %v2258
        %v2277 = vperm.slane %v1929, 0
        %v2279 = vadd.f32 %v2260, %v2277
        %v2280 = vadd.f32 %v2261, %v2277
        %v2281 = vadd.f32 %v2262, %v2277
        %v2282 = vadd.f32 %v2263, %v2277
        %v2283 = vadd.f32 %v2264, %v2277
        %v2284 = vadd.f32 %v2265, %v2277
        %v2285 = vadd.f32 %v2266, %v2277
        %v2286 = vadd.f32 %v2267, %v2277
        %v2287 = vadd.f32 %v2268, %v2277
        %v2288 = vadd.f32 %v2269, %v2277
        %v2289 = vadd.f32 %v2270, %v2277
        %v2290 = vadd.f32 %v2271, %v2277
        %v2291 = vadd.f32 %v2272, %v2277
        %v2292 = vadd.f32 %v2273, %v2277
        %v2293 = vadd.f32 %v2274, %v2277
        %v2294 = vadd.f32 %v2275, %v2277
        %v2295 = vpack.c.bf16 %v2280, %v2279
        %v2296 = vpack.c.bf16 %v2282, %v2281
        %v2297 = vpack.c.bf16 %v2284, %v2283
        %v2298 = vpack.c.bf16 %v2286, %v2285
        %v2299 = vpack.c.bf16 %v2288, %v2287
        %v2300 = vpack.c.bf16 %v2290, %v2289
        %v2301 = vpack.c.bf16 %v2292, %v2291
        %v2302 = vpack.c.bf16 %v2294, %v2293
        %v2303 = vld [vmem:[#allocation13] sm:$0xf]
        %v2304 = vld [vmem:[#allocation13 + $0x4] sm:$0xf]
        %v2305 = vld [vmem:[#allocation13 + $0x8] sm:$0xf]
        %v2306 = vld [vmem:[#allocation13 + $0xc] sm:$0xf]
        %v2307 = vld [vmem:[#allocation13 + $0x10] sm:$0xf]
        %v2308 = vld [vmem:[#allocation13 + $0x14] sm:$0xf]
        %v2309 = vld [vmem:[#allocation13 + $0x18] sm:$0xf]
        %v2310 = vld [vmem:[#allocation13 + $0x1c] sm:$0xf]
        %v2311 = vld [vmem:[#allocation13 + $0x20] sm:$0xf]
        %v2312 = vld [vmem:[#allocation13 + $0x24] sm:$0xf]
        %v2313 = vld [vmem:[#allocation13 + $0x28] sm:$0xf]
        %v2314 = vld [vmem:[#allocation13 + $0x2c] sm:$0xf]
        %v2315 = vld [vmem:[#allocation13 + $0x30] sm:$0xf]
        %v2316 = vld [vmem:[#allocation13 + $0x34] sm:$0xf]
        %v2317 = vld [vmem:[#allocation13 + $0x38] sm:$0xf]
        %v2318 = vld [vmem:[#allocation13 + $0x3c] sm:$0xf]
        %v2319 = vld [vmem:[#allocation15] sm:$0x1]
        %v2321 = vperm.slane %v2319, 0
        %v2339 = vunpack.c.l.b16 %v2303
        %v2340 = vunpack.c.l.b16 %v2304
        %v2341 = vunpack.c.l.b16 %v2305
        %v2342 = vunpack.c.l.b16 %v2306
        %v2343 = vunpack.c.l.b16 %v2307
        %v2344 = vunpack.c.l.b16 %v2308
        %v2345 = vunpack.c.l.b16 %v2309
        %v2346 = vunpack.c.l.b16 %v2310
        %v2347 = vunpack.c.l.b16 %v2311
        %v2348 = vunpack.c.l.b16 %v2312
        %v2349 = vunpack.c.l.b16 %v2313
        %v2350 = vunpack.c.l.b16 %v2314
        %v2351 = vunpack.c.l.b16 %v2315
        %v2352 = vunpack.c.l.b16 %v2316
        %v2353 = vunpack.c.l.b16 %v2317
        %v2354 = vunpack.c.l.b16 %v2318
        %v2355 = vpack.c.b16 %v2340, %v2339
        %v2356 = vpack.c.b16 %v2342, %v2341
        %v2357 = vpack.c.b16 %v2344, %v2343
        %v2358 = vpack.c.b16 %v2346, %v2345
        %v2359 = vpack.c.b16 %v2348, %v2347
        %v2360 = vpack.c.b16 %v2350, %v2349
        %v2361 = vpack.c.b16 %v2352, %v2351
        %v2362 = vpack.c.b16 %v2354, %v2353
        %2371 = vmatpush.bf16.msra.mxu0 %v2362
        %2372 = vmatpush.bf16.msra.mxu0 %v2361
        %2373 = vmatpush.bf16.msra.mxu0 %v2360
        %2374 = vmatpush.bf16.msra.mxu0 %v2359
        %2375 = vmatpush.bf16.msra.mxu0 %v2358
        %2376 = vmatpush.bf16.msra.mxu0 %v2357
        %2377 = vmatpush.bf16.msra.mxu0 %v2356
        %2378 = vmatpush.bf16.msra.mxu0 %v2355
        %2379 = vmatmul.bf16.gmra.mxu0 %v2295
        %v2380 = vpop.f32.mrf.mxu0
        %v2381 = vadd.f32 %v2321, %v2380
        %v2382 = vpop.f32.mrf.mxu0
        %v2383 = vadd.f32 %v2321, %v2382
        %2384 = vmatmul.bf16.gmra.mxu0 %v2296
        %v2385 = vpop.f32.mrf.mxu0
        %v2386 = vadd.f32 %v2321, %v2385
        %v2387 = vpop.f32.mrf.mxu0
        %v2388 = vadd.f32 %v2321, %v2387
        %2389 = vmatmul.bf16.gmra.mxu0 %v2297
        %v2390 = vpop.f32.mrf.mxu0
        %v2391 = vadd.f32 %v2321, %v2390
        %v2392 = vpop.f32.mrf.mxu0
        %v2393 = vadd.f32 %v2321, %v2392
        %2394 = vmatmul.bf16.gmra.mxu0 %v2298
        %v2395 = vpop.f32.mrf.mxu0
        %v2396 = vadd.f32 %v2321, %v2395
        %v2397 = vpop.f32.mrf.mxu0
        %v2398 = vadd.f32 %v2321, %v2397
        %2399 = vmatmul.bf16.gmra.mxu0 %v2299
        %v2400 = vpop.f32.mrf.mxu0
        %v2401 = vadd.f32 %v2321, %v2400
        %v2402 = vpop.f32.mrf.mxu0
        %v2403 = vadd.f32 %v2321, %v2402
        %2404 = vmatmul.bf16.gmra.mxu0 %v2300
        %v2405 = vpop.f32.mrf.mxu0
        %v2406 = vadd.f32 %v2321, %v2405
        %v2407 = vpop.f32.mrf.mxu0
        %v2408 = vadd.f32 %v2321, %v2407
        %2409 = vmatmul.bf16.gmra.mxu0 %v2301
        %v2410 = vpop.f32.mrf.mxu0
        %v2411 = vadd.f32 %v2321, %v2410
        %v2412 = vpop.f32.mrf.mxu0
        %v2413 = vadd.f32 %v2321, %v2412
        %2414 = vmatmul.bf16.gmra.mxu0 %v2302
        %v2415 = vpop.f32.mrf.mxu0
        %v2416 = vadd.f32 %v2321, %v2415
        %v2417 = vpop.f32.mrf.mxu0
        %v2418 = vadd.f32 %v2321, %v2417
        %2419 = vdwg.mxu0
        %v2420 = vpack.c.bf16 %v2381, %v2381
        %v2421 = vpack.c.bf16 %v2383, %v2383
        %v2422 = vpack.c.bf16 %v2386, %v2386
        %v2423 = vpack.c.bf16 %v2388, %v2388
        %v2424 = vpack.c.bf16 %v2391, %v2391
        %v2425 = vpack.c.bf16 %v2393, %v2393
        %v2426 = vpack.c.bf16 %v2396, %v2396
        %v2427 = vpack.c.bf16 %v2398, %v2398
        %v2428 = vpack.c.bf16 %v2401, %v2401
        %v2429 = vpack.c.bf16 %v2403, %v2403
        %v2430 = vpack.c.bf16 %v2406, %v2406
        %v2431 = vpack.c.bf16 %v2408, %v2408
        %v2432 = vpack.c.bf16 %v2411, %v2411
        %v2433 = vpack.c.bf16 %v2413, %v2413
        %v2434 = vpack.c.bf16 %v2416, %v2416
        %v2435 = vpack.c.bf16 %v2418, %v2418
        %2452 = vrot.lane.b32.xlu0 %v2420, 96
        %v2453 = vpop.permute.xlu0 %2452
        %2454 = vrot.lane.b32.xlu0 %v2421, 96
        %v2455 = vpop.permute.xlu0 %2454
        %2456 = vrot.lane.b32.xlu0 %v2422, 96
        %v2457 = vpop.permute.xlu0 %2456
        %2458 = vrot.lane.b32.xlu0 %v2423, 96
        %v2459 = vpop.permute.xlu0 %2458
        %2460 = vrot.lane.b32.xlu0 %v2424, 96
        %v2461 = vpop.permute.xlu0 %2460
        %2462 = vrot.lane.b32.xlu0 %v2425, 96
        %v2463 = vpop.permute.xlu0 %2462
        %2464 = vrot.lane.b32.xlu0 %v2426, 96
        %v2465 = vpop.permute.xlu0 %2464
        %2466 = vrot.lane.b32.xlu0 %v2427, 96
        %v2467 = vpop.permute.xlu0 %2466
        %2468 = vrot.lane.b32.xlu0 %v2428, 96
        %v2469 = vpop.permute.xlu0 %2468
        %2470 = vrot.lane.b32.xlu0 %v2429, 96
        %v2471 = vpop.permute.xlu0 %2470
        %2472 = vrot.lane.b32.xlu0 %v2430, 96
        %v2473 = vpop.permute.xlu0 %2472
        %2474 = vrot.lane.b32.xlu0 %v2431, 96
        %v2475 = vpop.permute.xlu0 %2474
        %2476 = vrot.lane.b32.xlu0 %v2432, 96
        %v2477 = vpop.permute.xlu0 %2476
        %2478 = vrot.lane.b32.xlu0 %v2433, 96
        %v2479 = vpop.permute.xlu0 %2478
        %2480 = vrot.lane.b32.xlu0 %v2434, 96
        %v2481 = vpop.permute.xlu0 %2480
        %2482 = vrot.lane.b32.xlu0 %v2435, 96
        %v2483 = vpop.permute.xlu0 %2482
        %2484 = vrot.lane.b32.xlu0 %v2420, 64
        %v2485 = vpop.permute.xlu0 %2484
        %2486 = vrot.lane.b32.xlu0 %v2421, 64
        %v2487 = vpop.permute.xlu0 %2486
        %2488 = vrot.lane.b32.xlu0 %v2422, 64
        %v2489 = vpop.permute.xlu0 %2488
        %2490 = vrot.lane.b32.xlu0 %v2423, 64
        %v2491 = vpop.permute.xlu0 %2490
        %2492 = vrot.lane.b32.xlu0 %v2424, 64
        %v2493 = vpop.permute.xlu0 %2492
        %2494 = vrot.lane.b32.xlu0 %v2425, 64
        %v2495 = vpop.permute.xlu0 %2494
        %2496 = vrot.lane.b32.xlu0 %v2426, 64
        %v2497 = vpop.permute.xlu0 %2496
        %2498 = vrot.lane.b32.xlu0 %v2427, 64
        %v2499 = vpop.permute.xlu0 %2498
        %2500 = vrot.lane.b32.xlu0 %v2428, 64
        %v2501 = vpop.permute.xlu0 %2500
        %2502 = vrot.lane.b32.xlu0 %v2429, 64
        %v2503 = vpop.permute.xlu0 %2502
        %2504 = vrot.lane.b32.xlu0 %v2430, 64
        %v2505 = vpop.permute.xlu0 %2504
        %2506 = vrot.lane.b32.xlu0 %v2431, 64
        %v2507 = vpop.permute.xlu0 %2506
        %2508 = vrot.lane.b32.xlu0 %v2432, 64
        %v2509 = vpop.permute.xlu0 %2508
        %2510 = vrot.lane.b32.xlu0 %v2433, 64
        %v2511 = vpop.permute.xlu0 %2510
        %2512 = vrot.lane.b32.xlu0 %v2434, 64
        %v2513 = vpop.permute.xlu0 %2512
        %2514 = vrot.lane.b32.xlu0 %v2435, 64
        %v2515 = vpop.permute.xlu0 %2514
        %2516 = vrot.lane.b32.xlu0 %v2420, 32
        %v2517 = vpop.permute.xlu0 %2516
        %2518 = vrot.lane.b32.xlu0 %v2421, 32
        %v2519 = vpop.permute.xlu0 %2518
        %2520 = vrot.lane.b32.xlu0 %v2422, 32
        %v2521 = vpop.permute.xlu0 %2520
        %2522 = vrot.lane.b32.xlu0 %v2423, 32
        %v2523 = vpop.permute.xlu0 %2522
        %2524 = vrot.lane.b32.xlu0 %v2424, 32
        %v2525 = vpop.permute.xlu0 %2524
        %2526 = vrot.lane.b32.xlu0 %v2425, 32
        %v2527 = vpop.permute.xlu0 %2526
        %2528 = vrot.lane.b32.xlu0 %v2426, 32
        %v2529 = vpop.permute.xlu0 %2528
        %2530 = vrot.lane.b32.xlu0 %v2427, 32
        %v2531 = vpop.permute.xlu0 %2530
        %2532 = vrot.lane.b32.xlu0 %v2428, 32
        %v2533 = vpop.permute.xlu0 %2532
        %2534 = vrot.lane.b32.xlu0 %v2429, 32
        %v2535 = vpop.permute.xlu0 %2534
        %2536 = vrot.lane.b32.xlu0 %v2430, 32
        %v2537 = vpop.permute.xlu0 %2536
        %2538 = vrot.lane.b32.xlu0 %v2431, 32
        %v2539 = vpop.permute.xlu0 %2538
        %2540 = vrot.lane.b32.xlu0 %v2432, 32
        %v2541 = vpop.permute.xlu0 %2540
        %2542 = vrot.lane.b32.xlu0 %v2433, 32
        %v2543 = vpop.permute.xlu0 %2542
        %2544 = vrot.lane.b32.xlu0 %v2434, 32
        %v2545 = vpop.permute.xlu0 %2544
        %2546 = vrot.lane.b32.xlu0 %v2435, 32
        %v2547 = vpop.permute.xlu0 %2546
        %v2548 = vld [vmem:[#allocation2] sm:$0xf]
        %v2549 = vld [vmem:[#allocation2 + $0x4] sm:$0xf]
        %v2550 = vld [vmem:[#allocation2 + $0x8] sm:$0xf]
        %v2551 = vld [vmem:[#allocation2 + $0xc] sm:$0xf]
        %v2552 = vld [vmem:[#allocation2 + $0x10] sm:$0xf]
        %v2553 = vld [vmem:[#allocation2 + $0x14] sm:$0xf]
        %v2554 = vld [vmem:[#allocation2 + $0x18] sm:$0xf]
        %v2555 = vld [vmem:[#allocation2 + $0x1c] sm:$0xf]
        %v2556 = vld [vmem:[#allocation2 + $0x20] sm:$0xf]
        %v2557 = vld [vmem:[#allocation2 + $0x24] sm:$0xf]
        %v2558 = vld [vmem:[#allocation2 + $0x28] sm:$0xf]
        %v2559 = vld [vmem:[#allocation2 + $0x2c] sm:$0xf]
        %v2560 = vld [vmem:[#allocation2 + $0x30] sm:$0xf]
        %v2561 = vld [vmem:[#allocation2 + $0x34] sm:$0xf]
        %v2562 = vld [vmem:[#allocation2 + $0x38] sm:$0xf]
        %v2563 = vld [vmem:[#allocation2 + $0x3c] sm:$0xf]
        %v2564 = vld [vmem:[#allocation2 + $0x40] sm:$0xf]
        %v2565 = vld [vmem:[#allocation2 + $0x44] sm:$0xf]
        %v2566 = vld [vmem:[#allocation2 + $0x48] sm:$0xf]
        %v2567 = vld [vmem:[#allocation2 + $0x4c] sm:$0xf]
        %v2568 = vld [vmem:[#allocation2 + $0x50] sm:$0xf]
        %v2569 = vld [vmem:[#allocation2 + $0x54] sm:$0xf]
        %v2570 = vld [vmem:[#allocation2 + $0x58] sm:$0xf]
        %v2571 = vld [vmem:[#allocation2 + $0x5c] sm:$0xf]
        %v2572 = vld [vmem:[#allocation2 + $0x60] sm:$0xf]
        %v2573 = vld [vmem:[#allocation2 + $0x64] sm:$0xf]
        %v2574 = vld [vmem:[#allocation2 + $0x68] sm:$0xf]
        %v2575 = vld [vmem:[#allocation2 + $0x6c] sm:$0xf]
        %v2576 = vld [vmem:[#allocation2 + $0x70] sm:$0xf]
        %v2577 = vld [vmem:[#allocation2 + $0x74] sm:$0xf]
        %v2578 = vld [vmem:[#allocation2 + $0x78] sm:$0xf]
        %v2579 = vld [vmem:[#allocation2 + $0x7c] sm:$0xf]
        %v2580 = vld [vmem:[#allocation2 + $0x80] sm:$0xf]
        %v2581 = vld [vmem:[#allocation2 + $0x84] sm:$0xf]
        %v2582 = vld [vmem:[#allocation2 + $0x88] sm:$0xf]
        %v2583 = vld [vmem:[#allocation2 + $0x8c] sm:$0xf]
        %v2584 = vld [vmem:[#allocation2 + $0x90] sm:$0xf]
        %v2585 = vld [vmem:[#allocation2 + $0x94] sm:$0xf]
        %v2586 = vld [vmem:[#allocation2 + $0x98] sm:$0xf]
        %v2587 = vld [vmem:[#allocation2 + $0x9c] sm:$0xf]
        %v2588 = vld [vmem:[#allocation2 + $0xa0] sm:$0xf]
        %v2589 = vld [vmem:[#allocation2 + $0xa4] sm:$0xf]
        %v2590 = vld [vmem:[#allocation2 + $0xa8] sm:$0xf]
        %v2591 = vld [vmem:[#allocation2 + $0xac] sm:$0xf]
        %v2592 = vld [vmem:[#allocation2 + $0xb0] sm:$0xf]
        %v2593 = vld [vmem:[#allocation2 + $0xb4] sm:$0xf]
        %v2594 = vld [vmem:[#allocation2 + $0xb8] sm:$0xf]
        %v2595 = vld [vmem:[#allocation2 + $0xbc] sm:$0xf]
        %v2596 = vld [vmem:[#allocation2 + $0xc0] sm:$0xf]
        %v2597 = vld [vmem:[#allocation2 + $0xc4] sm:$0xf]
        %v2598 = vld [vmem:[#allocation2 + $0xc8] sm:$0xf]
        %v2599 = vld [vmem:[#allocation2 + $0xcc] sm:$0xf]
        %v2600 = vld [vmem:[#allocation2 + $0xd0] sm:$0xf]
        %v2601 = vld [vmem:[#allocation2 + $0xd4] sm:$0xf]
        %v2602 = vld [vmem:[#allocation2 + $0xd8] sm:$0xf]
        %v2603 = vld [vmem:[#allocation2 + $0xdc] sm:$0xf]
        %v2604 = vld [vmem:[#allocation2 + $0xe0] sm:$0xf]
        %v2605 = vld [vmem:[#allocation2 + $0xe4] sm:$0xf]
        %v2606 = vld [vmem:[#allocation2 + $0xe8] sm:$0xf]
        %v2607 = vld [vmem:[#allocation2 + $0xec] sm:$0xf]
        %v2608 = vld [vmem:[#allocation2 + $0xf0] sm:$0xf]
        %v2609 = vld [vmem:[#allocation2 + $0xf4] sm:$0xf]
        %v2610 = vld [vmem:[#allocation2 + $0xf8] sm:$0xf]
        %v2611 = vld [vmem:[#allocation2 + $0xfc] sm:$0xf]
        %v2612 = vunpack.c.l.b16 %v2420
        %v2613 = vunpack.c.l.b16 %v2421
        %v2614 = vunpack.c.l.b16 %v2422
        %v2615 = vunpack.c.l.b16 %v2423
        %v2616 = vunpack.c.l.b16 %v2424
        %v2617 = vunpack.c.l.b16 %v2425
        %v2618 = vunpack.c.l.b16 %v2426
        %v2619 = vunpack.c.l.b16 %v2427
        %v2620 = vunpack.c.l.b16 %v2428
        %v2621 = vunpack.c.l.b16 %v2429
        %v2622 = vunpack.c.l.b16 %v2430
        %v2623 = vunpack.c.l.b16 %v2431
        %v2624 = vunpack.c.l.b16 %v2432
        %v2625 = vunpack.c.l.b16 %v2433
        %v2626 = vunpack.c.l.b16 %v2434
        %v2627 = vunpack.c.l.b16 %v2435
        %v2628 = vpack.c.b16 %v2613, %v2612
        %v2629 = vpack.c.b16 %v2615, %v2614
        %v2630 = vpack.c.b16 %v2617, %v2616
        %v2631 = vpack.c.b16 %v2619, %v2618
        %v2632 = vpack.c.b16 %v2621, %v2620
        %v2633 = vpack.c.b16 %v2623, %v2622
        %v2634 = vpack.c.b16 %v2625, %v2624
        %v2635 = vpack.c.b16 %v2627, %v2626
        %v2652 = vunpack.c.l.b16 %v2548
        %v2653 = vunpack.c.l.b16 %v2549
        %v2654 = vunpack.c.l.b16 %v2550
        %v2655 = vunpack.c.l.b16 %v2551
        %v2656 = vunpack.c.l.b16 %v2552
        %v2657 = vunpack.c.l.b16 %v2553
        %v2658 = vunpack.c.l.b16 %v2554
        %v2659 = vunpack.c.l.b16 %v2555
        %v2660 = vunpack.c.l.b16 %v2556
        %v2661 = vunpack.c.l.b16 %v2557
        %v2662 = vunpack.c.l.b16 %v2558
        %v2663 = vunpack.c.l.b16 %v2559
        %v2664 = vunpack.c.l.b16 %v2560
        %v2665 = vunpack.c.l.b16 %v2561
        %v2666 = vunpack.c.l.b16 %v2562
        %v2667 = vunpack.c.l.b16 %v2563
        %v2668 = vpack.c.b16 %v2653, %v2652
        %v2669 = vpack.c.b16 %v2655, %v2654
        %v2670 = vpack.c.b16 %v2657, %v2656
        %v2671 = vpack.c.b16 %v2659, %v2658
        %v2672 = vpack.c.b16 %v2661, %v2660
        %v2673 = vpack.c.b16 %v2663, %v2662
        %v2674 = vpack.c.b16 %v2665, %v2664
        %v2675 = vpack.c.b16 %v2667, %v2666
        %vm2676 = vcmask 261120
        %v2678 = vsel %vm2676, %v2628, 0
        %v2681 = vsel %vm2676, %v2629, 0
        %v2684 = vsel %vm2676, %v2630, 0
        %v2687 = vsel %vm2676, %v2631, 0
        %v2690 = vsel %vm2676, %v2632, 0
        %v2693 = vsel %vm2676, %v2633, 0
        %v2696 = vsel %vm2676, %v2634, 0
        %v2699 = vsel %vm2676, %v2635, 0
        %v2702 = vsel %vm2676, %v2668, 0
        %v2705 = vsel %vm2676, %v2669, 0
        %v2708 = vsel %vm2676, %v2670, 0
        %v2711 = vsel %vm2676, %v2671, 0
        %v2714 = vsel %vm2676, %v2672, 0
        %v2717 = vsel %vm2676, %v2673, 0
        %v2720 = vsel %vm2676, %v2674, 0
        %v2723 = vsel %vm2676, %v2675, 0
        %2725 = vmatpush.bf16.xpose.msra.mxu0 %v2723
        %2726 = vmatpush.bf16.xpose.msra.mxu0 %v2720
        %2727 = vmatpush.bf16.xpose.msra.mxu0 %v2717
        %2728 = vmatpush.bf16.xpose.msra.mxu0 %v2714
        %2729 = vmatpush.bf16.xpose.msra.mxu0 %v2711
        %2730 = vmatpush.bf16.xpose.msra.mxu0 %v2708
        %2731 = vmatpush.bf16.xpose.msra.mxu0 %v2705
        %2732 = vmatpush.bf16.xpose.msra.mxu0 %v2702
        %2733 = vmatmul.bf16.gmra.mxu0 %v2678
        %v2734 = vpop.f32.mrf.mxu0
        %v2735 = vadd.f32 0.0, %v2734
        %v2736 = vpop.f32.mrf.mxu0
        %v2737 = vadd.f32 0.0, %v2736
        %2738 = vmatmul.bf16.gmra.mxu0 %v2681
        %v2739 = vpop.f32.mrf.mxu0
        %v2740 = vadd.f32 0.0, %v2739
        %v2741 = vpop.f32.mrf.mxu0
        %v2742 = vadd.f32 0.0, %v2741
        %2743 = vmatmul.bf16.gmra.mxu0 %v2684
        %v2744 = vpop.f32.mrf.mxu0
        %v2745 = vadd.f32 0.0, %v2744
        %v2746 = vpop.f32.mrf.mxu0
        %v2747 = vadd.f32 0.0, %v2746
        %2748 = vmatmul.bf16.gmra.mxu0 %v2687
        %v2749 = vpop.f32.mrf.mxu0
        %v2750 = vadd.f32 0.0, %v2749
        %v2751 = vpop.f32.mrf.mxu0
        %v2752 = vadd.f32 0.0, %v2751
        %2753 = vmatmul.bf16.gmra.mxu0 %v2690
        %v2754 = vpop.f32.mrf.mxu0
        %v2755 = vadd.f32 0.0, %v2754
        %v2756 = vpop.f32.mrf.mxu0
        %v2757 = vadd.f32 0.0, %v2756
        %2758 = vmatmul.bf16.gmra.mxu0 %v2693
        %v2759 = vpop.f32.mrf.mxu0
        %v2760 = vadd.f32 0.0, %v2759
        %v2761 = vpop.f32.mrf.mxu0
        %v2762 = vadd.f32 0.0, %v2761
        %2763 = vmatmul.bf16.gmra.mxu0 %v2696
        %v2764 = vpop.f32.mrf.mxu0
        %v2765 = vadd.f32 0.0, %v2764
        %v2766 = vpop.f32.mrf.mxu0
        %v2767 = vadd.f32 0.0, %v2766
        %2768 = vmatmul.bf16.gmra.mxu0 %v2699
        %v2769 = vpop.f32.mrf.mxu0
        %v2770 = vadd.f32 0.0, %v2769
        %v2771 = vpop.f32.mrf.mxu0
        %v2772 = vadd.f32 0.0, %v2771
        %2773 = vdwg.mxu0
        %v2774 = vunpack.c.l.b16 %v2453
        %v2775 = vunpack.c.l.b16 %v2455
        %v2776 = vunpack.c.l.b16 %v2457
        %v2777 = vunpack.c.l.b16 %v2459
        %v2778 = vunpack.c.l.b16 %v2461
        %v2779 = vunpack.c.l.b16 %v2463
        %v2780 = vunpack.c.l.b16 %v2465
        %v2781 = vunpack.c.l.b16 %v2467
        %v2782 = vunpack.c.l.b16 %v2469
        %v2783 = vunpack.c.l.b16 %v2471
        %v2784 = vunpack.c.l.b16 %v2473
        %v2785 = vunpack.c.l.b16 %v2475
        %v2786 = vunpack.c.l.b16 %v2477
        %v2787 = vunpack.c.l.b16 %v2479
        %v2788 = vunpack.c.l.b16 %v2481
        %v2789 = vunpack.c.l.b16 %v2483
        %v2790 = vpack.c.b16 %v2775, %v2774
        %v2791 = vpack.c.b16 %v2777, %v2776
        %v2792 = vpack.c.b16 %v2779, %v2778
        %v2793 = vpack.c.b16 %v2781, %v2780
        %v2794 = vpack.c.b16 %v2783, %v2782
        %v2795 = vpack.c.b16 %v2785, %v2784
        %v2796 = vpack.c.b16 %v2787, %v2786
        %v2797 = vpack.c.b16 %v2789, %v2788
        %v2814 = vunpack.c.l.b16 %v2564
        %v2815 = vunpack.c.l.b16 %v2565
        %v2816 = vunpack.c.l.b16 %v2566
        %v2817 = vunpack.c.l.b16 %v2567
        %v2818 = vunpack.c.l.b16 %v2568
        %v2819 = vunpack.c.l.b16 %v2569
        %v2820 = vunpack.c.l.b16 %v2570
        %v2821 = vunpack.c.l.b16 %v2571
        %v2822 = vunpack.c.l.b16 %v2572
        %v2823 = vunpack.c.l.b16 %v2573
        %v2824 = vunpack.c.l.b16 %v2574
        %v2825 = vunpack.c.l.b16 %v2575
        %v2826 = vunpack.c.l.b16 %v2576
        %v2827 = vunpack.c.l.b16 %v2577
        %v2828 = vunpack.c.l.b16 %v2578
        %v2829 = vunpack.c.l.b16 %v2579
        %v2830 = vpack.c.b16 %v2815, %v2814
        %v2831 = vpack.c.b16 %v2817, %v2816
        %v2832 = vpack.c.b16 %v2819, %v2818
        %v2833 = vpack.c.b16 %v2821, %v2820
        %v2834 = vpack.c.b16 %v2823, %v2822
        %v2835 = vpack.c.b16 %v2825, %v2824
        %v2836 = vpack.c.b16 %v2827, %v2826
        %v2837 = vpack.c.b16 %v2829, %v2828
        %v2839 = vsel %vm2676, %v2790, 0
        %v2842 = vsel %vm2676, %v2791, 0
        %v2845 = vsel %vm2676, %v2792, 0
        %v2848 = vsel %vm2676, %v2793, 0
        %v2851 = vsel %vm2676, %v2794, 0
        %v2854 = vsel %vm2676, %v2795, 0
        %v2857 = vsel %vm2676, %v2796, 0
        %v2860 = vsel %vm2676, %v2797, 0
        %v2863 = vsel %vm2676, %v2830, 0
        %v2866 = vsel %vm2676, %v2831, 0
        %v2869 = vsel %vm2676, %v2832, 0
        %v2872 = vsel %vm2676, %v2833, 0
        %v2875 = vsel %vm2676, %v2834, 0
        %v2878 = vsel %vm2676, %v2835, 0
        %v2881 = vsel %vm2676, %v2836, 0
        %v2884 = vsel %vm2676, %v2837, 0
        %2886 = vmatpush.bf16.xpose.msra.mxu0 %v2884
        %2887 = vmatpush.bf16.xpose.msra.mxu0 %v2881
        %2888 = vmatpush.bf16.xpose.msra.mxu0 %v2878
        %2889 = vmatpush.bf16.xpose.msra.mxu0 %v2875
        %2890 = vmatpush.bf16.xpose.msra.mxu0 %v2872
        %2891 = vmatpush.bf16.xpose.msra.mxu0 %v2869
        %2892 = vmatpush.bf16.xpose.msra.mxu0 %v2866
        %2893 = vmatpush.bf16.xpose.msra.mxu0 %v2863
        %2894 = vmatmul.bf16.gmra.mxu0 %v2839
        %v2895 = vpop.f32.mrf.mxu0
        %v2896 = vadd.f32 0.0, %v2895
        %v2897 = vpop.f32.mrf.mxu0
        %v2898 = vadd.f32 0.0, %v2897
        %2899 = vmatmul.bf16.gmra.mxu0 %v2842
        %v2900 = vpop.f32.mrf.mxu0
        %v2901 = vadd.f32 0.0, %v2900
        %v2902 = vpop.f32.mrf.mxu0
        %v2903 = vadd.f32 0.0, %v2902
        %2904 = vmatmul.bf16.gmra.mxu0 %v2845
        %v2905 = vpop.f32.mrf.mxu0
        %v2906 = vadd.f32 0.0, %v2905
        %v2907 = vpop.f32.mrf.mxu0
        %v2908 = vadd.f32 0.0, %v2907
        %2909 = vmatmul.bf16.gmra.mxu0 %v2848
        %v2910 = vpop.f32.mrf.mxu0
        %v2911 = vadd.f32 0.0, %v2910
        %v2912 = vpop.f32.mrf.mxu0
        %v2913 = vadd.f32 0.0, %v2912
        %2914 = vmatmul.bf16.gmra.mxu0 %v2851
        %v2915 = vpop.f32.mrf.mxu0
        %v2916 = vadd.f32 0.0, %v2915
        %v2917 = vpop.f32.mrf.mxu0
        %v2918 = vadd.f32 0.0, %v2917
        %2919 = vmatmul.bf16.gmra.mxu0 %v2854
        %v2920 = vpop.f32.mrf.mxu0
        %v2921 = vadd.f32 0.0, %v2920
        %v2922 = vpop.f32.mrf.mxu0
        %v2923 = vadd.f32 0.0, %v2922
        %2924 = vmatmul.bf16.gmra.mxu0 %v2857
        %v2925 = vpop.f32.mrf.mxu0
        %v2926 = vadd.f32 0.0, %v2925
        %v2927 = vpop.f32.mrf.mxu0
        %v2928 = vadd.f32 0.0, %v2927
        %2929 = vmatmul.bf16.gmra.mxu0 %v2860
        %v2930 = vpop.f32.mrf.mxu0
        %v2931 = vadd.f32 0.0, %v2930
        %v2932 = vpop.f32.mrf.mxu0
        %v2933 = vadd.f32 0.0, %v2932
        %2934 = vdwg.mxu0
        %v2935 = vunpack.c.l.b16 %v2485
        %v2936 = vunpack.c.l.b16 %v2487
        %v2937 = vunpack.c.l.b16 %v2489
        %v2938 = vunpack.c.l.b16 %v2491
        %v2939 = vunpack.c.l.b16 %v2493
        %v2940 = vunpack.c.l.b16 %v2495
        %v2941 = vunpack.c.l.b16 %v2497
        %v2942 = vunpack.c.l.b16 %v2499
        %v2943 = vunpack.c.l.b16 %v2501
        %v2944 = vunpack.c.l.b16 %v2503
        %v2945 = vunpack.c.l.b16 %v2505
        %v2946 = vunpack.c.l.b16 %v2507
        %v2947 = vunpack.c.l.b16 %v2509
        %v2948 = vunpack.c.l.b16 %v2511
        %v2949 = vunpack.c.l.b16 %v2513
        %v2950 = vunpack.c.l.b16 %v2515
        %v2951 = vpack.c.b16 %v2936, %v2935
        %v2952 = vpack.c.b16 %v2938, %v2937
        %v2953 = vpack.c.b16 %v2940, %v2939
        %v2954 = vpack.c.b16 %v2942, %v2941
        %v2955 = vpack.c.b16 %v2944, %v2943
        %v2956 = vpack.c.b16 %v2946, %v2945
        %v2957 = vpack.c.b16 %v2948, %v2947
        %v2958 = vpack.c.b16 %v2950, %v2949
        %v2975 = vunpack.c.l.b16 %v2580
        %v2976 = vunpack.c.l.b16 %v2581
        %v2977 = vunpack.c.l.b16 %v2582
        %v2978 = vunpack.c.l.b16 %v2583
        %v2979 = vunpack.c.l.b16 %v2584
        %v2980 = vunpack.c.l.b16 %v2585
        %v2981 = vunpack.c.l.b16 %v2586
        %v2982 = vunpack.c.l.b16 %v2587
        %v2983 = vunpack.c.l.b16 %v2588
        %v2984 = vunpack.c.l.b16 %v2589
        %v2985 = vunpack.c.l.b16 %v2590
        %v2986 = vunpack.c.l.b16 %v2591
        %v2987 = vunpack.c.l.b16 %v2592
        %v2988 = vunpack.c.l.b16 %v2593
        %v2989 = vunpack.c.l.b16 %v2594
        %v2990 = vunpack.c.l.b16 %v2595
        %v2991 = vpack.c.b16 %v2976, %v2975
        %v2992 = vpack.c.b16 %v2978, %v2977
        %v2993 = vpack.c.b16 %v2980, %v2979
        %v2994 = vpack.c.b16 %v2982, %v2981
        %v2995 = vpack.c.b16 %v2984, %v2983
        %v2996 = vpack.c.b16 %v2986, %v2985
        %v2997 = vpack.c.b16 %v2988, %v2987
        %v2998 = vpack.c.b16 %v2990, %v2989
        %v3000 = vsel %vm2676, %v2951, 0
        %v3003 = vsel %vm2676, %v2952, 0
        %v3006 = vsel %vm2676, %v2953, 0
        %v3009 = vsel %vm2676, %v2954, 0
        %v3012 = vsel %vm2676, %v2955, 0
        %v3015 = vsel %vm2676, %v2956, 0
        %v3018 = vsel %vm2676, %v2957, 0
        %v3021 = vsel %vm2676, %v2958, 0
        %v3024 = vsel %vm2676, %v2991, 0
        %v3027 = vsel %vm2676, %v2992, 0
        %v3030 = vsel %vm2676, %v2993, 0
        %v3033 = vsel %vm2676, %v2994, 0
        %v3036 = vsel %vm2676, %v2995, 0
        %v3039 = vsel %vm2676, %v2996, 0
        %v3042 = vsel %vm2676, %v2997, 0
        %v3045 = vsel %vm2676, %v2998, 0
        %3047 = vmatpush.bf16.xpose.msra.mxu0 %v3045
        %3048 = vmatpush.bf16.xpose.msra.mxu0 %v3042
        %3049 = vmatpush.bf16.xpose.msra.mxu0 %v3039
        %3050 = vmatpush.bf16.xpose.msra.mxu0 %v3036
        %3051 = vmatpush.bf16.xpose.msra.mxu0 %v3033
        %3052 = vmatpush.bf16.xpose.msra.mxu0 %v3030
        %3053 = vmatpush.bf16.xpose.msra.mxu0 %v3027
        %3054 = vmatpush.bf16.xpose.msra.mxu0 %v3024
        %3055 = vmatmul.bf16.gmra.mxu0 %v3000
        %v3056 = vpop.f32.mrf.mxu0
        %v3057 = vadd.f32 0.0, %v3056
        %v3058 = vpop.f32.mrf.mxu0
        %v3059 = vadd.f32 0.0, %v3058
        %3060 = vmatmul.bf16.gmra.mxu0 %v3003
        %v3061 = vpop.f32.mrf.mxu0
        %v3062 = vadd.f32 0.0, %v3061
        %v3063 = vpop.f32.mrf.mxu0
        %v3064 = vadd.f32 0.0, %v3063
        %3065 = vmatmul.bf16.gmra.mxu0 %v3006
        %v3066 = vpop.f32.mrf.mxu0
        %v3067 = vadd.f32 0.0, %v3066
        %v3068 = vpop.f32.mrf.mxu0
        %v3069 = vadd.f32 0.0, %v3068
        %3070 = vmatmul.bf16.gmra.mxu0 %v3009
        %v3071 = vpop.f32.mrf.mxu0
        %v3072 = vadd.f32 0.0, %v3071
        %v3073 = vpop.f32.mrf.mxu0
        %v3074 = vadd.f32 0.0, %v3073
        %3075 = vmatmul.bf16.gmra.mxu0 %v3012
        %v3076 = vpop.f32.mrf.mxu0
        %v3077 = vadd.f32 0.0, %v3076
        %v3078 = vpop.f32.mrf.mxu0
        %v3079 = vadd.f32 0.0, %v3078
        %3080 = vmatmul.bf16.gmra.mxu0 %v3015
        %v3081 = vpop.f32.mrf.mxu0
        %v3082 = vadd.f32 0.0, %v3081
        %v3083 = vpop.f32.mrf.mxu0
        %v3084 = vadd.f32 0.0, %v3083
        %3085 = vmatmul.bf16.gmra.mxu0 %v3018
        %v3086 = vpop.f32.mrf.mxu0
        %v3087 = vadd.f32 0.0, %v3086
        %v3088 = vpop.f32.mrf.mxu0
        %v3089 = vadd.f32 0.0, %v3088
        %3090 = vmatmul.bf16.gmra.mxu0 %v3021
        %v3091 = vpop.f32.mrf.mxu0
        %v3092 = vadd.f32 0.0, %v3091
        %v3093 = vpop.f32.mrf.mxu0
        %v3094 = vadd.f32 0.0, %v3093
        %3095 = vdwg.mxu0
        %v3096 = vunpack.c.l.b16 %v2517
        %v3097 = vunpack.c.l.b16 %v2519
        %v3098 = vunpack.c.l.b16 %v2521
        %v3099 = vunpack.c.l.b16 %v2523
        %v3100 = vunpack.c.l.b16 %v2525
        %v3101 = vunpack.c.l.b16 %v2527
        %v3102 = vunpack.c.l.b16 %v2529
        %v3103 = vunpack.c.l.b16 %v2531
        %v3104 = vunpack.c.l.b16 %v2533
        %v3105 = vunpack.c.l.b16 %v2535
        %v3106 = vunpack.c.l.b16 %v2537
        %v3107 = vunpack.c.l.b16 %v2539
        %v3108 = vunpack.c.l.b16 %v2541
        %v3109 = vunpack.c.l.b16 %v2543
        %v3110 = vunpack.c.l.b16 %v2545
        %v3111 = vunpack.c.l.b16 %v2547
        %v3112 = vpack.c.b16 %v3097, %v3096
        %v3113 = vpack.c.b16 %v3099, %v3098
        %v3114 = vpack.c.b16 %v3101, %v3100
        %v3115 = vpack.c.b16 %v3103, %v3102
        %v3116 = vpack.c.b16 %v3105, %v3104
        %v3117 = vpack.c.b16 %v3107, %v3106
        %v3118 = vpack.c.b16 %v3109, %v3108
        %v3119 = vpack.c.b16 %v3111, %v3110
        %v3136 = vunpack.c.l.b16 %v2596
        %v3137 = vunpack.c.l.b16 %v2597
        %v3138 = vunpack.c.l.b16 %v2598
        %v3139 = vunpack.c.l.b16 %v2599
        %v3140 = vunpack.c.l.b16 %v2600
        %v3141 = vunpack.c.l.b16 %v2601
        %v3142 = vunpack.c.l.b16 %v2602
        %v3143 = vunpack.c.l.b16 %v2603
        %v3144 = vunpack.c.l.b16 %v2604
        %v3145 = vunpack.c.l.b16 %v2605
        %v3146 = vunpack.c.l.b16 %v2606
        %v3147 = vunpack.c.l.b16 %v2607
        %v3148 = vunpack.c.l.b16 %v2608
        %v3149 = vunpack.c.l.b16 %v2609
        %v3150 = vunpack.c.l.b16 %v2610
        %v3151 = vunpack.c.l.b16 %v2611
        %v3152 = vpack.c.b16 %v3137, %v3136
        %v3153 = vpack.c.b16 %v3139, %v3138
        %v3154 = vpack.c.b16 %v3141, %v3140
        %v3155 = vpack.c.b16 %v3143, %v3142
        %v3156 = vpack.c.b16 %v3145, %v3144
        %v3157 = vpack.c.b16 %v3147, %v3146
        %v3158 = vpack.c.b16 %v3149, %v3148
        %v3159 = vpack.c.b16 %v3151, %v3150
        %v3161 = vsel %vm2676, %v3112, 0
        %v3164 = vsel %vm2676, %v3113, 0
        %v3167 = vsel %vm2676, %v3114, 0
        %v3170 = vsel %vm2676, %v3115, 0
        %v3173 = vsel %vm2676, %v3116, 0
        %v3176 = vsel %vm2676, %v3117, 0
        %v3179 = vsel %vm2676, %v3118, 0
        %v3182 = vsel %vm2676, %v3119, 0
        %v3185 = vsel %vm2676, %v3152, 0
        %v3188 = vsel %vm2676, %v3153, 0
        %v3191 = vsel %vm2676, %v3154, 0
        %v3194 = vsel %vm2676, %v3155, 0
        %v3197 = vsel %vm2676, %v3156, 0
        %v3200 = vsel %vm2676, %v3157, 0
        %v3203 = vsel %vm2676, %v3158, 0
        %v3206 = vsel %vm2676, %v3159, 0
        %3208 = vmatpush.bf16.xpose.msra.mxu0 %v3206
        %3209 = vmatpush.bf16.xpose.msra.mxu0 %v3203
        %3210 = vmatpush.bf16.xpose.msra.mxu0 %v3200
        %3211 = vmatpush.bf16.xpose.msra.mxu0 %v3197
        %3212 = vmatpush.bf16.xpose.msra.mxu0 %v3194
        %3213 = vmatpush.bf16.xpose.msra.mxu0 %v3191
        %3214 = vmatpush.bf16.xpose.msra.mxu0 %v3188
        %3215 = vmatpush.bf16.xpose.msra.mxu0 %v3185
        %3216 = vmatmul.bf16.gmra.mxu0 %v3161
        %v3217 = vpop.f32.mrf.mxu0
        %v3218 = vadd.f32 0.0, %v3217
        %v3219 = vpop.f32.mrf.mxu0
        %v3220 = vadd.f32 0.0, %v3219
        %3221 = vmatmul.bf16.gmra.mxu0 %v3164
        %v3222 = vpop.f32.mrf.mxu0
        %v3223 = vadd.f32 0.0, %v3222
        %v3224 = vpop.f32.mrf.mxu0
        %v3225 = vadd.f32 0.0, %v3224
        %3226 = vmatmul.bf16.gmra.mxu0 %v3167
        %v3227 = vpop.f32.mrf.mxu0
        %v3228 = vadd.f32 0.0, %v3227
        %v3229 = vpop.f32.mrf.mxu0
        %v3230 = vadd.f32 0.0, %v3229
        %3231 = vmatmul.bf16.gmra.mxu0 %v3170
        %v3232 = vpop.f32.mrf.mxu0
        %v3233 = vadd.f32 0.0, %v3232
        %v3234 = vpop.f32.mrf.mxu0
        %v3235 = vadd.f32 0.0, %v3234
        %3236 = vmatmul.bf16.gmra.mxu0 %v3173
        %v3237 = vpop.f32.mrf.mxu0
        %v3238 = vadd.f32 0.0, %v3237
        %v3239 = vpop.f32.mrf.mxu0
        %v3240 = vadd.f32 0.0, %v3239
        %3241 = vmatmul.bf16.gmra.mxu0 %v3176
        %v3242 = vpop.f32.mrf.mxu0
        %v3243 = vadd.f32 0.0, %v3242
        %v3244 = vpop.f32.mrf.mxu0
        %v3245 = vadd.f32 0.0, %v3244
        %3246 = vmatmul.bf16.gmra.mxu0 %v3179
        %v3247 = vpop.f32.mrf.mxu0
        %v3248 = vadd.f32 0.0, %v3247
        %v3249 = vpop.f32.mrf.mxu0
        %v3250 = vadd.f32 0.0, %v3249
        %3251 = vmatmul.bf16.gmra.mxu0 %v3182
        %v3252 = vpop.f32.mrf.mxu0
        %v3253 = vadd.f32 0.0, %v3252
        %v3254 = vpop.f32.mrf.mxu0
        %v3255 = vadd.f32 0.0, %v3254
        %3256 = vdwg.mxu0
        %3257 = vmax.xlane.f32.xlu0 %v2735
        %v3258 = vpop.xlane.xlu0 %3257
        %3259 = vmax.xlane.f32.xlu0 %v2737
        %v3260 = vpop.xlane.xlu0 %3259
        %3261 = vmax.xlane.f32.xlu0 %v2740
        %v3262 = vpop.xlane.xlu0 %3261
        %3263 = vmax.xlane.f32.xlu0 %v2742
        %v3264 = vpop.xlane.xlu0 %3263
        %3265 = vmax.xlane.f32.xlu0 %v2745
        %v3266 = vpop.xlane.xlu0 %3265
        %3267 = vmax.xlane.f32.xlu0 %v2747
        %v3268 = vpop.xlane.xlu0 %3267
        %3269 = vmax.xlane.f32.xlu0 %v2750
        %v3270 = vpop.xlane.xlu0 %3269
        %3271 = vmax.xlane.f32.xlu0 %v2752
        %v3272 = vpop.xlane.xlu0 %3271
        %3273 = vmax.xlane.f32.xlu0 %v2755
        %v3274 = vpop.xlane.xlu0 %3273
        %3275 = vmax.xlane.f32.xlu0 %v2757
        %v3276 = vpop.xlane.xlu0 %3275
        %3277 = vmax.xlane.f32.xlu0 %v2760
        %v3278 = vpop.xlane.xlu0 %3277
        %3279 = vmax.xlane.f32.xlu0 %v2762
        %v3280 = vpop.xlane.xlu0 %3279
        %3281 = vmax.xlane.f32.xlu0 %v2765
        %v3282 = vpop.xlane.xlu0 %3281
        %3283 = vmax.xlane.f32.xlu0 %v2767
        %v3284 = vpop.xlane.xlu0 %3283
        %3285 = vmax.xlane.f32.xlu0 %v2770
        %v3286 = vpop.xlane.xlu0 %3285
        %3287 = vmax.xlane.f32.xlu0 %v2772
        %v3288 = vpop.xlane.xlu0 %3287
        %3289 = vmax.xlane.f32.xlu0 %v2896
        %v3290 = vpop.xlane.xlu0 %3289
        %3291 = vmax.xlane.f32.xlu0 %v2898
        %v3292 = vpop.xlane.xlu0 %3291
        %3293 = vmax.xlane.f32.xlu0 %v2901
        %v3294 = vpop.xlane.xlu0 %3293
        %3295 = vmax.xlane.f32.xlu0 %v2903
        %v3296 = vpop.xlane.xlu0 %3295
        %3297 = vmax.xlane.f32.xlu0 %v2906
        %v3298 = vpop.xlane.xlu0 %3297
        %3299 = vmax.xlane.f32.xlu0 %v2908
        %v3300 = vpop.xlane.xlu0 %3299
        %3301 = vmax.xlane.f32.xlu0 %v2911
        %v3302 = vpop.xlane.xlu0 %3301
        %3303 = vmax.xlane.f32.xlu0 %v2913
        %v3304 = vpop.xlane.xlu0 %3303
        %3305 = vmax.xlane.f32.xlu0 %v2916
        %v3306 = vpop.xlane.xlu0 %3305
        %3307 = vmax.xlane.f32.xlu0 %v2918
        %v3308 = vpop.xlane.xlu0 %3307
        %3309 = vmax.xlane.f32.xlu0 %v2921
        %v3310 = vpop.xlane.xlu0 %3309
        %3311 = vmax.xlane.f32.xlu0 %v2923
        %v3312 = vpop.xlane.xlu0 %3311
        %3313 = vmax.xlane.f32.xlu0 %v2926
        %v3314 = vpop.xlane.xlu0 %3313
        %3315 = vmax.xlane.f32.xlu0 %v2928
        %v3316 = vpop.xlane.xlu0 %3315
        %3317 = vmax.xlane.f32.xlu0 %v2931
        %v3318 = vpop.xlane.xlu0 %3317
        %3319 = vmax.xlane.f32.xlu0 %v2933
        %v3320 = vpop.xlane.xlu0 %3319
        %3321 = vmax.xlane.f32.xlu0 %v3057
        %v3322 = vpop.xlane.xlu0 %3321
        %3323 = vmax.xlane.f32.xlu0 %v3059
        %v3324 = vpop.xlane.xlu0 %3323
        %3325 = vmax.xlane.f32.xlu0 %v3062
        %v3326 = vpop.xlane.xlu0 %3325
        %3327 = vmax.xlane.f32.xlu0 %v3064
        %v3328 = vpop.xlane.xlu0 %3327
        %3329 = vmax.xlane.f32.xlu0 %v3067
        %v3330 = vpop.xlane.xlu0 %3329
        %3331 = vmax.xlane.f32.xlu0 %v3069
        %v3332 = vpop.xlane.xlu0 %3331
        %3333 = vmax.xlane.f32.xlu0 %v3072
        %v3334 = vpop.xlane.xlu0 %3333
        %3335 = vmax.xlane.f32.xlu0 %v3074
        %v3336 = vpop.xlane.xlu0 %3335
        %3337 = vmax.xlane.f32.xlu0 %v3077
        %v3338 = vpop.xlane.xlu0 %3337
        %3339 = vmax.xlane.f32.xlu0 %v3079
        %v3340 = vpop.xlane.xlu0 %3339
        %3341 = vmax.xlane.f32.xlu0 %v3082
        %v3342 = vpop.xlane.xlu0 %3341
        %3343 = vmax.xlane.f32.xlu0 %v3084
        %v3344 = vpop.xlane.xlu0 %3343
        %3345 = vmax.xlane.f32.xlu0 %v3087
        %v3346 = vpop.xlane.xlu0 %3345
        %3347 = vmax.xlane.f32.xlu0 %v3089
        %v3348 = vpop.xlane.xlu0 %3347
        %3349 = vmax.xlane.f32.xlu0 %v3092
        %v3350 = vpop.xlane.xlu0 %3349
        %3351 = vmax.xlane.f32.xlu0 %v3094
        %v3352 = vpop.xlane.xlu0 %3351
        %3353 = vmax.xlane.f32.xlu0 %v3218
        %v3354 = vpop.xlane.xlu0 %3353
        %3355 = vmax.xlane.f32.xlu0 %v3220
        %v3356 = vpop.xlane.xlu0 %3355
        %3357 = vmax.xlane.f32.xlu0 %v3223
        %v3358 = vpop.xlane.xlu0 %3357
        %3359 = vmax.xlane.f32.xlu0 %v3225
        %v3360 = vpop.xlane.xlu0 %3359
        %3361 = vmax.xlane.f32.xlu0 %v3228
        %v3362 = vpop.xlane.xlu0 %3361
        %3363 = vmax.xlane.f32.xlu0 %v3230
        %v3364 = vpop.xlane.xlu0 %3363
        %3365 = vmax.xlane.f32.xlu0 %v3233
        %v3366 = vpop.xlane.xlu0 %3365
        %3367 = vmax.xlane.f32.xlu0 %v3235
        %v3368 = vpop.xlane.xlu0 %3367
        %3369 = vmax.xlane.f32.xlu0 %v3238
        %v3370 = vpop.xlane.xlu0 %3369
        %3371 = vmax.xlane.f32.xlu0 %v3240
        %v3372 = vpop.xlane.xlu0 %3371
        %3373 = vmax.xlane.f32.xlu0 %v3243
        %v3374 = vpop.xlane.xlu0 %3373
        %3375 = vmax.xlane.f32.xlu0 %v3245
        %v3376 = vpop.xlane.xlu0 %3375
        %3377 = vmax.xlane.f32.xlu0 %v3248
        %v3378 = vpop.xlane.xlu0 %3377
        %3379 = vmax.xlane.f32.xlu0 %v3250
        %v3380 = vpop.xlane.xlu0 %3379
        %3381 = vmax.xlane.f32.xlu0 %v3253
        %v3382 = vpop.xlane.xlu0 %3381
        %3383 = vmax.xlane.f32.xlu0 %v3255
        %v3384 = vpop.xlane.xlu0 %3383
        %v3385 = vsub.f32 %v2735, %v3258
        %v3386 = vsub.f32 %v2737, %v3260
        %v3387 = vsub.f32 %v2740, %v3262
        %v3388 = vsub.f32 %v2742, %v3264
        %v3389 = vsub.f32 %v2745, %v3266
        %v3390 = vsub.f32 %v2747, %v3268
        %v3391 = vsub.f32 %v2750, %v3270
        %v3392 = vsub.f32 %v2752, %v3272
        %v3393 = vsub.f32 %v2755, %v3274
        %v3394 = vsub.f32 %v2757, %v3276
        %v3395 = vsub.f32 %v2760, %v3278
        %v3396 = vsub.f32 %v2762, %v3280
        %v3397 = vsub.f32 %v2765, %v3282
        %v3398 = vsub.f32 %v2767, %v3284
        %v3399 = vsub.f32 %v2770, %v3286
        %v3400 = vsub.f32 %v2772, %v3288
        %v3401 = vsub.f32 %v2896, %v3290
        %v3402 = vsub.f32 %v2898, %v3292
        %v3403 = vsub.f32 %v2901, %v3294
        %v3404 = vsub.f32 %v2903, %v3296
        %v3405 = vsub.f32 %v2906, %v3298
        %v3406 = vsub.f32 %v2908, %v3300
        %v3407 = vsub.f32 %v2911, %v3302
        %v3408 = vsub.f32 %v2913, %v3304
        %v3409 = vsub.f32 %v2916, %v3306
        %v3410 = vsub.f32 %v2918, %v3308
        %v3411 = vsub.f32 %v2921, %v3310
        %v3412 = vsub.f32 %v2923, %v3312
        %v3413 = vsub.f32 %v2926, %v3314
        %v3414 = vsub.f32 %v2928, %v3316
        %v3415 = vsub.f32 %v2931, %v3318
        %v3416 = vsub.f32 %v2933, %v3320
        %v3417 = vsub.f32 %v3057, %v3322
        %v3418 = vsub.f32 %v3059, %v3324
        %v3419 = vsub.f32 %v3062, %v3326
        %v3420 = vsub.f32 %v3064, %v3328
        %v3421 = vsub.f32 %v3067, %v3330
        %v3422 = vsub.f32 %v3069, %v3332
        %v3423 = vsub.f32 %v3072, %v3334
        %v3424 = vsub.f32 %v3074, %v3336
        %v3425 = vsub.f32 %v3077, %v3338
        %v3426 = vsub.f32 %v3079, %v3340
        %v3427 = vsub.f32 %v3082, %v3342
        %v3428 = vsub.f32 %v3084, %v3344
        %v3429 = vsub.f32 %v3087, %v3346
        %v3430 = vsub.f32 %v3089, %v3348
        %v3431 = vsub.f32 %v3092, %v3350
        %v3432 = vsub.f32 %v3094, %v3352
        %v3433 = vsub.f32 %v3218, %v3354
        %v3434 = vsub.f32 %v3220, %v3356
        %v3435 = vsub.f32 %v3223, %v3358
        %v3436 = vsub.f32 %v3225, %v3360
        %v3437 = vsub.f32 %v3228, %v3362
        %v3438 = vsub.f32 %v3230, %v3364
        %v3439 = vsub.f32 %v3233, %v3366
        %v3440 = vsub.f32 %v3235, %v3368
        %v3441 = vsub.f32 %v3238, %v3370
        %v3442 = vsub.f32 %v3240, %v3372
        %v3443 = vsub.f32 %v3243, %v3374
        %v3444 = vsub.f32 %v3245, %v3376
        %v3445 = vsub.f32 %v3248, %v3378
        %v3446 = vsub.f32 %v3250, %v3380
        %v3447 = vsub.f32 %v3253, %v3382
        %v3448 = vsub.f32 %v3255, %v3384
        %v3449 = vmul.f32 %v3385, 1.442695
        %v3450 = vpow.pop %v3449
        %v3451 = vmul.f32 %v3386, 1.442695
        %v3452 = vpow.pop %v3451
        %v3453 = vmul.f32 %v3387, 1.442695
        %v3454 = vpow.pop %v3453
        %v3455 = vmul.f32 %v3388, 1.442695
        %v3456 = vpow.pop %v3455
        %v3457 = vmul.f32 %v3389, 1.442695
        %v3458 = vpow.pop %v3457
        %v3459 = vmul.f32 %v3390, 1.442695
        %v3460 = vpow.pop %v3459
        %v3461 = vmul.f32 %v3391, 1.442695
        %v3462 = vpow.pop %v3461
        %v3463 = vmul.f32 %v3392, 1.442695
        %v3464 = vpow.pop %v3463
        %v3465 = vmul.f32 %v3393, 1.442695
        %v3466 = vpow.pop %v3465
        %v3467 = vmul.f32 %v3394, 1.442695
        %v3468 = vpow.pop %v3467
        %v3469 = vmul.f32 %v3395, 1.442695
        %v3470 = vpow.pop %v3469
        %v3471 = vmul.f32 %v3396, 1.442695
        %v3472 = vpow.pop %v3471
        %v3473 = vmul.f32 %v3397, 1.442695
        %v3474 = vpow.pop %v3473
        %v3475 = vmul.f32 %v3398, 1.442695
        %v3476 = vpow.pop %v3475
        %v3477 = vmul.f32 %v3399, 1.442695
        %v3478 = vpow.pop %v3477
        %v3479 = vmul.f32 %v3400, 1.442695
        %v3480 = vpow.pop %v3479
        %v3481 = vmul.f32 %v3401, 1.442695
        %v3482 = vpow.pop %v3481
        %v3483 = vmul.f32 %v3402, 1.442695
        %v3484 = vpow.pop %v3483
        %v3485 = vmul.f32 %v3403, 1.442695
        %v3486 = vpow.pop %v3485
        %v3487 = vmul.f32 %v3404, 1.442695
        %v3488 = vpow.pop %v3487
        %v3489 = vmul.f32 %v3405, 1.442695
        %v3490 = vpow.pop %v3489
        %v3491 = vmul.f32 %v3406, 1.442695
        %v3492 = vpow.pop %v3491
        %v3493 = vmul.f32 %v3407, 1.442695
        %v3494 = vpow.pop %v3493
        %v3495 = vmul.f32 %v3408, 1.442695
        %v3496 = vpow.pop %v3495
        %v3497 = vmul.f32 %v3409, 1.442695
        %v3498 = vpow.pop %v3497
        %v3499 = vmul.f32 %v3410, 1.442695
        %v3500 = vpow.pop %v3499
        %v3501 = vmul.f32 %v3411, 1.442695
        %v3502 = vpow.pop %v3501
        %v3503 = vmul.f32 %v3412, 1.442695
        %v3504 = vpow.pop %v3503
        %v3505 = vmul.f32 %v3413, 1.442695
        %v3506 = vpow.pop %v3505
        %v3507 = vmul.f32 %v3414, 1.442695
        %v3508 = vpow.pop %v3507
        %v3509 = vmul.f32 %v3415, 1.442695
        %v3510 = vpow.pop %v3509
        %v3511 = vmul.f32 %v3416, 1.442695
        %v3512 = vpow.pop %v3511
        %v3513 = vmul.f32 %v3417, 1.442695
        %v3514 = vpow.pop %v3513
        %v3515 = vmul.f32 %v3418, 1.442695
        %v3516 = vpow.pop %v3515
        %v3517 = vmul.f32 %v3419, 1.442695
        %v3518 = vpow.pop %v3517
        %v3519 = vmul.f32 %v3420, 1.442695
        %v3520 = vpow.pop %v3519
        %v3521 = vmul.f32 %v3421, 1.442695
        %v3522 = vpow.pop %v3521
        %v3523 = vmul.f32 %v3422, 1.442695
        %v3524 = vpow.pop %v3523
        %v3525 = vmul.f32 %v3423, 1.442695
        %v3526 = vpow.pop %v3525
        %v3527 = vmul.f32 %v3424, 1.442695
        %v3528 = vpow.pop %v3527
        %v3529 = vmul.f32 %v3425, 1.442695
        %v3530 = vpow.pop %v3529
        %v3531 = vmul.f32 %v3426, 1.442695
        %v3532 = vpow.pop %v3531
        %v3533 = vmul.f32 %v3427, 1.442695
        %v3534 = vpow.pop %v3533
        %v3535 = vmul.f32 %v3428, 1.442695
        %v3536 = vpow.pop %v3535
        %v3537 = vmul.f32 %v3429, 1.442695
        %v3538 = vpow.pop %v3537
        %v3539 = vmul.f32 %v3430, 1.442695
        %v3540 = vpow.pop %v3539
        %v3541 = vmul.f32 %v3431, 1.442695
        %v3542 = vpow.pop %v3541
        %v3543 = vmul.f32 %v3432, 1.442695
        %v3544 = vpow.pop %v3543
        %v3545 = vmul.f32 %v3433, 1.442695
        %v3546 = vpow.pop %v3545
        %v3547 = vmul.f32 %v3434, 1.442695
        %v3548 = vpow.pop %v3547
        %v3549 = vmul.f32 %v3435, 1.442695
        %v3550 = vpow.pop %v3549
        %v3551 = vmul.f32 %v3436, 1.442695
        %v3552 = vpow.pop %v3551
        %v3553 = vmul.f32 %v3437, 1.442695
        %v3554 = vpow.pop %v3553
        %v3555 = vmul.f32 %v3438, 1.442695
        %v3556 = vpow.pop %v3555
        %v3557 = vmul.f32 %v3439, 1.442695
        %v3558 = vpow.pop %v3557
        %v3559 = vmul.f32 %v3440, 1.442695
        %v3560 = vpow.pop %v3559
        %v3561 = vmul.f32 %v3441, 1.442695
        %v3562 = vpow.pop %v3561
        %v3563 = vmul.f32 %v3442, 1.442695
        %v3564 = vpow.pop %v3563
        %v3565 = vmul.f32 %v3443, 1.442695
        %v3566 = vpow.pop %v3565
        %v3567 = vmul.f32 %v3444, 1.442695
        %v3568 = vpow.pop %v3567
        %v3569 = vmul.f32 %v3445, 1.442695
        %v3570 = vpow.pop %v3569
        %v3571 = vmul.f32 %v3446, 1.442695
        %v3572 = vpow.pop %v3571
        %v3573 = vmul.f32 %v3447, 1.442695
        %v3574 = vpow.pop %v3573
        %v3575 = vmul.f32 %v3448, 1.442695
        %v3576 = vpow.pop %v3575
        %3577 = vadd.xlane.f32.xlu0 %v3450
        %v3578 = vpop.xlane.xlu0 %3577
        %3579 = vadd.xlane.f32.xlu0 %v3452
        %v3580 = vpop.xlane.xlu0 %3579
        %3581 = vadd.xlane.f32.xlu0 %v3454
        %v3582 = vpop.xlane.xlu0 %3581
        %3583 = vadd.xlane.f32.xlu0 %v3456
        %v3584 = vpop.xlane.xlu0 %3583
        %3585 = vadd.xlane.f32.xlu0 %v3458
        %v3586 = vpop.xlane.xlu0 %3585
        %3587 = vadd.xlane.f32.xlu0 %v3460
        %v3588 = vpop.xlane.xlu0 %3587
        %3589 = vadd.xlane.f32.xlu0 %v3462
        %v3590 = vpop.xlane.xlu0 %3589
        %3591 = vadd.xlane.f32.xlu0 %v3464
        %v3592 = vpop.xlane.xlu0 %3591
        %3593 = vadd.xlane.f32.xlu0 %v3466
        %v3594 = vpop.xlane.xlu0 %3593
        %3595 = vadd.xlane.f32.xlu0 %v3468
        %v3596 = vpop.xlane.xlu0 %3595
        %3597 = vadd.xlane.f32.xlu0 %v3470
        %v3598 = vpop.xlane.xlu0 %3597
        %3599 = vadd.xlane.f32.xlu0 %v3472
        %v3600 = vpop.xlane.xlu0 %3599
        %3601 = vadd.xlane.f32.xlu0 %v3474
        %v3602 = vpop.xlane.xlu0 %3601
        %3603 = vadd.xlane.f32.xlu0 %v3476
        %v3604 = vpop.xlane.xlu0 %3603
        %3605 = vadd.xlane.f32.xlu0 %v3478
        %v3606 = vpop.xlane.xlu0 %3605
        %3607 = vadd.xlane.f32.xlu0 %v3480
        %v3608 = vpop.xlane.xlu0 %3607
        %3609 = vadd.xlane.f32.xlu0 %v3482
        %v3610 = vpop.xlane.xlu0 %3609
        %3611 = vadd.xlane.f32.xlu0 %v3484
        %v3612 = vpop.xlane.xlu0 %3611
        %3613 = vadd.xlane.f32.xlu0 %v3486
        %v3614 = vpop.xlane.xlu0 %3613
        %3615 = vadd.xlane.f32.xlu0 %v3488
        %v3616 = vpop.xlane.xlu0 %3615
        %3617 = vadd.xlane.f32.xlu0 %v3490
        %v3618 = vpop.xlane.xlu0 %3617
        %3619 = vadd.xlane.f32.xlu0 %v3492
        %v3620 = vpop.xlane.xlu0 %3619
        %3621 = vadd.xlane.f32.xlu0 %v3494
        %v3622 = vpop.xlane.xlu0 %3621
        %3623 = vadd.xlane.f32.xlu0 %v3496
        %v3624 = vpop.xlane.xlu0 %3623
        %3625 = vadd.xlane.f32.xlu0 %v3498
        %v3626 = vpop.xlane.xlu0 %3625
        %3627 = vadd.xlane.f32.xlu0 %v3500
        %v3628 = vpop.xlane.xlu0 %3627
        %3629 = vadd.xlane.f32.xlu0 %v3502
        %v3630 = vpop.xlane.xlu0 %3629
        %3631 = vadd.xlane.f32.xlu0 %v3504
        %v3632 = vpop.xlane.xlu0 %3631
        %3633 = vadd.xlane.f32.xlu0 %v3506
        %v3634 = vpop.xlane.xlu0 %3633
        %3635 = vadd.xlane.f32.xlu0 %v3508
        %v3636 = vpop.xlane.xlu0 %3635
        %3637 = vadd.xlane.f32.xlu0 %v3510
        %v3638 = vpop.xlane.xlu0 %3637
        %3639 = vadd.xlane.f32.xlu0 %v3512
        %v3640 = vpop.xlane.xlu0 %3639
        %3641 = vadd.xlane.f32.xlu0 %v3514
        %v3642 = vpop.xlane.xlu0 %3641
        %3643 = vadd.xlane.f32.xlu0 %v3516
        %v3644 = vpop.xlane.xlu0 %3643
        %3645 = vadd.xlane.f32.xlu0 %v3518
        %v3646 = vpop.xlane.xlu0 %3645
        %3647 = vadd.xlane.f32.xlu0 %v3520
        %v3648 = vpop.xlane.xlu0 %3647
        %3649 = vadd.xlane.f32.xlu0 %v3522
        %v3650 = vpop.xlane.xlu0 %3649
        %3651 = vadd.xlane.f32.xlu0 %v3524
        %v3652 = vpop.xlane.xlu0 %3651
        %3653 = vadd.xlane.f32.xlu0 %v3526
        %v3654 = vpop.xlane.xlu0 %3653
        %3655 = vadd.xlane.f32.xlu0 %v3528
        %v3656 = vpop.xlane.xlu0 %3655
        %3657 = vadd.xlane.f32.xlu0 %v3530
        %v3658 = vpop.xlane.xlu0 %3657
        %3659 = vadd.xlane.f32.xlu0 %v3532
        %v3660 = vpop.xlane.xlu0 %3659
        %3661 = vadd.xlane.f32.xlu0 %v3534
        %v3662 = vpop.xlane.xlu0 %3661
        %3663 = vadd.xlane.f32.xlu0 %v3536
        %v3664 = vpop.xlane.xlu0 %3663
        %3665 = vadd.xlane.f32.xlu0 %v3538
        %v3666 = vpop.xlane.xlu0 %3665
        %3667 = vadd.xlane.f32.xlu0 %v3540
        %v3668 = vpop.xlane.xlu0 %3667
        %3669 = vadd.xlane.f32.xlu0 %v3542
        %v3670 = vpop.xlane.xlu0 %3669
        %3671 = vadd.xlane.f32.xlu0 %v3544
        %v3672 = vpop.xlane.xlu0 %3671
        %3673 = vadd.xlane.f32.xlu0 %v3546
        %v3674 = vpop.xlane.xlu0 %3673
        %3675 = vadd.xlane.f32.xlu0 %v3548
        %v3676 = vpop.xlane.xlu0 %3675
        %3677 = vadd.xlane.f32.xlu0 %v3550
        %v3678 = vpop.xlane.xlu0 %3677
        %3679 = vadd.xlane.f32.xlu0 %v3552
        %v3680 = vpop.xlane.xlu0 %3679
        %3681 = vadd.xlane.f32.xlu0 %v3554
        %v3682 = vpop.xlane.xlu0 %3681
        %3683 = vadd.xlane.f32.xlu0 %v3556
        %v3684 = vpop.xlane.xlu0 %3683
        %3685 = vadd.xlane.f32.xlu0 %v3558
        %v3686 = vpop.xlane.xlu0 %3685
        %3687 = vadd.xlane.f32.xlu0 %v3560
        %v3688 = vpop.xlane.xlu0 %3687
        %3689 = vadd.xlane.f32.xlu0 %v3562
        %v3690 = vpop.xlane.xlu0 %3689
        %3691 = vadd.xlane.f32.xlu0 %v3564
        %v3692 = vpop.xlane.xlu0 %3691
        %3693 = vadd.xlane.f32.xlu0 %v3566
        %v3694 = vpop.xlane.xlu0 %3693
        %3695 = vadd.xlane.f32.xlu0 %v3568
        %v3696 = vpop.xlane.xlu0 %3695
        %3697 = vadd.xlane.f32.xlu0 %v3570
        %v3698 = vpop.xlane.xlu0 %3697
        %3699 = vadd.xlane.f32.xlu0 %v3572
        %v3700 = vpop.xlane.xlu0 %3699
        %3701 = vadd.xlane.f32.xlu0 %v3574
        %v3702 = vpop.xlane.xlu0 %3701
        %3703 = vadd.xlane.f32.xlu0 %v3576
        %v3704 = vpop.xlane.xlu0 %3703
        %v3705 = vpack.c.bf16 %v3450, %v3450
        %v3706 = vpack.c.bf16 %v3452, %v3452
        %v3707 = vpack.c.bf16 %v3454, %v3454
        %v3708 = vpack.c.bf16 %v3456, %v3456
        %v3709 = vpack.c.bf16 %v3458, %v3458
        %v3710 = vpack.c.bf16 %v3460, %v3460
        %v3711 = vpack.c.bf16 %v3462, %v3462
        %v3712 = vpack.c.bf16 %v3464, %v3464
        %v3713 = vpack.c.bf16 %v3466, %v3466
        %v3714 = vpack.c.bf16 %v3468, %v3468
        %v3715 = vpack.c.bf16 %v3470, %v3470
        %v3716 = vpack.c.bf16 %v3472, %v3472
        %v3717 = vpack.c.bf16 %v3474, %v3474
        %v3718 = vpack.c.bf16 %v3476, %v3476
        %v3719 = vpack.c.bf16 %v3478, %v3478
        %v3720 = vpack.c.bf16 %v3480, %v3480
        %v3721 = vpack.c.bf16 %v3482, %v3482
        %v3722 = vpack.c.bf16 %v3484, %v3484
        %v3723 = vpack.c.bf16 %v3486, %v3486
        %v3724 = vpack.c.bf16 %v3488, %v3488
        %v3725 = vpack.c.bf16 %v3490, %v3490
        %v3726 = vpack.c.bf16 %v3492, %v3492
        %v3727 = vpack.c.bf16 %v3494, %v3494
        %v3728 = vpack.c.bf16 %v3496, %v3496
        %v3729 = vpack.c.bf16 %v3498, %v3498
        %v3730 = vpack.c.bf16 %v3500, %v3500
        %v3731 = vpack.c.bf16 %v3502, %v3502
        %v3732 = vpack.c.bf16 %v3504, %v3504
        %v3733 = vpack.c.bf16 %v3506, %v3506
        %v3734 = vpack.c.bf16 %v3508, %v3508
        %v3735 = vpack.c.bf16 %v3510, %v3510
        %v3736 = vpack.c.bf16 %v3512, %v3512
        %v3737 = vpack.c.bf16 %v3514, %v3514
        %v3738 = vpack.c.bf16 %v3516, %v3516
        %v3739 = vpack.c.bf16 %v3518, %v3518
        %v3740 = vpack.c.bf16 %v3520, %v3520
        %v3741 = vpack.c.bf16 %v3522, %v3522
        %v3742 = vpack.c.bf16 %v3524, %v3524
        %v3743 = vpack.c.bf16 %v3526, %v3526
        %v3744 = vpack.c.bf16 %v3528, %v3528
        %v3745 = vpack.c.bf16 %v3530, %v3530
        %v3746 = vpack.c.bf16 %v3532, %v3532
        %v3747 = vpack.c.bf16 %v3534, %v3534
        %v3748 = vpack.c.bf16 %v3536, %v3536
        %v3749 = vpack.c.bf16 %v3538, %v3538
        %v3750 = vpack.c.bf16 %v3540, %v3540
        %v3751 = vpack.c.bf16 %v3542, %v3542
        %v3752 = vpack.c.bf16 %v3544, %v3544
        %v3753 = vpack.c.bf16 %v3546, %v3546
        %v3754 = vpack.c.bf16 %v3548, %v3548
        %v3755 = vpack.c.bf16 %v3550, %v3550
        %v3756 = vpack.c.bf16 %v3552, %v3552
        %v3757 = vpack.c.bf16 %v3554, %v3554
        %v3758 = vpack.c.bf16 %v3556, %v3556
        %v3759 = vpack.c.bf16 %v3558, %v3558
        %v3760 = vpack.c.bf16 %v3560, %v3560
        %v3761 = vpack.c.bf16 %v3562, %v3562
        %v3762 = vpack.c.bf16 %v3564, %v3564
        %v3763 = vpack.c.bf16 %v3566, %v3566
        %v3764 = vpack.c.bf16 %v3568, %v3568
        %v3765 = vpack.c.bf16 %v3570, %v3570
        %v3766 = vpack.c.bf16 %v3572, %v3572
        %v3767 = vpack.c.bf16 %v3574, %v3574
        %v3768 = vpack.c.bf16 %v3576, %v3576
        %v3769 = vld [vmem:[#allocation3] sm:$0xf]
        %v3770 = vld [vmem:[#allocation3 + $0x4] sm:$0xf]
        %v3771 = vld [vmem:[#allocation3 + $0x8] sm:$0xf]
        %v3772 = vld [vmem:[#allocation3 + $0xc] sm:$0xf]
        %v3773 = vld [vmem:[#allocation3 + $0x10] sm:$0xf]
        %v3774 = vld [vmem:[#allocation3 + $0x14] sm:$0xf]
        %v3775 = vld [vmem:[#allocation3 + $0x18] sm:$0xf]
        %v3776 = vld [vmem:[#allocation3 + $0x1c] sm:$0xf]
        %v3777 = vld [vmem:[#allocation3 + $0x20] sm:$0xf]
        %v3778 = vld [vmem:[#allocation3 + $0x24] sm:$0xf]
        %v3779 = vld [vmem:[#allocation3 + $0x28] sm:$0xf]
        %v3780 = vld [vmem:[#allocation3 + $0x2c] sm:$0xf]
        %v3781 = vld [vmem:[#allocation3 + $0x30] sm:$0xf]
        %v3782 = vld [vmem:[#allocation3 + $0x34] sm:$0xf]
        %v3783 = vld [vmem:[#allocation3 + $0x38] sm:$0xf]
        %v3784 = vld [vmem:[#allocation3 + $0x3c] sm:$0xf]
        %v3785 = vld [vmem:[#allocation3 + $0x40] sm:$0xf]
        %v3786 = vld [vmem:[#allocation3 + $0x44] sm:$0xf]
        %v3787 = vld [vmem:[#allocation3 + $0x48] sm:$0xf]
        %v3788 = vld [vmem:[#allocation3 + $0x4c] sm:$0xf]
        %v3789 = vld [vmem:[#allocation3 + $0x50] sm:$0xf]
        %v3790 = vld [vmem:[#allocation3 + $0x54] sm:$0xf]
        %v3791 = vld [vmem:[#allocation3 + $0x58] sm:$0xf]
        %v3792 = vld [vmem:[#allocation3 + $0x5c] sm:$0xf]
        %v3793 = vld [vmem:[#allocation3 + $0x60] sm:$0xf]
        %v3794 = vld [vmem:[#allocation3 + $0x64] sm:$0xf]
        %v3795 = vld [vmem:[#allocation3 + $0x68] sm:$0xf]
        %v3796 = vld [vmem:[#allocation3 + $0x6c] sm:$0xf]
        %v3797 = vld [vmem:[#allocation3 + $0x70] sm:$0xf]
        %v3798 = vld [vmem:[#allocation3 + $0x74] sm:$0xf]
        %v3799 = vld [vmem:[#allocation3 + $0x78] sm:$0xf]
        %v3800 = vld [vmem:[#allocation3 + $0x7c] sm:$0xf]
        %v3801 = vld [vmem:[#allocation3 + $0x80] sm:$0xf]
        %v3802 = vld [vmem:[#allocation3 + $0x84] sm:$0xf]
        %v3803 = vld [vmem:[#allocation3 + $0x88] sm:$0xf]
        %v3804 = vld [vmem:[#allocation3 + $0x8c] sm:$0xf]
        %v3805 = vld [vmem:[#allocation3 + $0x90] sm:$0xf]
        %v3806 = vld [vmem:[#allocation3 + $0x94] sm:$0xf]
        %v3807 = vld [vmem:[#allocation3 + $0x98] sm:$0xf]
        %v3808 = vld [vmem:[#allocation3 + $0x9c] sm:$0xf]
        %v3809 = vld [vmem:[#allocation3 + $0xa0] sm:$0xf]
        %v3810 = vld [vmem:[#allocation3 + $0xa4] sm:$0xf]
        %v3811 = vld [vmem:[#allocation3 + $0xa8] sm:$0xf]
        %v3812 = vld [vmem:[#allocation3 + $0xac] sm:$0xf]
        %v3813 = vld [vmem:[#allocation3 + $0xb0] sm:$0xf]
        %v3814 = vld [vmem:[#allocation3 + $0xb4] sm:$0xf]
        %v3815 = vld [vmem:[#allocation3 + $0xb8] sm:$0xf]
        %v3816 = vld [vmem:[#allocation3 + $0xbc] sm:$0xf]
        %v3817 = vld [vmem:[#allocation3 + $0xc0] sm:$0xf]
        %v3818 = vld [vmem:[#allocation3 + $0xc4] sm:$0xf]
        %v3819 = vld [vmem:[#allocation3 + $0xc8] sm:$0xf]
        %v3820 = vld [vmem:[#allocation3 + $0xcc] sm:$0xf]
        %v3821 = vld [vmem:[#allocation3 + $0xd0] sm:$0xf]
        %v3822 = vld [vmem:[#allocation3 + $0xd4] sm:$0xf]
        %v3823 = vld [vmem:[#allocation3 + $0xd8] sm:$0xf]
        %v3824 = vld [vmem:[#allocation3 + $0xdc] sm:$0xf]
        %v3825 = vld [vmem:[#allocation3 + $0xe0] sm:$0xf]
        %v3826 = vld [vmem:[#allocation3 + $0xe4] sm:$0xf]
        %v3827 = vld [vmem:[#allocation3 + $0xe8] sm:$0xf]
        %v3828 = vld [vmem:[#allocation3 + $0xec] sm:$0xf]
        %v3829 = vld [vmem:[#allocation3 + $0xf0] sm:$0xf]
        %v3830 = vld [vmem:[#allocation3 + $0xf4] sm:$0xf]
        %v3831 = vld [vmem:[#allocation3 + $0xf8] sm:$0xf]
        %v3832 = vld [vmem:[#allocation3 + $0xfc] sm:$0xf]
        %v3849 = vunpack.c.l.b16 %v3705
        %v3850 = vunpack.c.l.b16 %v3706
        %v3851 = vunpack.c.l.b16 %v3707
        %v3852 = vunpack.c.l.b16 %v3708
        %v3853 = vunpack.c.l.b16 %v3709
        %v3854 = vunpack.c.l.b16 %v3710
        %v3855 = vunpack.c.l.b16 %v3711
        %v3856 = vunpack.c.l.b16 %v3712
        %v3857 = vunpack.c.l.b16 %v3713
        %v3858 = vunpack.c.l.b16 %v3714
        %v3859 = vunpack.c.l.b16 %v3715
        %v3860 = vunpack.c.l.b16 %v3716
        %v3861 = vunpack.c.l.b16 %v3717
        %v3862 = vunpack.c.l.b16 %v3718
        %v3863 = vunpack.c.l.b16 %v3719
        %v3864 = vunpack.c.l.b16 %v3720
        %v3865 = vpack.c.b16 %v3850, %v3849
        %v3866 = vpack.c.b16 %v3852, %v3851
        %v3867 = vpack.c.b16 %v3854, %v3853
        %v3868 = vpack.c.b16 %v3856, %v3855
        %v3869 = vpack.c.b16 %v3858, %v3857
        %v3870 = vpack.c.b16 %v3860, %v3859
        %v3871 = vpack.c.b16 %v3862, %v3861
        %v3872 = vpack.c.b16 %v3864, %v3863
        %v3897 = vunpack.c.l.b16 %v3769
        %v3898 = vunpack.c.l.b16 %v3770
        %v3899 = vunpack.c.l.b16 %v3771
        %v3900 = vunpack.c.l.b16 %v3772
        %v3901 = vunpack.c.l.b16 %v3773
        %v3902 = vunpack.c.l.b16 %v3774
        %v3903 = vunpack.c.l.b16 %v3775
        %v3904 = vunpack.c.l.b16 %v3776
        %v3905 = vunpack.c.l.b16 %v3777
        %v3906 = vunpack.c.l.b16 %v3778
        %v3907 = vunpack.c.l.b16 %v3779
        %v3908 = vunpack.c.l.b16 %v3780
        %v3909 = vunpack.c.l.b16 %v3781
        %v3910 = vunpack.c.l.b16 %v3782
        %v3911 = vunpack.c.l.b16 %v3783
        %v3912 = vunpack.c.l.b16 %v3784
        %v3913 = vpack.c.b16 %v3898, %v3897
        %v3914 = vpack.c.b16 %v3900, %v3899
        %v3915 = vpack.c.b16 %v3902, %v3901
        %v3916 = vpack.c.b16 %v3904, %v3903
        %v3917 = vpack.c.b16 %v3906, %v3905
        %v3918 = vpack.c.b16 %v3908, %v3907
        %v3919 = vpack.c.b16 %v3910, %v3909
        %v3920 = vpack.c.b16 %v3912, %v3911
        %3929 = vmatpush.bf16.msra.mxu0 %v3920
        %3930 = vmatpush.bf16.msra.mxu0 %v3919
        %3931 = vmatpush.bf16.msra.mxu0 %v3918
        %3932 = vmatpush.bf16.msra.mxu0 %v3917
        %3933 = vmatpush.bf16.msra.mxu0 %v3916
        %3934 = vmatpush.bf16.msra.mxu0 %v3915
        %3935 = vmatpush.bf16.msra.mxu0 %v3914
        %3936 = vmatpush.bf16.msra.mxu0 %v3913
        %3937 = vmatmul.bf16.gmra.mxu0 %v3865
        %v3938 = vpop.f32.mrf.mxu0
        %v3939 = vadd.f32 0.0, %v3938
        %v3940 = vpop.f32.mrf.mxu0
        %v3941 = vadd.f32 0.0, %v3940
        %3942 = vmatmul.bf16.gmra.mxu0 %v3866
        %v3943 = vpop.f32.mrf.mxu0
        %v3944 = vadd.f32 0.0, %v3943
        %v3945 = vpop.f32.mrf.mxu0
        %v3946 = vadd.f32 0.0, %v3945
        %3947 = vmatmul.bf16.gmra.mxu0 %v3867
        %v3948 = vpop.f32.mrf.mxu0
        %v3949 = vadd.f32 0.0, %v3948
        %v3950 = vpop.f32.mrf.mxu0
        %v3951 = vadd.f32 0.0, %v3950
        %3952 = vmatmul.bf16.gmra.mxu0 %v3868
        %v3953 = vpop.f32.mrf.mxu0
        %v3954 = vadd.f32 0.0, %v3953
        %v3955 = vpop.f32.mrf.mxu0
        %v3956 = vadd.f32 0.0, %v3955
        %3957 = vmatmul.bf16.gmra.mxu0 %v3869
        %v3958 = vpop.f32.mrf.mxu0
        %v3959 = vadd.f32 0.0, %v3958
        %v3960 = vpop.f32.mrf.mxu0
        %v3961 = vadd.f32 0.0, %v3960
        %3962 = vmatmul.bf16.gmra.mxu0 %v3870
        %v3963 = vpop.f32.mrf.mxu0
        %v3964 = vadd.f32 0.0, %v3963
        %v3965 = vpop.f32.mrf.mxu0
        %v3966 = vadd.f32 0.0, %v3965
        %3967 = vmatmul.bf16.gmra.mxu0 %v3871
        %v3968 = vpop.f32.mrf.mxu0
        %v3969 = vadd.f32 0.0, %v3968
        %v3970 = vpop.f32.mrf.mxu0
        %v3971 = vadd.f32 0.0, %v3970
        %3972 = vmatmul.bf16.gmra.mxu0 %v3872
        %v3973 = vpop.f32.mrf.mxu0
        %v3974 = vadd.f32 0.0, %v3973
        %v3975 = vpop.f32.mrf.mxu0
        %v3976 = vadd.f32 0.0, %v3975
        %3977 = vdwg.mxu0
        %v3994 = vunpack.c.l.b16 %v3721
        %v3995 = vunpack.c.l.b16 %v3722
        %v3996 = vunpack.c.l.b16 %v3723
        %v3997 = vunpack.c.l.b16 %v3724
        %v3998 = vunpack.c.l.b16 %v3725
        %v3999 = vunpack.c.l.b16 %v3726
        %v4000 = vunpack.c.l.b16 %v3727
        %v4001 = vunpack.c.l.b16 %v3728
        %v4002 = vunpack.c.l.b16 %v3729
        %v4003 = vunpack.c.l.b16 %v3730
        %v4004 = vunpack.c.l.b16 %v3731
        %v4005 = vunpack.c.l.b16 %v3732
        %v4006 = vunpack.c.l.b16 %v3733
        %v4007 = vunpack.c.l.b16 %v3734
        %v4008 = vunpack.c.l.b16 %v3735
        %v4009 = vunpack.c.l.b16 %v3736
        %v4010 = vpack.c.b16 %v3995, %v3994
        %v4011 = vpack.c.b16 %v3997, %v3996
        %v4012 = vpack.c.b16 %v3999, %v3998
        %v4013 = vpack.c.b16 %v4001, %v4000
        %v4014 = vpack.c.b16 %v4003, %v4002
        %v4015 = vpack.c.b16 %v4005, %v4004
        %v4016 = vpack.c.b16 %v4007, %v4006
        %v4017 = vpack.c.b16 %v4009, %v4008
        %v4042 = vunpack.c.l.b16 %v3785
        %v4043 = vunpack.c.l.b16 %v3786
        %v4044 = vunpack.c.l.b16 %v3787
        %v4045 = vunpack.c.l.b16 %v3788
        %v4046 = vunpack.c.l.b16 %v3789
        %v4047 = vunpack.c.l.b16 %v3790
        %v4048 = vunpack.c.l.b16 %v3791
        %v4049 = vunpack.c.l.b16 %v3792
        %v4050 = vunpack.c.l.b16 %v3793
        %v4051 = vunpack.c.l.b16 %v3794
        %v4052 = vunpack.c.l.b16 %v3795
        %v4053 = vunpack.c.l.b16 %v3796
        %v4054 = vunpack.c.l.b16 %v3797
        %v4055 = vunpack.c.l.b16 %v3798
        %v4056 = vunpack.c.l.b16 %v3799
        %v4057 = vunpack.c.l.b16 %v3800
        %v4058 = vpack.c.b16 %v4043, %v4042
        %v4059 = vpack.c.b16 %v4045, %v4044
        %v4060 = vpack.c.b16 %v4047, %v4046
        %v4061 = vpack.c.b16 %v4049, %v4048
        %v4062 = vpack.c.b16 %v4051, %v4050
        %v4063 = vpack.c.b16 %v4053, %v4052
        %v4064 = vpack.c.b16 %v4055, %v4054
        %v4065 = vpack.c.b16 %v4057, %v4056
        %4074 = vmatpush.bf16.msra.mxu0 %v4065
        %4075 = vmatpush.bf16.msra.mxu0 %v4064
        %4076 = vmatpush.bf16.msra.mxu0 %v4063
        %4077 = vmatpush.bf16.msra.mxu0 %v4062
        %4078 = vmatpush.bf16.msra.mxu0 %v4061
        %4079 = vmatpush.bf16.msra.mxu0 %v4060
        %4080 = vmatpush.bf16.msra.mxu0 %v4059
        %4081 = vmatpush.bf16.msra.mxu0 %v4058
        %4082 = vmatmul.bf16.gmra.mxu0 %v4010
        %v4083 = vpop.f32.mrf.mxu0
        %v4084 = vadd.f32 0.0, %v4083
        %v4085 = vpop.f32.mrf.mxu0
        %v4086 = vadd.f32 0.0, %v4085
        %4087 = vmatmul.bf16.gmra.mxu0 %v4011
        %v4088 = vpop.f32.mrf.mxu0
        %v4089 = vadd.f32 0.0, %v4088
        %v4090 = vpop.f32.mrf.mxu0
        %v4091 = vadd.f32 0.0, %v4090
        %4092 = vmatmul.bf16.gmra.mxu0 %v4012
        %v4093 = vpop.f32.mrf.mxu0
        %v4094 = vadd.f32 0.0, %v4093
        %v4095 = vpop.f32.mrf.mxu0
        %v4096 = vadd.f32 0.0, %v4095
        %4097 = vmatmul.bf16.gmra.mxu0 %v4013
        %v4098 = vpop.f32.mrf.mxu0
        %v4099 = vadd.f32 0.0, %v4098
        %v4100 = vpop.f32.mrf.mxu0
        %v4101 = vadd.f32 0.0, %v4100
        %4102 = vmatmul.bf16.gmra.mxu0 %v4014
        %v4103 = vpop.f32.mrf.mxu0
        %v4104 = vadd.f32 0.0, %v4103
        %v4105 = vpop.f32.mrf.mxu0
        %v4106 = vadd.f32 0.0, %v4105
        %4107 = vmatmul.bf16.gmra.mxu0 %v4015
        %v4108 = vpop.f32.mrf.mxu0
        %v4109 = vadd.f32 0.0, %v4108
        %v4110 = vpop.f32.mrf.mxu0
        %v4111 = vadd.f32 0.0, %v4110
        %4112 = vmatmul.bf16.gmra.mxu0 %v4016
        %v4113 = vpop.f32.mrf.mxu0
        %v4114 = vadd.f32 0.0, %v4113
        %v4115 = vpop.f32.mrf.mxu0
        %v4116 = vadd.f32 0.0, %v4115
        %4117 = vmatmul.bf16.gmra.mxu0 %v4017
        %v4118 = vpop.f32.mrf.mxu0
        %v4119 = vadd.f32 0.0, %v4118
        %v4120 = vpop.f32.mrf.mxu0
        %v4121 = vadd.f32 0.0, %v4120
        %4122 = vdwg.mxu0
        %v4139 = vunpack.c.l.b16 %v3737
        %v4140 = vunpack.c.l.b16 %v3738
        %v4141 = vunpack.c.l.b16 %v3739
        %v4142 = vunpack.c.l.b16 %v3740
        %v4143 = vunpack.c.l.b16 %v3741
        %v4144 = vunpack.c.l.b16 %v3742
        %v4145 = vunpack.c.l.b16 %v3743
        %v4146 = vunpack.c.l.b16 %v3744
        %v4147 = vunpack.c.l.b16 %v3745
        %v4148 = vunpack.c.l.b16 %v3746
        %v4149 = vunpack.c.l.b16 %v3747
        %v4150 = vunpack.c.l.b16 %v3748
        %v4151 = vunpack.c.l.b16 %v3749
        %v4152 = vunpack.c.l.b16 %v3750
        %v4153 = vunpack.c.l.b16 %v3751
        %v4154 = vunpack.c.l.b16 %v3752
        %v4155 = vpack.c.b16 %v4140, %v4139
        %v4156 = vpack.c.b16 %v4142, %v4141
        %v4157 = vpack.c.b16 %v4144, %v4143
        %v4158 = vpack.c.b16 %v4146, %v4145
        %v4159 = vpack.c.b16 %v4148, %v4147
        %v4160 = vpack.c.b16 %v4150, %v4149
        %v4161 = vpack.c.b16 %v4152, %v4151
        %v4162 = vpack.c.b16 %v4154, %v4153
        %v4187 = vunpack.c.l.b16 %v3801
        %v4188 = vunpack.c.l.b16 %v3802
        %v4189 = vunpack.c.l.b16 %v3803
        %v4190 = vunpack.c.l.b16 %v3804
        %v4191 = vunpack.c.l.b16 %v3805
        %v4192 = vunpack.c.l.b16 %v3806
        %v4193 = vunpack.c.l.b16 %v3807
        %v4194 = vunpack.c.l.b16 %v3808
        %v4195 = vunpack.c.l.b16 %v3809
        %v4196 = vunpack.c.l.b16 %v3810
        %v4197 = vunpack.c.l.b16 %v3811
        %v4198 = vunpack.c.l.b16 %v3812
        %v4199 = vunpack.c.l.b16 %v3813
        %v4200 = vunpack.c.l.b16 %v3814
        %v4201 = vunpack.c.l.b16 %v3815
        %v4202 = vunpack.c.l.b16 %v3816
        %v4203 = vpack.c.b16 %v4188, %v4187
        %v4204 = vpack.c.b16 %v4190, %v4189
        %v4205 = vpack.c.b16 %v4192, %v4191
        %v4206 = vpack.c.b16 %v4194, %v4193
        %v4207 = vpack.c.b16 %v4196, %v4195
        %v4208 = vpack.c.b16 %v4198, %v4197
        %v4209 = vpack.c.b16 %v4200, %v4199
        %v4210 = vpack.c.b16 %v4202, %v4201
        %4219 = vmatpush.bf16.msra.mxu0 %v4210
        %4220 = vmatpush.bf16.msra.mxu0 %v4209
        %4221 = vmatpush.bf16.msra.mxu0 %v4208
        %4222 = vmatpush.bf16.msra.mxu0 %v4207
        %4223 = vmatpush.bf16.msra.mxu0 %v4206
        %4224 = vmatpush.bf16.msra.mxu0 %v4205
        %4225 = vmatpush.bf16.msra.mxu0 %v4204
        %4226 = vmatpush.bf16.msra.mxu0 %v4203
        %4227 = vmatmul.bf16.gmra.mxu0 %v4155
        %v4228 = vpop.f32.mrf.mxu0
        %v4229 = vadd.f32 0.0, %v4228
        %v4230 = vpop.f32.mrf.mxu0
        %v4231 = vadd.f32 0.0, %v4230
        %4232 = vmatmul.bf16.gmra.mxu0 %v4156
        %v4233 = vpop.f32.mrf.mxu0
        %v4234 = vadd.f32 0.0, %v4233
        %v4235 = vpop.f32.mrf.mxu0
        %v4236 = vadd.f32 0.0, %v4235
        %4237 = vmatmul.bf16.gmra.mxu0 %v4157
        %v4238 = vpop.f32.mrf.mxu0
        %v4239 = vadd.f32 0.0, %v4238
        %v4240 = vpop.f32.mrf.mxu0
        %v4241 = vadd.f32 0.0, %v4240
        %4242 = vmatmul.bf16.gmra.mxu0 %v4158
        %v4243 = vpop.f32.mrf.mxu0
        %v4244 = vadd.f32 0.0, %v4243
        %v4245 = vpop.f32.mrf.mxu0
        %v4246 = vadd.f32 0.0, %v4245
        %4247 = vmatmul.bf16.gmra.mxu0 %v4159
        %v4248 = vpop.f32.mrf.mxu0
        %v4249 = vadd.f32 0.0, %v4248
        %v4250 = vpop.f32.mrf.mxu0
        %v4251 = vadd.f32 0.0, %v4250
        %4252 = vmatmul.bf16.gmra.mxu0 %v4160
        %v4253 = vpop.f32.mrf.mxu0
        %v4254 = vadd.f32 0.0, %v4253
        %v4255 = vpop.f32.mrf.mxu0
        %v4256 = vadd.f32 0.0, %v4255
        %4257 = vmatmul.bf16.gmra.mxu0 %v4161
        %v4258 = vpop.f32.mrf.mxu0
        %v4259 = vadd.f32 0.0, %v4258
        %v4260 = vpop.f32.mrf.mxu0
        %v4261 = vadd.f32 0.0, %v4260
        %4262 = vmatmul.bf16.gmra.mxu0 %v4162
        %v4263 = vpop.f32.mrf.mxu0
        %v4264 = vadd.f32 0.0, %v4263
        %v4265 = vpop.f32.mrf.mxu0
        %v4266 = vadd.f32 0.0, %v4265
        %4267 = vdwg.mxu0
        %v4284 = vunpack.c.l.b16 %v3753
        %v4285 = vunpack.c.l.b16 %v3754
        %v4286 = vunpack.c.l.b16 %v3755
        %v4287 = vunpack.c.l.b16 %v3756
        %v4288 = vunpack.c.l.b16 %v3757
        %v4289 = vunpack.c.l.b16 %v3758
        %v4290 = vunpack.c.l.b16 %v3759
        %v4291 = vunpack.c.l.b16 %v3760
        %v4292 = vunpack.c.l.b16 %v3761
        %v4293 = vunpack.c.l.b16 %v3762
        %v4294 = vunpack.c.l.b16 %v3763
        %v4295 = vunpack.c.l.b16 %v3764
        %v4296 = vunpack.c.l.b16 %v3765
        %v4297 = vunpack.c.l.b16 %v3766
        %v4298 = vunpack.c.l.b16 %v3767
        %v4299 = vunpack.c.l.b16 %v3768
        %v4300 = vpack.c.b16 %v4285, %v4284
        %v4301 = vpack.c.b16 %v4287, %v4286
        %v4302 = vpack.c.b16 %v4289, %v4288
        %v4303 = vpack.c.b16 %v4291, %v4290
        %v4304 = vpack.c.b16 %v4293, %v4292
        %v4305 = vpack.c.b16 %v4295, %v4294
        %v4306 = vpack.c.b16 %v4297, %v4296
        %v4307 = vpack.c.b16 %v4299, %v4298
        %v4332 = vunpack.c.l.b16 %v3817
        %v4333 = vunpack.c.l.b16 %v3818
        %v4334 = vunpack.c.l.b16 %v3819
        %v4335 = vunpack.c.l.b16 %v3820
        %v4336 = vunpack.c.l.b16 %v3821
        %v4337 = vunpack.c.l.b16 %v3822
        %v4338 = vunpack.c.l.b16 %v3823
        %v4339 = vunpack.c.l.b16 %v3824
        %v4340 = vunpack.c.l.b16 %v3825
        %v4341 = vunpack.c.l.b16 %v3826
        %v4342 = vunpack.c.l.b16 %v3827
        %v4343 = vunpack.c.l.b16 %v3828
        %v4344 = vunpack.c.l.b16 %v3829
        %v4345 = vunpack.c.l.b16 %v3830
        %v4346 = vunpack.c.l.b16 %v3831
        %v4347 = vunpack.c.l.b16 %v3832
        %v4348 = vpack.c.b16 %v4333, %v4332
        %v4349 = vpack.c.b16 %v4335, %v4334
        %v4350 = vpack.c.b16 %v4337, %v4336
        %v4351 = vpack.c.b16 %v4339, %v4338
        %v4352 = vpack.c.b16 %v4341, %v4340
        %v4353 = vpack.c.b16 %v4343, %v4342
        %v4354 = vpack.c.b16 %v4345, %v4344
        %v4355 = vpack.c.b16 %v4347, %v4346
        %4364 = vmatpush.bf16.msra.mxu0 %v4355
        %4365 = vmatpush.bf16.msra.mxu0 %v4354
        %4366 = vmatpush.bf16.msra.mxu0 %v4353
        %4367 = vmatpush.bf16.msra.mxu0 %v4352
        %4368 = vmatpush.bf16.msra.mxu0 %v4351
        %4369 = vmatpush.bf16.msra.mxu0 %v4350
        %4370 = vmatpush.bf16.msra.mxu0 %v4349
        %4371 = vmatpush.bf16.msra.mxu0 %v4348
        %4372 = vmatmul.bf16.gmra.mxu0 %v4300
        %v4373 = vpop.f32.mrf.mxu0
        %v4374 = vadd.f32 0.0, %v4373
        %v4375 = vpop.f32.mrf.mxu0
        %v4376 = vadd.f32 0.0, %v4375
        %4377 = vmatmul.bf16.gmra.mxu0 %v4301
        %v4378 = vpop.f32.mrf.mxu0
        %v4379 = vadd.f32 0.0, %v4378
        %v4380 = vpop.f32.mrf.mxu0
        %v4381 = vadd.f32 0.0, %v4380
        %4382 = vmatmul.bf16.gmra.mxu0 %v4302
        %v4383 = vpop.f32.mrf.mxu0
        %v4384 = vadd.f32 0.0, %v4383
        %v4385 = vpop.f32.mrf.mxu0
        %v4386 = vadd.f32 0.0, %v4385
        %4387 = vmatmul.bf16.gmra.mxu0 %v4303
        %v4388 = vpop.f32.mrf.mxu0
        %v4389 = vadd.f32 0.0, %v4388
        %v4390 = vpop.f32.mrf.mxu0
        %v4391 = vadd.f32 0.0, %v4390
        %4392 = vmatmul.bf16.gmra.mxu0 %v4304
        %v4393 = vpop.f32.mrf.mxu0
        %v4394 = vadd.f32 0.0, %v4393
        %v4395 = vpop.f32.mrf.mxu0
        %v4396 = vadd.f32 0.0, %v4395
        %4397 = vmatmul.bf16.gmra.mxu0 %v4305
        %v4398 = vpop.f32.mrf.mxu0
        %v4399 = vadd.f32 0.0, %v4398
        %v4400 = vpop.f32.mrf.mxu0
        %v4401 = vadd.f32 0.0, %v4400
        %4402 = vmatmul.bf16.gmra.mxu0 %v4306
        %v4403 = vpop.f32.mrf.mxu0
        %v4404 = vadd.f32 0.0, %v4403
        %v4405 = vpop.f32.mrf.mxu0
        %v4406 = vadd.f32 0.0, %v4405
        %4407 = vmatmul.bf16.gmra.mxu0 %v4307
        %v4408 = vpop.f32.mrf.mxu0
        %v4409 = vadd.f32 0.0, %v4408
        %v4410 = vpop.f32.mrf.mxu0
        %v4411 = vadd.f32 0.0, %v4410
        %4412 = vdwg.mxu0
        %v4413 = vrcp.pop %v3578
        %v4414 = vrcp.pop %v3580
        %v4415 = vrcp.pop %v3582
        %v4416 = vrcp.pop %v3584
        %v4417 = vrcp.pop %v3586
        %v4418 = vrcp.pop %v3588
        %v4419 = vrcp.pop %v3590
        %v4420 = vrcp.pop %v3592
        %v4421 = vrcp.pop %v3594
        %v4422 = vrcp.pop %v3596
        %v4423 = vrcp.pop %v3598
        %v4424 = vrcp.pop %v3600
        %v4425 = vrcp.pop %v3602
        %v4426 = vrcp.pop %v3604
        %v4427 = vrcp.pop %v3606
        %v4428 = vrcp.pop %v3608
        %v4429 = vrcp.pop %v3610
        %v4430 = vrcp.pop %v3612
        %v4431 = vrcp.pop %v3614
        %v4432 = vrcp.pop %v3616
        %v4433 = vrcp.pop %v3618
        %v4434 = vrcp.pop %v3620
        %v4435 = vrcp.pop %v3622
        %v4436 = vrcp.pop %v3624
        %v4437 = vrcp.pop %v3626
        %v4438 = vrcp.pop %v3628
        %v4439 = vrcp.pop %v3630
        %v4440 = vrcp.pop %v3632
        %v4441 = vrcp.pop %v3634
        %v4442 = vrcp.pop %v3636
        %v4443 = vrcp.pop %v3638
        %v4444 = vrcp.pop %v3640
        %v4445 = vrcp.pop %v3642
        %v4446 = vrcp.pop %v3644
        %v4447 = vrcp.pop %v3646
        %v4448 = vrcp.pop %v3648
        %v4449 = vrcp.pop %v3650
        %v4450 = vrcp.pop %v3652
        %v4451 = vrcp.pop %v3654
        %v4452 = vrcp.pop %v3656
        %v4453 = vrcp.pop %v3658
        %v4454 = vrcp.pop %v3660
        %v4455 = vrcp.pop %v3662
        %v4456 = vrcp.pop %v3664
        %v4457 = vrcp.pop %v3666
        %v4458 = vrcp.pop %v3668
        %v4459 = vrcp.pop %v3670
        %v4460 = vrcp.pop %v3672
        %v4461 = vrcp.pop %v3674
        %v4462 = vrcp.pop %v3676
        %v4463 = vrcp.pop %v3678
        %v4464 = vrcp.pop %v3680
        %v4465 = vrcp.pop %v3682
        %v4466 = vrcp.pop %v3684
        %v4467 = vrcp.pop %v3686
        %v4468 = vrcp.pop %v3688
        %v4469 = vrcp.pop %v3690
        %v4470 = vrcp.pop %v3692
        %v4471 = vrcp.pop %v3694
        %v4472 = vrcp.pop %v3696
        %v4473 = vrcp.pop %v3698
        %v4474 = vrcp.pop %v3700
        %v4475 = vrcp.pop %v3702
        %v4476 = vrcp.pop %v3704
        %v4477 = vmul.f32 %v3939, %v4413
        %v4478 = vmul.f32 %v3941, %v4414
        %v4479 = vmul.f32 %v3944, %v4415
        %v4480 = vmul.f32 %v3946, %v4416
        %v4481 = vmul.f32 %v3949, %v4417
        %v4482 = vmul.f32 %v3951, %v4418
        %v4483 = vmul.f32 %v3954, %v4419
        %v4484 = vmul.f32 %v3956, %v4420
        %v4485 = vmul.f32 %v3959, %v4421
        %v4486 = vmul.f32 %v3961, %v4422
        %v4487 = vmul.f32 %v3964, %v4423
        %v4488 = vmul.f32 %v3966, %v4424
        %v4489 = vmul.f32 %v3969, %v4425
        %v4490 = vmul.f32 %v3971, %v4426
        %v4491 = vmul.f32 %v3974, %v4427
        %v4492 = vmul.f32 %v3976, %v4428
        %v4493 = vmul.f32 %v4084, %v4429
        %v4494 = vmul.f32 %v4086, %v4430
        %v4495 = vmul.f32 %v4089, %v4431
        %v4496 = vmul.f32 %v4091, %v4432
        %v4497 = vmul.f32 %v4094, %v4433
        %v4498 = vmul.f32 %v4096, %v4434
        %v4499 = vmul.f32 %v4099, %v4435
        %v4500 = vmul.f32 %v4101, %v4436
        %v4501 = vmul.f32 %v4104, %v4437
        %v4502 = vmul.f32 %v4106, %v4438
        %v4503 = vmul.f32 %v4109, %v4439
        %v4504 = vmul.f32 %v4111, %v4440
        %v4505 = vmul.f32 %v4114, %v4441
        %v4506 = vmul.f32 %v4116, %v4442
        %v4507 = vmul.f32 %v4119, %v4443
        %v4508 = vmul.f32 %v4121, %v4444
        %v4509 = vmul.f32 %v4229, %v4445
        %v4510 = vmul.f32 %v4231, %v4446
        %v4511 = vmul.f32 %v4234, %v4447
        %v4512 = vmul.f32 %v4236, %v4448
        %v4513 = vmul.f32 %v4239, %v4449
        %v4514 = vmul.f32 %v4241, %v4450
        %v4515 = vmul.f32 %v4244, %v4451
        %v4516 = vmul.f32 %v4246, %v4452
        %v4517 = vmul.f32 %v4249, %v4453
        %v4518 = vmul.f32 %v4251, %v4454
        %v4519 = vmul.f32 %v4254, %v4455
        %v4520 = vmul.f32 %v4256, %v4456
        %v4521 = vmul.f32 %v4259, %v4457
        %v4522 = vmul.f32 %v4261, %v4458
        %v4523 = vmul.f32 %v4264, %v4459
        %v4524 = vmul.f32 %v4266, %v4460
        %v4525 = vmul.f32 %v4374, %v4461
        %v4526 = vmul.f32 %v4376, %v4462
        %v4527 = vmul.f32 %v4379, %v4463
        %v4528 = vmul.f32 %v4381, %v4464
        %v4529 = vmul.f32 %v4384, %v4465
        %v4530 = vmul.f32 %v4386, %v4466
        %v4531 = vmul.f32 %v4389, %v4467
        %v4532 = vmul.f32 %v4391, %v4468
        %v4533 = vmul.f32 %v4394, %v4469
        %v4534 = vmul.f32 %v4396, %v4470
        %v4535 = vmul.f32 %v4399, %v4471
        %v4536 = vmul.f32 %v4401, %v4472
        %v4537 = vmul.f32 %v4404, %v4473
        %v4538 = vmul.f32 %v4406, %v4474
        %v4539 = vmul.f32 %v4409, %v4475
        %v4540 = vmul.f32 %v4411, %v4476
        %v4541 = vpack.c.bf16 %v4477, %v4477
        %v4542 = vpack.c.bf16 %v4478, %v4478
        %v4543 = vpack.c.bf16 %v4479, %v4479
        %v4544 = vpack.c.bf16 %v4480, %v4480
        %v4545 = vpack.c.bf16 %v4481, %v4481
        %v4546 = vpack.c.bf16 %v4482, %v4482
        %v4547 = vpack.c.bf16 %v4483, %v4483
        %v4548 = vpack.c.bf16 %v4484, %v4484
        %v4549 = vpack.c.bf16 %v4485, %v4485
        %v4550 = vpack.c.bf16 %v4486, %v4486
        %v4551 = vpack.c.bf16 %v4487, %v4487
        %v4552 = vpack.c.bf16 %v4488, %v4488
        %v4553 = vpack.c.bf16 %v4489, %v4489
        %v4554 = vpack.c.bf16 %v4490, %v4490
        %v4555 = vpack.c.bf16 %v4491, %v4491
        %v4556 = vpack.c.bf16 %v4492, %v4492
        %v4557 = vpack.c.bf16 %v4493, %v4493
        %v4558 = vpack.c.bf16 %v4494, %v4494
        %v4559 = vpack.c.bf16 %v4495, %v4495
        %v4560 = vpack.c.bf16 %v4496, %v4496
        %v4561 = vpack.c.bf16 %v4497, %v4497
        %v4562 = vpack.c.bf16 %v4498, %v4498
        %v4563 = vpack.c.bf16 %v4499, %v4499
        %v4564 = vpack.c.bf16 %v4500, %v4500
        %v4565 = vpack.c.bf16 %v4501, %v4501
        %v4566 = vpack.c.bf16 %v4502, %v4502
        %v4567 = vpack.c.bf16 %v4503, %v4503
        %v4568 = vpack.c.bf16 %v4504, %v4504
        %v4569 = vpack.c.bf16 %v4505, %v4505
        %v4570 = vpack.c.bf16 %v4506, %v4506
        %v4571 = vpack.c.bf16 %v4507, %v4507
        %v4572 = vpack.c.bf16 %v4508, %v4508
        %v4573 = vpack.c.bf16 %v4509, %v4509
        %v4574 = vpack.c.bf16 %v4510, %v4510
        %v4575 = vpack.c.bf16 %v4511, %v4511
        %v4576 = vpack.c.bf16 %v4512, %v4512
        %v4577 = vpack.c.bf16 %v4513, %v4513
        %v4578 = vpack.c.bf16 %v4514, %v4514
        %v4579 = vpack.c.bf16 %v4515, %v4515
        %v4580 = vpack.c.bf16 %v4516, %v4516
        %v4581 = vpack.c.bf16 %v4517, %v4517
        %v4582 = vpack.c.bf16 %v4518, %v4518
        %v4583 = vpack.c.bf16 %v4519, %v4519
        %v4584 = vpack.c.bf16 %v4520, %v4520
        %v4585 = vpack.c.bf16 %v4521, %v4521
        %v4586 = vpack.c.bf16 %v4522, %v4522
        %v4587 = vpack.c.bf16 %v4523, %v4523
        %v4588 = vpack.c.bf16 %v4524, %v4524
        %v4589 = vpack.c.bf16 %v4525, %v4525
        %v4590 = vpack.c.bf16 %v4526, %v4526
        %v4591 = vpack.c.bf16 %v4527, %v4527
        %v4592 = vpack.c.bf16 %v4528, %v4528
        %v4593 = vpack.c.bf16 %v4529, %v4529
        %v4594 = vpack.c.bf16 %v4530, %v4530
        %v4595 = vpack.c.bf16 %v4531, %v4531
        %v4596 = vpack.c.bf16 %v4532, %v4532
        %v4597 = vpack.c.bf16 %v4533, %v4533
        %v4598 = vpack.c.bf16 %v4534, %v4534
        %v4599 = vpack.c.bf16 %v4535, %v4535
        %v4600 = vpack.c.bf16 %v4536, %v4536
        %v4601 = vpack.c.bf16 %v4537, %v4537
        %v4602 = vpack.c.bf16 %v4538, %v4538
        %v4603 = vpack.c.bf16 %v4539, %v4539
        %v4604 = vpack.c.bf16 %v4540, %v4540
        %v4621 = vunpack.c.l.b16 %v4541
        %v4622 = vunpack.c.l.b16 %v4542
        %v4623 = vunpack.c.l.b16 %v4543
        %v4624 = vunpack.c.l.b16 %v4544
        %v4625 = vunpack.c.l.b16 %v4545
        %v4626 = vunpack.c.l.b16 %v4546
        %v4627 = vunpack.c.l.b16 %v4547
        %v4628 = vunpack.c.l.b16 %v4548
        %v4629 = vunpack.c.l.b16 %v4549
        %v4630 = vunpack.c.l.b16 %v4550
        %v4631 = vunpack.c.l.b16 %v4551
        %v4632 = vunpack.c.l.b16 %v4552
        %v4633 = vunpack.c.l.b16 %v4553
        %v4634 = vunpack.c.l.b16 %v4554
        %v4635 = vunpack.c.l.b16 %v4555
        %v4636 = vunpack.c.l.b16 %v4556
        %v4637 = vpack.c.b16 %v4622, %v4621
        %v4638 = vpack.c.b16 %v4624, %v4623
        %v4639 = vpack.c.b16 %v4626, %v4625
        %v4640 = vpack.c.b16 %v4628, %v4627
        %v4641 = vpack.c.b16 %v4630, %v4629
        %v4642 = vpack.c.b16 %v4632, %v4631
        %v4643 = vpack.c.b16 %v4634, %v4633
        %v4644 = vpack.c.b16 %v4636, %v4635
        %v4661 = vunpack.c.l.b16 %v4557
        %v4662 = vunpack.c.l.b16 %v4558
        %v4663 = vunpack.c.l.b16 %v4559
        %v4664 = vunpack.c.l.b16 %v4560
        %v4665 = vunpack.c.l.b16 %v4561
        %v4666 = vunpack.c.l.b16 %v4562
        %v4667 = vunpack.c.l.b16 %v4563
        %v4668 = vunpack.c.l.b16 %v4564
        %v4669 = vunpack.c.l.b16 %v4565
        %v4670 = vunpack.c.l.b16 %v4566
        %v4671 = vunpack.c.l.b16 %v4567
        %v4672 = vunpack.c.l.b16 %v4568
        %v4673 = vunpack.c.l.b16 %v4569
        %v4674 = vunpack.c.l.b16 %v4570
        %v4675 = vunpack.c.l.b16 %v4571
        %v4676 = vunpack.c.l.b16 %v4572
        %v4677 = vpack.c.b16 %v4662, %v4661
        %v4678 = vpack.c.b16 %v4664, %v4663
        %v4679 = vpack.c.b16 %v4666, %v4665
        %v4680 = vpack.c.b16 %v4668, %v4667
        %v4681 = vpack.c.b16 %v4670, %v4669
        %v4682 = vpack.c.b16 %v4672, %v4671
        %v4683 = vpack.c.b16 %v4674, %v4673
        %v4684 = vpack.c.b16 %v4676, %v4675
        %4685 = vrot.lane.b32.xlu0 %v4677, 32
        %v4686 = vpop.permute.xlu0 %4685
        %4687 = vrot.lane.b32.xlu0 %v4678, 32
        %v4688 = vpop.permute.xlu0 %4687
        %4689 = vrot.lane.b32.xlu0 %v4679, 32
        %v4690 = vpop.permute.xlu0 %4689
        %4691 = vrot.lane.b32.xlu0 %v4680, 32
        %v4692 = vpop.permute.xlu0 %4691
        %4693 = vrot.lane.b32.xlu0 %v4681, 32
        %v4694 = vpop.permute.xlu0 %4693
        %4695 = vrot.lane.b32.xlu0 %v4682, 32
        %v4696 = vpop.permute.xlu0 %4695
        %4697 = vrot.lane.b32.xlu0 %v4683, 32
        %v4698 = vpop.permute.xlu0 %4697
        %4699 = vrot.lane.b32.xlu0 %v4684, 32
        %v4700 = vpop.permute.xlu0 %4699
        %v4717 = vunpack.c.l.b16 %v4573
        %v4718 = vunpack.c.l.b16 %v4574
        %v4719 = vunpack.c.l.b16 %v4575
        %v4720 = vunpack.c.l.b16 %v4576
        %v4721 = vunpack.c.l.b16 %v4577
        %v4722 = vunpack.c.l.b16 %v4578
        %v4723 = vunpack.c.l.b16 %v4579
        %v4724 = vunpack.c.l.b16 %v4580
        %v4725 = vunpack.c.l.b16 %v4581
        %v4726 = vunpack.c.l.b16 %v4582
        %v4727 = vunpack.c.l.b16 %v4583
        %v4728 = vunpack.c.l.b16 %v4584
        %v4729 = vunpack.c.l.b16 %v4585
        %v4730 = vunpack.c.l.b16 %v4586
        %v4731 = vunpack.c.l.b16 %v4587
        %v4732 = vunpack.c.l.b16 %v4588
        %v4733 = vpack.c.b16 %v4718, %v4717
        %v4734 = vpack.c.b16 %v4720, %v4719
        %v4735 = vpack.c.b16 %v4722, %v4721
        %v4736 = vpack.c.b16 %v4724, %v4723
        %v4737 = vpack.c.b16 %v4726, %v4725
        %v4738 = vpack.c.b16 %v4728, %v4727
        %v4739 = vpack.c.b16 %v4730, %v4729
        %v4740 = vpack.c.b16 %v4732, %v4731
        %4741 = vrot.lane.b32.xlu0 %v4733, 64
        %v4742 = vpop.permute.xlu0 %4741
        %4743 = vrot.lane.b32.xlu0 %v4734, 64
        %v4744 = vpop.permute.xlu0 %4743
        %4745 = vrot.lane.b32.xlu0 %v4735, 64
        %v4746 = vpop.permute.xlu0 %4745
        %4747 = vrot.lane.b32.xlu0 %v4736, 64
        %v4748 = vpop.permute.xlu0 %4747
        %4749 = vrot.lane.b32.xlu0 %v4737, 64
        %v4750 = vpop.permute.xlu0 %4749
        %4751 = vrot.lane.b32.xlu0 %v4738, 64
        %v4752 = vpop.permute.xlu0 %4751
        %4753 = vrot.lane.b32.xlu0 %v4739, 64
        %v4754 = vpop.permute.xlu0 %4753
        %4755 = vrot.lane.b32.xlu0 %v4740, 64
        %v4756 = vpop.permute.xlu0 %4755
        %v4773 = vunpack.c.l.b16 %v4589
        %v4774 = vunpack.c.l.b16 %v4590
        %v4775 = vunpack.c.l.b16 %v4591
        %v4776 = vunpack.c.l.b16 %v4592
        %v4777 = vunpack.c.l.b16 %v4593
        %v4778 = vunpack.c.l.b16 %v4594
        %v4779 = vunpack.c.l.b16 %v4595
        %v4780 = vunpack.c.l.b16 %v4596
        %v4781 = vunpack.c.l.b16 %v4597
        %v4782 = vunpack.c.l.b16 %v4598
        %v4783 = vunpack.c.l.b16 %v4599
        %v4784 = vunpack.c.l.b16 %v4600
        %v4785 = vunpack.c.l.b16 %v4601
        %v4786 = vunpack.c.l.b16 %v4602
        %v4787 = vunpack.c.l.b16 %v4603
        %v4788 = vunpack.c.l.b16 %v4604
        %v4789 = vpack.c.b16 %v4774, %v4773
        %v4790 = vpack.c.b16 %v4776, %v4775
        %v4791 = vpack.c.b16 %v4778, %v4777
        %v4792 = vpack.c.b16 %v4780, %v4779
        %v4793 = vpack.c.b16 %v4782, %v4781
        %v4794 = vpack.c.b16 %v4784, %v4783
        %v4795 = vpack.c.b16 %v4786, %v4785
        %v4796 = vpack.c.b16 %v4788, %v4787
        %4797 = vrot.lane.b32.xlu0 %v4789, 96
        %v4798 = vpop.permute.xlu0 %4797
        %4799 = vrot.lane.b32.xlu0 %v4790, 96
        %v4800 = vpop.permute.xlu0 %4799
        %4801 = vrot.lane.b32.xlu0 %v4791, 96
        %v4802 = vpop.permute.xlu0 %4801
        %4803 = vrot.lane.b32.xlu0 %v4792, 96
        %v4804 = vpop.permute.xlu0 %4803
        %4805 = vrot.lane.b32.xlu0 %v4793, 96
        %v4806 = vpop.permute.xlu0 %4805
        %4807 = vrot.lane.b32.xlu0 %v4794, 96
        %v4808 = vpop.permute.xlu0 %4807
        %4809 = vrot.lane.b32.xlu0 %v4795, 96
        %v4810 = vpop.permute.xlu0 %4809
        %4811 = vrot.lane.b32.xlu0 %v4796, 96
        %v4812 = vpop.permute.xlu0 %4811
        %v4815 = vsel %vm2676, %v4637, %v4686
        %v4818 = vsel %vm2676, %v4638, %v4688
        %v4821 = vsel %vm2676, %v4639, %v4690
        %v4824 = vsel %vm2676, %v4640, %v4692
        %v4827 = vsel %vm2676, %v4641, %v4694
        %v4830 = vsel %vm2676, %v4642, %v4696
        %v4833 = vsel %vm2676, %v4643, %v4698
        %v4836 = vsel %vm2676, %v4644, %v4700
        %vm4837 = vcmask 523264
        %v4839 = vsel %vm4837, %v4815, %v4742
        %v4841 = vsel %vm4837, %v4818, %v4744
        %v4843 = vsel %vm4837, %v4821, %v4746
        %v4845 = vsel %vm4837, %v4824, %v4748
        %v4847 = vsel %vm4837, %v4827, %v4750
        %v4849 = vsel %vm4837, %v4830, %v4752
        %v4851 = vsel %vm4837, %v4833, %v4754
        %v4853 = vsel %vm4837, %v4836, %v4756
        %vm4854 = vcmask 785408
        %v4856 = vsel %vm4854, %v4839, %v4798
        %v4859 = vsel %vm4854, %v4841, %v4800
        %v4862 = vsel %vm4854, %v4843, %v4802
        %v4865 = vsel %vm4854, %v4845, %v4804
        %v4868 = vsel %vm4854, %v4847, %v4806
        %v4871 = vsel %vm4854, %v4849, %v4808
        %v4874 = vsel %vm4854, %v4851, %v4810
        %v4877 = vsel %vm4854, %v4853, %v4812
        %v4879 = vld [vmem:[#allocation18] sm:$0xf]
        %v4880 = vld [vmem:[#allocation18 + $0x4] sm:$0xf]
        %v4881 = vld [vmem:[#allocation18 + $0x8] sm:$0xf]
        %v4882 = vld [vmem:[#allocation18 + $0xc] sm:$0xf]
        %v4883 = vld [vmem:[#allocation18 + $0x10] sm:$0xf]
        %v4884 = vld [vmem:[#allocation18 + $0x14] sm:$0xf]
        %v4885 = vld [vmem:[#allocation18 + $0x18] sm:$0xf]
        %v4886 = vld [vmem:[#allocation18 + $0x1c] sm:$0xf]
        %v4887 = vld [vmem:[#allocation18 + $0x20] sm:$0xf]
        %v4888 = vld [vmem:[#allocation18 + $0x24] sm:$0xf]
        %v4889 = vld [vmem:[#allocation18 + $0x28] sm:$0xf]
        %v4890 = vld [vmem:[#allocation18 + $0x2c] sm:$0xf]
        %v4891 = vld [vmem:[#allocation18 + $0x30] sm:$0xf]
        %v4892 = vld [vmem:[#allocation18 + $0x34] sm:$0xf]
        %v4893 = vld [vmem:[#allocation18 + $0x38] sm:$0xf]
        %v4894 = vld [vmem:[#allocation18 + $0x3c] sm:$0xf]
        %v4895 = vld [vmem:[%s11] sm:$0x1]
        %v4897 = vperm.slane %v4895, 0
        %v4915 = vunpack.c.l.b16 %v4879
        %v4916 = vunpack.c.l.b16 %v4880
        %v4917 = vunpack.c.l.b16 %v4881
        %v4918 = vunpack.c.l.b16 %v4882
        %v4919 = vunpack.c.l.b16 %v4883
        %v4920 = vunpack.c.l.b16 %v4884
        %v4921 = vunpack.c.l.b16 %v4885
        %v4922 = vunpack.c.l.b16 %v4886
        %v4923 = vunpack.c.l.b16 %v4887
        %v4924 = vunpack.c.l.b16 %v4888
        %v4925 = vunpack.c.l.b16 %v4889
        %v4926 = vunpack.c.l.b16 %v4890
        %v4927 = vunpack.c.l.b16 %v4891
        %v4928 = vunpack.c.l.b16 %v4892
        %v4929 = vunpack.c.l.b16 %v4893
        %v4930 = vunpack.c.l.b16 %v4894
        %v4931 = vpack.c.b16 %v4916, %v4915
        %v4932 = vpack.c.b16 %v4918, %v4917
        %v4933 = vpack.c.b16 %v4920, %v4919
        %v4934 = vpack.c.b16 %v4922, %v4921
        %v4935 = vpack.c.b16 %v4924, %v4923
        %v4936 = vpack.c.b16 %v4926, %v4925
        %v4937 = vpack.c.b16 %v4928, %v4927
        %v4938 = vpack.c.b16 %v4930, %v4929
        %4947 = vmatpush.bf16.msra.mxu0 %v4938
        %4948 = vmatpush.bf16.msra.mxu0 %v4937
        %4949 = vmatpush.bf16.msra.mxu0 %v4936
        %4950 = vmatpush.bf16.msra.mxu0 %v4935
        %4951 = vmatpush.bf16.msra.mxu0 %v4934
        %4952 = vmatpush.bf16.msra.mxu0 %v4933
        %4953 = vmatpush.bf16.msra.mxu0 %v4932
        %4954 = vmatpush.bf16.msra.mxu0 %v4931
        %4955 = vmatmul.bf16.gmra.mxu0 %v4856
        %v4956 = vpop.f32.mrf.mxu0
        %v4957 = vadd.f32 %v4897, %v4956
        %v4958 = vpop.f32.mrf.mxu0
        %v4959 = vadd.f32 %v4897, %v4958
        %4960 = vmatmul.bf16.gmra.mxu0 %v4859
        %v4961 = vpop.f32.mrf.mxu0
        %v4962 = vadd.f32 %v4897, %v4961
        %v4963 = vpop.f32.mrf.mxu0
        %v4964 = vadd.f32 %v4897, %v4963
        %4965 = vmatmul.bf16.gmra.mxu0 %v4862
        %v4966 = vpop.f32.mrf.mxu0
        %v4967 = vadd.f32 %v4897, %v4966
        %v4968 = vpop.f32.mrf.mxu0
        %v4969 = vadd.f32 %v4897, %v4968
        %4970 = vmatmul.bf16.gmra.mxu0 %v4865
        %v4971 = vpop.f32.mrf.mxu0
        %v4972 = vadd.f32 %v4897, %v4971
        %v4973 = vpop.f32.mrf.mxu0
        %v4974 = vadd.f32 %v4897, %v4973
        %4975 = vmatmul.bf16.gmra.mxu0 %v4868
        %v4976 = vpop.f32.mrf.mxu0
        %v4977 = vadd.f32 %v4897, %v4976
        %v4978 = vpop.f32.mrf.mxu0
        %v4979 = vadd.f32 %v4897, %v4978
        %4980 = vmatmul.bf16.gmra.mxu0 %v4871
        %v4981 = vpop.f32.mrf.mxu0
        %v4982 = vadd.f32 %v4897, %v4981
        %v4983 = vpop.f32.mrf.mxu0
        %v4984 = vadd.f32 %v4897, %v4983
        %4985 = vmatmul.bf16.gmra.mxu0 %v4874
        %v4986 = vpop.f32.mrf.mxu0
        %v4987 = vadd.f32 %v4897, %v4986
        %v4988 = vpop.f32.mrf.mxu0
        %v4989 = vadd.f32 %v4897, %v4988
        %4990 = vmatmul.bf16.gmra.mxu0 %v4877
        %v4991 = vpop.f32.mrf.mxu0
        %v4992 = vadd.f32 %v4897, %v4991
        %v4993 = vpop.f32.mrf.mxu0
        %v4994 = vadd.f32 %v4897, %v4993
        %4995 = vdwg.mxu0
        %v4996 = vld [vmem:[%s12] sm:$0x1]
        %v4998 = vperm.slane %v4996, 0
        %v5000 = vmul.f32 %v4957, %v4998
        %v5001 = vmul.f32 %v4959, %v4998
        %v5002 = vmul.f32 %v4962, %v4998
        %v5003 = vmul.f32 %v4964, %v4998
        %v5004 = vmul.f32 %v4967, %v4998
        %v5005 = vmul.f32 %v4969, %v4998
        %v5006 = vmul.f32 %v4972, %v4998
        %v5007 = vmul.f32 %v4974, %v4998
        %v5008 = vmul.f32 %v4977, %v4998
        %v5009 = vmul.f32 %v4979, %v4998
        %v5010 = vmul.f32 %v4982, %v4998
        %v5011 = vmul.f32 %v4984, %v4998
        %v5012 = vmul.f32 %v4987, %v4998
        %v5013 = vmul.f32 %v4989, %v4998
        %v5014 = vmul.f32 %v4992, %v4998
        %v5015 = vmul.f32 %v4994, %v4998
        %v5016 = vadd.f32 %v1912, %v5000
        %v5017 = vadd.f32 %v1913, %v5001
        %v5018 = vadd.f32 %v1914, %v5002
        %v5019 = vadd.f32 %v1915, %v5003
        %v5020 = vadd.f32 %v1916, %v5004
        %v5021 = vadd.f32 %v1917, %v5005
        %v5022 = vadd.f32 %v1918, %v5006
        %v5023 = vadd.f32 %v1919, %v5007
        %v5024 = vadd.f32 %v1920, %v5008
        %v5025 = vadd.f32 %v1921, %v5009
        %v5026 = vadd.f32 %v1922, %v5010
        %v5027 = vadd.f32 %v1923, %v5011
        %v5028 = vadd.f32 %v1924, %v5012
        %v5029 = vadd.f32 %v1925, %v5013
        %v5030 = vadd.f32 %v1926, %v5014
        %v5031 = vadd.f32 %v1927, %v5015
        %v5032 = vld [vmem:[%s13] sm:$0x1]
        %v5033 = vld [vmem:[%s14] sm:$0x1]
        %5034 = vadd.xlane.f32.xlu0 %v5016
        %v5035 = vpop.xlane.xlu0 %5034
        %5036 = vadd.xlane.f32.xlu0 %v5017
        %v5037 = vpop.xlane.xlu0 %5036
        %5038 = vadd.xlane.f32.xlu0 %v5018
        %v5039 = vpop.xlane.xlu0 %5038
        %5040 = vadd.xlane.f32.xlu0 %v5019
        %v5041 = vpop.xlane.xlu0 %5040
        %5042 = vadd.xlane.f32.xlu0 %v5020
        %v5043 = vpop.xlane.xlu0 %5042
        %5044 = vadd.xlane.f32.xlu0 %v5021
        %v5045 = vpop.xlane.xlu0 %5044
        %5046 = vadd.xlane.f32.xlu0 %v5022
        %v5047 = vpop.xlane.xlu0 %5046
        %5048 = vadd.xlane.f32.xlu0 %v5023
        %v5049 = vpop.xlane.xlu0 %5048
        %5050 = vadd.xlane.f32.xlu0 %v5024
        %v5051 = vpop.xlane.xlu0 %5050
        %5052 = vadd.xlane.f32.xlu0 %v5025
        %v5053 = vpop.xlane.xlu0 %5052
        %5054 = vadd.xlane.f32.xlu0 %v5026
        %v5055 = vpop.xlane.xlu0 %5054
        %5056 = vadd.xlane.f32.xlu0 %v5027
        %v5057 = vpop.xlane.xlu0 %5056
        %5058 = vadd.xlane.f32.xlu0 %v5028
        %v5059 = vpop.xlane.xlu0 %5058
        %5060 = vadd.xlane.f32.xlu0 %v5029
        %v5061 = vpop.xlane.xlu0 %5060
        %5062 = vadd.xlane.f32.xlu0 %v5030
        %v5063 = vpop.xlane.xlu0 %5062
        %5064 = vadd.xlane.f32.xlu0 %v5031
        %v5065 = vpop.xlane.xlu0 %5064
        %v5066 = vmul.f32 %v5035, %v1968
        %v5067 = vmul.f32 %v5037, %v1968
        %v5068 = vmul.f32 %v5039, %v1968
        %v5069 = vmul.f32 %v5041, %v1968
        %v5070 = vmul.f32 %v5043, %v1968
        %v5071 = vmul.f32 %v5045, %v1968
        %v5072 = vmul.f32 %v5047, %v1968
        %v5073 = vmul.f32 %v5049, %v1968
        %v5074 = vmul.f32 %v5051, %v1968
        %v5075 = vmul.f32 %v5053, %v1968
        %v5076 = vmul.f32 %v5055, %v1968
        %v5077 = vmul.f32 %v5057, %v1968
        %v5078 = vmul.f32 %v5059, %v1968
        %v5079 = vmul.f32 %v5061, %v1968
        %v5080 = vmul.f32 %v5063, %v1968
        %v5081 = vmul.f32 %v5065, %v1968
        %v5082 = vsub.f32 %v5016, %v5066
        %v5083 = vsub.f32 %v5017, %v5067
        %v5084 = vsub.f32 %v5018, %v5068
        %v5085 = vsub.f32 %v5019, %v5069
        %v5086 = vsub.f32 %v5020, %v5070
        %v5087 = vsub.f32 %v5021, %v5071
        %v5088 = vsub.f32 %v5022, %v5072
        %v5089 = vsub.f32 %v5023, %v5073
        %v5090 = vsub.f32 %v5024, %v5074
        %v5091 = vsub.f32 %v5025, %v5075
        %v5092 = vsub.f32 %v5026, %v5076
        %v5093 = vsub.f32 %v5027, %v5077
        %v5094 = vsub.f32 %v5028, %v5078
        %v5095 = vsub.f32 %v5029, %v5079
        %v5096 = vsub.f32 %v5030, %v5080
        %v5097 = vsub.f32 %v5031, %v5081
        %v5098 = vmul.f32 %v5082, %v5082
        %v5099 = vmul.f32 %v5083, %v5083
        %v5100 = vmul.f32 %v5084, %v5084
        %v5101 = vmul.f32 %v5085, %v5085
        %v5102 = vmul.f32 %v5086, %v5086
        %v5103 = vmul.f32 %v5087, %v5087
        %v5104 = vmul.f32 %v5088, %v5088
        %v5105 = vmul.f32 %v5089, %v5089
        %v5106 = vmul.f32 %v5090, %v5090
        %v5107 = vmul.f32 %v5091, %v5091
        %v5108 = vmul.f32 %v5092, %v5092
        %v5109 = vmul.f32 %v5093, %v5093
        %v5110 = vmul.f32 %v5094, %v5094
        %v5111 = vmul.f32 %v5095, %v5095
        %v5112 = vmul.f32 %v5096, %v5096
        %v5113 = vmul.f32 %v5097, %v5097
        %5114 = vadd.xlane.f32.xlu0 %v5098
        %v5115 = vpop.xlane.xlu0 %5114
        %5116 = vadd.xlane.f32.xlu0 %v5099
        %v5117 = vpop.xlane.xlu0 %5116
        %5118 = vadd.xlane.f32.xlu0 %v5100
        %v5119 = vpop.xlane.xlu0 %5118
        %5120 = vadd.xlane.f32.xlu0 %v5101
        %v5121 = vpop.xlane.xlu0 %5120
        %5122 = vadd.xlane.f32.xlu0 %v5102
        %v5123 = vpop.xlane.xlu0 %5122
        %5124 = vadd.xlane.f32.xlu0 %v5103
        %v5125 = vpop.xlane.xlu0 %5124
        %5126 = vadd.xlane.f32.xlu0 %v5104
        %v5127 = vpop.xlane.xlu0 %5126
        %5128 = vadd.xlane.f32.xlu0 %v5105
        %v5129 = vpop.xlane.xlu0 %5128
        %5130 = vadd.xlane.f32.xlu0 %v5106
        %v5131 = vpop.xlane.xlu0 %5130
        %5132 = vadd.xlane.f32.xlu0 %v5107
        %v5133 = vpop.xlane.xlu0 %5132
        %5134 = vadd.xlane.f32.xlu0 %v5108
        %v5135 = vpop.xlane.xlu0 %5134
        %5136 = vadd.xlane.f32.xlu0 %v5109
        %v5137 = vpop.xlane.xlu0 %5136
        %5138 = vadd.xlane.f32.xlu0 %v5110
        %v5139 = vpop.xlane.xlu0 %5138
        %5140 = vadd.xlane.f32.xlu0 %v5111
        %v5141 = vpop.xlane.xlu0 %5140
        %5142 = vadd.xlane.f32.xlu0 %v5112
        %v5143 = vpop.xlane.xlu0 %5142
        %5144 = vadd.xlane.f32.xlu0 %v5113
        %v5145 = vpop.xlane.xlu0 %5144
        %v5146 = vmul.f32 %v5115, %v1968
        %v5147 = vmul.f32 %v5117, %v1968
        %v5148 = vmul.f32 %v5119, %v1968
        %v5149 = vmul.f32 %v5121, %v1968
        %v5150 = vmul.f32 %v5123, %v1968
        %v5151 = vmul.f32 %v5125, %v1968
        %v5152 = vmul.f32 %v5127, %v1968
        %v5153 = vmul.f32 %v5129, %v1968
        %v5154 = vmul.f32 %v5131, %v1968
        %v5155 = vmul.f32 %v5133, %v1968
        %v5156 = vmul.f32 %v5135, %v1968
        %v5157 = vmul.f32 %v5137, %v1968
        %v5158 = vmul.f32 %v5139, %v1968
        %v5159 = vmul.f32 %v5141, %v1968
        %v5160 = vmul.f32 %v5143, %v1968
        %v5161 = vmul.f32 %v5145, %v1968
        %v5162 = vadd.f32 %v5146, 1e-05
        %v5163 = vadd.f32 %v5147, 1e-05
        %v5164 = vadd.f32 %v5148, 1e-05
        %v5165 = vadd.f32 %v5149, 1e-05
        %v5166 = vadd.f32 %v5150, 1e-05
        %v5167 = vadd.f32 %v5151, 1e-05
        %v5168 = vadd.f32 %v5152, 1e-05
        %v5169 = vadd.f32 %v5153, 1e-05
        %v5170 = vadd.f32 %v5154, 1e-05
        %v5171 = vadd.f32 %v5155, 1e-05
        %v5172 = vadd.f32 %v5156, 1e-05
        %v5173 = vadd.f32 %v5157, 1e-05
        %v5174 = vadd.f32 %v5158, 1e-05
        %v5175 = vadd.f32 %v5159, 1e-05
        %v5176 = vadd.f32 %v5160, 1e-05
        %v5177 = vadd.f32 %v5161, 1e-05
        %v5178 = vrsqrt.pop %v5162
        %v5179 = vmul.f32 %v5178, %v5162
        %v5180 = vmul.f32 %v5179, %v5178
        %v5181 = vmul.f32 0.5, %v5180
        %v5182 = vsub.f32 1.5, %v5181
        %v5183 = vmul.f32 %v5178, %v5182
        %vm5184 = vweird.f32 %v5162
        %vm5185 = vweird.f32 %v5178
        %vm5186 = vmor %vm5184, %vm5185
        %v5187 = vsel %vm5186, %v5178, %v5183
        %v5188 = vrsqrt.pop %v5163
        %v5189 = vmul.f32 %v5188, %v5163
        %v5190 = vmul.f32 %v5189, %v5188
        %v5191 = vmul.f32 0.5, %v5190
        %v5192 = vsub.f32 1.5, %v5191
        %v5193 = vmul.f32 %v5188, %v5192
        %vm5194 = vweird.f32 %v5163
        %vm5195 = vweird.f32 %v5188
        %vm5196 = vmor %vm5194, %vm5195
        %v5197 = vsel %vm5196, %v5188, %v5193
        %v5198 = vrsqrt.pop %v5164
        %v5199 = vmul.f32 %v5198, %v5164
        %v5200 = vmul.f32 %v5199, %v5198
        %v5201 = vmul.f32 0.5, %v5200
        %v5202 = vsub.f32 1.5, %v5201
        %v5203 = vmul.f32 %v5198, %v5202
        %vm5204 = vweird.f32 %v5164
        %vm5205 = vweird.f32 %v5198
        %vm5206 = vmor %vm5204, %vm5205
        %v5207 = vsel %vm5206, %v5198, %v5203
        %v5208 = vrsqrt.pop %v5165
        %v5209 = vmul.f32 %v5208, %v5165
        %v5210 = vmul.f32 %v5209, %v5208
        %v5211 = vmul.f32 0.5, %v5210
        %v5212 = vsub.f32 1.5, %v5211
        %v5213 = vmul.f32 %v5208, %v5212
        %vm5214 = vweird.f32 %v5165
        %vm5215 = vweird.f32 %v5208
        %vm5216 = vmor %vm5214, %vm5215
        %v5217 = vsel %vm5216, %v5208, %v5213
        %v5218 = vrsqrt.pop %v5166
        %v5219 = vmul.f32 %v5218, %v5166
        %v5220 = vmul.f32 %v5219, %v5218
        %v5221 = vmul.f32 0.5, %v5220
        %v5222 = vsub.f32 1.5, %v5221
        %v5223 = vmul.f32 %v5218, %v5222
        %vm5224 = vweird.f32 %v5166
        %vm5225 = vweird.f32 %v5218
        %vm5226 = vmor %vm5224, %vm5225
        %v5227 = vsel %vm5226, %v5218, %v5223
        %v5228 = vrsqrt.pop %v5167
        %v5229 = vmul.f32 %v5228, %v5167
        %v5230 = vmul.f32 %v5229, %v5228
        %v5231 = vmul.f32 0.5, %v5230
        %v5232 = vsub.f32 1.5, %v5231
        %v5233 = vmul.f32 %v5228, %v5232
        %vm5234 = vweird.f32 %v5167
        %vm5235 = vweird.f32 %v5228
        %vm5236 = vmor %vm5234, %vm5235
        %v5237 = vsel %vm5236, %v5228, %v5233
        %v5238 = vrsqrt.pop %v5168
        %v5239 = vmul.f32 %v5238, %v5168
        %v5240 = vmul.f32 %v5239, %v5238
        %v5241 = vmul.f32 0.5, %v5240
        %v5242 = vsub.f32 1.5, %v5241
        %v5243 = vmul.f32 %v5238, %v5242
        %vm5244 = vweird.f32 %v5168
        %vm5245 = vweird.f32 %v5238
        %vm5246 = vmor %vm5244, %vm5245
        %v5247 = vsel %vm5246, %v5238, %v5243
        %v5248 = vrsqrt.pop %v5169
        %v5249 = vmul.f32 %v5248, %v5169
        %v5250 = vmul.f32 %v5249, %v5248
        %v5251 = vmul.f32 0.5, %v5250
        %v5252 = vsub.f32 1.5, %v5251
        %v5253 = vmul.f32 %v5248, %v5252
        %vm5254 = vweird.f32 %v5169
        %vm5255 = vweird.f32 %v5248
        %vm5256 = vmor %vm5254, %vm5255
        %v5257 = vsel %vm5256, %v5248, %v5253
        %v5258 = vrsqrt.pop %v5170
        %v5259 = vmul.f32 %v5258, %v5170
        %v5260 = vmul.f32 %v5259, %v5258
        %v5261 = vmul.f32 0.5, %v5260
        %v5262 = vsub.f32 1.5, %v5261
        %v5263 = vmul.f32 %v5258, %v5262
        %vm5264 = vweird.f32 %v5170
        %vm5265 = vweird.f32 %v5258
        %vm5266 = vmor %vm5264, %vm5265
        %v5267 = vsel %vm5266, %v5258, %v5263
        %v5268 = vrsqrt.pop %v5171
        %v5269 = vmul.f32 %v5268, %v5171
        %v5270 = vmul.f32 %v5269, %v5268
        %v5271 = vmul.f32 0.5, %v5270
        %v5272 = vsub.f32 1.5, %v5271
        %v5273 = vmul.f32 %v5268, %v5272
        %vm5274 = vweird.f32 %v5171
        %vm5275 = vweird.f32 %v5268
        %vm5276 = vmor %vm5274, %vm5275
        %v5277 = vsel %vm5276, %v5268, %v5273
        %v5278 = vrsqrt.pop %v5172
        %v5279 = vmul.f32 %v5278, %v5172
        %v5280 = vmul.f32 %v5279, %v5278
        %v5281 = vmul.f32 0.5, %v5280
        %v5282 = vsub.f32 1.5, %v5281
        %v5283 = vmul.f32 %v5278, %v5282
        %vm5284 = vweird.f32 %v5172
        %vm5285 = vweird.f32 %v5278
        %vm5286 = vmor %vm5284, %vm5285
        %v5287 = vsel %vm5286, %v5278, %v5283
        %v5288 = vrsqrt.pop %v5173
        %v5289 = vmul.f32 %v5288, %v5173
        %v5290 = vmul.f32 %v5289, %v5288
        %v5291 = vmul.f32 0.5, %v5290
        %v5292 = vsub.f32 1.5, %v5291
        %v5293 = vmul.f32 %v5288, %v5292
        %vm5294 = vweird.f32 %v5173
        %vm5295 = vweird.f32 %v5288
        %vm5296 = vmor %vm5294, %vm5295
        %v5297 = vsel %vm5296, %v5288, %v5293
        %v5298 = vrsqrt.pop %v5174
        %v5299 = vmul.f32 %v5298, %v5174
        %v5300 = vmul.f32 %v5299, %v5298
        %v5301 = vmul.f32 0.5, %v5300
        %v5302 = vsub.f32 1.5, %v5301
        %v5303 = vmul.f32 %v5298, %v5302
        %vm5304 = vweird.f32 %v5174
        %vm5305 = vweird.f32 %v5298
        %vm5306 = vmor %vm5304, %vm5305
        %v5307 = vsel %vm5306, %v5298, %v5303
        %v5308 = vrsqrt.pop %v5175
        %v5309 = vmul.f32 %v5308, %v5175
        %v5310 = vmul.f32 %v5309, %v5308
        %v5311 = vmul.f32 0.5, %v5310
        %v5312 = vsub.f32 1.5, %v5311
        %v5313 = vmul.f32 %v5308, %v5312
        %vm5314 = vweird.f32 %v5175
        %vm5315 = vweird.f32 %v5308
        %vm5316 = vmor %vm5314, %vm5315
        %v5317 = vsel %vm5316, %v5308, %v5313
        %v5318 = vrsqrt.pop %v5176
        %v5319 = vmul.f32 %v5318, %v5176
        %v5320 = vmul.f32 %v5319, %v5318
        %v5321 = vmul.f32 0.5, %v5320
        %v5322 = vsub.f32 1.5, %v5321
        %v5323 = vmul.f32 %v5318, %v5322
        %vm5324 = vweird.f32 %v5176
        %vm5325 = vweird.f32 %v5318
        %vm5326 = vmor %vm5324, %vm5325
        %v5327 = vsel %vm5326, %v5318, %v5323
        %v5328 = vrsqrt.pop %v5177
        %v5329 = vmul.f32 %v5328, %v5177
        %v5330 = vmul.f32 %v5329, %v5328
        %v5331 = vmul.f32 0.5, %v5330
        %v5332 = vsub.f32 1.5, %v5331
        %v5333 = vmul.f32 %v5328, %v5332
        %vm5334 = vweird.f32 %v5177
        %vm5335 = vweird.f32 %v5328
        %vm5336 = vmor %vm5334, %vm5335
        %v5337 = vsel %vm5336, %v5328, %v5333
        %v5338 = vmul.f32 %v5082, %v5187
        %v5339 = vmul.f32 %v5083, %v5197
        %v5340 = vmul.f32 %v5084, %v5207
        %v5341 = vmul.f32 %v5085, %v5217
        %v5342 = vmul.f32 %v5086, %v5227
        %v5343 = vmul.f32 %v5087, %v5237
        %v5344 = vmul.f32 %v5088, %v5247
        %v5345 = vmul.f32 %v5089, %v5257
        %v5346 = vmul.f32 %v5090, %v5267
        %v5347 = vmul.f32 %v5091, %v5277
        %v5348 = vmul.f32 %v5092, %v5287
        %v5349 = vmul.f32 %v5093, %v5297
        %v5350 = vmul.f32 %v5094, %v5307
        %v5351 = vmul.f32 %v5095, %v5317
        %v5352 = vmul.f32 %v5096, %v5327
        %v5353 = vmul.f32 %v5097, %v5337
        %v5355 = vperm.slane %v5032, 0
        %v5357 = vmul.f32 %v5338, %v5355
        %v5358 = vmul.f32 %v5339, %v5355
        %v5359 = vmul.f32 %v5340, %v5355
        %v5360 = vmul.f32 %v5341, %v5355
        %v5361 = vmul.f32 %v5342, %v5355
        %v5362 = vmul.f32 %v5343, %v5355
        %v5363 = vmul.f32 %v5344, %v5355
        %v5364 = vmul.f32 %v5345, %v5355
        %v5365 = vmul.f32 %v5346, %v5355
        %v5366 = vmul.f32 %v5347, %v5355
        %v5367 = vmul.f32 %v5348, %v5355
        %v5368 = vmul.f32 %v5349, %v5355
        %v5369 = vmul.f32 %v5350, %v5355
        %v5370 = vmul.f32 %v5351, %v5355
        %v5371 = vmul.f32 %v5352, %v5355
        %v5372 = vmul.f32 %v5353, %v5355
        %v5374 = vperm.slane %v5033, 0
        %v5376 = vadd.f32 %v5357, %v5374
        %v5377 = vadd.f32 %v5358, %v5374
        %v5378 = vadd.f32 %v5359, %v5374
        %v5379 = vadd.f32 %v5360, %v5374
        %v5380 = vadd.f32 %v5361, %v5374
        %v5381 = vadd.f32 %v5362, %v5374
        %v5382 = vadd.f32 %v5363, %v5374
        %v5383 = vadd.f32 %v5364, %v5374
        %v5384 = vadd.f32 %v5365, %v5374
        %v5385 = vadd.f32 %v5366, %v5374
        %v5386 = vadd.f32 %v5367, %v5374
        %v5387 = vadd.f32 %v5368, %v5374
        %v5388 = vadd.f32 %v5369, %v5374
        %v5389 = vadd.f32 %v5370, %v5374
        %v5390 = vadd.f32 %v5371, %v5374
        %v5391 = vadd.f32 %v5372, %v5374
        %v5392 = vpack.c.bf16 %v5377, %v5376
        %v5393 = vpack.c.bf16 %v5379, %v5378
        %v5394 = vpack.c.bf16 %v5381, %v5380
        %v5395 = vpack.c.bf16 %v5383, %v5382
        %v5396 = vpack.c.bf16 %v5385, %v5384
        %v5397 = vpack.c.bf16 %v5387, %v5386
        %v5398 = vpack.c.bf16 %v5389, %v5388
        %v5399 = vpack.c.bf16 %v5391, %v5390
        %v5400 = vld [vmem:[#allocation19] sm:$0xff]
        %v5401 = vld [vmem:[#allocation19 + $0x8] sm:$0xff]
        %v5402 = vld [vmem:[#allocation19 + $0x10] sm:$0xff]
        %v5403 = vld [vmem:[#allocation19 + $0x18] sm:$0xff]
        %v5404 = vld [vmem:[#allocation19 + $0x20] sm:$0xff]
        %v5405 = vld [vmem:[#allocation19 + $0x28] sm:$0xff]
        %v5406 = vld [vmem:[#allocation19 + $0x30] sm:$0xff]
        %v5407 = vld [vmem:[#allocation19 + $0x38] sm:$0xff]
        %v5408 = vld [vmem:[#allocation19 + $0x40] sm:$0xff]
        %v5409 = vld [vmem:[#allocation19 + $0x48] sm:$0xff]
        %v5410 = vld [vmem:[#allocation19 + $0x50] sm:$0xff]
        %v5411 = vld [vmem:[#allocation19 + $0x58] sm:$0xff]
        %v5412 = vld [vmem:[#allocation19 + $0x60] sm:$0xff]
        %v5413 = vld [vmem:[#allocation19 + $0x68] sm:$0xff]
        %v5414 = vld [vmem:[#allocation19 + $0x70] sm:$0xff]
        %v5415 = vld [vmem:[#allocation19 + $0x78] sm:$0xff]
        %v5416 = vld [vmem:[#allocation19 + $0x80] sm:$0xff]
        %v5417 = vld [vmem:[#allocation19 + $0x88] sm:$0xff]
        %v5418 = vld [vmem:[#allocation19 + $0x90] sm:$0xff]
        %v5419 = vld [vmem:[#allocation19 + $0x98] sm:$0xff]
        %v5420 = vld [vmem:[#allocation19 + $0xa0] sm:$0xff]
        %v5421 = vld [vmem:[#allocation19 + $0xa8] sm:$0xff]
        %v5422 = vld [vmem:[#allocation19 + $0xb0] sm:$0xff]
        %v5423 = vld [vmem:[#allocation19 + $0xb8] sm:$0xff]
        %v5424 = vld [vmem:[#allocation19 + $0xc0] sm:$0xff]
        %v5425 = vld [vmem:[#allocation19 + $0xc8] sm:$0xff]
        %v5426 = vld [vmem:[#allocation19 + $0xd0] sm:$0xff]
        %v5427 = vld [vmem:[#allocation19 + $0xd8] sm:$0xff]
        %v5428 = vld [vmem:[#allocation19 + $0xe0] sm:$0xff]
        %v5429 = vld [vmem:[#allocation19 + $0xe8] sm:$0xff]
        %v5430 = vld [vmem:[#allocation19 + $0xf0] sm:$0xff]
        %v5431 = vld [vmem:[#allocation19 + $0xf8] sm:$0xff]
        %v5432 = vld [vmem:[%s16] sm:$0xf]
        %v5434 = vperm.slane %v5432, 0
        %v5435 = vperm.slane %v5432, 1
        %v5436 = vperm.slane %v5432, 2
        %v5437 = vperm.slane %v5432, 3
        %v5474 = vunpack.c.l.b16 %v5400
        %v5475 = vunpack.c.h.b16 %v5400
        %v5476 = vunpack.c.l.b16 %v5401
        %v5477 = vunpack.c.h.b16 %v5401
        %v5478 = vunpack.c.l.b16 %v5402
        %v5479 = vunpack.c.h.b16 %v5402
        %v5480 = vunpack.c.l.b16 %v5403
        %v5481 = vunpack.c.h.b16 %v5403
        %v5482 = vunpack.c.l.b16 %v5404
        %v5483 = vunpack.c.h.b16 %v5404
        %v5484 = vunpack.c.l.b16 %v5405
        %v5485 = vunpack.c.h.b16 %v5405
        %v5486 = vunpack.c.l.b16 %v5406
        %v5487 = vunpack.c.h.b16 %v5406
        %v5488 = vunpack.c.l.b16 %v5407
        %v5489 = vunpack.c.h.b16 %v5407
        %v5490 = vunpack.c.l.b16 %v5408
        %v5491 = vunpack.c.h.b16 %v5408
        %v5492 = vunpack.c.l.b16 %v5409
        %v5493 = vunpack.c.h.b16 %v5409
        %v5494 = vunpack.c.l.b16 %v5410
        %v5495 = vunpack.c.h.b16 %v5410
        %v5496 = vunpack.c.l.b16 %v5411
        %v5497 = vunpack.c.h.b16 %v5411
        %v5498 = vunpack.c.l.b16 %v5412
        %v5499 = vunpack.c.h.b16 %v5412
        %v5500 = vunpack.c.l.b16 %v5413
        %v5501 = vunpack.c.h.b16 %v5413
        %v5502 = vunpack.c.l.b16 %v5414
        %v5503 = vunpack.c.h.b16 %v5414
        %v5504 = vunpack.c.l.b16 %v5415
        %v5505 = vunpack.c.h.b16 %v5415
        %v5506 = vunpack.c.l.b16 %v5416
        %v5507 = vunpack.c.h.b16 %v5416
        %v5508 = vunpack.c.l.b16 %v5417
        %v5509 = vunpack.c.h.b16 %v5417
        %v5510 = vunpack.c.l.b16 %v5418
        %v5511 = vunpack.c.h.b16 %v5418
        %v5512 = vunpack.c.l.b16 %v5419
        %v5513 = vunpack.c.h.b16 %v5419
        %v5514 = vunpack.c.l.b16 %v5420
        %v5515 = vunpack.c.h.b16 %v5420
        %v5516 = vunpack.c.l.b16 %v5421
        %v5517 = vunpack.c.h.b16 %v5421
        %v5518 = vunpack.c.l.b16 %v5422
        %v5519 = vunpack.c.h.b16 %v5422
        %v5520 = vunpack.c.l.b16 %v5423
        %v5521 = vunpack.c.h.b16 %v5423
        %v5522 = vunpack.c.l.b16 %v5424
        %v5523 = vunpack.c.h.b16 %v5424
        %v5524 = vunpack.c.l.b16 %v5425
        %v5525 = vunpack.c.h.b16 %v5425
        %v5526 = vunpack.c.l.b16 %v5426
        %v5527 = vunpack.c.h.b16 %v5426
        %v5528 = vunpack.c.l.b16 %v5427
        %v5529 = vunpack.c.h.b16 %v5427
        %v5530 = vunpack.c.l.b16 %v5428
        %v5531 = vunpack.c.h.b16 %v5428
        %v5532 = vunpack.c.l.b16 %v5429
        %v5533 = vunpack.c.h.b16 %v5429
        %v5534 = vunpack.c.l.b16 %v5430
        %v5535 = vunpack.c.h.b16 %v5430
        %v5536 = vunpack.c.l.b16 %v5431
        %v5537 = vunpack.c.h.b16 %v5431
        %v5538 = vpack.c.b16 %v5478, %v5474
        %v5539 = vpack.c.b16 %v5479, %v5475
        %v5540 = vpack.c.b16 %v5480, %v5476
        %v5541 = vpack.c.b16 %v5481, %v5477
        %v5542 = vpack.c.b16 %v5486, %v5482
        %v5543 = vpack.c.b16 %v5487, %v5483
        %v5544 = vpack.c.b16 %v5488, %v5484
        %v5545 = vpack.c.b16 %v5489, %v5485
        %v5546 = vpack.c.b16 %v5494, %v5490
        %v5547 = vpack.c.b16 %v5495, %v5491
        %v5548 = vpack.c.b16 %v5496, %v5492
        %v5549 = vpack.c.b16 %v5497, %v5493
        %v5550 = vpack.c.b16 %v5502, %v5498
        %v5551 = vpack.c.b16 %v5503, %v5499
        %v5552 = vpack.c.b16 %v5504, %v5500
        %v5553 = vpack.c.b16 %v5505, %v5501
        %v5554 = vpack.c.b16 %v5510, %v5506
        %v5555 = vpack.c.b16 %v5511, %v5507
        %v5556 = vpack.c.b16 %v5512, %v5508
        %v5557 = vpack.c.b16 %v5513, %v5509
        %v5558 = vpack.c.b16 %v5518, %v5514
        %v5559 = vpack.c.b16 %v5519, %v5515
        %v5560 = vpack.c.b16 %v5520, %v5516
        %v5561 = vpack.c.b16 %v5521, %v5517
        %v5562 = vpack.c.b16 %v5526, %v5522
        %v5563 = vpack.c.b16 %v5527, %v5523
        %v5564 = vpack.c.b16 %v5528, %v5524
        %v5565 = vpack.c.b16 %v5529, %v5525
        %v5566 = vpack.c.b16 %v5534, %v5530
        %v5567 = vpack.c.b16 %v5535, %v5531
        %v5568 = vpack.c.b16 %v5536, %v5532
        %v5569 = vpack.c.b16 %v5537, %v5533
        %5602 = vmatpush.bf16.msra.mxu0 %v5566
        %5603 = vmatpush.bf16.msra.mxu0 %v5562
        %5604 = vmatpush.bf16.msra.mxu0 %v5558
        %5605 = vmatpush.bf16.msra.mxu0 %v5554
        %5606 = vmatpush.bf16.msra.mxu0 %v5550
        %5607 = vmatpush.bf16.msra.mxu0 %v5546
        %5608 = vmatpush.bf16.msra.mxu0 %v5542
        %5609 = vmatpush.bf16.msra.mxu0 %v5538
        %5610 = vmatmul.bf16.gmra.mxu0 %v5392
        %v5611 = vpop.f32.mrf.mxu0
        %v5612 = vadd.f32 %v5434, %v5611
        %v5613 = vpop.f32.mrf.mxu0
        %v5614 = vadd.f32 %v5434, %v5613
        %5615 = vmatmul.bf16.gmra.mxu0 %v5393
        %v5616 = vpop.f32.mrf.mxu0
        %v5617 = vadd.f32 %v5434, %v5616
        %v5618 = vpop.f32.mrf.mxu0
        %v5619 = vadd.f32 %v5434, %v5618
        %5620 = vmatmul.bf16.gmra.mxu0 %v5394
        %v5621 = vpop.f32.mrf.mxu0
        %v5622 = vadd.f32 %v5434, %v5621
        %v5623 = vpop.f32.mrf.mxu0
        %v5624 = vadd.f32 %v5434, %v5623
        %5625 = vmatmul.bf16.gmra.mxu0 %v5395
        %v5626 = vpop.f32.mrf.mxu0
        %v5627 = vadd.f32 %v5434, %v5626
        %v5628 = vpop.f32.mrf.mxu0
        %v5629 = vadd.f32 %v5434, %v5628
        %5630 = vmatmul.bf16.gmra.mxu0 %v5396
        %v5631 = vpop.f32.mrf.mxu0
        %v5632 = vadd.f32 %v5434, %v5631
        %v5633 = vpop.f32.mrf.mxu0
        %v5634 = vadd.f32 %v5434, %v5633
        %5635 = vmatmul.bf16.gmra.mxu0 %v5397
        %v5636 = vpop.f32.mrf.mxu0
        %v5637 = vadd.f32 %v5434, %v5636
        %v5638 = vpop.f32.mrf.mxu0
        %v5639 = vadd.f32 %v5434, %v5638
        %5640 = vmatmul.bf16.gmra.mxu0 %v5398
        %v5641 = vpop.f32.mrf.mxu0
        %v5642 = vadd.f32 %v5434, %v5641
        %v5643 = vpop.f32.mrf.mxu0
        %v5644 = vadd.f32 %v5434, %v5643
        %5645 = vmatmul.bf16.gmra.mxu0 %v5399
        %v5646 = vpop.f32.mrf.mxu0
        %v5647 = vadd.f32 %v5434, %v5646
        %v5648 = vpop.f32.mrf.mxu0
        %v5649 = vadd.f32 %v5434, %v5648
        %5650 = vdwg.mxu0
        %5651 = vmatpush.bf16.msra.mxu0 %v5567
        %5652 = vmatpush.bf16.msra.mxu0 %v5563
        %5653 = vmatpush.bf16.msra.mxu0 %v5559
        %5654 = vmatpush.bf16.msra.mxu0 %v5555
        %5655 = vmatpush.bf16.msra.mxu0 %v5551
        %5656 = vmatpush.bf16.msra.mxu0 %v5547
        %5657 = vmatpush.bf16.msra.mxu0 %v5543
        %5658 = vmatpush.bf16.msra.mxu0 %v5539
        %5659 = vmatmul.bf16.gmra.mxu0 %v5392
        %v5660 = vpop.f32.mrf.mxu0
        %v5661 = vadd.f32 %v5435, %v5660
        %v5662 = vpop.f32.mrf.mxu0
        %v5663 = vadd.f32 %v5435, %v5662
        %5664 = vmatmul.bf16.gmra.mxu0 %v5393
        %v5665 = vpop.f32.mrf.mxu0
        %v5666 = vadd.f32 %v5435, %v5665
        %v5667 = vpop.f32.mrf.mxu0
        %v5668 = vadd.f32 %v5435, %v5667
        %5669 = vmatmul.bf16.gmra.mxu0 %v5394
        %v5670 = vpop.f32.mrf.mxu0
        %v5671 = vadd.f32 %v5435, %v5670
        %v5672 = vpop.f32.mrf.mxu0
        %v5673 = vadd.f32 %v5435, %v5672
        %5674 = vmatmul.bf16.gmra.mxu0 %v5395
        %v5675 = vpop.f32.mrf.mxu0
        %v5676 = vadd.f32 %v5435, %v5675
        %v5677 = vpop.f32.mrf.mxu0
        %v5678 = vadd.f32 %v5435, %v5677
        %5679 = vmatmul.bf16.gmra.mxu0 %v5396
        %v5680 = vpop.f32.mrf.mxu0
        %v5681 = vadd.f32 %v5435, %v5680
        %v5682 = vpop.f32.mrf.mxu0
        %v5683 = vadd.f32 %v5435, %v5682
        %5684 = vmatmul.bf16.gmra.mxu0 %v5397
        %v5685 = vpop.f32.mrf.mxu0
        %v5686 = vadd.f32 %v5435, %v5685
        %v5687 = vpop.f32.mrf.mxu0
        %v5688 = vadd.f32 %v5435, %v5687
        %5689 = vmatmul.bf16.gmra.mxu0 %v5398
        %v5690 = vpop.f32.mrf.mxu0
        %v5691 = vadd.f32 %v5435, %v5690
        %v5692 = vpop.f32.mrf.mxu0
        %v5693 = vadd.f32 %v5435, %v5692
        %5694 = vmatmul.bf16.gmra.mxu0 %v5399
        %v5695 = vpop.f32.mrf.mxu0
        %v5696 = vadd.f32 %v5435, %v5695
        %v5697 = vpop.f32.mrf.mxu0
        %v5698 = vadd.f32 %v5435, %v5697
        %5699 = vdwg.mxu0
        %5700 = vmatpush.bf16.msra.mxu0 %v5568
        %5701 = vmatpush.bf16.msra.mxu0 %v5564
        %5702 = vmatpush.bf16.msra.mxu0 %v5560
        %5703 = vmatpush.bf16.msra.mxu0 %v5556
        %5704 = vmatpush.bf16.msra.mxu0 %v5552
        %5705 = vmatpush.bf16.msra.mxu0 %v5548
        %5706 = vmatpush.bf16.msra.mxu0 %v5544
        %5707 = vmatpush.bf16.msra.mxu0 %v5540
        %5708 = vmatmul.bf16.gmra.mxu0 %v5392
        %v5709 = vpop.f32.mrf.mxu0
        %v5710 = vadd.f32 %v5436, %v5709
        %v5711 = vpop.f32.mrf.mxu0
        %v5712 = vadd.f32 %v5436, %v5711
        %5713 = vmatmul.bf16.gmra.mxu0 %v5393
        %v5714 = vpop.f32.mrf.mxu0
        %v5715 = vadd.f32 %v5436, %v5714
        %v5716 = vpop.f32.mrf.mxu0
        %v5717 = vadd.f32 %v5436, %v5716
        %5718 = vmatmul.bf16.gmra.mxu0 %v5394
        %v5719 = vpop.f32.mrf.mxu0
        %v5720 = vadd.f32 %v5436, %v5719
        %v5721 = vpop.f32.mrf.mxu0
        %v5722 = vadd.f32 %v5436, %v5721
        %5723 = vmatmul.bf16.gmra.mxu0 %v5395
        %v5724 = vpop.f32.mrf.mxu0
        %v5725 = vadd.f32 %v5436, %v5724
        %v5726 = vpop.f32.mrf.mxu0
        %v5727 = vadd.f32 %v5436, %v5726
        %5728 = vmatmul.bf16.gmra.mxu0 %v5396
        %v5729 = vpop.f32.mrf.mxu0
        %v5730 = vadd.f32 %v5436, %v5729
        %v5731 = vpop.f32.mrf.mxu0
        %v5732 = vadd.f32 %v5436, %v5731
        %5733 = vmatmul.bf16.gmra.mxu0 %v5397
        %v5734 = vpop.f32.mrf.mxu0
        %v5735 = vadd.f32 %v5436, %v5734
        %v5736 = vpop.f32.mrf.mxu0
        %v5737 = vadd.f32 %v5436, %v5736
        %5738 = vmatmul.bf16.gmra.mxu0 %v5398
        %v5739 = vpop.f32.mrf.mxu0
        %v5740 = vadd.f32 %v5436, %v5739
        %v5741 = vpop.f32.mrf.mxu0
        %v5742 = vadd.f32 %v5436, %v5741
        %5743 = vmatmul.bf16.gmra.mxu0 %v5399
        %v5744 = vpop.f32.mrf.mxu0
        %v5745 = vadd.f32 %v5436, %v5744
        %v5746 = vpop.f32.mrf.mxu0
        %v5747 = vadd.f32 %v5436, %v5746
        %5748 = vdwg.mxu0
        %5749 = vmatpush.bf16.msra.mxu0 %v5569
        %5750 = vmatpush.bf16.msra.mxu0 %v5565
        %5751 = vmatpush.bf16.msra.mxu0 %v5561
        %5752 = vmatpush.bf16.msra.mxu0 %v5557
        %5753 = vmatpush.bf16.msra.mxu0 %v5553
        %5754 = vmatpush.bf16.msra.mxu0 %v5549
        %5755 = vmatpush.bf16.msra.mxu0 %v5545
        %5756 = vmatpush.bf16.msra.mxu0 %v5541
        %5757 = vmatmul.bf16.gmra.mxu0 %v5392
        %v5758 = vpop.f32.mrf.mxu0
        %v5759 = vadd.f32 %v5437, %v5758
        %v5760 = vpop.f32.mrf.mxu0
        %v5761 = vadd.f32 %v5437, %v5760
        %5762 = vmatmul.bf16.gmra.mxu0 %v5393
        %v5763 = vpop.f32.mrf.mxu0
        %v5764 = vadd.f32 %v5437, %v5763
        %v5765 = vpop.f32.mrf.mxu0
        %v5766 = vadd.f32 %v5437, %v5765
        %5767 = vmatmul.bf16.gmra.mxu0 %v5394
        %v5768 = vpop.f32.mrf.mxu0
        %v5769 = vadd.f32 %v5437, %v5768
        %v5770 = vpop.f32.mrf.mxu0
        %v5771 = vadd.f32 %v5437, %v5770
        %5772 = vmatmul.bf16.gmra.mxu0 %v5395
        %v5773 = vpop.f32.mrf.mxu0
        %v5774 = vadd.f32 %v5437, %v5773
        %v5775 = vpop.f32.mrf.mxu0
        %v5776 = vadd.f32 %v5437, %v5775
        %5777 = vmatmul.bf16.gmra.mxu0 %v5396
        %v5778 = vpop.f32.mrf.mxu0
        %v5779 = vadd.f32 %v5437, %v5778
        %v5780 = vpop.f32.mrf.mxu0
        %v5781 = vadd.f32 %v5437, %v5780
        %5782 = vmatmul.bf16.gmra.mxu0 %v5397
        %v5783 = vpop.f32.mrf.mxu0
        %v5784 = vadd.f32 %v5437, %v5783
        %v5785 = vpop.f32.mrf.mxu0
        %v5786 = vadd.f32 %v5437, %v5785
        %5787 = vmatmul.bf16.gmra.mxu0 %v5398
        %v5788 = vpop.f32.mrf.mxu0
        %v5789 = vadd.f32 %v5437, %v5788
        %v5790 = vpop.f32.mrf.mxu0
        %v5791 = vadd.f32 %v5437, %v5790
        %5792 = vmatmul.bf16.gmra.mxu0 %v5399
        %v5793 = vpop.f32.mrf.mxu0
        %v5794 = vadd.f32 %v5437, %v5793
        %v5795 = vpop.f32.mrf.mxu0
        %v5796 = vadd.f32 %v5437, %v5795
        %5797 = vdwg.mxu0
        %v5798 = vmul.f32 %v5612, 0.5
        %v5799 = vmul.f32 %v5661, 0.5
        %v5800 = vmul.f32 %v5710, 0.5
        %v5801 = vmul.f32 %v5759, 0.5
        %v5802 = vmul.f32 %v5614, 0.5
        %v5803 = vmul.f32 %v5663, 0.5
        %v5804 = vmul.f32 %v5712, 0.5
        %v5805 = vmul.f32 %v5761, 0.5
        %v5806 = vmul.f32 %v5617, 0.5
        %v5807 = vmul.f32 %v5666, 0.5
        %v5808 = vmul.f32 %v5715, 0.5
        %v5809 = vmul.f32 %v5764, 0.5
        %v5810 = vmul.f32 %v5619, 0.5
        %v5811 = vmul.f32 %v5668, 0.5
        %v5812 = vmul.f32 %v5717, 0.5
        %v5813 = vmul.f32 %v5766, 0.5
        %v5814 = vmul.f32 %v5622, 0.5
        %v5815 = vmul.f32 %v5671, 0.5
        %v5816 = vmul.f32 %v5720, 0.5
        %v5817 = vmul.f32 %v5769, 0.5
        %v5818 = vmul.f32 %v5624, 0.5
        %v5819 = vmul.f32 %v5673, 0.5
        %v5820 = vmul.f32 %v5722, 0.5
        %v5821 = vmul.f32 %v5771, 0.5
        %v5822 = vmul.f32 %v5627, 0.5
        %v5823 = vmul.f32 %v5676, 0.5
        %v5824 = vmul.f32 %v5725, 0.5
        %v5825 = vmul.f32 %v5774, 0.5
        %v5826 = vmul.f32 %v5629, 0.5
        %v5827 = vmul.f32 %v5678, 0.5
        %v5828 = vmul.f32 %v5727, 0.5
        %v5829 = vmul.f32 %v5776, 0.5
        %v5830 = vmul.f32 %v5632, 0.5
        %v5831 = vmul.f32 %v5681, 0.5
        %v5832 = vmul.f32 %v5730, 0.5
        %v5833 = vmul.f32 %v5779, 0.5
        %v5834 = vmul.f32 %v5634, 0.5
        %v5835 = vmul.f32 %v5683, 0.5
        %v5836 = vmul.f32 %v5732, 0.5
        %v5837 = vmul.f32 %v5781, 0.5
        %v5838 = vmul.f32 %v5637, 0.5
        %v5839 = vmul.f32 %v5686, 0.5
        %v5840 = vmul.f32 %v5735, 0.5
        %v5841 = vmul.f32 %v5784, 0.5
        %v5842 = vmul.f32 %v5639, 0.5
        %v5843 = vmul.f32 %v5688, 0.5
        %v5844 = vmul.f32 %v5737, 0.5
        %v5845 = vmul.f32 %v5786, 0.5
        %v5846 = vmul.f32 %v5642, 0.5
        %v5847 = vmul.f32 %v5691, 0.5
        %v5848 = vmul.f32 %v5740, 0.5
        %v5849 = vmul.f32 %v5789, 0.5
        %v5850 = vmul.f32 %v5644, 0.5
        %v5851 = vmul.f32 %v5693, 0.5
        %v5852 = vmul.f32 %v5742, 0.5
        %v5853 = vmul.f32 %v5791, 0.5
        %v5854 = vmul.f32 %v5647, 0.5
        %v5855 = vmul.f32 %v5696, 0.5
        %v5856 = vmul.f32 %v5745, 0.5
        %v5857 = vmul.f32 %v5794, 0.5
        %v5858 = vmul.f32 %v5649, 0.5
        %v5859 = vmul.f32 %v5698, 0.5
        %v5860 = vmul.f32 %v5747, 0.5
        %v5861 = vmul.f32 %v5796, 0.5
        %v5862 = vmul.f32 %v5612, 0.70710677
        %v5863 = vmul.f32 %v5661, 0.70710677
        %v5864 = vmul.f32 %v5710, 0.70710677
        %v5865 = vmul.f32 %v5759, 0.70710677
        %v5866 = vmul.f32 %v5614, 0.70710677
        %v5867 = vmul.f32 %v5663, 0.70710677
        %v5868 = vmul.f32 %v5712, 0.70710677
        %v5869 = vmul.f32 %v5761, 0.70710677
        %v5870 = vmul.f32 %v5617, 0.70710677
        %v5871 = vmul.f32 %v5666, 0.70710677
        %v5872 = vmul.f32 %v5715, 0.70710677
        %v5873 = vmul.f32 %v5764, 0.70710677
        %v5874 = vmul.f32 %v5619, 0.70710677
        %v5875 = vmul.f32 %v5668, 0.70710677
        %v5876 = vmul.f32 %v5717, 0.70710677
        %v5877 = vmul.f32 %v5766, 0.70710677
        %v5878 = vmul.f32 %v5622, 0.70710677
        %v5879 = vmul.f32 %v5671, 0.70710677
        %v5880 = vmul.f32 %v5720, 0.70710677
        %v5881 = vmul.f32 %v5769, 0.70710677
        %v5882 = vmul.f32 %v5624, 0.70710677
        %v5883 = vmul.f32 %v5673, 0.70710677
        %v5884 = vmul.f32 %v5722, 0.70710677
        %v5885 = vmul.f32 %v5771, 0.70710677
        %v5886 = vmul.f32 %v5627, 0.70710677
        %v5887 = vmul.f32 %v5676, 0.70710677
        %v5888 = vmul.f32 %v5725, 0.70710677
        %v5889 = vmul.f32 %v5774, 0.70710677
        %v5890 = vmul.f32 %v5629, 0.70710677
        %v5891 = vmul.f32 %v5678, 0.70710677
        %v5892 = vmul.f32 %v5727, 0.70710677
        %v5893 = vmul.f32 %v5776, 0.70710677
        %v5894 = vmul.f32 %v5632, 0.70710677
        %v5895 = vmul.f32 %v5681, 0.70710677
        %v5896 = vmul.f32 %v5730, 0.70710677
        %v5897 = vmul.f32 %v5779, 0.70710677
        %v5898 = vmul.f32 %v5634, 0.70710677
        %v5899 = vmul.f32 %v5683, 0.70710677
        %v5900 = vmul.f32 %v5732, 0.70710677
        %v5901 = vmul.f32 %v5781, 0.70710677
        %v5902 = vmul.f32 %v5637, 0.70710677
        %v5903 = vmul.f32 %v5686, 0.70710677
        %v5904 = vmul.f32 %v5735, 0.70710677
        %v5905 = vmul.f32 %v5784, 0.70710677
        %v5906 = vmul.f32 %v5639, 0.70710677
        %v5907 = vmul.f32 %v5688, 0.70710677
        %v5908 = vmul.f32 %v5737, 0.70710677
        %v5909 = vmul.f32 %v5786, 0.70710677
        %v5910 = vmul.f32 %v5642, 0.70710677
        %v5911 = vmul.f32 %v5691, 0.70710677
        %v5912 = vmul.f32 %v5740, 0.70710677
        %v5913 = vmul.f32 %v5789, 0.70710677
        %v5914 = vmul.f32 %v5644, 0.70710677
        %v5915 = vmul.f32 %v5693, 0.70710677
        %v5916 = vmul.f32 %v5742, 0.70710677
        %v5917 = vmul.f32 %v5791, 0.70710677
        %v5918 = vmul.f32 %v5647, 0.70710677
        %v5919 = vmul.f32 %v5696, 0.70710677
        %v5920 = vmul.f32 %v5745, 0.70710677
        %v5921 = vmul.f32 %v5794, 0.70710677
        %v5922 = vmul.f32 %v5649, 0.70710677
        %v5923 = vmul.f32 %v5698, 0.70710677
        %v5924 = vmul.f32 %v5747, 0.70710677
        %v5925 = vmul.f32 %v5796, 0.70710677
        %v5926 = vmul.f32 %v5862, %v5862
        %v5927 = vmin.f32 16.0, %v5926
        %v5928 = vmul.f32 %v5927, 2.1237322e-06
        %v5929 = vadd.f32 %v5928, 0.00028619796
        %v5930 = vmul.f32 %v5927, %v5929
        %v5931 = vadd.f32 %v5930, 0.0036580483
        %v5932 = vmul.f32 %v5927, %v5931
        %v5933 = vadd.f32 %v5932, 0.05243302
        %v5934 = vmul.f32 %v5927, %v5933
        %v5935 = vadd.f32 %v5934, 0.18741608
        %v5936 = vmul.f32 %v5927, %v5935
        %v5937 = vadd.f32 %v5936, 1.1283791
        %v5938 = vmul.f32 %v5862, %v5937
        %v5939 = vmul.f32 %v5927, 3.8918573e-05
        %v5940 = vadd.f32 %v5939, 0.001143296
        %v5941 = vmul.f32 %v5927, %v5940
        %v5942 = vadd.f32 %v5941, 0.014752088
        %v5943 = vmul.f32 %v5927, %v5942
        %v5944 = vadd.f32 %v5943, 0.112945676
        %v5945 = vmul.f32 %v5927, %v5944
        %v5946 = vadd.f32 %v5945, 0.4994258
        %v5947 = vmul.f32 %v5927, %v5946
        %v5948 = vadd.f32 %v5947, 1.0
        %v5949 = vrcp.pop %v5948
        %v5950 = vmul.f32 %v5948, %v5949
        %v5951 = vsub.f32 1.0, %v5950
        %v5952 = vmul.f32 %v5949, %v5951
        %v5953 = vadd.f32 %v5949, %v5952
        %vm5954 = vweird.f32 %v5948
        %vm5955 = vweird.f32 %v5949
        %vm5956 = vmor %vm5954, %vm5955
        %v5957 = vsel %vm5956, %v5949, %v5953
        %v5958 = vand.u32 2147483647, %v5948
        %vm5959 = vcmp.eq.f32.partialorder %v5958, 8.507059e+37
        %v5960 = vand.u32 %v5948, 2147483648
        %v5961 = vor.u32 1.1754944e-38, %v5960
        %v5962 = vsel %vm5959, %v5961, %v5957
        %v5963 = vmul.f32 %v5938, %v5962
        %v5964 = vmin.f32 %v5963, 1.0
        %v5965 = vmax.f32 %v5964, -1.0
        %v5966 = vmul.f32 %v5863, %v5863
        %v5967 = vmin.f32 16.0, %v5966
        %v5968 = vmul.f32 %v5967, 2.1237322e-06
        %v5969 = vadd.f32 %v5968, 0.00028619796
        %v5970 = vmul.f32 %v5967, %v5969
        %v5971 = vadd.f32 %v5970, 0.0036580483
        %v5972 = vmul.f32 %v5967, %v5971
        %v5973 = vadd.f32 %v5972, 0.05243302
        %v5974 = vmul.f32 %v5967, %v5973
        %v5975 = vadd.f32 %v5974, 0.18741608
        %v5976 = vmul.f32 %v5967, %v5975
        %v5977 = vadd.f32 %v5976, 1.1283791
        %v5978 = vmul.f32 %v5863, %v5977
        %v5979 = vmul.f32 %v5967, 3.8918573e-05
        %v5980 = vadd.f32 %v5979, 0.001143296
        %v5981 = vmul.f32 %v5967, %v5980
        %v5982 = vadd.f32 %v5981, 0.014752088
        %v5983 = vmul.f32 %v5967, %v5982
        %v5984 = vadd.f32 %v5983, 0.112945676
        %v5985 = vmul.f32 %v5967, %v5984
        %v5986 = vadd.f32 %v5985, 0.4994258
        %v5987 = vmul.f32 %v5967, %v5986
        %v5988 = vadd.f32 %v5987, 1.0
        %v5989 = vrcp.pop %v5988
        %v5990 = vmul.f32 %v5988, %v5989
        %v5991 = vsub.f32 1.0, %v5990
        %v5992 = vmul.f32 %v5989, %v5991
        %v5993 = vadd.f32 %v5989, %v5992
        %vm5994 = vweird.f32 %v5988
        %vm5995 = vweird.f32 %v5989
        %vm5996 = vmor %vm5994, %vm5995
        %v5997 = vsel %vm5996, %v5989, %v5993
        %v5998 = vand.u32 2147483647, %v5988
        %vm5999 = vcmp.eq.f32.partialorder %v5998, 8.507059e+37
        %v6000 = vand.u32 %v5988, 2147483648
        %v6001 = vor.u32 1.1754944e-38, %v6000
        %v6002 = vsel %vm5999, %v6001, %v5997
        %v6003 = vmul.f32 %v5978, %v6002
        %v6004 = vmin.f32 %v6003, 1.0
        %v6005 = vmax.f32 %v6004, -1.0
        %v6006 = vmul.f32 %v5864, %v5864
        %v6007 = vmin.f32 16.0, %v6006
        %v6008 = vmul.f32 %v6007, 2.1237322e-06
        %v6009 = vadd.f32 %v6008, 0.00028619796
        %v6010 = vmul.f32 %v6007, %v6009
        %v6011 = vadd.f32 %v6010, 0.0036580483
        %v6012 = vmul.f32 %v6007, %v6011
        %v6013 = vadd.f32 %v6012, 0.05243302
        %v6014 = vmul.f32 %v6007, %v6013
        %v6015 = vadd.f32 %v6014, 0.18741608
        %v6016 = vmul.f32 %v6007, %v6015
        %v6017 = vadd.f32 %v6016, 1.1283791
        %v6018 = vmul.f32 %v5864, %v6017
        %v6019 = vmul.f32 %v6007, 3.8918573e-05
        %v6020 = vadd.f32 %v6019, 0.001143296
        %v6021 = vmul.f32 %v6007, %v6020
        %v6022 = vadd.f32 %v6021, 0.014752088
        %v6023 = vmul.f32 %v6007, %v6022
        %v6024 = vadd.f32 %v6023, 0.112945676
        %v6025 = vmul.f32 %v6007, %v6024
        %v6026 = vadd.f32 %v6025, 0.4994258
        %v6027 = vmul.f32 %v6007, %v6026
        %v6028 = vadd.f32 %v6027, 1.0
        %v6029 = vrcp.pop %v6028
        %v6030 = vmul.f32 %v6028, %v6029
        %v6031 = vsub.f32 1.0, %v6030
        %v6032 = vmul.f32 %v6029, %v6031
        %v6033 = vadd.f32 %v6029, %v6032
        %vm6034 = vweird.f32 %v6028
        %vm6035 = vweird.f32 %v6029
        %vm6036 = vmor %vm6034, %vm6035
        %v6037 = vsel %vm6036, %v6029, %v6033
        %v6038 = vand.u32 2147483647, %v6028
        %vm6039 = vcmp.eq.f32.partialorder %v6038, 8.507059e+37
        %v6040 = vand.u32 %v6028, 2147483648
        %v6041 = vor.u32 1.1754944e-38, %v6040
        %v6042 = vsel %vm6039, %v6041, %v6037
        %v6043 = vmul.f32 %v6018, %v6042
        %v6044 = vmin.f32 %v6043, 1.0
        %v6045 = vmax.f32 %v6044, -1.0
        %v6046 = vmul.f32 %v5865, %v5865
        %v6047 = vmin.f32 16.0, %v6046
        %v6048 = vmul.f32 %v6047, 2.1237322e-06
        %v6049 = vadd.f32 %v6048, 0.00028619796
        %v6050 = vmul.f32 %v6047, %v6049
        %v6051 = vadd.f32 %v6050, 0.0036580483
        %v6052 = vmul.f32 %v6047, %v6051
        %v6053 = vadd.f32 %v6052, 0.05243302
        %v6054 = vmul.f32 %v6047, %v6053
        %v6055 = vadd.f32 %v6054, 0.18741608
        %v6056 = vmul.f32 %v6047, %v6055
        %v6057 = vadd.f32 %v6056, 1.1283791
        %v6058 = vmul.f32 %v5865, %v6057
        %v6059 = vmul.f32 %v6047, 3.8918573e-05
        %v6060 = vadd.f32 %v6059, 0.001143296
        %v6061 = vmul.f32 %v6047, %v6060
        %v6062 = vadd.f32 %v6061, 0.014752088
        %v6063 = vmul.f32 %v6047, %v6062
        %v6064 = vadd.f32 %v6063, 0.112945676
        %v6065 = vmul.f32 %v6047, %v6064
        %v6066 = vadd.f32 %v6065, 0.4994258
        %v6067 = vmul.f32 %v6047, %v6066
        %v6068 = vadd.f32 %v6067, 1.0
        %v6069 = vrcp.pop %v6068
        %v6070 = vmul.f32 %v6068, %v6069
        %v6071 = vsub.f32 1.0, %v6070
        %v6072 = vmul.f32 %v6069, %v6071
        %v6073 = vadd.f32 %v6069, %v6072
        %vm6074 = vweird.f32 %v6068
        %vm6075 = vweird.f32 %v6069
        %vm6076 = vmor %vm6074, %vm6075
        %v6077 = vsel %vm6076, %v6069, %v6073
        %v6078 = vand.u32 2147483647, %v6068
        %vm6079 = vcmp.eq.f32.partialorder %v6078, 8.507059e+37
        %v6080 = vand.u32 %v6068, 2147483648
        %v6081 = vor.u32 1.1754944e-38, %v6080
        %v6082 = vsel %vm6079, %v6081, %v6077
        %v6083 = vmul.f32 %v6058, %v6082
        %v6084 = vmin.f32 %v6083, 1.0
        %v6085 = vmax.f32 %v6084, -1.0
        %v6086 = vmul.f32 %v5866, %v5866
        %v6087 = vmin.f32 16.0, %v6086
        %v6088 = vmul.f32 %v6087, 2.1237322e-06
        %v6089 = vadd.f32 %v6088, 0.00028619796
        %v6090 = vmul.f32 %v6087, %v6089
        %v6091 = vadd.f32 %v6090, 0.0036580483
        %v6092 = vmul.f32 %v6087, %v6091
        %v6093 = vadd.f32 %v6092, 0.05243302
        %v6094 = vmul.f32 %v6087, %v6093
        %v6095 = vadd.f32 %v6094, 0.18741608
        %v6096 = vmul.f32 %v6087, %v6095
        %v6097 = vadd.f32 %v6096, 1.1283791
        %v6098 = vmul.f32 %v5866, %v6097
        %v6099 = vmul.f32 %v6087, 3.8918573e-05
        %v6100 = vadd.f32 %v6099, 0.001143296
        %v6101 = vmul.f32 %v6087, %v6100
        %v6102 = vadd.f32 %v6101, 0.014752088
        %v6103 = vmul.f32 %v6087, %v6102
        %v6104 = vadd.f32 %v6103, 0.112945676
        %v6105 = vmul.f32 %v6087, %v6104
        %v6106 = vadd.f32 %v6105, 0.4994258
        %v6107 = vmul.f32 %v6087, %v6106
        %v6108 = vadd.f32 %v6107, 1.0
        %v6109 = vrcp.pop %v6108
        %v6110 = vmul.f32 %v6108, %v6109
        %v6111 = vsub.f32 1.0, %v6110
        %v6112 = vmul.f32 %v6109, %v6111
        %v6113 = vadd.f32 %v6109, %v6112
        %vm6114 = vweird.f32 %v6108
        %vm6115 = vweird.f32 %v6109
        %vm6116 = vmor %vm6114, %vm6115
        %v6117 = vsel %vm6116, %v6109, %v6113
        %v6118 = vand.u32 2147483647, %v6108
        %vm6119 = vcmp.eq.f32.partialorder %v6118, 8.507059e+37
        %v6120 = vand.u32 %v6108, 2147483648
        %v6121 = vor.u32 1.1754944e-38, %v6120
        %v6122 = vsel %vm6119, %v6121, %v6117
        %v6123 = vmul.f32 %v6098, %v6122
        %v6124 = vmin.f32 %v6123, 1.0
        %v6125 = vmax.f32 %v6124, -1.0
        %v6126 = vmul.f32 %v5867, %v5867
        %v6127 = vmin.f32 16.0, %v6126
        %v6128 = vmul.f32 %v6127, 2.1237322e-06
        %v6129 = vadd.f32 %v6128, 0.00028619796
        %v6130 = vmul.f32 %v6127, %v6129
        %v6131 = vadd.f32 %v6130, 0.0036580483
        %v6132 = vmul.f32 %v6127, %v6131
        %v6133 = vadd.f32 %v6132, 0.05243302
        %v6134 = vmul.f32 %v6127, %v6133
        %v6135 = vadd.f32 %v6134, 0.18741608
        %v6136 = vmul.f32 %v6127, %v6135
        %v6137 = vadd.f32 %v6136, 1.1283791
        %v6138 = vmul.f32 %v5867, %v6137
        %v6139 = vmul.f32 %v6127, 3.8918573e-05
        %v6140 = vadd.f32 %v6139, 0.001143296
        %v6141 = vmul.f32 %v6127, %v6140
        %v6142 = vadd.f32 %v6141, 0.014752088
        %v6143 = vmul.f32 %v6127, %v6142
        %v6144 = vadd.f32 %v6143, 0.112945676
        %v6145 = vmul.f32 %v6127, %v6144
        %v6146 = vadd.f32 %v6145, 0.4994258
        %v6147 = vmul.f32 %v6127, %v6146
        %v6148 = vadd.f32 %v6147, 1.0
        %v6149 = vrcp.pop %v6148
        %v6150 = vmul.f32 %v6148, %v6149
        %v6151 = vsub.f32 1.0, %v6150
        %v6152 = vmul.f32 %v6149, %v6151
        %v6153 = vadd.f32 %v6149, %v6152
        %vm6154 = vweird.f32 %v6148
        %vm6155 = vweird.f32 %v6149
        %vm6156 = vmor %vm6154, %vm6155
        %v6157 = vsel %vm6156, %v6149, %v6153
        %v6158 = vand.u32 2147483647, %v6148
        %vm6159 = vcmp.eq.f32.partialorder %v6158, 8.507059e+37
        %v6160 = vand.u32 %v6148, 2147483648
        %v6161 = vor.u32 1.1754944e-38, %v6160
        %v6162 = vsel %vm6159, %v6161, %v6157
        %v6163 = vmul.f32 %v6138, %v6162
        %v6164 = vmin.f32 %v6163, 1.0
        %v6165 = vmax.f32 %v6164, -1.0
        %v6166 = vmul.f32 %v5868, %v5868
        %v6167 = vmin.f32 16.0, %v6166
        %v6168 = vmul.f32 %v6167, 2.1237322e-06
        %v6169 = vadd.f32 %v6168, 0.00028619796
        %v6170 = vmul.f32 %v6167, %v6169
        %v6171 = vadd.f32 %v6170, 0.0036580483
        %v6172 = vmul.f32 %v6167, %v6171
        %v6173 = vadd.f32 %v6172, 0.05243302
        %v6174 = vmul.f32 %v6167, %v6173
        %v6175 = vadd.f32 %v6174, 0.18741608
        %v6176 = vmul.f32 %v6167, %v6175
        %v6177 = vadd.f32 %v6176, 1.1283791
        %v6178 = vmul.f32 %v5868, %v6177
        %v6179 = vmul.f32 %v6167, 3.8918573e-05
        %v6180 = vadd.f32 %v6179, 0.001143296
        %v6181 = vmul.f32 %v6167, %v6180
        %v6182 = vadd.f32 %v6181, 0.014752088
        %v6183 = vmul.f32 %v6167, %v6182
        %v6184 = vadd.f32 %v6183, 0.112945676
        %v6185 = vmul.f32 %v6167, %v6184
        %v6186 = vadd.f32 %v6185, 0.4994258
        %v6187 = vmul.f32 %v6167, %v6186
        %v6188 = vadd.f32 %v6187, 1.0
        %v6189 = vrcp.pop %v6188
        %v6190 = vmul.f32 %v6188, %v6189
        %v6191 = vsub.f32 1.0, %v6190
        %v6192 = vmul.f32 %v6189, %v6191
        %v6193 = vadd.f32 %v6189, %v6192
        %vm6194 = vweird.f32 %v6188
        %vm6195 = vweird.f32 %v6189
        %vm6196 = vmor %vm6194, %vm6195
        %v6197 = vsel %vm6196, %v6189, %v6193
        %v6198 = vand.u32 2147483647, %v6188
        %vm6199 = vcmp.eq.f32.partialorder %v6198, 8.507059e+37
        %v6200 = vand.u32 %v6188, 2147483648
        %v6201 = vor.u32 1.1754944e-38, %v6200
        %v6202 = vsel %vm6199, %v6201, %v6197
        %v6203 = vmul.f32 %v6178, %v6202
        %v6204 = vmin.f32 %v6203, 1.0
        %v6205 = vmax.f32 %v6204, -1.0
        %v6206 = vmul.f32 %v5869, %v5869
        %v6207 = vmin.f32 16.0, %v6206
        %v6208 = vmul.f32 %v6207, 2.1237322e-06
        %v6209 = vadd.f32 %v6208, 0.00028619796
        %v6210 = vmul.f32 %v6207, %v6209
        %v6211 = vadd.f32 %v6210, 0.0036580483
        %v6212 = vmul.f32 %v6207, %v6211
        %v6213 = vadd.f32 %v6212, 0.05243302
        %v6214 = vmul.f32 %v6207, %v6213
        %v6215 = vadd.f32 %v6214, 0.18741608
        %v6216 = vmul.f32 %v6207, %v6215
        %v6217 = vadd.f32 %v6216, 1.1283791
        %v6218 = vmul.f32 %v5869, %v6217
        %v6219 = vmul.f32 %v6207, 3.8918573e-05
        %v6220 = vadd.f32 %v6219, 0.001143296
        %v6221 = vmul.f32 %v6207, %v6220
        %v6222 = vadd.f32 %v6221, 0.014752088
        %v6223 = vmul.f32 %v6207, %v6222
        %v6224 = vadd.f32 %v6223, 0.112945676
        %v6225 = vmul.f32 %v6207, %v6224
        %v6226 = vadd.f32 %v6225, 0.4994258
        %v6227 = vmul.f32 %v6207, %v6226
        %v6228 = vadd.f32 %v6227, 1.0
        %v6229 = vrcp.pop %v6228
        %v6230 = vmul.f32 %v6228, %v6229
        %v6231 = vsub.f32 1.0, %v6230
        %v6232 = vmul.f32 %v6229, %v6231
        %v6233 = vadd.f32 %v6229, %v6232
        %vm6234 = vweird.f32 %v6228
        %vm6235 = vweird.f32 %v6229
        %vm6236 = vmor %vm6234, %vm6235
        %v6237 = vsel %vm6236, %v6229, %v6233
        %v6238 = vand.u32 2147483647, %v6228
        %vm6239 = vcmp.eq.f32.partialorder %v6238, 8.507059e+37
        %v6240 = vand.u32 %v6228, 2147483648
        %v6241 = vor.u32 1.1754944e-38, %v6240
        %v6242 = vsel %vm6239, %v6241, %v6237
        %v6243 = vmul.f32 %v6218, %v6242
        %v6244 = vmin.f32 %v6243, 1.0
        %v6245 = vmax.f32 %v6244, -1.0
        %v6246 = vmul.f32 %v5870, %v5870
        %v6247 = vmin.f32 16.0, %v6246
        %v6248 = vmul.f32 %v6247, 2.1237322e-06
        %v6249 = vadd.f32 %v6248, 0.00028619796
        %v6250 = vmul.f32 %v6247, %v6249
        %v6251 = vadd.f32 %v6250, 0.0036580483
        %v6252 = vmul.f32 %v6247, %v6251
        %v6253 = vadd.f32 %v6252, 0.05243302
        %v6254 = vmul.f32 %v6247, %v6253
        %v6255 = vadd.f32 %v6254, 0.18741608
        %v6256 = vmul.f32 %v6247, %v6255
        %v6257 = vadd.f32 %v6256, 1.1283791
        %v6258 = vmul.f32 %v5870, %v6257
        %v6259 = vmul.f32 %v6247, 3.8918573e-05
        %v6260 = vadd.f32 %v6259, 0.001143296
        %v6261 = vmul.f32 %v6247, %v6260
        %v6262 = vadd.f32 %v6261, 0.014752088
        %v6263 = vmul.f32 %v6247, %v6262
        %v6264 = vadd.f32 %v6263, 0.112945676
        %v6265 = vmul.f32 %v6247, %v6264
        %v6266 = vadd.f32 %v6265, 0.4994258
        %v6267 = vmul.f32 %v6247, %v6266
        %v6268 = vadd.f32 %v6267, 1.0
        %v6269 = vrcp.pop %v6268
        %v6270 = vmul.f32 %v6268, %v6269
        %v6271 = vsub.f32 1.0, %v6270
        %v6272 = vmul.f32 %v6269, %v6271
        %v6273 = vadd.f32 %v6269, %v6272
        %vm6274 = vweird.f32 %v6268
        %vm6275 = vweird.f32 %v6269
        %vm6276 = vmor %vm6274, %vm6275
        %v6277 = vsel %vm6276, %v6269, %v6273
        %v6278 = vand.u32 2147483647, %v6268
        %vm6279 = vcmp.eq.f32.partialorder %v6278, 8.507059e+37
        %v6280 = vand.u32 %v6268, 2147483648
        %v6281 = vor.u32 1.1754944e-38, %v6280
        %v6282 = vsel %vm6279, %v6281, %v6277
        %v6283 = vmul.f32 %v6258, %v6282
        %v6284 = vmin.f32 %v6283, 1.0
        %v6285 = vmax.f32 %v6284, -1.0
        %v6286 = vmul.f32 %v5871, %v5871
        %v6287 = vmin.f32 16.0, %v6286
        %v6288 = vmul.f32 %v6287, 2.1237322e-06
        %v6289 = vadd.f32 %v6288, 0.00028619796
        %v6290 = vmul.f32 %v6287, %v6289
        %v6291 = vadd.f32 %v6290, 0.0036580483
        %v6292 = vmul.f32 %v6287, %v6291
        %v6293 = vadd.f32 %v6292, 0.05243302
        %v6294 = vmul.f32 %v6287, %v6293
        %v6295 = vadd.f32 %v6294, 0.18741608
        %v6296 = vmul.f32 %v6287, %v6295
        %v6297 = vadd.f32 %v6296, 1.1283791
        %v6298 = vmul.f32 %v5871, %v6297
        %v6299 = vmul.f32 %v6287, 3.8918573e-05
        %v6300 = vadd.f32 %v6299, 0.001143296
        %v6301 = vmul.f32 %v6287, %v6300
        %v6302 = vadd.f32 %v6301, 0.014752088
        %v6303 = vmul.f32 %v6287, %v6302
        %v6304 = vadd.f32 %v6303, 0.112945676
        %v6305 = vmul.f32 %v6287, %v6304
        %v6306 = vadd.f32 %v6305, 0.4994258
        %v6307 = vmul.f32 %v6287, %v6306
        %v6308 = vadd.f32 %v6307, 1.0
        %v6309 = vrcp.pop %v6308
        %v6310 = vmul.f32 %v6308, %v6309
        %v6311 = vsub.f32 1.0, %v6310
        %v6312 = vmul.f32 %v6309, %v6311
        %v6313 = vadd.f32 %v6309, %v6312
        %vm6314 = vweird.f32 %v6308
        %vm6315 = vweird.f32 %v6309
        %vm6316 = vmor %vm6314, %vm6315
        %v6317 = vsel %vm6316, %v6309, %v6313
        %v6318 = vand.u32 2147483647, %v6308
        %vm6319 = vcmp.eq.f32.partialorder %v6318, 8.507059e+37
        %v6320 = vand.u32 %v6308, 2147483648
        %v6321 = vor.u32 1.1754944e-38, %v6320
        %v6322 = vsel %vm6319, %v6321, %v6317
        %v6323 = vmul.f32 %v6298, %v6322
        %v6324 = vmin.f32 %v6323, 1.0
        %v6325 = vmax.f32 %v6324, -1.0
        %v6326 = vmul.f32 %v5872, %v5872
        %v6327 = vmin.f32 16.0, %v6326
        %v6328 = vmul.f32 %v6327, 2.1237322e-06
        %v6329 = vadd.f32 %v6328, 0.00028619796
        %v6330 = vmul.f32 %v6327, %v6329
        %v6331 = vadd.f32 %v6330, 0.0036580483
        %v6332 = vmul.f32 %v6327, %v6331
        %v6333 = vadd.f32 %v6332, 0.05243302
        %v6334 = vmul.f32 %v6327, %v6333
        %v6335 = vadd.f32 %v6334, 0.18741608
        %v6336 = vmul.f32 %v6327, %v6335
        %v6337 = vadd.f32 %v6336, 1.1283791
        %v6338 = vmul.f32 %v5872, %v6337
        %v6339 = vmul.f32 %v6327, 3.8918573e-05
        %v6340 = vadd.f32 %v6339, 0.001143296
        %v6341 = vmul.f32 %v6327, %v6340
        %v6342 = vadd.f32 %v6341, 0.014752088
        %v6343 = vmul.f32 %v6327, %v6342
        %v6344 = vadd.f32 %v6343, 0.112945676
        %v6345 = vmul.f32 %v6327, %v6344
        %v6346 = vadd.f32 %v6345, 0.4994258
        %v6347 = vmul.f32 %v6327, %v6346
        %v6348 = vadd.f32 %v6347, 1.0
        %v6349 = vrcp.pop %v6348
        %v6350 = vmul.f32 %v6348, %v6349
        %v6351 = vsub.f32 1.0, %v6350
        %v6352 = vmul.f32 %v6349, %v6351
        %v6353 = vadd.f32 %v6349, %v6352
        %vm6354 = vweird.f32 %v6348
        %vm6355 = vweird.f32 %v6349
        %vm6356 = vmor %vm6354, %vm6355
        %v6357 = vsel %vm6356, %v6349, %v6353
        %v6358 = vand.u32 2147483647, %v6348
        %vm6359 = vcmp.eq.f32.partialorder %v6358, 8.507059e+37
        %v6360 = vand.u32 %v6348, 2147483648
        %v6361 = vor.u32 1.1754944e-38, %v6360
        %v6362 = vsel %vm6359, %v6361, %v6357
        %v6363 = vmul.f32 %v6338, %v6362
        %v6364 = vmin.f32 %v6363, 1.0
        %v6365 = vmax.f32 %v6364, -1.0
        %v6366 = vmul.f32 %v5873, %v5873
        %v6367 = vmin.f32 16.0, %v6366
        %v6368 = vmul.f32 %v6367, 2.1237322e-06
        %v6369 = vadd.f32 %v6368, 0.00028619796
        %v6370 = vmul.f32 %v6367, %v6369
        %v6371 = vadd.f32 %v6370, 0.0036580483
        %v6372 = vmul.f32 %v6367, %v6371
        %v6373 = vadd.f32 %v6372, 0.05243302
        %v6374 = vmul.f32 %v6367, %v6373
        %v6375 = vadd.f32 %v6374, 0.18741608
        %v6376 = vmul.f32 %v6367, %v6375
        %v6377 = vadd.f32 %v6376, 1.1283791
        %v6378 = vmul.f32 %v5873, %v6377
        %v6379 = vmul.f32 %v6367, 3.8918573e-05
        %v6380 = vadd.f32 %v6379, 0.001143296
        %v6381 = vmul.f32 %v6367, %v6380
        %v6382 = vadd.f32 %v6381, 0.014752088
        %v6383 = vmul.f32 %v6367, %v6382
        %v6384 = vadd.f32 %v6383, 0.112945676
        %v6385 = vmul.f32 %v6367, %v6384
        %v6386 = vadd.f32 %v6385, 0.4994258
        %v6387 = vmul.f32 %v6367, %v6386
        %v6388 = vadd.f32 %v6387, 1.0
        %v6389 = vrcp.pop %v6388
        %v6390 = vmul.f32 %v6388, %v6389
        %v6391 = vsub.f32 1.0, %v6390
        %v6392 = vmul.f32 %v6389, %v6391
        %v6393 = vadd.f32 %v6389, %v6392
        %vm6394 = vweird.f32 %v6388
        %vm6395 = vweird.f32 %v6389
        %vm6396 = vmor %vm6394, %vm6395
        %v6397 = vsel %vm6396, %v6389, %v6393
        %v6398 = vand.u32 2147483647, %v6388
        %vm6399 = vcmp.eq.f32.partialorder %v6398, 8.507059e+37
        %v6400 = vand.u32 %v6388, 2147483648
        %v6401 = vor.u32 1.1754944e-38, %v6400
        %v6402 = vsel %vm6399, %v6401, %v6397
        %v6403 = vmul.f32 %v6378, %v6402
        %v6404 = vmin.f32 %v6403, 1.0
        %v6405 = vmax.f32 %v6404, -1.0
        %v6406 = vmul.f32 %v5874, %v5874
        %v6407 = vmin.f32 16.0, %v6406
        %v6408 = vmul.f32 %v6407, 2.1237322e-06
        %v6409 = vadd.f32 %v6408, 0.00028619796
        %v6410 = vmul.f32 %v6407, %v6409
        %v6411 = vadd.f32 %v6410, 0.0036580483
        %v6412 = vmul.f32 %v6407, %v6411
        %v6413 = vadd.f32 %v6412, 0.05243302
        %v6414 = vmul.f32 %v6407, %v6413
        %v6415 = vadd.f32 %v6414, 0.18741608
        %v6416 = vmul.f32 %v6407, %v6415
        %v6417 = vadd.f32 %v6416, 1.1283791
        %v6418 = vmul.f32 %v5874, %v6417
        %v6419 = vmul.f32 %v6407, 3.8918573e-05
        %v6420 = vadd.f32 %v6419, 0.001143296
        %v6421 = vmul.f32 %v6407, %v6420
        %v6422 = vadd.f32 %v6421, 0.014752088
        %v6423 = vmul.f32 %v6407, %v6422
        %v6424 = vadd.f32 %v6423, 0.112945676
        %v6425 = vmul.f32 %v6407, %v6424
        %v6426 = vadd.f32 %v6425, 0.4994258
        %v6427 = vmul.f32 %v6407, %v6426
        %v6428 = vadd.f32 %v6427, 1.0
        %v6429 = vrcp.pop %v6428
        %v6430 = vmul.f32 %v6428, %v6429
        %v6431 = vsub.f32 1.0, %v6430
        %v6432 = vmul.f32 %v6429, %v6431
        %v6433 = vadd.f32 %v6429, %v6432
        %vm6434 = vweird.f32 %v6428
        %vm6435 = vweird.f32 %v6429
        %vm6436 = vmor %vm6434, %vm6435
        %v6437 = vsel %vm6436, %v6429, %v6433
        %v6438 = vand.u32 2147483647, %v6428
        %vm6439 = vcmp.eq.f32.partialorder %v6438, 8.507059e+37
        %v6440 = vand.u32 %v6428, 2147483648
        %v6441 = vor.u32 1.1754944e-38, %v6440
        %v6442 = vsel %vm6439, %v6441, %v6437
        %v6443 = vmul.f32 %v6418, %v6442
        %v6444 = vmin.f32 %v6443, 1.0
        %v6445 = vmax.f32 %v6444, -1.0
        %v6446 = vmul.f32 %v5875, %v5875
        %v6447 = vmin.f32 16.0, %v6446
        %v6448 = vmul.f32 %v6447, 2.1237322e-06
        %v6449 = vadd.f32 %v6448, 0.00028619796
        %v6450 = vmul.f32 %v6447, %v6449
        %v6451 = vadd.f32 %v6450, 0.0036580483
        %v6452 = vmul.f32 %v6447, %v6451
        %v6453 = vadd.f32 %v6452, 0.05243302
        %v6454 = vmul.f32 %v6447, %v6453
        %v6455 = vadd.f32 %v6454, 0.18741608
        %v6456 = vmul.f32 %v6447, %v6455
        %v6457 = vadd.f32 %v6456, 1.1283791
        %v6458 = vmul.f32 %v5875, %v6457
        %v6459 = vmul.f32 %v6447, 3.8918573e-05
        %v6460 = vadd.f32 %v6459, 0.001143296
        %v6461 = vmul.f32 %v6447, %v6460
        %v6462 = vadd.f32 %v6461, 0.014752088
        %v6463 = vmul.f32 %v6447, %v6462
        %v6464 = vadd.f32 %v6463, 0.112945676
        %v6465 = vmul.f32 %v6447, %v6464
        %v6466 = vadd.f32 %v6465, 0.4994258
        %v6467 = vmul.f32 %v6447, %v6466
        %v6468 = vadd.f32 %v6467, 1.0
        %v6469 = vrcp.pop %v6468
        %v6470 = vmul.f32 %v6468, %v6469
        %v6471 = vsub.f32 1.0, %v6470
        %v6472 = vmul.f32 %v6469, %v6471
        %v6473 = vadd.f32 %v6469, %v6472
        %vm6474 = vweird.f32 %v6468
        %vm6475 = vweird.f32 %v6469
        %vm6476 = vmor %vm6474, %vm6475
        %v6477 = vsel %vm6476, %v6469, %v6473
        %v6478 = vand.u32 2147483647, %v6468
        %vm6479 = vcmp.eq.f32.partialorder %v6478, 8.507059e+37
        %v6480 = vand.u32 %v6468, 2147483648
        %v6481 = vor.u32 1.1754944e-38, %v6480
        %v6482 = vsel %vm6479, %v6481, %v6477
        %v6483 = vmul.f32 %v6458, %v6482
        %v6484 = vmin.f32 %v6483, 1.0
        %v6485 = vmax.f32 %v6484, -1.0
        %v6486 = vmul.f32 %v5876, %v5876
        %v6487 = vmin.f32 16.0, %v6486
        %v6488 = vmul.f32 %v6487, 2.1237322e-06
        %v6489 = vadd.f32 %v6488, 0.00028619796
        %v6490 = vmul.f32 %v6487, %v6489
        %v6491 = vadd.f32 %v6490, 0.0036580483
        %v6492 = vmul.f32 %v6487, %v6491
        %v6493 = vadd.f32 %v6492, 0.05243302
        %v6494 = vmul.f32 %v6487, %v6493
        %v6495 = vadd.f32 %v6494, 0.18741608
        %v6496 = vmul.f32 %v6487, %v6495
        %v6497 = vadd.f32 %v6496, 1.1283791
        %v6498 = vmul.f32 %v5876, %v6497
        %v6499 = vmul.f32 %v6487, 3.8918573e-05
        %v6500 = vadd.f32 %v6499, 0.001143296
        %v6501 = vmul.f32 %v6487, %v6500
        %v6502 = vadd.f32 %v6501, 0.014752088
        %v6503 = vmul.f32 %v6487, %v6502
        %v6504 = vadd.f32 %v6503, 0.112945676
        %v6505 = vmul.f32 %v6487, %v6504
        %v6506 = vadd.f32 %v6505, 0.4994258
        %v6507 = vmul.f32 %v6487, %v6506
        %v6508 = vadd.f32 %v6507, 1.0
        %v6509 = vrcp.pop %v6508
        %v6510 = vmul.f32 %v6508, %v6509
        %v6511 = vsub.f32 1.0, %v6510
        %v6512 = vmul.f32 %v6509, %v6511
        %v6513 = vadd.f32 %v6509, %v6512
        %vm6514 = vweird.f32 %v6508
        %vm6515 = vweird.f32 %v6509
        %vm6516 = vmor %vm6514, %vm6515
        %v6517 = vsel %vm6516, %v6509, %v6513
        %v6518 = vand.u32 2147483647, %v6508
        %vm6519 = vcmp.eq.f32.partialorder %v6518, 8.507059e+37
        %v6520 = vand.u32 %v6508, 2147483648
        %v6521 = vor.u32 1.1754944e-38, %v6520
        %v6522 = vsel %vm6519, %v6521, %v6517
        %v6523 = vmul.f32 %v6498, %v6522
        %v6524 = vmin.f32 %v6523, 1.0
        %v6525 = vmax.f32 %v6524, -1.0
        %v6526 = vmul.f32 %v5877, %v5877
        %v6527 = vmin.f32 16.0, %v6526
        %v6528 = vmul.f32 %v6527, 2.1237322e-06
        %v6529 = vadd.f32 %v6528, 0.00028619796
        %v6530 = vmul.f32 %v6527, %v6529
        %v6531 = vadd.f32 %v6530, 0.0036580483
        %v6532 = vmul.f32 %v6527, %v6531
        %v6533 = vadd.f32 %v6532, 0.05243302
        %v6534 = vmul.f32 %v6527, %v6533
        %v6535 = vadd.f32 %v6534, 0.18741608
        %v6536 = vmul.f32 %v6527, %v6535
        %v6537 = vadd.f32 %v6536, 1.1283791
        %v6538 = vmul.f32 %v5877, %v6537
        %v6539 = vmul.f32 %v6527, 3.8918573e-05
        %v6540 = vadd.f32 %v6539, 0.001143296
        %v6541 = vmul.f32 %v6527, %v6540
        %v6542 = vadd.f32 %v6541, 0.014752088
        %v6543 = vmul.f32 %v6527, %v6542
        %v6544 = vadd.f32 %v6543, 0.112945676
        %v6545 = vmul.f32 %v6527, %v6544
        %v6546 = vadd.f32 %v6545, 0.4994258
        %v6547 = vmul.f32 %v6527, %v6546
        %v6548 = vadd.f32 %v6547, 1.0
        %v6549 = vrcp.pop %v6548
        %v6550 = vmul.f32 %v6548, %v6549
        %v6551 = vsub.f32 1.0, %v6550
        %v6552 = vmul.f32 %v6549, %v6551
        %v6553 = vadd.f32 %v6549, %v6552
        %vm6554 = vweird.f32 %v6548
        %vm6555 = vweird.f32 %v6549
        %vm6556 = vmor %vm6554, %vm6555
        %v6557 = vsel %vm6556, %v6549, %v6553
        %v6558 = vand.u32 2147483647, %v6548
        %vm6559 = vcmp.eq.f32.partialorder %v6558, 8.507059e+37
        %v6560 = vand.u32 %v6548, 2147483648
        %v6561 = vor.u32 1.1754944e-38, %v6560
        %v6562 = vsel %vm6559, %v6561, %v6557
        %v6563 = vmul.f32 %v6538, %v6562
        %v6564 = vmin.f32 %v6563, 1.0
        %v6565 = vmax.f32 %v6564, -1.0
        %v6566 = vmul.f32 %v5878, %v5878
        %v6567 = vmin.f32 16.0, %v6566
        %v6568 = vmul.f32 %v6567, 2.1237322e-06
        %v6569 = vadd.f32 %v6568, 0.00028619796
        %v6570 = vmul.f32 %v6567, %v6569
        %v6571 = vadd.f32 %v6570, 0.0036580483
        %v6572 = vmul.f32 %v6567, %v6571
        %v6573 = vadd.f32 %v6572, 0.05243302
        %v6574 = vmul.f32 %v6567, %v6573
        %v6575 = vadd.f32 %v6574, 0.18741608
        %v6576 = vmul.f32 %v6567, %v6575
        %v6577 = vadd.f32 %v6576, 1.1283791
        %v6578 = vmul.f32 %v5878, %v6577
        %v6579 = vmul.f32 %v6567, 3.8918573e-05
        %v6580 = vadd.f32 %v6579, 0.001143296
        %v6581 = vmul.f32 %v6567, %v6580
        %v6582 = vadd.f32 %v6581, 0.014752088
        %v6583 = vmul.f32 %v6567, %v6582
        %v6584 = vadd.f32 %v6583, 0.112945676
        %v6585 = vmul.f32 %v6567, %v6584
        %v6586 = vadd.f32 %v6585, 0.4994258
        %v6587 = vmul.f32 %v6567, %v6586
        %v6588 = vadd.f32 %v6587, 1.0
        %v6589 = vrcp.pop %v6588
        %v6590 = vmul.f32 %v6588, %v6589
        %v6591 = vsub.f32 1.0, %v6590
        %v6592 = vmul.f32 %v6589, %v6591
        %v6593 = vadd.f32 %v6589, %v6592
        %vm6594 = vweird.f32 %v6588
        %vm6595 = vweird.f32 %v6589
        %vm6596 = vmor %vm6594, %vm6595
        %v6597 = vsel %vm6596, %v6589, %v6593
        %v6598 = vand.u32 2147483647, %v6588
        %vm6599 = vcmp.eq.f32.partialorder %v6598, 8.507059e+37
        %v6600 = vand.u32 %v6588, 2147483648
        %v6601 = vor.u32 1.1754944e-38, %v6600
        %v6602 = vsel %vm6599, %v6601, %v6597
        %v6603 = vmul.f32 %v6578, %v6602
        %v6604 = vmin.f32 %v6603, 1.0
        %v6605 = vmax.f32 %v6604, -1.0
        %v6606 = vmul.f32 %v5879, %v5879
        %v6607 = vmin.f32 16.0, %v6606
        %v6608 = vmul.f32 %v6607, 2.1237322e-06
        %v6609 = vadd.f32 %v6608, 0.00028619796
        %v6610 = vmul.f32 %v6607, %v6609
        %v6611 = vadd.f32 %v6610, 0.0036580483
        %v6612 = vmul.f32 %v6607, %v6611
        %v6613 = vadd.f32 %v6612, 0.05243302
        %v6614 = vmul.f32 %v6607, %v6613
        %v6615 = vadd.f32 %v6614, 0.18741608
        %v6616 = vmul.f32 %v6607, %v6615
        %v6617 = vadd.f32 %v6616, 1.1283791
        %v6618 = vmul.f32 %v5879, %v6617
        %v6619 = vmul.f32 %v6607, 3.8918573e-05
        %v6620 = vadd.f32 %v6619, 0.001143296
        %v6621 = vmul.f32 %v6607, %v6620
        %v6622 = vadd.f32 %v6621, 0.014752088
        %v6623 = vmul.f32 %v6607, %v6622
        %v6624 = vadd.f32 %v6623, 0.112945676
        %v6625 = vmul.f32 %v6607, %v6624
        %v6626 = vadd.f32 %v6625, 0.4994258
        %v6627 = vmul.f32 %v6607, %v6626
        %v6628 = vadd.f32 %v6627, 1.0
        %v6629 = vrcp.pop %v6628
        %v6630 = vmul.f32 %v6628, %v6629
        %v6631 = vsub.f32 1.0, %v6630
        %v6632 = vmul.f32 %v6629, %v6631
        %v6633 = vadd.f32 %v6629, %v6632
        %vm6634 = vweird.f32 %v6628
        %vm6635 = vweird.f32 %v6629
        %vm6636 = vmor %vm6634, %vm6635
        %v6637 = vsel %vm6636, %v6629, %v6633
        %v6638 = vand.u32 2147483647, %v6628
        %vm6639 = vcmp.eq.f32.partialorder %v6638, 8.507059e+37
        %v6640 = vand.u32 %v6628, 2147483648
        %v6641 = vor.u32 1.1754944e-38, %v6640
        %v6642 = vsel %vm6639, %v6641, %v6637
        %v6643 = vmul.f32 %v6618, %v6642
        %v6644 = vmin.f32 %v6643, 1.0
        %v6645 = vmax.f32 %v6644, -1.0
        %v6646 = vmul.f32 %v5880, %v5880
        %v6647 = vmin.f32 16.0, %v6646
        %v6648 = vmul.f32 %v6647, 2.1237322e-06
        %v6649 = vadd.f32 %v6648, 0.00028619796
        %v6650 = vmul.f32 %v6647, %v6649
        %v6651 = vadd.f32 %v6650, 0.0036580483
        %v6652 = vmul.f32 %v6647, %v6651
        %v6653 = vadd.f32 %v6652, 0.05243302
        %v6654 = vmul.f32 %v6647, %v6653
        %v6655 = vadd.f32 %v6654, 0.18741608
        %v6656 = vmul.f32 %v6647, %v6655
        %v6657 = vadd.f32 %v6656, 1.1283791
        %v6658 = vmul.f32 %v5880, %v6657
        %v6659 = vmul.f32 %v6647, 3.8918573e-05
        %v6660 = vadd.f32 %v6659, 0.001143296
        %v6661 = vmul.f32 %v6647, %v6660
        %v6662 = vadd.f32 %v6661, 0.014752088
        %v6663 = vmul.f32 %v6647, %v6662
        %v6664 = vadd.f32 %v6663, 0.112945676
        %v6665 = vmul.f32 %v6647, %v6664
        %v6666 = vadd.f32 %v6665, 0.4994258
        %v6667 = vmul.f32 %v6647, %v6666
        %v6668 = vadd.f32 %v6667, 1.0
        %v6669 = vrcp.pop %v6668
        %v6670 = vmul.f32 %v6668, %v6669
        %v6671 = vsub.f32 1.0, %v6670
        %v6672 = vmul.f32 %v6669, %v6671
        %v6673 = vadd.f32 %v6669, %v6672
        %vm6674 = vweird.f32 %v6668
        %vm6675 = vweird.f32 %v6669
        %vm6676 = vmor %vm6674, %vm6675
        %v6677 = vsel %vm6676, %v6669, %v6673
        %v6678 = vand.u32 2147483647, %v6668
        %vm6679 = vcmp.eq.f32.partialorder %v6678, 8.507059e+37
        %v6680 = vand.u32 %v6668, 2147483648
        %v6681 = vor.u32 1.1754944e-38, %v6680
        %v6682 = vsel %vm6679, %v6681, %v6677
        %v6683 = vmul.f32 %v6658, %v6682
        %v6684 = vmin.f32 %v6683, 1.0
        %v6685 = vmax.f32 %v6684, -1.0
        %v6686 = vmul.f32 %v5881, %v5881
        %v6687 = vmin.f32 16.0, %v6686
        %v6688 = vmul.f32 %v6687, 2.1237322e-06
        %v6689 = vadd.f32 %v6688, 0.00028619796
        %v6690 = vmul.f32 %v6687, %v6689
        %v6691 = vadd.f32 %v6690, 0.0036580483
        %v6692 = vmul.f32 %v6687, %v6691
        %v6693 = vadd.f32 %v6692, 0.05243302
        %v6694 = vmul.f32 %v6687, %v6693
        %v6695 = vadd.f32 %v6694, 0.18741608
        %v6696 = vmul.f32 %v6687, %v6695
        %v6697 = vadd.f32 %v6696, 1.1283791
        %v6698 = vmul.f32 %v5881, %v6697
        %v6699 = vmul.f32 %v6687, 3.8918573e-05
        %v6700 = vadd.f32 %v6699, 0.001143296
        %v6701 = vmul.f32 %v6687, %v6700
        %v6702 = vadd.f32 %v6701, 0.014752088
        %v6703 = vmul.f32 %v6687, %v6702
        %v6704 = vadd.f32 %v6703, 0.112945676
        %v6705 = vmul.f32 %v6687, %v6704
        %v6706 = vadd.f32 %v6705, 0.4994258
        %v6707 = vmul.f32 %v6687, %v6706
        %v6708 = vadd.f32 %v6707, 1.0
        %v6709 = vrcp.pop %v6708
        %v6710 = vmul.f32 %v6708, %v6709
        %v6711 = vsub.f32 1.0, %v6710
        %v6712 = vmul.f32 %v6709, %v6711
        %v6713 = vadd.f32 %v6709, %v6712
        %vm6714 = vweird.f32 %v6708
        %vm6715 = vweird.f32 %v6709
        %vm6716 = vmor %vm6714, %vm6715
        %v6717 = vsel %vm6716, %v6709, %v6713
        %v6718 = vand.u32 2147483647, %v6708
        %vm6719 = vcmp.eq.f32.partialorder %v6718, 8.507059e+37
        %v6720 = vand.u32 %v6708, 2147483648
        %v6721 = vor.u32 1.1754944e-38, %v6720
        %v6722 = vsel %vm6719, %v6721, %v6717
        %v6723 = vmul.f32 %v6698, %v6722
        %v6724 = vmin.f32 %v6723, 1.0
        %v6725 = vmax.f32 %v6724, -1.0
        %v6726 = vmul.f32 %v5882, %v5882
        %v6727 = vmin.f32 16.0, %v6726
        %v6728 = vmul.f32 %v6727, 2.1237322e-06
        %v6729 = vadd.f32 %v6728, 0.00028619796
        %v6730 = vmul.f32 %v6727, %v6729
        %v6731 = vadd.f32 %v6730, 0.0036580483
        %v6732 = vmul.f32 %v6727, %v6731
        %v6733 = vadd.f32 %v6732, 0.05243302
        %v6734 = vmul.f32 %v6727, %v6733
        %v6735 = vadd.f32 %v6734, 0.18741608
        %v6736 = vmul.f32 %v6727, %v6735
        %v6737 = vadd.f32 %v6736, 1.1283791
        %v6738 = vmul.f32 %v5882, %v6737
        %v6739 = vmul.f32 %v6727, 3.8918573e-05
        %v6740 = vadd.f32 %v6739, 0.001143296
        %v6741 = vmul.f32 %v6727, %v6740
        %v6742 = vadd.f32 %v6741, 0.014752088
        %v6743 = vmul.f32 %v6727, %v6742
        %v6744 = vadd.f32 %v6743, 0.112945676
        %v6745 = vmul.f32 %v6727, %v6744
        %v6746 = vadd.f32 %v6745, 0.4994258
        %v6747 = vmul.f32 %v6727, %v6746
        %v6748 = vadd.f32 %v6747, 1.0
        %v6749 = vrcp.pop %v6748
        %v6750 = vmul.f32 %v6748, %v6749
        %v6751 = vsub.f32 1.0, %v6750
        %v6752 = vmul.f32 %v6749, %v6751
        %v6753 = vadd.f32 %v6749, %v6752
        %vm6754 = vweird.f32 %v6748
        %vm6755 = vweird.f32 %v6749
        %vm6756 = vmor %vm6754, %vm6755
        %v6757 = vsel %vm6756, %v6749, %v6753
        %v6758 = vand.u32 2147483647, %v6748
        %vm6759 = vcmp.eq.f32.partialorder %v6758, 8.507059e+37
        %v6760 = vand.u32 %v6748, 2147483648
        %v6761 = vor.u32 1.1754944e-38, %v6760
        %v6762 = vsel %vm6759, %v6761, %v6757
        %v6763 = vmul.f32 %v6738, %v6762
        %v6764 = vmin.f32 %v6763, 1.0
        %v6765 = vmax.f32 %v6764, -1.0
        %v6766 = vmul.f32 %v5883, %v5883
        %v6767 = vmin.f32 16.0, %v6766
        %v6768 = vmul.f32 %v6767, 2.1237322e-06
        %v6769 = vadd.f32 %v6768, 0.00028619796
        %v6770 = vmul.f32 %v6767, %v6769
        %v6771 = vadd.f32 %v6770, 0.0036580483
        %v6772 = vmul.f32 %v6767, %v6771
        %v6773 = vadd.f32 %v6772, 0.05243302
        %v6774 = vmul.f32 %v6767, %v6773
        %v6775 = vadd.f32 %v6774, 0.18741608
        %v6776 = vmul.f32 %v6767, %v6775
        %v6777 = vadd.f32 %v6776, 1.1283791
        %v6778 = vmul.f32 %v5883, %v6777
        %v6779 = vmul.f32 %v6767, 3.8918573e-05
        %v6780 = vadd.f32 %v6779, 0.001143296
        %v6781 = vmul.f32 %v6767, %v6780
        %v6782 = vadd.f32 %v6781, 0.014752088
        %v6783 = vmul.f32 %v6767, %v6782
        %v6784 = vadd.f32 %v6783, 0.112945676
        %v6785 = vmul.f32 %v6767, %v6784
        %v6786 = vadd.f32 %v6785, 0.4994258
        %v6787 = vmul.f32 %v6767, %v6786
        %v6788 = vadd.f32 %v6787, 1.0
        %v6789 = vrcp.pop %v6788
        %v6790 = vmul.f32 %v6788, %v6789
        %v6791 = vsub.f32 1.0, %v6790
        %v6792 = vmul.f32 %v6789, %v6791
        %v6793 = vadd.f32 %v6789, %v6792
        %vm6794 = vweird.f32 %v6788
        %vm6795 = vweird.f32 %v6789
        %vm6796 = vmor %vm6794, %vm6795
        %v6797 = vsel %vm6796, %v6789, %v6793
        %v6798 = vand.u32 2147483647, %v6788
        %vm6799 = vcmp.eq.f32.partialorder %v6798, 8.507059e+37
        %v6800 = vand.u32 %v6788, 2147483648
        %v6801 = vor.u32 1.1754944e-38, %v6800
        %v6802 = vsel %vm6799, %v6801, %v6797
        %v6803 = vmul.f32 %v6778, %v6802
        %v6804 = vmin.f32 %v6803, 1.0
        %v6805 = vmax.f32 %v6804, -1.0
        %v6806 = vmul.f32 %v5884, %v5884
        %v6807 = vmin.f32 16.0, %v6806
        %v6808 = vmul.f32 %v6807, 2.1237322e-06
        %v6809 = vadd.f32 %v6808, 0.00028619796
        %v6810 = vmul.f32 %v6807, %v6809
        %v6811 = vadd.f32 %v6810, 0.0036580483
        %v6812 = vmul.f32 %v6807, %v6811
        %v6813 = vadd.f32 %v6812, 0.05243302
        %v6814 = vmul.f32 %v6807, %v6813
        %v6815 = vadd.f32 %v6814, 0.18741608
        %v6816 = vmul.f32 %v6807, %v6815
        %v6817 = vadd.f32 %v6816, 1.1283791
        %v6818 = vmul.f32 %v5884, %v6817
        %v6819 = vmul.f32 %v6807, 3.8918573e-05
        %v6820 = vadd.f32 %v6819, 0.001143296
        %v6821 = vmul.f32 %v6807, %v6820
        %v6822 = vadd.f32 %v6821, 0.014752088
        %v6823 = vmul.f32 %v6807, %v6822
        %v6824 = vadd.f32 %v6823, 0.112945676
        %v6825 = vmul.f32 %v6807, %v6824
        %v6826 = vadd.f32 %v6825, 0.4994258
        %v6827 = vmul.f32 %v6807, %v6826
        %v6828 = vadd.f32 %v6827, 1.0
        %v6829 = vrcp.pop %v6828
        %v6830 = vmul.f32 %v6828, %v6829
        %v6831 = vsub.f32 1.0, %v6830
        %v6832 = vmul.f32 %v6829, %v6831
        %v6833 = vadd.f32 %v6829, %v6832
        %vm6834 = vweird.f32 %v6828
        %vm6835 = vweird.f32 %v6829
        %vm6836 = vmor %vm6834, %vm6835
        %v6837 = vsel %vm6836, %v6829, %v6833
        %v6838 = vand.u32 2147483647, %v6828
        %vm6839 = vcmp.eq.f32.partialorder %v6838, 8.507059e+37
        %v6840 = vand.u32 %v6828, 2147483648
        %v6841 = vor.u32 1.1754944e-38, %v6840
        %v6842 = vsel %vm6839, %v6841, %v6837
        %v6843 = vmul.f32 %v6818, %v6842
        %v6844 = vmin.f32 %v6843, 1.0
        %v6845 = vmax.f32 %v6844, -1.0
        %v6846 = vmul.f32 %v5885, %v5885
        %v6847 = vmin.f32 16.0, %v6846
        %v6848 = vmul.f32 %v6847, 2.1237322e-06
        %v6849 = vadd.f32 %v6848, 0.00028619796
        %v6850 = vmul.f32 %v6847, %v6849
        %v6851 = vadd.f32 %v6850, 0.0036580483
        %v6852 = vmul.f32 %v6847, %v6851
        %v6853 = vadd.f32 %v6852, 0.05243302
        %v6854 = vmul.f32 %v6847, %v6853
        %v6855 = vadd.f32 %v6854, 0.18741608
        %v6856 = vmul.f32 %v6847, %v6855
        %v6857 = vadd.f32 %v6856, 1.1283791
        %v6858 = vmul.f32 %v5885, %v6857
        %v6859 = vmul.f32 %v6847, 3.8918573e-05
        %v6860 = vadd.f32 %v6859, 0.001143296
        %v6861 = vmul.f32 %v6847, %v6860
        %v6862 = vadd.f32 %v6861, 0.014752088
        %v6863 = vmul.f32 %v6847, %v6862
        %v6864 = vadd.f32 %v6863, 0.112945676
        %v6865 = vmul.f32 %v6847, %v6864
        %v6866 = vadd.f32 %v6865, 0.4994258
        %v6867 = vmul.f32 %v6847, %v6866
        %v6868 = vadd.f32 %v6867, 1.0
        %v6869 = vrcp.pop %v6868
        %v6870 = vmul.f32 %v6868, %v6869
        %v6871 = vsub.f32 1.0, %v6870
        %v6872 = vmul.f32 %v6869, %v6871
        %v6873 = vadd.f32 %v6869, %v6872
        %vm6874 = vweird.f32 %v6868
        %vm6875 = vweird.f32 %v6869
        %vm6876 = vmor %vm6874, %vm6875
        %v6877 = vsel %vm6876, %v6869, %v6873
        %v6878 = vand.u32 2147483647, %v6868
        %vm6879 = vcmp.eq.f32.partialorder %v6878, 8.507059e+37
        %v6880 = vand.u32 %v6868, 2147483648
        %v6881 = vor.u32 1.1754944e-38, %v6880
        %v6882 = vsel %vm6879, %v6881, %v6877
        %v6883 = vmul.f32 %v6858, %v6882
        %v6884 = vmin.f32 %v6883, 1.0
        %v6885 = vmax.f32 %v6884, -1.0
        %v6886 = vmul.f32 %v5886, %v5886
        %v6887 = vmin.f32 16.0, %v6886
        %v6888 = vmul.f32 %v6887, 2.1237322e-06
        %v6889 = vadd.f32 %v6888, 0.00028619796
        %v6890 = vmul.f32 %v6887, %v6889
        %v6891 = vadd.f32 %v6890, 0.0036580483
        %v6892 = vmul.f32 %v6887, %v6891
        %v6893 = vadd.f32 %v6892, 0.05243302
        %v6894 = vmul.f32 %v6887, %v6893
        %v6895 = vadd.f32 %v6894, 0.18741608
        %v6896 = vmul.f32 %v6887, %v6895
        %v6897 = vadd.f32 %v6896, 1.1283791
        %v6898 = vmul.f32 %v5886, %v6897
        %v6899 = vmul.f32 %v6887, 3.8918573e-05
        %v6900 = vadd.f32 %v6899, 0.001143296
        %v6901 = vmul.f32 %v6887, %v6900
        %v6902 = vadd.f32 %v6901, 0.014752088
        %v6903 = vmul.f32 %v6887, %v6902
        %v6904 = vadd.f32 %v6903, 0.112945676
        %v6905 = vmul.f32 %v6887, %v6904
        %v6906 = vadd.f32 %v6905, 0.4994258
        %v6907 = vmul.f32 %v6887, %v6906
        %v6908 = vadd.f32 %v6907, 1.0
        %v6909 = vrcp.pop %v6908
        %v6910 = vmul.f32 %v6908, %v6909
        %v6911 = vsub.f32 1.0, %v6910
        %v6912 = vmul.f32 %v6909, %v6911
        %v6913 = vadd.f32 %v6909, %v6912
        %vm6914 = vweird.f32 %v6908
        %vm6915 = vweird.f32 %v6909
        %vm6916 = vmor %vm6914, %vm6915
        %v6917 = vsel %vm6916, %v6909, %v6913
        %v6918 = vand.u32 2147483647, %v6908
        %vm6919 = vcmp.eq.f32.partialorder %v6918, 8.507059e+37
        %v6920 = vand.u32 %v6908, 2147483648
        %v6921 = vor.u32 1.1754944e-38, %v6920
        %v6922 = vsel %vm6919, %v6921, %v6917
        %v6923 = vmul.f32 %v6898, %v6922
        %v6924 = vmin.f32 %v6923, 1.0
        %v6925 = vmax.f32 %v6924, -1.0
        %v6926 = vmul.f32 %v5887, %v5887
        %v6927 = vmin.f32 16.0, %v6926
        %v6928 = vmul.f32 %v6927, 2.1237322e-06
        %v6929 = vadd.f32 %v6928, 0.00028619796
        %v6930 = vmul.f32 %v6927, %v6929
        %v6931 = vadd.f32 %v6930, 0.0036580483
        %v6932 = vmul.f32 %v6927, %v6931
        %v6933 = vadd.f32 %v6932, 0.05243302
        %v6934 = vmul.f32 %v6927, %v6933
        %v6935 = vadd.f32 %v6934, 0.18741608
        %v6936 = vmul.f32 %v6927, %v6935
        %v6937 = vadd.f32 %v6936, 1.1283791
        %v6938 = vmul.f32 %v5887, %v6937
        %v6939 = vmul.f32 %v6927, 3.8918573e-05
        %v6940 = vadd.f32 %v6939, 0.001143296
        %v6941 = vmul.f32 %v6927, %v6940
        %v6942 = vadd.f32 %v6941, 0.014752088
        %v6943 = vmul.f32 %v6927, %v6942
        %v6944 = vadd.f32 %v6943, 0.112945676
        %v6945 = vmul.f32 %v6927, %v6944
        %v6946 = vadd.f32 %v6945, 0.4994258
        %v6947 = vmul.f32 %v6927, %v6946
        %v6948 = vadd.f32 %v6947, 1.0
        %v6949 = vrcp.pop %v6948
        %v6950 = vmul.f32 %v6948, %v6949
        %v6951 = vsub.f32 1.0, %v6950
        %v6952 = vmul.f32 %v6949, %v6951
        %v6953 = vadd.f32 %v6949, %v6952
        %vm6954 = vweird.f32 %v6948
        %vm6955 = vweird.f32 %v6949
        %vm6956 = vmor %vm6954, %vm6955
        %v6957 = vsel %vm6956, %v6949, %v6953
        %v6958 = vand.u32 2147483647, %v6948
        %vm6959 = vcmp.eq.f32.partialorder %v6958, 8.507059e+37
        %v6960 = vand.u32 %v6948, 2147483648
        %v6961 = vor.u32 1.1754944e-38, %v6960
        %v6962 = vsel %vm6959, %v6961, %v6957
        %v6963 = vmul.f32 %v6938, %v6962
        %v6964 = vmin.f32 %v6963, 1.0
        %v6965 = vmax.f32 %v6964, -1.0
        %v6966 = vmul.f32 %v5888, %v5888
        %v6967 = vmin.f32 16.0, %v6966
        %v6968 = vmul.f32 %v6967, 2.1237322e-06
        %v6969 = vadd.f32 %v6968, 0.00028619796
        %v6970 = vmul.f32 %v6967, %v6969
        %v6971 = vadd.f32 %v6970, 0.0036580483
        %v6972 = vmul.f32 %v6967, %v6971
        %v6973 = vadd.f32 %v6972, 0.05243302
        %v6974 = vmul.f32 %v6967, %v6973
        %v6975 = vadd.f32 %v6974, 0.18741608
        %v6976 = vmul.f32 %v6967, %v6975
        %v6977 = vadd.f32 %v6976, 1.1283791
        %v6978 = vmul.f32 %v5888, %v6977
        %v6979 = vmul.f32 %v6967, 3.8918573e-05
        %v6980 = vadd.f32 %v6979, 0.001143296
        %v6981 = vmul.f32 %v6967, %v6980
        %v6982 = vadd.f32 %v6981, 0.014752088
        %v6983 = vmul.f32 %v6967, %v6982
        %v6984 = vadd.f32 %v6983, 0.112945676
        %v6985 = vmul.f32 %v6967, %v6984
        %v6986 = vadd.f32 %v6985, 0.4994258
        %v6987 = vmul.f32 %v6967, %v6986
        %v6988 = vadd.f32 %v6987, 1.0
        %v6989 = vrcp.pop %v6988
        %v6990 = vmul.f32 %v6988, %v6989
        %v6991 = vsub.f32 1.0, %v6990
        %v6992 = vmul.f32 %v6989, %v6991
        %v6993 = vadd.f32 %v6989, %v6992
        %vm6994 = vweird.f32 %v6988
        %vm6995 = vweird.f32 %v6989
        %vm6996 = vmor %vm6994, %vm6995
        %v6997 = vsel %vm6996, %v6989, %v6993
        %v6998 = vand.u32 2147483647, %v6988
        %vm6999 = vcmp.eq.f32.partialorder %v6998, 8.507059e+37
        %v7000 = vand.u32 %v6988, 2147483648
        %v7001 = vor.u32 1.1754944e-38, %v7000
        %v7002 = vsel %vm6999, %v7001, %v6997
        %v7003 = vmul.f32 %v6978, %v7002
        %v7004 = vmin.f32 %v7003, 1.0
        %v7005 = vmax.f32 %v7004, -1.0
        %v7006 = vmul.f32 %v5889, %v5889
        %v7007 = vmin.f32 16.0, %v7006
        %v7008 = vmul.f32 %v7007, 2.1237322e-06
        %v7009 = vadd.f32 %v7008, 0.00028619796
        %v7010 = vmul.f32 %v7007, %v7009
        %v7011 = vadd.f32 %v7010, 0.0036580483
        %v7012 = vmul.f32 %v7007, %v7011
        %v7013 = vadd.f32 %v7012, 0.05243302
        %v7014 = vmul.f32 %v7007, %v7013
        %v7015 = vadd.f32 %v7014, 0.18741608
        %v7016 = vmul.f32 %v7007, %v7015
        %v7017 = vadd.f32 %v7016, 1.1283791
        %v7018 = vmul.f32 %v5889, %v7017
        %v7019 = vmul.f32 %v7007, 3.8918573e-05
        %v7020 = vadd.f32 %v7019, 0.001143296
        %v7021 = vmul.f32 %v7007, %v7020
        %v7022 = vadd.f32 %v7021, 0.014752088
        %v7023 = vmul.f32 %v7007, %v7022
        %v7024 = vadd.f32 %v7023, 0.112945676
        %v7025 = vmul.f32 %v7007, %v7024
        %v7026 = vadd.f32 %v7025, 0.4994258
        %v7027 = vmul.f32 %v7007, %v7026
        %v7028 = vadd.f32 %v7027, 1.0
        %v7029 = vrcp.pop %v7028
        %v7030 = vmul.f32 %v7028, %v7029
        %v7031 = vsub.f32 1.0, %v7030
        %v7032 = vmul.f32 %v7029, %v7031
        %v7033 = vadd.f32 %v7029, %v7032
        %vm7034 = vweird.f32 %v7028
        %vm7035 = vweird.f32 %v7029
        %vm7036 = vmor %vm7034, %vm7035
        %v7037 = vsel %vm7036, %v7029, %v7033
        %v7038 = vand.u32 2147483647, %v7028
        %vm7039 = vcmp.eq.f32.partialorder %v7038, 8.507059e+37
        %v7040 = vand.u32 %v7028, 2147483648
        %v7041 = vor.u32 1.1754944e-38, %v7040
        %v7042 = vsel %vm7039, %v7041, %v7037
        %v7043 = vmul.f32 %v7018, %v7042
        %v7044 = vmin.f32 %v7043, 1.0
        %v7045 = vmax.f32 %v7044, -1.0
        %v7046 = vmul.f32 %v5890, %v5890
        %v7047 = vmin.f32 16.0, %v7046
        %v7048 = vmul.f32 %v7047, 2.1237322e-06
        %v7049 = vadd.f32 %v7048, 0.00028619796
        %v7050 = vmul.f32 %v7047, %v7049
        %v7051 = vadd.f32 %v7050, 0.0036580483
        %v7052 = vmul.f32 %v7047, %v7051
        %v7053 = vadd.f32 %v7052, 0.05243302
        %v7054 = vmul.f32 %v7047, %v7053
        %v7055 = vadd.f32 %v7054, 0.18741608
        %v7056 = vmul.f32 %v7047, %v7055
        %v7057 = vadd.f32 %v7056, 1.1283791
        %v7058 = vmul.f32 %v5890, %v7057
        %v7059 = vmul.f32 %v7047, 3.8918573e-05
        %v7060 = vadd.f32 %v7059, 0.001143296
        %v7061 = vmul.f32 %v7047, %v7060
        %v7062 = vadd.f32 %v7061, 0.014752088
        %v7063 = vmul.f32 %v7047, %v7062
        %v7064 = vadd.f32 %v7063, 0.112945676
        %v7065 = vmul.f32 %v7047, %v7064
        %v7066 = vadd.f32 %v7065, 0.4994258
        %v7067 = vmul.f32 %v7047, %v7066
        %v7068 = vadd.f32 %v7067, 1.0
        %v7069 = vrcp.pop %v7068
        %v7070 = vmul.f32 %v7068, %v7069
        %v7071 = vsub.f32 1.0, %v7070
        %v7072 = vmul.f32 %v7069, %v7071
        %v7073 = vadd.f32 %v7069, %v7072
        %vm7074 = vweird.f32 %v7068
        %vm7075 = vweird.f32 %v7069
        %vm7076 = vmor %vm7074, %vm7075
        %v7077 = vsel %vm7076, %v7069, %v7073
        %v7078 = vand.u32 2147483647, %v7068
        %vm7079 = vcmp.eq.f32.partialorder %v7078, 8.507059e+37
        %v7080 = vand.u32 %v7068, 2147483648
        %v7081 = vor.u32 1.1754944e-38, %v7080
        %v7082 = vsel %vm7079, %v7081, %v7077
        %v7083 = vmul.f32 %v7058, %v7082
        %v7084 = vmin.f32 %v7083, 1.0
        %v7085 = vmax.f32 %v7084, -1.0
        %v7086 = vmul.f32 %v5891, %v5891
        %v7087 = vmin.f32 16.0, %v7086
        %v7088 = vmul.f32 %v7087, 2.1237322e-06
        %v7089 = vadd.f32 %v7088, 0.00028619796
        %v7090 = vmul.f32 %v7087, %v7089
        %v7091 = vadd.f32 %v7090, 0.0036580483
        %v7092 = vmul.f32 %v7087, %v7091
        %v7093 = vadd.f32 %v7092, 0.05243302
        %v7094 = vmul.f32 %v7087, %v7093
        %v7095 = vadd.f32 %v7094, 0.18741608
        %v7096 = vmul.f32 %v7087, %v7095
        %v7097 = vadd.f32 %v7096, 1.1283791
        %v7098 = vmul.f32 %v5891, %v7097
        %v7099 = vmul.f32 %v7087, 3.8918573e-05
        %v7100 = vadd.f32 %v7099, 0.001143296
        %v7101 = vmul.f32 %v7087, %v7100
        %v7102 = vadd.f32 %v7101, 0.014752088
        %v7103 = vmul.f32 %v7087, %v7102
        %v7104 = vadd.f32 %v7103, 0.112945676
        %v7105 = vmul.f32 %v7087, %v7104
        %v7106 = vadd.f32 %v7105, 0.4994258
        %v7107 = vmul.f32 %v7087, %v7106
        %v7108 = vadd.f32 %v7107, 1.0
        %v7109 = vrcp.pop %v7108
        %v7110 = vmul.f32 %v7108, %v7109
        %v7111 = vsub.f32 1.0, %v7110
        %v7112 = vmul.f32 %v7109, %v7111
        %v7113 = vadd.f32 %v7109, %v7112
        %vm7114 = vweird.f32 %v7108
        %vm7115 = vweird.f32 %v7109
        %vm7116 = vmor %vm7114, %vm7115
        %v7117 = vsel %vm7116, %v7109, %v7113
        %v7118 = vand.u32 2147483647, %v7108
        %vm7119 = vcmp.eq.f32.partialorder %v7118, 8.507059e+37
        %v7120 = vand.u32 %v7108, 2147483648
        %v7121 = vor.u32 1.1754944e-38, %v7120
        %v7122 = vsel %vm7119, %v7121, %v7117
        %v7123 = vmul.f32 %v7098, %v7122
        %v7124 = vmin.f32 %v7123, 1.0
        %v7125 = vmax.f32 %v7124, -1.0
        %v7126 = vmul.f32 %v5892, %v5892
        %v7127 = vmin.f32 16.0, %v7126
        %v7128 = vmul.f32 %v7127, 2.1237322e-06
        %v7129 = vadd.f32 %v7128, 0.00028619796
        %v7130 = vmul.f32 %v7127, %v7129
        %v7131 = vadd.f32 %v7130, 0.0036580483
        %v7132 = vmul.f32 %v7127, %v7131
        %v7133 = vadd.f32 %v7132, 0.05243302
        %v7134 = vmul.f32 %v7127, %v7133
        %v7135 = vadd.f32 %v7134, 0.18741608
        %v7136 = vmul.f32 %v7127, %v7135
        %v7137 = vadd.f32 %v7136, 1.1283791
        %v7138 = vmul.f32 %v5892, %v7137
        %v7139 = vmul.f32 %v7127, 3.8918573e-05
        %v7140 = vadd.f32 %v7139, 0.001143296
        %v7141 = vmul.f32 %v7127, %v7140
        %v7142 = vadd.f32 %v7141, 0.014752088
        %v7143 = vmul.f32 %v7127, %v7142
        %v7144 = vadd.f32 %v7143, 0.112945676
        %v7145 = vmul.f32 %v7127, %v7144
        %v7146 = vadd.f32 %v7145, 0.4994258
        %v7147 = vmul.f32 %v7127, %v7146
        %v7148 = vadd.f32 %v7147, 1.0
        %v7149 = vrcp.pop %v7148
        %v7150 = vmul.f32 %v7148, %v7149
        %v7151 = vsub.f32 1.0, %v7150
        %v7152 = vmul.f32 %v7149, %v7151
        %v7153 = vadd.f32 %v7149, %v7152
        %vm7154 = vweird.f32 %v7148
        %vm7155 = vweird.f32 %v7149
        %vm7156 = vmor %vm7154, %vm7155
        %v7157 = vsel %vm7156, %v7149, %v7153
        %v7158 = vand.u32 2147483647, %v7148
        %vm7159 = vcmp.eq.f32.partialorder %v7158, 8.507059e+37
        %v7160 = vand.u32 %v7148, 2147483648
        %v7161 = vor.u32 1.1754944e-38, %v7160
        %v7162 = vsel %vm7159, %v7161, %v7157
        %v7163 = vmul.f32 %v7138, %v7162
        %v7164 = vmin.f32 %v7163, 1.0
        %v7165 = vmax.f32 %v7164, -1.0
        %v7166 = vmul.f32 %v5893, %v5893
        %v7167 = vmin.f32 16.0, %v7166
        %v7168 = vmul.f32 %v7167, 2.1237322e-06
        %v7169 = vadd.f32 %v7168, 0.00028619796
        %v7170 = vmul.f32 %v7167, %v7169
        %v7171 = vadd.f32 %v7170, 0.0036580483
        %v7172 = vmul.f32 %v7167, %v7171
        %v7173 = vadd.f32 %v7172, 0.05243302
        %v7174 = vmul.f32 %v7167, %v7173
        %v7175 = vadd.f32 %v7174, 0.18741608
        %v7176 = vmul.f32 %v7167, %v7175
        %v7177 = vadd.f32 %v7176, 1.1283791
        %v7178 = vmul.f32 %v5893, %v7177
        %v7179 = vmul.f32 %v7167, 3.8918573e-05
        %v7180 = vadd.f32 %v7179, 0.001143296
        %v7181 = vmul.f32 %v7167, %v7180
        %v7182 = vadd.f32 %v7181, 0.014752088
        %v7183 = vmul.f32 %v7167, %v7182
        %v7184 = vadd.f32 %v7183, 0.112945676
        %v7185 = vmul.f32 %v7167, %v7184
        %v7186 = vadd.f32 %v7185, 0.4994258
        %v7187 = vmul.f32 %v7167, %v7186
        %v7188 = vadd.f32 %v7187, 1.0
        %v7189 = vrcp.pop %v7188
        %v7190 = vmul.f32 %v7188, %v7189
        %v7191 = vsub.f32 1.0, %v7190
        %v7192 = vmul.f32 %v7189, %v7191
        %v7193 = vadd.f32 %v7189, %v7192
        %vm7194 = vweird.f32 %v7188
        %vm7195 = vweird.f32 %v7189
        %vm7196 = vmor %vm7194, %vm7195
        %v7197 = vsel %vm7196, %v7189, %v7193
        %v7198 = vand.u32 2147483647, %v7188
        %vm7199 = vcmp.eq.f32.partialorder %v7198, 8.507059e+37
        %v7200 = vand.u32 %v7188, 2147483648
        %v7201 = vor.u32 1.1754944e-38, %v7200
        %v7202 = vsel %vm7199, %v7201, %v7197
        %v7203 = vmul.f32 %v7178, %v7202
        %v7204 = vmin.f32 %v7203, 1.0
        %v7205 = vmax.f32 %v7204, -1.0
        %v7206 = vmul.f32 %v5894, %v5894
        %v7207 = vmin.f32 16.0, %v7206
        %v7208 = vmul.f32 %v7207, 2.1237322e-06
        %v7209 = vadd.f32 %v7208, 0.00028619796
        %v7210 = vmul.f32 %v7207, %v7209
        %v7211 = vadd.f32 %v7210, 0.0036580483
        %v7212 = vmul.f32 %v7207, %v7211
        %v7213 = vadd.f32 %v7212, 0.05243302
        %v7214 = vmul.f32 %v7207, %v7213
        %v7215 = vadd.f32 %v7214, 0.18741608
        %v7216 = vmul.f32 %v7207, %v7215
        %v7217 = vadd.f32 %v7216, 1.1283791
        %v7218 = vmul.f32 %v5894, %v7217
        %v7219 = vmul.f32 %v7207, 3.8918573e-05
        %v7220 = vadd.f32 %v7219, 0.001143296
        %v7221 = vmul.f32 %v7207, %v7220
        %v7222 = vadd.f32 %v7221, 0.014752088
        %v7223 = vmul.f32 %v7207, %v7222
        %v7224 = vadd.f32 %v7223, 0.112945676
        %v7225 = vmul.f32 %v7207, %v7224
        %v7226 = vadd.f32 %v7225, 0.4994258
        %v7227 = vmul.f32 %v7207, %v7226
        %v7228 = vadd.f32 %v7227, 1.0
        %v7229 = vrcp.pop %v7228
        %v7230 = vmul.f32 %v7228, %v7229
        %v7231 = vsub.f32 1.0, %v7230
        %v7232 = vmul.f32 %v7229, %v7231
        %v7233 = vadd.f32 %v7229, %v7232
        %vm7234 = vweird.f32 %v7228
        %vm7235 = vweird.f32 %v7229
        %vm7236 = vmor %vm7234, %vm7235
        %v7237 = vsel %vm7236, %v7229, %v7233
        %v7238 = vand.u32 2147483647, %v7228
        %vm7239 = vcmp.eq.f32.partialorder %v7238, 8.507059e+37
        %v7240 = vand.u32 %v7228, 2147483648
        %v7241 = vor.u32 1.1754944e-38, %v7240
        %v7242 = vsel %vm7239, %v7241, %v7237
        %v7243 = vmul.f32 %v7218, %v7242
        %v7244 = vmin.f32 %v7243, 1.0
        %v7245 = vmax.f32 %v7244, -1.0
        %v7246 = vmul.f32 %v5895, %v5895
        %v7247 = vmin.f32 16.0, %v7246
        %v7248 = vmul.f32 %v7247, 2.1237322e-06
        %v7249 = vadd.f32 %v7248, 0.00028619796
        %v7250 = vmul.f32 %v7247, %v7249
        %v7251 = vadd.f32 %v7250, 0.0036580483
        %v7252 = vmul.f32 %v7247, %v7251
        %v7253 = vadd.f32 %v7252, 0.05243302
        %v7254 = vmul.f32 %v7247, %v7253
        %v7255 = vadd.f32 %v7254, 0.18741608
        %v7256 = vmul.f32 %v7247, %v7255
        %v7257 = vadd.f32 %v7256, 1.1283791
        %v7258 = vmul.f32 %v5895, %v7257
        %v7259 = vmul.f32 %v7247, 3.8918573e-05
        %v7260 = vadd.f32 %v7259, 0.001143296
        %v7261 = vmul.f32 %v7247, %v7260
        %v7262 = vadd.f32 %v7261, 0.014752088
        %v7263 = vmul.f32 %v7247, %v7262
        %v7264 = vadd.f32 %v7263, 0.112945676
        %v7265 = vmul.f32 %v7247, %v7264
        %v7266 = vadd.f32 %v7265, 0.4994258
        %v7267 = vmul.f32 %v7247, %v7266
        %v7268 = vadd.f32 %v7267, 1.0
        %v7269 = vrcp.pop %v7268
        %v7270 = vmul.f32 %v7268, %v7269
        %v7271 = vsub.f32 1.0, %v7270
        %v7272 = vmul.f32 %v7269, %v7271
        %v7273 = vadd.f32 %v7269, %v7272
        %vm7274 = vweird.f32 %v7268
        %vm7275 = vweird.f32 %v7269
        %vm7276 = vmor %vm7274, %vm7275
        %v7277 = vsel %vm7276, %v7269, %v7273
        %v7278 = vand.u32 2147483647, %v7268
        %vm7279 = vcmp.eq.f32.partialorder %v7278, 8.507059e+37
        %v7280 = vand.u32 %v7268, 2147483648
        %v7281 = vor.u32 1.1754944e-38, %v7280
        %v7282 = vsel %vm7279, %v7281, %v7277
        %v7283 = vmul.f32 %v7258, %v7282
        %v7284 = vmin.f32 %v7283, 1.0
        %v7285 = vmax.f32 %v7284, -1.0
        %v7286 = vmul.f32 %v5896, %v5896
        %v7287 = vmin.f32 16.0, %v7286
        %v7288 = vmul.f32 %v7287, 2.1237322e-06
        %v7289 = vadd.f32 %v7288, 0.00028619796
        %v7290 = vmul.f32 %v7287, %v7289
        %v7291 = vadd.f32 %v7290, 0.0036580483
        %v7292 = vmul.f32 %v7287, %v7291
        %v7293 = vadd.f32 %v7292, 0.05243302
        %v7294 = vmul.f32 %v7287, %v7293
        %v7295 = vadd.f32 %v7294, 0.18741608
        %v7296 = vmul.f32 %v7287, %v7295
        %v7297 = vadd.f32 %v7296, 1.1283791
        %v7298 = vmul.f32 %v5896, %v7297
        %v7299 = vmul.f32 %v7287, 3.8918573e-05
        %v7300 = vadd.f32 %v7299, 0.001143296
        %v7301 = vmul.f32 %v7287, %v7300
        %v7302 = vadd.f32 %v7301, 0.014752088
        %v7303 = vmul.f32 %v7287, %v7302
        %v7304 = vadd.f32 %v7303, 0.112945676
        %v7305 = vmul.f32 %v7287, %v7304
        %v7306 = vadd.f32 %v7305, 0.4994258
        %v7307 = vmul.f32 %v7287, %v7306
        %v7308 = vadd.f32 %v7307, 1.0
        %v7309 = vrcp.pop %v7308
        %v7310 = vmul.f32 %v7308, %v7309
        %v7311 = vsub.f32 1.0, %v7310
        %v7312 = vmul.f32 %v7309, %v7311
        %v7313 = vadd.f32 %v7309, %v7312
        %vm7314 = vweird.f32 %v7308
        %vm7315 = vweird.f32 %v7309
        %vm7316 = vmor %vm7314, %vm7315
        %v7317 = vsel %vm7316, %v7309, %v7313
        %v7318 = vand.u32 2147483647, %v7308
        %vm7319 = vcmp.eq.f32.partialorder %v7318, 8.507059e+37
        %v7320 = vand.u32 %v7308, 2147483648
        %v7321 = vor.u32 1.1754944e-38, %v7320
        %v7322 = vsel %vm7319, %v7321, %v7317
        %v7323 = vmul.f32 %v7298, %v7322
        %v7324 = vmin.f32 %v7323, 1.0
        %v7325 = vmax.f32 %v7324, -1.0
        %v7326 = vmul.f32 %v5897, %v5897
        %v7327 = vmin.f32 16.0, %v7326
        %v7328 = vmul.f32 %v7327, 2.1237322e-06
        %v7329 = vadd.f32 %v7328, 0.00028619796
        %v7330 = vmul.f32 %v7327, %v7329
        %v7331 = vadd.f32 %v7330, 0.0036580483
        %v7332 = vmul.f32 %v7327, %v7331
        %v7333 = vadd.f32 %v7332, 0.05243302
        %v7334 = vmul.f32 %v7327, %v7333
        %v7335 = vadd.f32 %v7334, 0.18741608
        %v7336 = vmul.f32 %v7327, %v7335
        %v7337 = vadd.f32 %v7336, 1.1283791
        %v7338 = vmul.f32 %v5897, %v7337
        %v7339 = vmul.f32 %v7327, 3.8918573e-05
        %v7340 = vadd.f32 %v7339, 0.001143296
        %v7341 = vmul.f32 %v7327, %v7340
        %v7342 = vadd.f32 %v7341, 0.014752088
        %v7343 = vmul.f32 %v7327, %v7342
        %v7344 = vadd.f32 %v7343, 0.112945676
        %v7345 = vmul.f32 %v7327, %v7344
        %v7346 = vadd.f32 %v7345, 0.4994258
        %v7347 = vmul.f32 %v7327, %v7346
        %v7348 = vadd.f32 %v7347, 1.0
        %v7349 = vrcp.pop %v7348
        %v7350 = vmul.f32 %v7348, %v7349
        %v7351 = vsub.f32 1.0, %v7350
        %v7352 = vmul.f32 %v7349, %v7351
        %v7353 = vadd.f32 %v7349, %v7352
        %vm7354 = vweird.f32 %v7348
        %vm7355 = vweird.f32 %v7349
        %vm7356 = vmor %vm7354, %vm7355
        %v7357 = vsel %vm7356, %v7349, %v7353
        %v7358 = vand.u32 2147483647, %v7348
        %vm7359 = vcmp.eq.f32.partialorder %v7358, 8.507059e+37
        %v7360 = vand.u32 %v7348, 2147483648
        %v7361 = vor.u32 1.1754944e-38, %v7360
        %v7362 = vsel %vm7359, %v7361, %v7357
        %v7363 = vmul.f32 %v7338, %v7362
        %v7364 = vmin.f32 %v7363, 1.0
        %v7365 = vmax.f32 %v7364, -1.0
        %v7366 = vmul.f32 %v5898, %v5898
        %v7367 = vmin.f32 16.0, %v7366
        %v7368 = vmul.f32 %v7367, 2.1237322e-06
        %v7369 = vadd.f32 %v7368, 0.00028619796
        %v7370 = vmul.f32 %v7367, %v7369
        %v7371 = vadd.f32 %v7370, 0.0036580483
        %v7372 = vmul.f32 %v7367, %v7371
        %v7373 = vadd.f32 %v7372, 0.05243302
        %v7374 = vmul.f32 %v7367, %v7373
        %v7375 = vadd.f32 %v7374, 0.18741608
        %v7376 = vmul.f32 %v7367, %v7375
        %v7377 = vadd.f32 %v7376, 1.1283791
        %v7378 = vmul.f32 %v5898, %v7377
        %v7379 = vmul.f32 %v7367, 3.8918573e-05
        %v7380 = vadd.f32 %v7379, 0.001143296
        %v7381 = vmul.f32 %v7367, %v7380
        %v7382 = vadd.f32 %v7381, 0.014752088
        %v7383 = vmul.f32 %v7367, %v7382
        %v7384 = vadd.f32 %v7383, 0.112945676
        %v7385 = vmul.f32 %v7367, %v7384
        %v7386 = vadd.f32 %v7385, 0.4994258
        %v7387 = vmul.f32 %v7367, %v7386
        %v7388 = vadd.f32 %v7387, 1.0
        %v7389 = vrcp.pop %v7388
        %v7390 = vmul.f32 %v7388, %v7389
        %v7391 = vsub.f32 1.0, %v7390
        %v7392 = vmul.f32 %v7389, %v7391
        %v7393 = vadd.f32 %v7389, %v7392
        %vm7394 = vweird.f32 %v7388
        %vm7395 = vweird.f32 %v7389
        %vm7396 = vmor %vm7394, %vm7395
        %v7397 = vsel %vm7396, %v7389, %v7393
        %v7398 = vand.u32 2147483647, %v7388
        %vm7399 = vcmp.eq.f32.partialorder %v7398, 8.507059e+37
        %v7400 = vand.u32 %v7388, 2147483648
        %v7401 = vor.u32 1.1754944e-38, %v7400
        %v7402 = vsel %vm7399, %v7401, %v7397
        %v7403 = vmul.f32 %v7378, %v7402
        %v7404 = vmin.f32 %v7403, 1.0
        %v7405 = vmax.f32 %v7404, -1.0
        %v7406 = vmul.f32 %v5899, %v5899
        %v7407 = vmin.f32 16.0, %v7406
        %v7408 = vmul.f32 %v7407, 2.1237322e-06
        %v7409 = vadd.f32 %v7408, 0.00028619796
        %v7410 = vmul.f32 %v7407, %v7409
        %v7411 = vadd.f32 %v7410, 0.0036580483
        %v7412 = vmul.f32 %v7407, %v7411
        %v7413 = vadd.f32 %v7412, 0.05243302
        %v7414 = vmul.f32 %v7407, %v7413
        %v7415 = vadd.f32 %v7414, 0.18741608
        %v7416 = vmul.f32 %v7407, %v7415
        %v7417 = vadd.f32 %v7416, 1.1283791
        %v7418 = vmul.f32 %v5899, %v7417
        %v7419 = vmul.f32 %v7407, 3.8918573e-05
        %v7420 = vadd.f32 %v7419, 0.001143296
        %v7421 = vmul.f32 %v7407, %v7420
        %v7422 = vadd.f32 %v7421, 0.014752088
        %v7423 = vmul.f32 %v7407, %v7422
        %v7424 = vadd.f32 %v7423, 0.112945676
        %v7425 = vmul.f32 %v7407, %v7424
        %v7426 = vadd.f32 %v7425, 0.4994258
        %v7427 = vmul.f32 %v7407, %v7426
        %v7428 = vadd.f32 %v7427, 1.0
        %v7429 = vrcp.pop %v7428
        %v7430 = vmul.f32 %v7428, %v7429
        %v7431 = vsub.f32 1.0, %v7430
        %v7432 = vmul.f32 %v7429, %v7431
        %v7433 = vadd.f32 %v7429, %v7432
        %vm7434 = vweird.f32 %v7428
        %vm7435 = vweird.f32 %v7429
        %vm7436 = vmor %vm7434, %vm7435
        %v7437 = vsel %vm7436, %v7429, %v7433
        %v7438 = vand.u32 2147483647, %v7428
        %vm7439 = vcmp.eq.f32.partialorder %v7438, 8.507059e+37
        %v7440 = vand.u32 %v7428, 2147483648
        %v7441 = vor.u32 1.1754944e-38, %v7440
        %v7442 = vsel %vm7439, %v7441, %v7437
        %v7443 = vmul.f32 %v7418, %v7442
        %v7444 = vmin.f32 %v7443, 1.0
        %v7445 = vmax.f32 %v7444, -1.0
        %v7446 = vmul.f32 %v5900, %v5900
        %v7447 = vmin.f32 16.0, %v7446
        %v7448 = vmul.f32 %v7447, 2.1237322e-06
        %v7449 = vadd.f32 %v7448, 0.00028619796
        %v7450 = vmul.f32 %v7447, %v7449
        %v7451 = vadd.f32 %v7450, 0.0036580483
        %v7452 = vmul.f32 %v7447, %v7451
        %v7453 = vadd.f32 %v7452, 0.05243302
        %v7454 = vmul.f32 %v7447, %v7453
        %v7455 = vadd.f32 %v7454, 0.18741608
        %v7456 = vmul.f32 %v7447, %v7455
        %v7457 = vadd.f32 %v7456, 1.1283791
        %v7458 = vmul.f32 %v5900, %v7457
        %v7459 = vmul.f32 %v7447, 3.8918573e-05
        %v7460 = vadd.f32 %v7459, 0.001143296
        %v7461 = vmul.f32 %v7447, %v7460
        %v7462 = vadd.f32 %v7461, 0.014752088
        %v7463 = vmul.f32 %v7447, %v7462
        %v7464 = vadd.f32 %v7463, 0.112945676
        %v7465 = vmul.f32 %v7447, %v7464
        %v7466 = vadd.f32 %v7465, 0.4994258
        %v7467 = vmul.f32 %v7447, %v7466
        %v7468 = vadd.f32 %v7467, 1.0
        %v7469 = vrcp.pop %v7468
        %v7470 = vmul.f32 %v7468, %v7469
        %v7471 = vsub.f32 1.0, %v7470
        %v7472 = vmul.f32 %v7469, %v7471
        %v7473 = vadd.f32 %v7469, %v7472
        %vm7474 = vweird.f32 %v7468
        %vm7475 = vweird.f32 %v7469
        %vm7476 = vmor %vm7474, %vm7475
        %v7477 = vsel %vm7476, %v7469, %v7473
        %v7478 = vand.u32 2147483647, %v7468
        %vm7479 = vcmp.eq.f32.partialorder %v7478, 8.507059e+37
        %v7480 = vand.u32 %v7468, 2147483648
        %v7481 = vor.u32 1.1754944e-38, %v7480
        %v7482 = vsel %vm7479, %v7481, %v7477
        %v7483 = vmul.f32 %v7458, %v7482
        %v7484 = vmin.f32 %v7483, 1.0
        %v7485 = vmax.f32 %v7484, -1.0
        %v7486 = vmul.f32 %v5901, %v5901
        %v7487 = vmin.f32 16.0, %v7486
        %v7488 = vmul.f32 %v7487, 2.1237322e-06
        %v7489 = vadd.f32 %v7488, 0.00028619796
        %v7490 = vmul.f32 %v7487, %v7489
        %v7491 = vadd.f32 %v7490, 0.0036580483
        %v7492 = vmul.f32 %v7487, %v7491
        %v7493 = vadd.f32 %v7492, 0.05243302
        %v7494 = vmul.f32 %v7487, %v7493
        %v7495 = vadd.f32 %v7494, 0.18741608
        %v7496 = vmul.f32 %v7487, %v7495
        %v7497 = vadd.f32 %v7496, 1.1283791
        %v7498 = vmul.f32 %v5901, %v7497
        %v7499 = vmul.f32 %v7487, 3.8918573e-05
        %v7500 = vadd.f32 %v7499, 0.001143296
        %v7501 = vmul.f32 %v7487, %v7500
        %v7502 = vadd.f32 %v7501, 0.014752088
        %v7503 = vmul.f32 %v7487, %v7502
        %v7504 = vadd.f32 %v7503, 0.112945676
        %v7505 = vmul.f32 %v7487, %v7504
        %v7506 = vadd.f32 %v7505, 0.4994258
        %v7507 = vmul.f32 %v7487, %v7506
        %v7508 = vadd.f32 %v7507, 1.0
        %v7509 = vrcp.pop %v7508
        %v7510 = vmul.f32 %v7508, %v7509
        %v7511 = vsub.f32 1.0, %v7510
        %v7512 = vmul.f32 %v7509, %v7511
        %v7513 = vadd.f32 %v7509, %v7512
        %vm7514 = vweird.f32 %v7508
        %vm7515 = vweird.f32 %v7509
        %vm7516 = vmor %vm7514, %vm7515
        %v7517 = vsel %vm7516, %v7509, %v7513
        %v7518 = vand.u32 2147483647, %v7508
        %vm7519 = vcmp.eq.f32.partialorder %v7518, 8.507059e+37
        %v7520 = vand.u32 %v7508, 2147483648
        %v7521 = vor.u32 1.1754944e-38, %v7520
        %v7522 = vsel %vm7519, %v7521, %v7517
        %v7523 = vmul.f32 %v7498, %v7522
        %v7524 = vmin.f32 %v7523, 1.0
        %v7525 = vmax.f32 %v7524, -1.0
        %v7526 = vmul.f32 %v5902, %v5902
        %v7527 = vmin.f32 16.0, %v7526
        %v7528 = vmul.f32 %v7527, 2.1237322e-06
        %v7529 = vadd.f32 %v7528, 0.00028619796
        %v7530 = vmul.f32 %v7527, %v7529
        %v7531 = vadd.f32 %v7530, 0.0036580483
        %v7532 = vmul.f32 %v7527, %v7531
        %v7533 = vadd.f32 %v7532, 0.05243302
        %v7534 = vmul.f32 %v7527, %v7533
        %v7535 = vadd.f32 %v7534, 0.18741608
        %v7536 = vmul.f32 %v7527, %v7535
        %v7537 = vadd.f32 %v7536, 1.1283791
        %v7538 = vmul.f32 %v5902, %v7537
        %v7539 = vmul.f32 %v7527, 3.8918573e-05
        %v7540 = vadd.f32 %v7539, 0.001143296
        %v7541 = vmul.f32 %v7527, %v7540
        %v7542 = vadd.f32 %v7541, 0.014752088
        %v7543 = vmul.f32 %v7527, %v7542
        %v7544 = vadd.f32 %v7543, 0.112945676
        %v7545 = vmul.f32 %v7527, %v7544
        %v7546 = vadd.f32 %v7545, 0.4994258
        %v7547 = vmul.f32 %v7527, %v7546
        %v7548 = vadd.f32 %v7547, 1.0
        %v7549 = vrcp.pop %v7548
        %v7550 = vmul.f32 %v7548, %v7549
        %v7551 = vsub.f32 1.0, %v7550
        %v7552 = vmul.f32 %v7549, %v7551
        %v7553 = vadd.f32 %v7549, %v7552
        %vm7554 = vweird.f32 %v7548
        %vm7555 = vweird.f32 %v7549
        %vm7556 = vmor %vm7554, %vm7555
        %v7557 = vsel %vm7556, %v7549, %v7553
        %v7558 = vand.u32 2147483647, %v7548
        %vm7559 = vcmp.eq.f32.partialorder %v7558, 8.507059e+37
        %v7560 = vand.u32 %v7548, 2147483648
        %v7561 = vor.u32 1.1754944e-38, %v7560
        %v7562 = vsel %vm7559, %v7561, %v7557
        %v7563 = vmul.f32 %v7538, %v7562
        %v7564 = vmin.f32 %v7563, 1.0
        %v7565 = vmax.f32 %v7564, -1.0
        %v7566 = vmul.f32 %v5903, %v5903
        %v7567 = vmin.f32 16.0, %v7566
        %v7568 = vmul.f32 %v7567, 2.1237322e-06
        %v7569 = vadd.f32 %v7568, 0.00028619796
        %v7570 = vmul.f32 %v7567, %v7569
        %v7571 = vadd.f32 %v7570, 0.0036580483
        %v7572 = vmul.f32 %v7567, %v7571
        %v7573 = vadd.f32 %v7572, 0.05243302
        %v7574 = vmul.f32 %v7567, %v7573
        %v7575 = vadd.f32 %v7574, 0.18741608
        %v7576 = vmul.f32 %v7567, %v7575
        %v7577 = vadd.f32 %v7576, 1.1283791
        %v7578 = vmul.f32 %v5903, %v7577
        %v7579 = vmul.f32 %v7567, 3.8918573e-05
        %v7580 = vadd.f32 %v7579, 0.001143296
        %v7581 = vmul.f32 %v7567, %v7580
        %v7582 = vadd.f32 %v7581, 0.014752088
        %v7583 = vmul.f32 %v7567, %v7582
        %v7584 = vadd.f32 %v7583, 0.112945676
        %v7585 = vmul.f32 %v7567, %v7584
        %v7586 = vadd.f32 %v7585, 0.4994258
        %v7587 = vmul.f32 %v7567, %v7586
        %v7588 = vadd.f32 %v7587, 1.0
        %v7589 = vrcp.pop %v7588
        %v7590 = vmul.f32 %v7588, %v7589
        %v7591 = vsub.f32 1.0, %v7590
        %v7592 = vmul.f32 %v7589, %v7591
        %v7593 = vadd.f32 %v7589, %v7592
        %vm7594 = vweird.f32 %v7588
        %vm7595 = vweird.f32 %v7589
        %vm7596 = vmor %vm7594, %vm7595
        %v7597 = vsel %vm7596, %v7589, %v7593
        %v7598 = vand.u32 2147483647, %v7588
        %vm7599 = vcmp.eq.f32.partialorder %v7598, 8.507059e+37
        %v7600 = vand.u32 %v7588, 2147483648
        %v7601 = vor.u32 1.1754944e-38, %v7600
        %v7602 = vsel %vm7599, %v7601, %v7597
        %v7603 = vmul.f32 %v7578, %v7602
        %v7604 = vmin.f32 %v7603, 1.0
        %v7605 = vmax.f32 %v7604, -1.0
        %v7606 = vmul.f32 %v5904, %v5904
        %v7607 = vmin.f32 16.0, %v7606
        %v7608 = vmul.f32 %v7607, 2.1237322e-06
        %v7609 = vadd.f32 %v7608, 0.00028619796
        %v7610 = vmul.f32 %v7607, %v7609
        %v7611 = vadd.f32 %v7610, 0.0036580483
        %v7612 = vmul.f32 %v7607, %v7611
        %v7613 = vadd.f32 %v7612, 0.05243302
        %v7614 = vmul.f32 %v7607, %v7613
        %v7615 = vadd.f32 %v7614, 0.18741608
        %v7616 = vmul.f32 %v7607, %v7615
        %v7617 = vadd.f32 %v7616, 1.1283791
        %v7618 = vmul.f32 %v5904, %v7617
        %v7619 = vmul.f32 %v7607, 3.8918573e-05
        %v7620 = vadd.f32 %v7619, 0.001143296
        %v7621 = vmul.f32 %v7607, %v7620
        %v7622 = vadd.f32 %v7621, 0.014752088
        %v7623 = vmul.f32 %v7607, %v7622
        %v7624 = vadd.f32 %v7623, 0.112945676
        %v7625 = vmul.f32 %v7607, %v7624
        %v7626 = vadd.f32 %v7625, 0.4994258
        %v7627 = vmul.f32 %v7607, %v7626
        %v7628 = vadd.f32 %v7627, 1.0
        %v7629 = vrcp.pop %v7628
        %v7630 = vmul.f32 %v7628, %v7629
        %v7631 = vsub.f32 1.0, %v7630
        %v7632 = vmul.f32 %v7629, %v7631
        %v7633 = vadd.f32 %v7629, %v7632
        %vm7634 = vweird.f32 %v7628
        %vm7635 = vweird.f32 %v7629
        %vm7636 = vmor %vm7634, %vm7635
        %v7637 = vsel %vm7636, %v7629, %v7633
        %v7638 = vand.u32 2147483647, %v7628
        %vm7639 = vcmp.eq.f32.partialorder %v7638, 8.507059e+37
        %v7640 = vand.u32 %v7628, 2147483648
        %v7641 = vor.u32 1.1754944e-38, %v7640
        %v7642 = vsel %vm7639, %v7641, %v7637
        %v7643 = vmul.f32 %v7618, %v7642
        %v7644 = vmin.f32 %v7643, 1.0
        %v7645 = vmax.f32 %v7644, -1.0
        %v7646 = vmul.f32 %v5905, %v5905
        %v7647 = vmin.f32 16.0, %v7646
        %v7648 = vmul.f32 %v7647, 2.1237322e-06
        %v7649 = vadd.f32 %v7648, 0.00028619796
        %v7650 = vmul.f32 %v7647, %v7649
        %v7651 = vadd.f32 %v7650, 0.0036580483
        %v7652 = vmul.f32 %v7647, %v7651
        %v7653 = vadd.f32 %v7652, 0.05243302
        %v7654 = vmul.f32 %v7647, %v7653
        %v7655 = vadd.f32 %v7654, 0.18741608
        %v7656 = vmul.f32 %v7647, %v7655
        %v7657 = vadd.f32 %v7656, 1.1283791
        %v7658 = vmul.f32 %v5905, %v7657
        %v7659 = vmul.f32 %v7647, 3.8918573e-05
        %v7660 = vadd.f32 %v7659, 0.001143296
        %v7661 = vmul.f32 %v7647, %v7660
        %v7662 = vadd.f32 %v7661, 0.014752088
        %v7663 = vmul.f32 %v7647, %v7662
        %v7664 = vadd.f32 %v7663, 0.112945676
        %v7665 = vmul.f32 %v7647, %v7664
        %v7666 = vadd.f32 %v7665, 0.4994258
        %v7667 = vmul.f32 %v7647, %v7666
        %v7668 = vadd.f32 %v7667, 1.0
        %v7669 = vrcp.pop %v7668
        %v7670 = vmul.f32 %v7668, %v7669
        %v7671 = vsub.f32 1.0, %v7670
        %v7672 = vmul.f32 %v7669, %v7671
        %v7673 = vadd.f32 %v7669, %v7672
        %vm7674 = vweird.f32 %v7668
        %vm7675 = vweird.f32 %v7669
        %vm7676 = vmor %vm7674, %vm7675
        %v7677 = vsel %vm7676, %v7669, %v7673
        %v7678 = vand.u32 2147483647, %v7668
        %vm7679 = vcmp.eq.f32.partialorder %v7678, 8.507059e+37
        %v7680 = vand.u32 %v7668, 2147483648
        %v7681 = vor.u32 1.1754944e-38, %v7680
        %v7682 = vsel %vm7679, %v7681, %v7677
        %v7683 = vmul.f32 %v7658, %v7682
        %v7684 = vmin.f32 %v7683, 1.0
        %v7685 = vmax.f32 %v7684, -1.0
        %v7686 = vmul.f32 %v5906, %v5906
        %v7687 = vmin.f32 16.0, %v7686
        %v7688 = vmul.f32 %v7687, 2.1237322e-06
        %v7689 = vadd.f32 %v7688, 0.00028619796
        %v7690 = vmul.f32 %v7687, %v7689
        %v7691 = vadd.f32 %v7690, 0.0036580483
        %v7692 = vmul.f32 %v7687, %v7691
        %v7693 = vadd.f32 %v7692, 0.05243302
        %v7694 = vmul.f32 %v7687, %v7693
        %v7695 = vadd.f32 %v7694, 0.18741608
        %v7696 = vmul.f32 %v7687, %v7695
        %v7697 = vadd.f32 %v7696, 1.1283791
        %v7698 = vmul.f32 %v5906, %v7697
        %v7699 = vmul.f32 %v7687, 3.8918573e-05
        %v7700 = vadd.f32 %v7699, 0.001143296
        %v7701 = vmul.f32 %v7687, %v7700
        %v7702 = vadd.f32 %v7701, 0.014752088
        %v7703 = vmul.f32 %v7687, %v7702
        %v7704 = vadd.f32 %v7703, 0.112945676
        %v7705 = vmul.f32 %v7687, %v7704
        %v7706 = vadd.f32 %v7705, 0.4994258
        %v7707 = vmul.f32 %v7687, %v7706
        %v7708 = vadd.f32 %v7707, 1.0
        %v7709 = vrcp.pop %v7708
        %v7710 = vmul.f32 %v7708, %v7709
        %v7711 = vsub.f32 1.0, %v7710
        %v7712 = vmul.f32 %v7709, %v7711
        %v7713 = vadd.f32 %v7709, %v7712
        %vm7714 = vweird.f32 %v7708
        %vm7715 = vweird.f32 %v7709
        %vm7716 = vmor %vm7714, %vm7715
        %v7717 = vsel %vm7716, %v7709, %v7713
        %v7718 = vand.u32 2147483647, %v7708
        %vm7719 = vcmp.eq.f32.partialorder %v7718, 8.507059e+37
        %v7720 = vand.u32 %v7708, 2147483648
        %v7721 = vor.u32 1.1754944e-38, %v7720
        %v7722 = vsel %vm7719, %v7721, %v7717
        %v7723 = vmul.f32 %v7698, %v7722
        %v7724 = vmin.f32 %v7723, 1.0
        %v7725 = vmax.f32 %v7724, -1.0
        %v7726 = vmul.f32 %v5907, %v5907
        %v7727 = vmin.f32 16.0, %v7726
        %v7728 = vmul.f32 %v7727, 2.1237322e-06
        %v7729 = vadd.f32 %v7728, 0.00028619796
        %v7730 = vmul.f32 %v7727, %v7729
        %v7731 = vadd.f32 %v7730, 0.0036580483
        %v7732 = vmul.f32 %v7727, %v7731
        %v7733 = vadd.f32 %v7732, 0.05243302
        %v7734 = vmul.f32 %v7727, %v7733
        %v7735 = vadd.f32 %v7734, 0.18741608
        %v7736 = vmul.f32 %v7727, %v7735
        %v7737 = vadd.f32 %v7736, 1.1283791
        %v7738 = vmul.f32 %v5907, %v7737
        %v7739 = vmul.f32 %v7727, 3.8918573e-05
        %v7740 = vadd.f32 %v7739, 0.001143296
        %v7741 = vmul.f32 %v7727, %v7740
        %v7742 = vadd.f32 %v7741, 0.014752088
        %v7743 = vmul.f32 %v7727, %v7742
        %v7744 = vadd.f32 %v7743, 0.112945676
        %v7745 = vmul.f32 %v7727, %v7744
        %v7746 = vadd.f32 %v7745, 0.4994258
        %v7747 = vmul.f32 %v7727, %v7746
        %v7748 = vadd.f32 %v7747, 1.0
        %v7749 = vrcp.pop %v7748
        %v7750 = vmul.f32 %v7748, %v7749
        %v7751 = vsub.f32 1.0, %v7750
        %v7752 = vmul.f32 %v7749, %v7751
        %v7753 = vadd.f32 %v7749, %v7752
        %vm7754 = vweird.f32 %v7748
        %vm7755 = vweird.f32 %v7749
        %vm7756 = vmor %vm7754, %vm7755
        %v7757 = vsel %vm7756, %v7749, %v7753
        %v7758 = vand.u32 2147483647, %v7748
        %vm7759 = vcmp.eq.f32.partialorder %v7758, 8.507059e+37
        %v7760 = vand.u32 %v7748, 2147483648
        %v7761 = vor.u32 1.1754944e-38, %v7760
        %v7762 = vsel %vm7759, %v7761, %v7757
        %v7763 = vmul.f32 %v7738, %v7762
        %v7764 = vmin.f32 %v7763, 1.0
        %v7765 = vmax.f32 %v7764, -1.0
        %v7766 = vmul.f32 %v5908, %v5908
        %v7767 = vmin.f32 16.0, %v7766
        %v7768 = vmul.f32 %v7767, 2.1237322e-06
        %v7769 = vadd.f32 %v7768, 0.00028619796
        %v7770 = vmul.f32 %v7767, %v7769
        %v7771 = vadd.f32 %v7770, 0.0036580483
        %v7772 = vmul.f32 %v7767, %v7771
        %v7773 = vadd.f32 %v7772, 0.05243302
        %v7774 = vmul.f32 %v7767, %v7773
        %v7775 = vadd.f32 %v7774, 0.18741608
        %v7776 = vmul.f32 %v7767, %v7775
        %v7777 = vadd.f32 %v7776, 1.1283791
        %v7778 = vmul.f32 %v5908, %v7777
        %v7779 = vmul.f32 %v7767, 3.8918573e-05
        %v7780 = vadd.f32 %v7779, 0.001143296
        %v7781 = vmul.f32 %v7767, %v7780
        %v7782 = vadd.f32 %v7781, 0.014752088
        %v7783 = vmul.f32 %v7767, %v7782
        %v7784 = vadd.f32 %v7783, 0.112945676
        %v7785 = vmul.f32 %v7767, %v7784
        %v7786 = vadd.f32 %v7785, 0.4994258
        %v7787 = vmul.f32 %v7767, %v7786
        %v7788 = vadd.f32 %v7787, 1.0
        %v7789 = vrcp.pop %v7788
        %v7790 = vmul.f32 %v7788, %v7789
        %v7791 = vsub.f32 1.0, %v7790
        %v7792 = vmul.f32 %v7789, %v7791
        %v7793 = vadd.f32 %v7789, %v7792
        %vm7794 = vweird.f32 %v7788
        %vm7795 = vweird.f32 %v7789
        %vm7796 = vmor %vm7794, %vm7795
        %v7797 = vsel %vm7796, %v7789, %v7793
        %v7798 = vand.u32 2147483647, %v7788
        %vm7799 = vcmp.eq.f32.partialorder %v7798, 8.507059e+37
        %v7800 = vand.u32 %v7788, 2147483648
        %v7801 = vor.u32 1.1754944e-38, %v7800
        %v7802 = vsel %vm7799, %v7801, %v7797
        %v7803 = vmul.f32 %v7778, %v7802
        %v7804 = vmin.f32 %v7803, 1.0
        %v7805 = vmax.f32 %v7804, -1.0
        %v7806 = vmul.f32 %v5909, %v5909
        %v7807 = vmin.f32 16.0, %v7806
        %v7808 = vmul.f32 %v7807, 2.1237322e-06
        %v7809 = vadd.f32 %v7808, 0.00028619796
        %v7810 = vmul.f32 %v7807, %v7809
        %v7811 = vadd.f32 %v7810, 0.0036580483
        %v7812 = vmul.f32 %v7807, %v7811
        %v7813 = vadd.f32 %v7812, 0.05243302
        %v7814 = vmul.f32 %v7807, %v7813
        %v7815 = vadd.f32 %v7814, 0.18741608
        %v7816 = vmul.f32 %v7807, %v7815
        %v7817 = vadd.f32 %v7816, 1.1283791
        %v7818 = vmul.f32 %v5909, %v7817
        %v7819 = vmul.f32 %v7807, 3.8918573e-05
        %v7820 = vadd.f32 %v7819, 0.001143296
        %v7821 = vmul.f32 %v7807, %v7820
        %v7822 = vadd.f32 %v7821, 0.014752088
        %v7823 = vmul.f32 %v7807, %v7822
        %v7824 = vadd.f32 %v7823, 0.112945676
        %v7825 = vmul.f32 %v7807, %v7824
        %v7826 = vadd.f32 %v7825, 0.4994258
        %v7827 = vmul.f32 %v7807, %v7826
        %v7828 = vadd.f32 %v7827, 1.0
        %v7829 = vrcp.pop %v7828
        %v7830 = vmul.f32 %v7828, %v7829
        %v7831 = vsub.f32 1.0, %v7830
        %v7832 = vmul.f32 %v7829, %v7831
        %v7833 = vadd.f32 %v7829, %v7832
        %vm7834 = vweird.f32 %v7828
        %vm7835 = vweird.f32 %v7829
        %vm7836 = vmor %vm7834, %vm7835
        %v7837 = vsel %vm7836, %v7829, %v7833
        %v7838 = vand.u32 2147483647, %v7828
        %vm7839 = vcmp.eq.f32.partialorder %v7838, 8.507059e+37
        %v7840 = vand.u32 %v7828, 2147483648
        %v7841 = vor.u32 1.1754944e-38, %v7840
        %v7842 = vsel %vm7839, %v7841, %v7837
        %v7843 = vmul.f32 %v7818, %v7842
        %v7844 = vmin.f32 %v7843, 1.0
        %v7845 = vmax.f32 %v7844, -1.0
        %v7846 = vmul.f32 %v5910, %v5910
        %v7847 = vmin.f32 16.0, %v7846
        %v7848 = vmul.f32 %v7847, 2.1237322e-06
        %v7849 = vadd.f32 %v7848, 0.00028619796
        %v7850 = vmul.f32 %v7847, %v7849
        %v7851 = vadd.f32 %v7850, 0.0036580483
        %v7852 = vmul.f32 %v7847, %v7851
        %v7853 = vadd.f32 %v7852, 0.05243302
        %v7854 = vmul.f32 %v7847, %v7853
        %v7855 = vadd.f32 %v7854, 0.18741608
        %v7856 = vmul.f32 %v7847, %v7855
        %v7857 = vadd.f32 %v7856, 1.1283791
        %v7858 = vmul.f32 %v5910, %v7857
        %v7859 = vmul.f32 %v7847, 3.8918573e-05
        %v7860 = vadd.f32 %v7859, 0.001143296
        %v7861 = vmul.f32 %v7847, %v7860
        %v7862 = vadd.f32 %v7861, 0.014752088
        %v7863 = vmul.f32 %v7847, %v7862
        %v7864 = vadd.f32 %v7863, 0.112945676
        %v7865 = vmul.f32 %v7847, %v7864
        %v7866 = vadd.f32 %v7865, 0.4994258
        %v7867 = vmul.f32 %v7847, %v7866
        %v7868 = vadd.f32 %v7867, 1.0
        %v7869 = vrcp.pop %v7868
        %v7870 = vmul.f32 %v7868, %v7869
        %v7871 = vsub.f32 1.0, %v7870
        %v7872 = vmul.f32 %v7869, %v7871
        %v7873 = vadd.f32 %v7869, %v7872
        %vm7874 = vweird.f32 %v7868
        %vm7875 = vweird.f32 %v7869
        %vm7876 = vmor %vm7874, %vm7875
        %v7877 = vsel %vm7876, %v7869, %v7873
        %v7878 = vand.u32 2147483647, %v7868
        %vm7879 = vcmp.eq.f32.partialorder %v7878, 8.507059e+37
        %v7880 = vand.u32 %v7868, 2147483648
        %v7881 = vor.u32 1.1754944e-38, %v7880
        %v7882 = vsel %vm7879, %v7881, %v7877
        %v7883 = vmul.f32 %v7858, %v7882
        %v7884 = vmin.f32 %v7883, 1.0
        %v7885 = vmax.f32 %v7884, -1.0
        %v7886 = vmul.f32 %v5911, %v5911
        %v7887 = vmin.f32 16.0, %v7886
        %v7888 = vmul.f32 %v7887, 2.1237322e-06
        %v7889 = vadd.f32 %v7888, 0.00028619796
        %v7890 = vmul.f32 %v7887, %v7889
        %v7891 = vadd.f32 %v7890, 0.0036580483
        %v7892 = vmul.f32 %v7887, %v7891
        %v7893 = vadd.f32 %v7892, 0.05243302
        %v7894 = vmul.f32 %v7887, %v7893
        %v7895 = vadd.f32 %v7894, 0.18741608
        %v7896 = vmul.f32 %v7887, %v7895
        %v7897 = vadd.f32 %v7896, 1.1283791
        %v7898 = vmul.f32 %v5911, %v7897
        %v7899 = vmul.f32 %v7887, 3.8918573e-05
        %v7900 = vadd.f32 %v7899, 0.001143296
        %v7901 = vmul.f32 %v7887, %v7900
        %v7902 = vadd.f32 %v7901, 0.014752088
        %v7903 = vmul.f32 %v7887, %v7902
        %v7904 = vadd.f32 %v7903, 0.112945676
        %v7905 = vmul.f32 %v7887, %v7904
        %v7906 = vadd.f32 %v7905, 0.4994258
        %v7907 = vmul.f32 %v7887, %v7906
        %v7908 = vadd.f32 %v7907, 1.0
        %v7909 = vrcp.pop %v7908
        %v7910 = vmul.f32 %v7908, %v7909
        %v7911 = vsub.f32 1.0, %v7910
        %v7912 = vmul.f32 %v7909, %v7911
        %v7913 = vadd.f32 %v7909, %v7912
        %vm7914 = vweird.f32 %v7908
        %vm7915 = vweird.f32 %v7909
        %vm7916 = vmor %vm7914, %vm7915
        %v7917 = vsel %vm7916, %v7909, %v7913
        %v7918 = vand.u32 2147483647, %v7908
        %vm7919 = vcmp.eq.f32.partialorder %v7918, 8.507059e+37
        %v7920 = vand.u32 %v7908, 2147483648
        %v7921 = vor.u32 1.1754944e-38, %v7920
        %v7922 = vsel %vm7919, %v7921, %v7917
        %v7923 = vmul.f32 %v7898, %v7922
        %v7924 = vmin.f32 %v7923, 1.0
        %v7925 = vmax.f32 %v7924, -1.0
        %v7926 = vmul.f32 %v5912, %v5912
        %v7927 = vmin.f32 16.0, %v7926
        %v7928 = vmul.f32 %v7927, 2.1237322e-06
        %v7929 = vadd.f32 %v7928, 0.00028619796
        %v7930 = vmul.f32 %v7927, %v7929
        %v7931 = vadd.f32 %v7930, 0.0036580483
        %v7932 = vmul.f32 %v7927, %v7931
        %v7933 = vadd.f32 %v7932, 0.05243302
        %v7934 = vmul.f32 %v7927, %v7933
        %v7935 = vadd.f32 %v7934, 0.18741608
        %v7936 = vmul.f32 %v7927, %v7935
        %v7937 = vadd.f32 %v7936, 1.1283791
        %v7938 = vmul.f32 %v5912, %v7937
        %v7939 = vmul.f32 %v7927, 3.8918573e-05
        %v7940 = vadd.f32 %v7939, 0.001143296
        %v7941 = vmul.f32 %v7927, %v7940
        %v7942 = vadd.f32 %v7941, 0.014752088
        %v7943 = vmul.f32 %v7927, %v7942
        %v7944 = vadd.f32 %v7943, 0.112945676
        %v7945 = vmul.f32 %v7927, %v7944
        %v7946 = vadd.f32 %v7945, 0.4994258
        %v7947 = vmul.f32 %v7927, %v7946
        %v7948 = vadd.f32 %v7947, 1.0
        %v7949 = vrcp.pop %v7948
        %v7950 = vmul.f32 %v7948, %v7949
        %v7951 = vsub.f32 1.0, %v7950
        %v7952 = vmul.f32 %v7949, %v7951
        %v7953 = vadd.f32 %v7949, %v7952
        %vm7954 = vweird.f32 %v7948
        %vm7955 = vweird.f32 %v7949
        %vm7956 = vmor %vm7954, %vm7955
        %v7957 = vsel %vm7956, %v7949, %v7953
        %v7958 = vand.u32 2147483647, %v7948
        %vm7959 = vcmp.eq.f32.partialorder %v7958, 8.507059e+37
        %v7960 = vand.u32 %v7948, 2147483648
        %v7961 = vor.u32 1.1754944e-38, %v7960
        %v7962 = vsel %vm7959, %v7961, %v7957
        %v7963 = vmul.f32 %v7938, %v7962
        %v7964 = vmin.f32 %v7963, 1.0
        %v7965 = vmax.f32 %v7964, -1.0
        %v7966 = vmul.f32 %v5913, %v5913
        %v7967 = vmin.f32 16.0, %v7966
        %v7968 = vmul.f32 %v7967, 2.1237322e-06
        %v7969 = vadd.f32 %v7968, 0.00028619796
        %v7970 = vmul.f32 %v7967, %v7969
        %v7971 = vadd.f32 %v7970, 0.0036580483
        %v7972 = vmul.f32 %v7967, %v7971
        %v7973 = vadd.f32 %v7972, 0.05243302
        %v7974 = vmul.f32 %v7967, %v7973
        %v7975 = vadd.f32 %v7974, 0.18741608
        %v7976 = vmul.f32 %v7967, %v7975
        %v7977 = vadd.f32 %v7976, 1.1283791
        %v7978 = vmul.f32 %v5913, %v7977
        %v7979 = vmul.f32 %v7967, 3.8918573e-05
        %v7980 = vadd.f32 %v7979, 0.001143296
        %v7981 = vmul.f32 %v7967, %v7980
        %v7982 = vadd.f32 %v7981, 0.014752088
        %v7983 = vmul.f32 %v7967, %v7982
        %v7984 = vadd.f32 %v7983, 0.112945676
        %v7985 = vmul.f32 %v7967, %v7984
        %v7986 = vadd.f32 %v7985, 0.4994258
        %v7987 = vmul.f32 %v7967, %v7986
        %v7988 = vadd.f32 %v7987, 1.0
        %v7989 = vrcp.pop %v7988
        %v7990 = vmul.f32 %v7988, %v7989
        %v7991 = vsub.f32 1.0, %v7990
        %v7992 = vmul.f32 %v7989, %v7991
        %v7993 = vadd.f32 %v7989, %v7992
        %vm7994 = vweird.f32 %v7988
        %vm7995 = vweird.f32 %v7989
        %vm7996 = vmor %vm7994, %vm7995
        %v7997 = vsel %vm7996, %v7989, %v7993
        %v7998 = vand.u32 2147483647, %v7988
        %vm7999 = vcmp.eq.f32.partialorder %v7998, 8.507059e+37
        %v8000 = vand.u32 %v7988, 2147483648
        %v8001 = vor.u32 1.1754944e-38, %v8000
        %v8002 = vsel %vm7999, %v8001, %v7997
        %v8003 = vmul.f32 %v7978, %v8002
        %v8004 = vmin.f32 %v8003, 1.0
        %v8005 = vmax.f32 %v8004, -1.0
        %v8006 = vmul.f32 %v5914, %v5914
        %v8007 = vmin.f32 16.0, %v8006
        %v8008 = vmul.f32 %v8007, 2.1237322e-06
        %v8009 = vadd.f32 %v8008, 0.00028619796
        %v8010 = vmul.f32 %v8007, %v8009
        %v8011 = vadd.f32 %v8010, 0.0036580483
        %v8012 = vmul.f32 %v8007, %v8011
        %v8013 = vadd.f32 %v8012, 0.05243302
        %v8014 = vmul.f32 %v8007, %v8013
        %v8015 = vadd.f32 %v8014, 0.18741608
        %v8016 = vmul.f32 %v8007, %v8015
        %v8017 = vadd.f32 %v8016, 1.1283791
        %v8018 = vmul.f32 %v5914, %v8017
        %v8019 = vmul.f32 %v8007, 3.8918573e-05
        %v8020 = vadd.f32 %v8019, 0.001143296
        %v8021 = vmul.f32 %v8007, %v8020
        %v8022 = vadd.f32 %v8021, 0.014752088
        %v8023 = vmul.f32 %v8007, %v8022
        %v8024 = vadd.f32 %v8023, 0.112945676
        %v8025 = vmul.f32 %v8007, %v8024
        %v8026 = vadd.f32 %v8025, 0.4994258
        %v8027 = vmul.f32 %v8007, %v8026
        %v8028 = vadd.f32 %v8027, 1.0
        %v8029 = vrcp.pop %v8028
        %v8030 = vmul.f32 %v8028, %v8029
        %v8031 = vsub.f32 1.0, %v8030
        %v8032 = vmul.f32 %v8029, %v8031
        %v8033 = vadd.f32 %v8029, %v8032
        %vm8034 = vweird.f32 %v8028
        %vm8035 = vweird.f32 %v8029
        %vm8036 = vmor %vm8034, %vm8035
        %v8037 = vsel %vm8036, %v8029, %v8033
        %v8038 = vand.u32 2147483647, %v8028
        %vm8039 = vcmp.eq.f32.partialorder %v8038, 8.507059e+37
        %v8040 = vand.u32 %v8028, 2147483648
        %v8041 = vor.u32 1.1754944e-38, %v8040
        %v8042 = vsel %vm8039, %v8041, %v8037
        %v8043 = vmul.f32 %v8018, %v8042
        %v8044 = vmin.f32 %v8043, 1.0
        %v8045 = vmax.f32 %v8044, -1.0
        %v8046 = vmul.f32 %v5915, %v5915
        %v8047 = vmin.f32 16.0, %v8046
        %v8048 = vmul.f32 %v8047, 2.1237322e-06
        %v8049 = vadd.f32 %v8048, 0.00028619796
        %v8050 = vmul.f32 %v8047, %v8049
        %v8051 = vadd.f32 %v8050, 0.0036580483
        %v8052 = vmul.f32 %v8047, %v8051
        %v8053 = vadd.f32 %v8052, 0.05243302
        %v8054 = vmul.f32 %v8047, %v8053
        %v8055 = vadd.f32 %v8054, 0.18741608
        %v8056 = vmul.f32 %v8047, %v8055
        %v8057 = vadd.f32 %v8056, 1.1283791
        %v8058 = vmul.f32 %v5915, %v8057
        %v8059 = vmul.f32 %v8047, 3.8918573e-05
        %v8060 = vadd.f32 %v8059, 0.001143296
        %v8061 = vmul.f32 %v8047, %v8060
        %v8062 = vadd.f32 %v8061, 0.014752088
        %v8063 = vmul.f32 %v8047, %v8062
        %v8064 = vadd.f32 %v8063, 0.112945676
        %v8065 = vmul.f32 %v8047, %v8064
        %v8066 = vadd.f32 %v8065, 0.4994258
        %v8067 = vmul.f32 %v8047, %v8066
        %v8068 = vadd.f32 %v8067, 1.0
        %v8069 = vrcp.pop %v8068
        %v8070 = vmul.f32 %v8068, %v8069
        %v8071 = vsub.f32 1.0, %v8070
        %v8072 = vmul.f32 %v8069, %v8071
        %v8073 = vadd.f32 %v8069, %v8072
        %vm8074 = vweird.f32 %v8068
        %vm8075 = vweird.f32 %v8069
        %vm8076 = vmor %vm8074, %vm8075
        %v8077 = vsel %vm8076, %v8069, %v8073
        %v8078 = vand.u32 2147483647, %v8068
        %vm8079 = vcmp.eq.f32.partialorder %v8078, 8.507059e+37
        %v8080 = vand.u32 %v8068, 2147483648
        %v8081 = vor.u32 1.1754944e-38, %v8080
        %v8082 = vsel %vm8079, %v8081, %v8077
        %v8083 = vmul.f32 %v8058, %v8082
        %v8084 = vmin.f32 %v8083, 1.0
        %v8085 = vmax.f32 %v8084, -1.0
        %v8086 = vmul.f32 %v5916, %v5916
        %v8087 = vmin.f32 16.0, %v8086
        %v8088 = vmul.f32 %v8087, 2.1237322e-06
        %v8089 = vadd.f32 %v8088, 0.00028619796
        %v8090 = vmul.f32 %v8087, %v8089
        %v8091 = vadd.f32 %v8090, 0.0036580483
        %v8092 = vmul.f32 %v8087, %v8091
        %v8093 = vadd.f32 %v8092, 0.05243302
        %v8094 = vmul.f32 %v8087, %v8093
        %v8095 = vadd.f32 %v8094, 0.18741608
        %v8096 = vmul.f32 %v8087, %v8095
        %v8097 = vadd.f32 %v8096, 1.1283791
        %v8098 = vmul.f32 %v5916, %v8097
        %v8099 = vmul.f32 %v8087, 3.8918573e-05
        %v8100 = vadd.f32 %v8099, 0.001143296
        %v8101 = vmul.f32 %v8087, %v8100
        %v8102 = vadd.f32 %v8101, 0.014752088
        %v8103 = vmul.f32 %v8087, %v8102
        %v8104 = vadd.f32 %v8103, 0.112945676
        %v8105 = vmul.f32 %v8087, %v8104
        %v8106 = vadd.f32 %v8105, 0.4994258
        %v8107 = vmul.f32 %v8087, %v8106
        %v8108 = vadd.f32 %v8107, 1.0
        %v8109 = vrcp.pop %v8108
        %v8110 = vmul.f32 %v8108, %v8109
        %v8111 = vsub.f32 1.0, %v8110
        %v8112 = vmul.f32 %v8109, %v8111
        %v8113 = vadd.f32 %v8109, %v8112
        %vm8114 = vweird.f32 %v8108
        %vm8115 = vweird.f32 %v8109
        %vm8116 = vmor %vm8114, %vm8115
        %v8117 = vsel %vm8116, %v8109, %v8113
        %v8118 = vand.u32 2147483647, %v8108
        %vm8119 = vcmp.eq.f32.partialorder %v8118, 8.507059e+37
        %v8120 = vand.u32 %v8108, 2147483648
        %v8121 = vor.u32 1.1754944e-38, %v8120
        %v8122 = vsel %vm8119, %v8121, %v8117
        %v8123 = vmul.f32 %v8098, %v8122
        %v8124 = vmin.f32 %v8123, 1.0
        %v8125 = vmax.f32 %v8124, -1.0
        %v8126 = vmul.f32 %v5917, %v5917
        %v8127 = vmin.f32 16.0, %v8126
        %v8128 = vmul.f32 %v8127, 2.1237322e-06
        %v8129 = vadd.f32 %v8128, 0.00028619796
        %v8130 = vmul.f32 %v8127, %v8129
        %v8131 = vadd.f32 %v8130, 0.0036580483
        %v8132 = vmul.f32 %v8127, %v8131
        %v8133 = vadd.f32 %v8132, 0.05243302
        %v8134 = vmul.f32 %v8127, %v8133
        %v8135 = vadd.f32 %v8134, 0.18741608
        %v8136 = vmul.f32 %v8127, %v8135
        %v8137 = vadd.f32 %v8136, 1.1283791
        %v8138 = vmul.f32 %v5917, %v8137
        %v8139 = vmul.f32 %v8127, 3.8918573e-05
        %v8140 = vadd.f32 %v8139, 0.001143296
        %v8141 = vmul.f32 %v8127, %v8140
        %v8142 = vadd.f32 %v8141, 0.014752088
        %v8143 = vmul.f32 %v8127, %v8142
        %v8144 = vadd.f32 %v8143, 0.112945676
        %v8145 = vmul.f32 %v8127, %v8144
        %v8146 = vadd.f32 %v8145, 0.4994258
        %v8147 = vmul.f32 %v8127, %v8146
        %v8148 = vadd.f32 %v8147, 1.0
        %v8149 = vrcp.pop %v8148
        %v8150 = vmul.f32 %v8148, %v8149
        %v8151 = vsub.f32 1.0, %v8150
        %v8152 = vmul.f32 %v8149, %v8151
        %v8153 = vadd.f32 %v8149, %v8152
        %vm8154 = vweird.f32 %v8148
        %vm8155 = vweird.f32 %v8149
        %vm8156 = vmor %vm8154, %vm8155
        %v8157 = vsel %vm8156, %v8149, %v8153
        %v8158 = vand.u32 2147483647, %v8148
        %vm8159 = vcmp.eq.f32.partialorder %v8158, 8.507059e+37
        %v8160 = vand.u32 %v8148, 2147483648
        %v8161 = vor.u32 1.1754944e-38, %v8160
        %v8162 = vsel %vm8159, %v8161, %v8157
        %v8163 = vmul.f32 %v8138, %v8162
        %v8164 = vmin.f32 %v8163, 1.0
        %v8165 = vmax.f32 %v8164, -1.0
        %v8166 = vmul.f32 %v5918, %v5918
        %v8167 = vmin.f32 16.0, %v8166
        %v8168 = vmul.f32 %v8167, 2.1237322e-06
        %v8169 = vadd.f32 %v8168, 0.00028619796
        %v8170 = vmul.f32 %v8167, %v8169
        %v8171 = vadd.f32 %v8170, 0.0036580483
        %v8172 = vmul.f32 %v8167, %v8171
        %v8173 = vadd.f32 %v8172, 0.05243302
        %v8174 = vmul.f32 %v8167, %v8173
        %v8175 = vadd.f32 %v8174, 0.18741608
        %v8176 = vmul.f32 %v8167, %v8175
        %v8177 = vadd.f32 %v8176, 1.1283791
        %v8178 = vmul.f32 %v5918, %v8177
        %v8179 = vmul.f32 %v8167, 3.8918573e-05
        %v8180 = vadd.f32 %v8179, 0.001143296
        %v8181 = vmul.f32 %v8167, %v8180
        %v8182 = vadd.f32 %v8181, 0.014752088
        %v8183 = vmul.f32 %v8167, %v8182
        %v8184 = vadd.f32 %v8183, 0.112945676
        %v8185 = vmul.f32 %v8167, %v8184
        %v8186 = vadd.f32 %v8185, 0.4994258
        %v8187 = vmul.f32 %v8167, %v8186
        %v8188 = vadd.f32 %v8187, 1.0
        %v8189 = vrcp.pop %v8188
        %v8190 = vmul.f32 %v8188, %v8189
        %v8191 = vsub.f32 1.0, %v8190
        %v8192 = vmul.f32 %v8189, %v8191
        %v8193 = vadd.f32 %v8189, %v8192
        %vm8194 = vweird.f32 %v8188
        %vm8195 = vweird.f32 %v8189
        %vm8196 = vmor %vm8194, %vm8195
        %v8197 = vsel %vm8196, %v8189, %v8193
        %v8198 = vand.u32 2147483647, %v8188
        %vm8199 = vcmp.eq.f32.partialorder %v8198, 8.507059e+37
        %v8200 = vand.u32 %v8188, 2147483648
        %v8201 = vor.u32 1.1754944e-38, %v8200
        %v8202 = vsel %vm8199, %v8201, %v8197
        %v8203 = vmul.f32 %v8178, %v8202
        %v8204 = vmin.f32 %v8203, 1.0
        %v8205 = vmax.f32 %v8204, -1.0
        %v8206 = vmul.f32 %v5919, %v5919
        %v8207 = vmin.f32 16.0, %v8206
        %v8208 = vmul.f32 %v8207, 2.1237322e-06
        %v8209 = vadd.f32 %v8208, 0.00028619796
        %v8210 = vmul.f32 %v8207, %v8209
        %v8211 = vadd.f32 %v8210, 0.0036580483
        %v8212 = vmul.f32 %v8207, %v8211
        %v8213 = vadd.f32 %v8212, 0.05243302
        %v8214 = vmul.f32 %v8207, %v8213
        %v8215 = vadd.f32 %v8214, 0.18741608
        %v8216 = vmul.f32 %v8207, %v8215
        %v8217 = vadd.f32 %v8216, 1.1283791
        %v8218 = vmul.f32 %v5919, %v8217
        %v8219 = vmul.f32 %v8207, 3.8918573e-05
        %v8220 = vadd.f32 %v8219, 0.001143296
        %v8221 = vmul.f32 %v8207, %v8220
        %v8222 = vadd.f32 %v8221, 0.014752088
        %v8223 = vmul.f32 %v8207, %v8222
        %v8224 = vadd.f32 %v8223, 0.112945676
        %v8225 = vmul.f32 %v8207, %v8224
        %v8226 = vadd.f32 %v8225, 0.4994258
        %v8227 = vmul.f32 %v8207, %v8226
        %v8228 = vadd.f32 %v8227, 1.0
        %v8229 = vrcp.pop %v8228
        %v8230 = vmul.f32 %v8228, %v8229
        %v8231 = vsub.f32 1.0, %v8230
        %v8232 = vmul.f32 %v8229, %v8231
        %v8233 = vadd.f32 %v8229, %v8232
        %vm8234 = vweird.f32 %v8228
        %vm8235 = vweird.f32 %v8229
        %vm8236 = vmor %vm8234, %vm8235
        %v8237 = vsel %vm8236, %v8229, %v8233
        %v8238 = vand.u32 2147483647, %v8228
        %vm8239 = vcmp.eq.f32.partialorder %v8238, 8.507059e+37
        %v8240 = vand.u32 %v8228, 2147483648
        %v8241 = vor.u32 1.1754944e-38, %v8240
        %v8242 = vsel %vm8239, %v8241, %v8237
        %v8243 = vmul.f32 %v8218, %v8242
        %v8244 = vmin.f32 %v8243, 1.0
        %v8245 = vmax.f32 %v8244, -1.0
        %v8246 = vmul.f32 %v5920, %v5920
        %v8247 = vmin.f32 16.0, %v8246
        %v8248 = vmul.f32 %v8247, 2.1237322e-06
        %v8249 = vadd.f32 %v8248, 0.00028619796
        %v8250 = vmul.f32 %v8247, %v8249
        %v8251 = vadd.f32 %v8250, 0.0036580483
        %v8252 = vmul.f32 %v8247, %v8251
        %v8253 = vadd.f32 %v8252, 0.05243302
        %v8254 = vmul.f32 %v8247, %v8253
        %v8255 = vadd.f32 %v8254, 0.18741608
        %v8256 = vmul.f32 %v8247, %v8255
        %v8257 = vadd.f32 %v8256, 1.1283791
        %v8258 = vmul.f32 %v5920, %v8257
        %v8259 = vmul.f32 %v8247, 3.8918573e-05
        %v8260 = vadd.f32 %v8259, 0.001143296
        %v8261 = vmul.f32 %v8247, %v8260
        %v8262 = vadd.f32 %v8261, 0.014752088
        %v8263 = vmul.f32 %v8247, %v8262
        %v8264 = vadd.f32 %v8263, 0.112945676
        %v8265 = vmul.f32 %v8247, %v8264
        %v8266 = vadd.f32 %v8265, 0.4994258
        %v8267 = vmul.f32 %v8247, %v8266
        %v8268 = vadd.f32 %v8267, 1.0
        %v8269 = vrcp.pop %v8268
        %v8270 = vmul.f32 %v8268, %v8269
        %v8271 = vsub.f32 1.0, %v8270
        %v8272 = vmul.f32 %v8269, %v8271
        %v8273 = vadd.f32 %v8269, %v8272
        %vm8274 = vweird.f32 %v8268
        %vm8275 = vweird.f32 %v8269
        %vm8276 = vmor %vm8274, %vm8275
        %v8277 = vsel %vm8276, %v8269, %v8273
        %v8278 = vand.u32 2147483647, %v8268
        %vm8279 = vcmp.eq.f32.partialorder %v8278, 8.507059e+37
        %v8280 = vand.u32 %v8268, 2147483648
        %v8281 = vor.u32 1.1754944e-38, %v8280
        %v8282 = vsel %vm8279, %v8281, %v8277
        %v8283 = vmul.f32 %v8258, %v8282
        %v8284 = vmin.f32 %v8283, 1.0
        %v8285 = vmax.f32 %v8284, -1.0
        %v8286 = vmul.f32 %v5921, %v5921
        %v8287 = vmin.f32 16.0, %v8286
        %v8288 = vmul.f32 %v8287, 2.1237322e-06
        %v8289 = vadd.f32 %v8288, 0.00028619796
        %v8290 = vmul.f32 %v8287, %v8289
        %v8291 = vadd.f32 %v8290, 0.0036580483
        %v8292 = vmul.f32 %v8287, %v8291
        %v8293 = vadd.f32 %v8292, 0.05243302
        %v8294 = vmul.f32 %v8287, %v8293
        %v8295 = vadd.f32 %v8294, 0.18741608
        %v8296 = vmul.f32 %v8287, %v8295
        %v8297 = vadd.f32 %v8296, 1.1283791
        %v8298 = vmul.f32 %v5921, %v8297
        %v8299 = vmul.f32 %v8287, 3.8918573e-05
        %v8300 = vadd.f32 %v8299, 0.001143296
        %v8301 = vmul.f32 %v8287, %v8300
        %v8302 = vadd.f32 %v8301, 0.014752088
        %v8303 = vmul.f32 %v8287, %v8302
        %v8304 = vadd.f32 %v8303, 0.112945676
        %v8305 = vmul.f32 %v8287, %v8304
        %v8306 = vadd.f32 %v8305, 0.4994258
        %v8307 = vmul.f32 %v8287, %v8306
        %v8308 = vadd.f32 %v8307, 1.0
        %v8309 = vrcp.pop %v8308
        %v8310 = vmul.f32 %v8308, %v8309
        %v8311 = vsub.f32 1.0, %v8310
        %v8312 = vmul.f32 %v8309, %v8311
        %v8313 = vadd.f32 %v8309, %v8312
        %vm8314 = vweird.f32 %v8308
        %vm8315 = vweird.f32 %v8309
        %vm8316 = vmor %vm8314, %vm8315
        %v8317 = vsel %vm8316, %v8309, %v8313
        %v8318 = vand.u32 2147483647, %v8308
        %vm8319 = vcmp.eq.f32.partialorder %v8318, 8.507059e+37
        %v8320 = vand.u32 %v8308, 2147483648
        %v8321 = vor.u32 1.1754944e-38, %v8320
        %v8322 = vsel %vm8319, %v8321, %v8317
        %v8323 = vmul.f32 %v8298, %v8322
        %v8324 = vmin.f32 %v8323, 1.0
        %v8325 = vmax.f32 %v8324, -1.0
        %v8326 = vmul.f32 %v5922, %v5922
        %v8327 = vmin.f32 16.0, %v8326
        %v8328 = vmul.f32 %v8327, 2.1237322e-06
        %v8329 = vadd.f32 %v8328, 0.00028619796
        %v8330 = vmul.f32 %v8327, %v8329
        %v8331 = vadd.f32 %v8330, 0.0036580483
        %v8332 = vmul.f32 %v8327, %v8331
        %v8333 = vadd.f32 %v8332, 0.05243302
        %v8334 = vmul.f32 %v8327, %v8333
        %v8335 = vadd.f32 %v8334, 0.18741608
        %v8336 = vmul.f32 %v8327, %v8335
        %v8337 = vadd.f32 %v8336, 1.1283791
        %v8338 = vmul.f32 %v5922, %v8337
        %v8339 = vmul.f32 %v8327, 3.8918573e-05
        %v8340 = vadd.f32 %v8339, 0.001143296
        %v8341 = vmul.f32 %v8327, %v8340
        %v8342 = vadd.f32 %v8341, 0.014752088
        %v8343 = vmul.f32 %v8327, %v8342
        %v8344 = vadd.f32 %v8343, 0.112945676
        %v8345 = vmul.f32 %v8327, %v8344
        %v8346 = vadd.f32 %v8345, 0.4994258
        %v8347 = vmul.f32 %v8327, %v8346
        %v8348 = vadd.f32 %v8347, 1.0
        %v8349 = vrcp.pop %v8348
        %v8350 = vmul.f32 %v8348, %v8349
        %v8351 = vsub.f32 1.0, %v8350
        %v8352 = vmul.f32 %v8349, %v8351
        %v8353 = vadd.f32 %v8349, %v8352
        %vm8354 = vweird.f32 %v8348
        %vm8355 = vweird.f32 %v8349
        %vm8356 = vmor %vm8354, %vm8355
        %v8357 = vsel %vm8356, %v8349, %v8353
        %v8358 = vand.u32 2147483647, %v8348
        %vm8359 = vcmp.eq.f32.partialorder %v8358, 8.507059e+37
        %v8360 = vand.u32 %v8348, 2147483648
        %v8361 = vor.u32 1.1754944e-38, %v8360
        %v8362 = vsel %vm8359, %v8361, %v8357
        %v8363 = vmul.f32 %v8338, %v8362
        %v8364 = vmin.f32 %v8363, 1.0
        %v8365 = vmax.f32 %v8364, -1.0
        %v8366 = vmul.f32 %v5923, %v5923
        %v8367 = vmin.f32 16.0, %v8366
        %v8368 = vmul.f32 %v8367, 2.1237322e-06
        %v8369 = vadd.f32 %v8368, 0.00028619796
        %v8370 = vmul.f32 %v8367, %v8369
        %v8371 = vadd.f32 %v8370, 0.0036580483
        %v8372 = vmul.f32 %v8367, %v8371
        %v8373 = vadd.f32 %v8372, 0.05243302
        %v8374 = vmul.f32 %v8367, %v8373
        %v8375 = vadd.f32 %v8374, 0.18741608
        %v8376 = vmul.f32 %v8367, %v8375
        %v8377 = vadd.f32 %v8376, 1.1283791
        %v8378 = vmul.f32 %v5923, %v8377
        %v8379 = vmul.f32 %v8367, 3.8918573e-05
        %v8380 = vadd.f32 %v8379, 0.001143296
        %v8381 = vmul.f32 %v8367, %v8380
        %v8382 = vadd.f32 %v8381, 0.014752088
        %v8383 = vmul.f32 %v8367, %v8382
        %v8384 = vadd.f32 %v8383, 0.112945676
        %v8385 = vmul.f32 %v8367, %v8384
        %v8386 = vadd.f32 %v8385, 0.4994258
        %v8387 = vmul.f32 %v8367, %v8386
        %v8388 = vadd.f32 %v8387, 1.0
        %v8389 = vrcp.pop %v8388
        %v8390 = vmul.f32 %v8388, %v8389
        %v8391 = vsub.f32 1.0, %v8390
        %v8392 = vmul.f32 %v8389, %v8391
        %v8393 = vadd.f32 %v8389, %v8392
        %vm8394 = vweird.f32 %v8388
        %vm8395 = vweird.f32 %v8389
        %vm8396 = vmor %vm8394, %vm8395
        %v8397 = vsel %vm8396, %v8389, %v8393
        %v8398 = vand.u32 2147483647, %v8388
        %vm8399 = vcmp.eq.f32.partialorder %v8398, 8.507059e+37
        %v8400 = vand.u32 %v8388, 2147483648
        %v8401 = vor.u32 1.1754944e-38, %v8400
        %v8402 = vsel %vm8399, %v8401, %v8397
        %v8403 = vmul.f32 %v8378, %v8402
        %v8404 = vmin.f32 %v8403, 1.0
        %v8405 = vmax.f32 %v8404, -1.0
        %v8406 = vmul.f32 %v5924, %v5924
        %v8407 = vmin.f32 16.0, %v8406
        %v8408 = vmul.f32 %v8407, 2.1237322e-06
        %v8409 = vadd.f32 %v8408, 0.00028619796
        %v8410 = vmul.f32 %v8407, %v8409
        %v8411 = vadd.f32 %v8410, 0.0036580483
        %v8412 = vmul.f32 %v8407, %v8411
        %v8413 = vadd.f32 %v8412, 0.05243302
        %v8414 = vmul.f32 %v8407, %v8413
        %v8415 = vadd.f32 %v8414, 0.18741608
        %v8416 = vmul.f32 %v8407, %v8415
        %v8417 = vadd.f32 %v8416, 1.1283791
        %v8418 = vmul.f32 %v5924, %v8417
        %v8419 = vmul.f32 %v8407, 3.8918573e-05
        %v8420 = vadd.f32 %v8419, 0.001143296
        %v8421 = vmul.f32 %v8407, %v8420
        %v8422 = vadd.f32 %v8421, 0.014752088
        %v8423 = vmul.f32 %v8407, %v8422
        %v8424 = vadd.f32 %v8423, 0.112945676
        %v8425 = vmul.f32 %v8407, %v8424
        %v8426 = vadd.f32 %v8425, 0.4994258
        %v8427 = vmul.f32 %v8407, %v8426
        %v8428 = vadd.f32 %v8427, 1.0
        %v8429 = vrcp.pop %v8428
        %v8430 = vmul.f32 %v8428, %v8429
        %v8431 = vsub.f32 1.0, %v8430
        %v8432 = vmul.f32 %v8429, %v8431
        %v8433 = vadd.f32 %v8429, %v8432
        %vm8434 = vweird.f32 %v8428
        %vm8435 = vweird.f32 %v8429
        %vm8436 = vmor %vm8434, %vm8435
        %v8437 = vsel %vm8436, %v8429, %v8433
        %v8438 = vand.u32 2147483647, %v8428
        %vm8439 = vcmp.eq.f32.partialorder %v8438, 8.507059e+37
        %v8440 = vand.u32 %v8428, 2147483648
        %v8441 = vor.u32 1.1754944e-38, %v8440
        %v8442 = vsel %vm8439, %v8441, %v8437
        %v8443 = vmul.f32 %v8418, %v8442
        %v8444 = vmin.f32 %v8443, 1.0
        %v8445 = vmax.f32 %v8444, -1.0
        %v8446 = vmul.f32 %v5925, %v5925
        %v8447 = vmin.f32 16.0, %v8446
        %v8448 = vmul.f32 %v8447, 2.1237322e-06
        %v8449 = vadd.f32 %v8448, 0.00028619796
        %v8450 = vmul.f32 %v8447, %v8449
        %v8451 = vadd.f32 %v8450, 0.0036580483
        %v8452 = vmul.f32 %v8447, %v8451
        %v8453 = vadd.f32 %v8452, 0.05243302
        %v8454 = vmul.f32 %v8447, %v8453
        %v8455 = vadd.f32 %v8454, 0.18741608
        %v8456 = vmul.f32 %v8447, %v8455
        %v8457 = vadd.f32 %v8456, 1.1283791
        %v8458 = vmul.f32 %v5925, %v8457
        %v8459 = vmul.f32 %v8447, 3.8918573e-05
        %v8460 = vadd.f32 %v8459, 0.001143296
        %v8461 = vmul.f32 %v8447, %v8460
        %v8462 = vadd.f32 %v8461, 0.014752088
        %v8463 = vmul.f32 %v8447, %v8462
        %v8464 = vadd.f32 %v8463, 0.112945676
        %v8465 = vmul.f32 %v8447, %v8464
        %v8466 = vadd.f32 %v8465, 0.4994258
        %v8467 = vmul.f32 %v8447, %v8466
        %v8468 = vadd.f32 %v8467, 1.0
        %v8469 = vrcp.pop %v8468
        %v8470 = vmul.f32 %v8468, %v8469
        %v8471 = vsub.f32 1.0, %v8470
        %v8472 = vmul.f32 %v8469, %v8471
        %v8473 = vadd.f32 %v8469, %v8472
        %vm8474 = vweird.f32 %v8468
        %vm8475 = vweird.f32 %v8469
        %vm8476 = vmor %vm8474, %vm8475
        %v8477 = vsel %vm8476, %v8469, %v8473
        %v8478 = vand.u32 2147483647, %v8468
        %vm8479 = vcmp.eq.f32.partialorder %v8478, 8.507059e+37
        %v8480 = vand.u32 %v8468, 2147483648
        %v8481 = vor.u32 1.1754944e-38, %v8480
        %v8482 = vsel %vm8479, %v8481, %v8477
        %v8483 = vmul.f32 %v8458, %v8482
        %v8484 = vmin.f32 %v8483, 1.0
        %v8485 = vmax.f32 %v8484, -1.0
        %v8486 = vadd.f32 %v5965, 1.0
        %v8487 = vadd.f32 %v6005, 1.0
        %v8488 = vadd.f32 %v6045, 1.0
        %v8489 = vadd.f32 %v6085, 1.0
        %v8490 = vadd.f32 %v6125, 1.0
        %v8491 = vadd.f32 %v6165, 1.0
        %v8492 = vadd.f32 %v6205, 1.0
        %v8493 = vadd.f32 %v6245, 1.0
        %v8494 = vadd.f32 %v6285, 1.0
        %v8495 = vadd.f32 %v6325, 1.0
        %v8496 = vadd.f32 %v6365, 1.0
        %v8497 = vadd.f32 %v6405, 1.0
        %v8498 = vadd.f32 %v6445, 1.0
        %v8499 = vadd.f32 %v6485, 1.0
        %v8500 = vadd.f32 %v6525, 1.0
        %v8501 = vadd.f32 %v6565, 1.0
        %v8502 = vadd.f32 %v6605, 1.0
        %v8503 = vadd.f32 %v6645, 1.0
        %v8504 = vadd.f32 %v6685, 1.0
        %v8505 = vadd.f32 %v6725, 1.0
        %v8506 = vadd.f32 %v6765, 1.0
        %v8507 = vadd.f32 %v6805, 1.0
        %v8508 = vadd.f32 %v6845, 1.0
        %v8509 = vadd.f32 %v6885, 1.0
        %v8510 = vadd.f32 %v6925, 1.0
        %v8511 = vadd.f32 %v6965, 1.0
        %v8512 = vadd.f32 %v7005, 1.0
        %v8513 = vadd.f32 %v7045, 1.0
        %v8514 = vadd.f32 %v7085, 1.0
        %v8515 = vadd.f32 %v7125, 1.0
        %v8516 = vadd.f32 %v7165, 1.0
        %v8517 = vadd.f32 %v7205, 1.0
        %v8518 = vadd.f32 %v7245, 1.0
        %v8519 = vadd.f32 %v7285, 1.0
        %v8520 = vadd.f32 %v7325, 1.0
        %v8521 = vadd.f32 %v7365, 1.0
        %v8522 = vadd.f32 %v7405, 1.0
        %v8523 = vadd.f32 %v7445, 1.0
        %v8524 = vadd.f32 %v7485, 1.0
        %v8525 = vadd.f32 %v7525, 1.0
        %v8526 = vadd.f32 %v7565, 1.0
        %v8527 = vadd.f32 %v7605, 1.0
        %v8528 = vadd.f32 %v7645, 1.0
        %v8529 = vadd.f32 %v7685, 1.0
        %v8530 = vadd.f32 %v7725, 1.0
        %v8531 = vadd.f32 %v7765, 1.0
        %v8532 = vadd.f32 %v7805, 1.0
        %v8533 = vadd.f32 %v7845, 1.0
        %v8534 = vadd.f32 %v7885, 1.0
        %v8535 = vadd.f32 %v7925, 1.0
        %v8536 = vadd.f32 %v7965, 1.0
        %v8537 = vadd.f32 %v8005, 1.0
        %v8538 = vadd.f32 %v8045, 1.0
        %v8539 = vadd.f32 %v8085, 1.0
        %v8540 = vadd.f32 %v8125, 1.0
        %v8541 = vadd.f32 %v8165, 1.0
        %v8542 = vadd.f32 %v8205, 1.0
        %v8543 = vadd.f32 %v8245, 1.0
        %v8544 = vadd.f32 %v8285, 1.0
        %v8545 = vadd.f32 %v8325, 1.0
        %v8546 = vadd.f32 %v8365, 1.0
        %v8547 = vadd.f32 %v8405, 1.0
        %v8548 = vadd.f32 %v8445, 1.0
        %v8549 = vadd.f32 %v8485, 1.0
        %v8550 = vmul.f32 %v5798, %v8486
        %v8551 = vmul.f32 %v5799, %v8487
        %v8552 = vmul.f32 %v5800, %v8488
        %v8553 = vmul.f32 %v5801, %v8489
        %v8554 = vmul.f32 %v5802, %v8490
        %v8555 = vmul.f32 %v5803, %v8491
        %v8556 = vmul.f32 %v5804, %v8492
        %v8557 = vmul.f32 %v5805, %v8493
        %v8558 = vmul.f32 %v5806, %v8494
        %v8559 = vmul.f32 %v5807, %v8495
        %v8560 = vmul.f32 %v5808, %v8496
        %v8561 = vmul.f32 %v5809, %v8497
        %v8562 = vmul.f32 %v5810, %v8498
        %v8563 = vmul.f32 %v5811, %v8499
        %v8564 = vmul.f32 %v5812, %v8500
        %v8565 = vmul.f32 %v5813, %v8501
        %v8566 = vmul.f32 %v5814, %v8502
        %v8567 = vmul.f32 %v5815, %v8503
        %v8568 = vmul.f32 %v5816, %v8504
        %v8569 = vmul.f32 %v5817, %v8505
        %v8570 = vmul.f32 %v5818, %v8506
        %v8571 = vmul.f32 %v5819, %v8507
        %v8572 = vmul.f32 %v5820, %v8508
        %v8573 = vmul.f32 %v5821, %v8509
        %v8574 = vmul.f32 %v5822, %v8510
        %v8575 = vmul.f32 %v5823, %v8511
        %v8576 = vmul.f32 %v5824, %v8512
        %v8577 = vmul.f32 %v5825, %v8513
        %v8578 = vmul.f32 %v5826, %v8514
        %v8579 = vmul.f32 %v5827, %v8515
        %v8580 = vmul.f32 %v5828, %v8516
        %v8581 = vmul.f32 %v5829, %v8517
        %v8582 = vmul.f32 %v5830, %v8518
        %v8583 = vmul.f32 %v5831, %v8519
        %v8584 = vmul.f32 %v5832, %v8520
        %v8585 = vmul.f32 %v5833, %v8521
        %v8586 = vmul.f32 %v5834, %v8522
        %v8587 = vmul.f32 %v5835, %v8523
        %v8588 = vmul.f32 %v5836, %v8524
        %v8589 = vmul.f32 %v5837, %v8525
        %v8590 = vmul.f32 %v5838, %v8526
        %v8591 = vmul.f32 %v5839, %v8527
        %v8592 = vmul.f32 %v5840, %v8528
        %v8593 = vmul.f32 %v5841, %v8529
        %v8594 = vmul.f32 %v5842, %v8530
        %v8595 = vmul.f32 %v5843, %v8531
        %v8596 = vmul.f32 %v5844, %v8532
        %v8597 = vmul.f32 %v5845, %v8533
        %v8598 = vmul.f32 %v5846, %v8534
        %v8599 = vmul.f32 %v5847, %v8535
        %v8600 = vmul.f32 %v5848, %v8536
        %v8601 = vmul.f32 %v5849, %v8537
        %v8602 = vmul.f32 %v5850, %v8538
        %v8603 = vmul.f32 %v5851, %v8539
        %v8604 = vmul.f32 %v5852, %v8540
        %v8605 = vmul.f32 %v5853, %v8541
        %v8606 = vmul.f32 %v5854, %v8542
        %v8607 = vmul.f32 %v5855, %v8543
        %v8608 = vmul.f32 %v5856, %v8544
        %v8609 = vmul.f32 %v5857, %v8545
        %v8610 = vmul.f32 %v5858, %v8546
        %v8611 = vmul.f32 %v5859, %v8547
        %v8612 = vmul.f32 %v5860, %v8548
        %v8613 = vmul.f32 %v5861, %v8549
        %v8614 = vpack.c.bf16 %v8554, %v8550
        %v8615 = vpack.c.bf16 %v8555, %v8551
        %v8616 = vpack.c.bf16 %v8556, %v8552
        %v8617 = vpack.c.bf16 %v8557, %v8553
        %v8618 = vpack.c.bf16 %v8562, %v8558
        %v8619 = vpack.c.bf16 %v8563, %v8559
        %v8620 = vpack.c.bf16 %v8564, %v8560
        %v8621 = vpack.c.bf16 %v8565, %v8561
        %v8622 = vpack.c.bf16 %v8570, %v8566
        %v8623 = vpack.c.bf16 %v8571, %v8567
        %v8624 = vpack.c.bf16 %v8572, %v8568
        %v8625 = vpack.c.bf16 %v8573, %v8569
        %v8626 = vpack.c.bf16 %v8578, %v8574
        %v8627 = vpack.c.bf16 %v8579, %v8575
        %v8628 = vpack.c.bf16 %v8580, %v8576
        %v8629 = vpack.c.bf16 %v8581, %v8577
        %v8630 = vpack.c.bf16 %v8586, %v8582
        %v8631 = vpack.c.bf16 %v8587, %v8583
        %v8632 = vpack.c.bf16 %v8588, %v8584
        %v8633 = vpack.c.bf16 %v8589, %v8585
        %v8634 = vpack.c.bf16 %v8594, %v8590
        %v8635 = vpack.c.bf16 %v8595, %v8591
        %v8636 = vpack.c.bf16 %v8596, %v8592
        %v8637 = vpack.c.bf16 %v8597, %v8593
        %v8638 = vpack.c.bf16 %v8602, %v8598
        %v8639 = vpack.c.bf16 %v8603, %v8599
        %v8640 = vpack.c.bf16 %v8604, %v8600
        %v8641 = vpack.c.bf16 %v8605, %v8601
        %v8642 = vpack.c.bf16 %v8610, %v8606
        %v8643 = vpack.c.bf16 %v8611, %v8607
        %v8644 = vpack.c.bf16 %v8612, %v8608
        %v8645 = vpack.c.bf16 %v8613, %v8609
        %v8646 = vld [vmem:[#allocation21] sm:$0xf]
        %v8647 = vld [vmem:[#allocation21 + $0x4] sm:$0xf]
        %v8648 = vld [vmem:[#allocation21 + $0x8] sm:$0xf]
        %v8649 = vld [vmem:[#allocation21 + $0xc] sm:$0xf]
        %v8650 = vld [vmem:[#allocation21 + $0x10] sm:$0xf]
        %v8651 = vld [vmem:[#allocation21 + $0x14] sm:$0xf]
        %v8652 = vld [vmem:[#allocation21 + $0x18] sm:$0xf]
        %v8653 = vld [vmem:[#allocation21 + $0x1c] sm:$0xf]
        %v8654 = vld [vmem:[#allocation21 + $0x20] sm:$0xf]
        %v8655 = vld [vmem:[#allocation21 + $0x24] sm:$0xf]
        %v8656 = vld [vmem:[#allocation21 + $0x28] sm:$0xf]
        %v8657 = vld [vmem:[#allocation21 + $0x2c] sm:$0xf]
        %v8658 = vld [vmem:[#allocation21 + $0x30] sm:$0xf]
        %v8659 = vld [vmem:[#allocation21 + $0x34] sm:$0xf]
        %v8660 = vld [vmem:[#allocation21 + $0x38] sm:$0xf]
        %v8661 = vld [vmem:[#allocation21 + $0x3c] sm:$0xf]
        %v8662 = vld [vmem:[#allocation21 + $0x40] sm:$0xf]
        %v8663 = vld [vmem:[#allocation21 + $0x44] sm:$0xf]
        %v8664 = vld [vmem:[#allocation21 + $0x48] sm:$0xf]
        %v8665 = vld [vmem:[#allocation21 + $0x4c] sm:$0xf]
        %v8666 = vld [vmem:[#allocation21 + $0x50] sm:$0xf]
        %v8667 = vld [vmem:[#allocation21 + $0x54] sm:$0xf]
        %v8668 = vld [vmem:[#allocation21 + $0x58] sm:$0xf]
        %v8669 = vld [vmem:[#allocation21 + $0x5c] sm:$0xf]
        %v8670 = vld [vmem:[#allocation21 + $0x60] sm:$0xf]
        %v8671 = vld [vmem:[#allocation21 + $0x64] sm:$0xf]
        %v8672 = vld [vmem:[#allocation21 + $0x68] sm:$0xf]
        %v8673 = vld [vmem:[#allocation21 + $0x6c] sm:$0xf]
        %v8674 = vld [vmem:[#allocation21 + $0x70] sm:$0xf]
        %v8675 = vld [vmem:[#allocation21 + $0x74] sm:$0xf]
        %v8676 = vld [vmem:[#allocation21 + $0x78] sm:$0xf]
        %v8677 = vld [vmem:[#allocation21 + $0x7c] sm:$0xf]
        %v8678 = vld [vmem:[#allocation21 + $0x80] sm:$0xf]
        %v8679 = vld [vmem:[#allocation21 + $0x84] sm:$0xf]
        %v8680 = vld [vmem:[#allocation21 + $0x88] sm:$0xf]
        %v8681 = vld [vmem:[#allocation21 + $0x8c] sm:$0xf]
        %v8682 = vld [vmem:[#allocation21 + $0x90] sm:$0xf]
        %v8683 = vld [vmem:[#allocation21 + $0x94] sm:$0xf]
        %v8684 = vld [vmem:[#allocation21 + $0x98] sm:$0xf]
        %v8685 = vld [vmem:[#allocation21 + $0x9c] sm:$0xf]
        %v8686 = vld [vmem:[#allocation21 + $0xa0] sm:$0xf]
        %v8687 = vld [vmem:[#allocation21 + $0xa4] sm:$0xf]
        %v8688 = vld [vmem:[#allocation21 + $0xa8] sm:$0xf]
        %v8689 = vld [vmem:[#allocation21 + $0xac] sm:$0xf]
        %v8690 = vld [vmem:[#allocation21 + $0xb0] sm:$0xf]
        %v8691 = vld [vmem:[#allocation21 + $0xb4] sm:$0xf]
        %v8692 = vld [vmem:[#allocation21 + $0xb8] sm:$0xf]
        %v8693 = vld [vmem:[#allocation21 + $0xbc] sm:$0xf]
        %v8694 = vld [vmem:[#allocation21 + $0xc0] sm:$0xf]
        %v8695 = vld [vmem:[#allocation21 + $0xc4] sm:$0xf]
        %v8696 = vld [vmem:[#allocation21 + $0xc8] sm:$0xf]
        %v8697 = vld [vmem:[#allocation21 + $0xcc] sm:$0xf]
        %v8698 = vld [vmem:[#allocation21 + $0xd0] sm:$0xf]
        %v8699 = vld [vmem:[#allocation21 + $0xd4] sm:$0xf]
        %v8700 = vld [vmem:[#allocation21 + $0xd8] sm:$0xf]
        %v8701 = vld [vmem:[#allocation21 + $0xdc] sm:$0xf]
        %v8702 = vld [vmem:[#allocation21 + $0xe0] sm:$0xf]
        %v8703 = vld [vmem:[#allocation21 + $0xe4] sm:$0xf]
        %v8704 = vld [vmem:[#allocation21 + $0xe8] sm:$0xf]
        %v8705 = vld [vmem:[#allocation21 + $0xec] sm:$0xf]
        %v8706 = vld [vmem:[#allocation21 + $0xf0] sm:$0xf]
        %v8707 = vld [vmem:[#allocation21 + $0xf4] sm:$0xf]
        %v8708 = vld [vmem:[#allocation21 + $0xf8] sm:$0xf]
        %v8709 = vld [vmem:[#allocation21 + $0xfc] sm:$0xf]
        %v8710 = vld [vmem:[%s18] sm:$0x1]
        %v8712 = vperm.slane %v8710, 0
        %v8778 = vunpack.c.l.b16 %v8646
        %v8779 = vunpack.c.l.b16 %v8647
        %v8780 = vunpack.c.l.b16 %v8648
        %v8781 = vunpack.c.l.b16 %v8649
        %v8782 = vunpack.c.l.b16 %v8650
        %v8783 = vunpack.c.l.b16 %v8651
        %v8784 = vunpack.c.l.b16 %v8652
        %v8785 = vunpack.c.l.b16 %v8653
        %v8786 = vunpack.c.l.b16 %v8654
        %v8787 = vunpack.c.l.b16 %v8655
        %v8788 = vunpack.c.l.b16 %v8656
        %v8789 = vunpack.c.l.b16 %v8657
        %v8790 = vunpack.c.l.b16 %v8658
        %v8791 = vunpack.c.l.b16 %v8659
        %v8792 = vunpack.c.l.b16 %v8660
        %v8793 = vunpack.c.l.b16 %v8661
        %v8794 = vunpack.c.l.b16 %v8662
        %v8795 = vunpack.c.l.b16 %v8663
        %v8796 = vunpack.c.l.b16 %v8664
        %v8797 = vunpack.c.l.b16 %v8665
        %v8798 = vunpack.c.l.b16 %v8666
        %v8799 = vunpack.c.l.b16 %v8667
        %v8800 = vunpack.c.l.b16 %v8668
        %v8801 = vunpack.c.l.b16 %v8669
        %v8802 = vunpack.c.l.b16 %v8670
        %v8803 = vunpack.c.l.b16 %v8671
        %v8804 = vunpack.c.l.b16 %v8672
        %v8805 = vunpack.c.l.b16 %v8673
        %v8806 = vunpack.c.l.b16 %v8674
        %v8807 = vunpack.c.l.b16 %v8675
        %v8808 = vunpack.c.l.b16 %v8676
        %v8809 = vunpack.c.l.b16 %v8677
        %v8810 = vunpack.c.l.b16 %v8678
        %v8811 = vunpack.c.l.b16 %v8679
        %v8812 = vunpack.c.l.b16 %v8680
        %v8813 = vunpack.c.l.b16 %v8681
        %v8814 = vunpack.c.l.b16 %v8682
        %v8815 = vunpack.c.l.b16 %v8683
        %v8816 = vunpack.c.l.b16 %v8684
        %v8817 = vunpack.c.l.b16 %v8685
        %v8818 = vunpack.c.l.b16 %v8686
        %v8819 = vunpack.c.l.b16 %v8687
        %v8820 = vunpack.c.l.b16 %v8688
        %v8821 = vunpack.c.l.b16 %v8689
        %v8822 = vunpack.c.l.b16 %v8690
        %v8823 = vunpack.c.l.b16 %v8691
        %v8824 = vunpack.c.l.b16 %v8692
        %v8825 = vunpack.c.l.b16 %v8693
        %v8826 = vunpack.c.l.b16 %v8694
        %v8827 = vunpack.c.l.b16 %v8695
        %v8828 = vunpack.c.l.b16 %v8696
        %v8829 = vunpack.c.l.b16 %v8697
        %v8830 = vunpack.c.l.b16 %v8698
        %v8831 = vunpack.c.l.b16 %v8699
        %v8832 = vunpack.c.l.b16 %v8700
        %v8833 = vunpack.c.l.b16 %v8701
        %v8834 = vunpack.c.l.b16 %v8702
        %v8835 = vunpack.c.l.b16 %v8703
        %v8836 = vunpack.c.l.b16 %v8704
        %v8837 = vunpack.c.l.b16 %v8705
        %v8838 = vunpack.c.l.b16 %v8706
        %v8839 = vunpack.c.l.b16 %v8707
        %v8840 = vunpack.c.l.b16 %v8708
        %v8841 = vunpack.c.l.b16 %v8709
        %v8842 = vpack.c.b16 %v8779, %v8778
        %v8843 = vpack.c.b16 %v8781, %v8780
        %v8844 = vpack.c.b16 %v8783, %v8782
        %v8845 = vpack.c.b16 %v8785, %v8784
        %v8846 = vpack.c.b16 %v8787, %v8786
        %v8847 = vpack.c.b16 %v8789, %v8788
        %v8848 = vpack.c.b16 %v8791, %v8790
        %v8849 = vpack.c.b16 %v8793, %v8792
        %v8850 = vpack.c.b16 %v8795, %v8794
        %v8851 = vpack.c.b16 %v8797, %v8796
        %v8852 = vpack.c.b16 %v8799, %v8798
        %v8853 = vpack.c.b16 %v8801, %v8800
        %v8854 = vpack.c.b16 %v8803, %v8802
        %v8855 = vpack.c.b16 %v8805, %v8804
        %v8856 = vpack.c.b16 %v8807, %v8806
        %v8857 = vpack.c.b16 %v8809, %v8808
        %v8858 = vpack.c.b16 %v8811, %v8810
        %v8859 = vpack.c.b16 %v8813, %v8812
        %v8860 = vpack.c.b16 %v8815, %v8814
        %v8861 = vpack.c.b16 %v8817, %v8816
        %v8862 = vpack.c.b16 %v8819, %v8818
        %v8863 = vpack.c.b16 %v8821, %v8820
        %v8864 = vpack.c.b16 %v8823, %v8822
        %v8865 = vpack.c.b16 %v8825, %v8824
        %v8866 = vpack.c.b16 %v8827, %v8826
        %v8867 = vpack.c.b16 %v8829, %v8828
        %v8868 = vpack.c.b16 %v8831, %v8830
        %v8869 = vpack.c.b16 %v8833, %v8832
        %v8870 = vpack.c.b16 %v8835, %v8834
        %v8871 = vpack.c.b16 %v8837, %v8836
        %v8872 = vpack.c.b16 %v8839, %v8838
        %v8873 = vpack.c.b16 %v8841, %v8840
        %8906 = vmatpush.bf16.msra.mxu0 %v8849
        %8907 = vmatpush.bf16.msra.mxu0 %v8848
        %8908 = vmatpush.bf16.msra.mxu0 %v8847
        %8909 = vmatpush.bf16.msra.mxu0 %v8846
        %8910 = vmatpush.bf16.msra.mxu0 %v8845
        %8911 = vmatpush.bf16.msra.mxu0 %v8844
        %8912 = vmatpush.bf16.msra.mxu0 %v8843
        %8913 = vmatpush.bf16.msra.mxu0 %v8842
        %8914 = vmatmul.bf16.gmra.mxu0 %v8614
        %v8915 = vpop.f32.mrf.mxu0
        %v8916 = vadd.f32 %v8712, %v8915
        %v8917 = vpop.f32.mrf.mxu0
        %v8918 = vadd.f32 %v8712, %v8917
        %8919 = vmatmul.bf16.gmra.mxu0 %v8618
        %v8920 = vpop.f32.mrf.mxu0
        %v8921 = vadd.f32 %v8712, %v8920
        %v8922 = vpop.f32.mrf.mxu0
        %v8923 = vadd.f32 %v8712, %v8922
        %8924 = vmatmul.bf16.gmra.mxu0 %v8622
        %v8925 = vpop.f32.mrf.mxu0
        %v8926 = vadd.f32 %v8712, %v8925
        %v8927 = vpop.f32.mrf.mxu0
        %v8928 = vadd.f32 %v8712, %v8927
        %8929 = vmatmul.bf16.gmra.mxu0 %v8626
        %v8930 = vpop.f32.mrf.mxu0
        %v8931 = vadd.f32 %v8712, %v8930
        %v8932 = vpop.f32.mrf.mxu0
        %v8933 = vadd.f32 %v8712, %v8932
        %8934 = vmatmul.bf16.gmra.mxu0 %v8630
        %v8935 = vpop.f32.mrf.mxu0
        %v8936 = vadd.f32 %v8712, %v8935
        %v8937 = vpop.f32.mrf.mxu0
        %v8938 = vadd.f32 %v8712, %v8937
        %8939 = vmatmul.bf16.gmra.mxu0 %v8634
        %v8940 = vpop.f32.mrf.mxu0
        %v8941 = vadd.f32 %v8712, %v8940
        %v8942 = vpop.f32.mrf.mxu0
        %v8943 = vadd.f32 %v8712, %v8942
        %8944 = vmatmul.bf16.gmra.mxu0 %v8638
        %v8945 = vpop.f32.mrf.mxu0
        %v8946 = vadd.f32 %v8712, %v8945
        %v8947 = vpop.f32.mrf.mxu0
        %v8948 = vadd.f32 %v8712, %v8947
        %8949 = vmatmul.bf16.gmra.mxu0 %v8642
        %v8950 = vpop.f32.mrf.mxu0
        %v8951 = vadd.f32 %v8712, %v8950
        %v8952 = vpop.f32.mrf.mxu0
        %v8953 = vadd.f32 %v8712, %v8952
        %8954 = vdwg.mxu0
        %8955 = vmatpush.bf16.msra.mxu0 %v8857
        %8956 = vmatpush.bf16.msra.mxu0 %v8856
        %8957 = vmatpush.bf16.msra.mxu0 %v8855
        %8958 = vmatpush.bf16.msra.mxu0 %v8854
        %8959 = vmatpush.bf16.msra.mxu0 %v8853
        %8960 = vmatpush.bf16.msra.mxu0 %v8852
        %8961 = vmatpush.bf16.msra.mxu0 %v8851
        %8962 = vmatpush.bf16.msra.mxu0 %v8850
        %8963 = vmatmul.bf16.gmra.mxu0 %v8615
        %v8964 = vpop.f32.mrf.mxu0
        %v8965 = vadd.f32 %v8916, %v8964
        %v8966 = vpop.f32.mrf.mxu0
        %v8967 = vadd.f32 %v8918, %v8966
        %8968 = vmatmul.bf16.gmra.mxu0 %v8619
        %v8969 = vpop.f32.mrf.mxu0
        %v8970 = vadd.f32 %v8921, %v8969
        %v8971 = vpop.f32.mrf.mxu0
        %v8972 = vadd.f32 %v8923, %v8971
        %8973 = vmatmul.bf16.gmra.mxu0 %v8623
        %v8974 = vpop.f32.mrf.mxu0
        %v8975 = vadd.f32 %v8926, %v8974
        %v8976 = vpop.f32.mrf.mxu0
        %v8977 = vadd.f32 %v8928, %v8976
        %8978 = vmatmul.bf16.gmra.mxu0 %v8627
        %v8979 = vpop.f32.mrf.mxu0
        %v8980 = vadd.f32 %v8931, %v8979
        %v8981 = vpop.f32.mrf.mxu0
        %v8982 = vadd.f32 %v8933, %v8981
        %8983 = vmatmul.bf16.gmra.mxu0 %v8631
        %v8984 = vpop.f32.mrf.mxu0
        %v8985 = vadd.f32 %v8936, %v8984
        %v8986 = vpop.f32.mrf.mxu0
        %v8987 = vadd.f32 %v8938, %v8986
        %8988 = vmatmul.bf16.gmra.mxu0 %v8635
        %v8989 = vpop.f32.mrf.mxu0
        %v8990 = vadd.f32 %v8941, %v8989
        %v8991 = vpop.f32.mrf.mxu0
        %v8992 = vadd.f32 %v8943, %v8991
        %8993 = vmatmul.bf16.gmra.mxu0 %v8639
        %v8994 = vpop.f32.mrf.mxu0
        %v8995 = vadd.f32 %v8946, %v8994
        %v8996 = vpop.f32.mrf.mxu0
        %v8997 = vadd.f32 %v8948, %v8996
        %8998 = vmatmul.bf16.gmra.mxu0 %v8643
        %v8999 = vpop.f32.mrf.mxu0
        %v9000 = vadd.f32 %v8951, %v8999
        %v9001 = vpop.f32.mrf.mxu0
        %v9002 = vadd.f32 %v8953, %v9001
        %9003 = vdwg.mxu0
        %9004 = vmatpush.bf16.msra.mxu0 %v8865
        %9005 = vmatpush.bf16.msra.mxu0 %v8864
        %9006 = vmatpush.bf16.msra.mxu0 %v8863
        %9007 = vmatpush.bf16.msra.mxu0 %v8862
        %9008 = vmatpush.bf16.msra.mxu0 %v8861
        %9009 = vmatpush.bf16.msra.mxu0 %v8860
        %9010 = vmatpush.bf16.msra.mxu0 %v8859
        %9011 = vmatpush.bf16.msra.mxu0 %v8858
        %9012 = vmatmul.bf16.gmra.mxu0 %v8616
        %v9013 = vpop.f32.mrf.mxu0
        %v9014 = vadd.f32 %v8965, %v9013
        %v9015 = vpop.f32.mrf.mxu0
        %v9016 = vadd.f32 %v8967, %v9015
        %9017 = vmatmul.bf16.gmra.mxu0 %v8620
        %v9018 = vpop.f32.mrf.mxu0
        %v9019 = vadd.f32 %v8970, %v9018
        %v9020 = vpop.f32.mrf.mxu0
        %v9021 = vadd.f32 %v8972, %v9020
        %9022 = vmatmul.bf16.gmra.mxu0 %v8624
        %v9023 = vpop.f32.mrf.mxu0
        %v9024 = vadd.f32 %v8975, %v9023
        %v9025 = vpop.f32.mrf.mxu0
        %v9026 = vadd.f32 %v8977, %v9025
        %9027 = vmatmul.bf16.gmra.mxu0 %v8628
        %v9028 = vpop.f32.mrf.mxu0
        %v9029 = vadd.f32 %v8980, %v9028
        %v9030 = vpop.f32.mrf.mxu0
        %v9031 = vadd.f32 %v8982, %v9030
        %9032 = vmatmul.bf16.gmra.mxu0 %v8632
        %v9033 = vpop.f32.mrf.mxu0
        %v9034 = vadd.f32 %v8985, %v9033
        %v9035 = vpop.f32.mrf.mxu0
        %v9036 = vadd.f32 %v8987, %v9035
        %9037 = vmatmul.bf16.gmra.mxu0 %v8636
        %v9038 = vpop.f32.mrf.mxu0
        %v9039 = vadd.f32 %v8990, %v9038
        %v9040 = vpop.f32.mrf.mxu0
        %v9041 = vadd.f32 %v8992, %v9040
        %9042 = vmatmul.bf16.gmra.mxu0 %v8640
        %v9043 = vpop.f32.mrf.mxu0
        %v9044 = vadd.f32 %v8995, %v9043
        %v9045 = vpop.f32.mrf.mxu0
        %v9046 = vadd.f32 %v8997, %v9045
        %9047 = vmatmul.bf16.gmra.mxu0 %v8644
        %v9048 = vpop.f32.mrf.mxu0
        %v9049 = vadd.f32 %v9000, %v9048
        %v9050 = vpop.f32.mrf.mxu0
        %v9051 = vadd.f32 %v9002, %v9050
        %9052 = vdwg.mxu0
        %9053 = vmatpush.bf16.msra.mxu0 %v8873
        %9054 = vmatpush.bf16.msra.mxu0 %v8872
        %9055 = vmatpush.bf16.msra.mxu0 %v8871
        %9056 = vmatpush.bf16.msra.mxu0 %v8870
        %9057 = vmatpush.bf16.msra.mxu0 %v8869
        %9058 = vmatpush.bf16.msra.mxu0 %v8868
        %9059 = vmatpush.bf16.msra.mxu0 %v8867
        %9060 = vmatpush.bf16.msra.mxu0 %v8866
        %9061 = vmatmul.bf16.gmra.mxu0 %v8617
        %v9062 = vpop.f32.mrf.mxu0
        %v9063 = vadd.f32 %v9014, %v9062
        %v9064 = vpop.f32.mrf.mxu0
        %v9065 = vadd.f32 %v9016, %v9064
        %9066 = vmatmul.bf16.gmra.mxu0 %v8621
        %v9067 = vpop.f32.mrf.mxu0
        %v9068 = vadd.f32 %v9019, %v9067
        %v9069 = vpop.f32.mrf.mxu0
        %v9070 = vadd.f32 %v9021, %v9069
        %9071 = vmatmul.bf16.gmra.mxu0 %v8625
        %v9072 = vpop.f32.mrf.mxu0
        %v9073 = vadd.f32 %v9024, %v9072
        %v9074 = vpop.f32.mrf.mxu0
        %v9075 = vadd.f32 %v9026, %v9074
        %9076 = vmatmul.bf16.gmra.mxu0 %v8629
        %v9077 = vpop.f32.mrf.mxu0
        %v9078 = vadd.f32 %v9029, %v9077
        %v9079 = vpop.f32.mrf.mxu0
        %v9080 = vadd.f32 %v9031, %v9079
        %9081 = vmatmul.bf16.gmra.mxu0 %v8633
        %v9082 = vpop.f32.mrf.mxu0
        %v9083 = vadd.f32 %v9034, %v9082
        %v9084 = vpop.f32.mrf.mxu0
        %v9085 = vadd.f32 %v9036, %v9084
        %9086 = vmatmul.bf16.gmra.mxu0 %v8637
        %v9087 = vpop.f32.mrf.mxu0
        %v9088 = vadd.f32 %v9039, %v9087
        %v9089 = vpop.f32.mrf.mxu0
        %v9090 = vadd.f32 %v9041, %v9089
        %9091 = vmatmul.bf16.gmra.mxu0 %v8641
        %v9092 = vpop.f32.mrf.mxu0
        %v9093 = vadd.f32 %v9044, %v9092
        %v9094 = vpop.f32.mrf.mxu0
        %v9095 = vadd.f32 %v9046, %v9094
        %9096 = vmatmul.bf16.gmra.mxu0 %v8645
        %v9097 = vpop.f32.mrf.mxu0
        %v9098 = vadd.f32 %v9049, %v9097
        %v9099 = vpop.f32.mrf.mxu0
        %v9100 = vadd.f32 %v9051, %v9099
        %9101 = vdwg.mxu0
        %v9102 = vld [vmem:[%s19] sm:$0x1]
        %v9104 = vperm.slane %v9102, 0
        %v9106 = vmul.f32 %v9063, %v9104
        %v9107 = vmul.f32 %v9065, %v9104
        %v9108 = vmul.f32 %v9068, %v9104
        %v9109 = vmul.f32 %v9070, %v9104
        %v9110 = vmul.f32 %v9073, %v9104
        %v9111 = vmul.f32 %v9075, %v9104
        %v9112 = vmul.f32 %v9078, %v9104
        %v9113 = vmul.f32 %v9080, %v9104
        %v9114 = vmul.f32 %v9083, %v9104
        %v9115 = vmul.f32 %v9085, %v9104
        %v9116 = vmul.f32 %v9088, %v9104
        %v9117 = vmul.f32 %v9090, %v9104
        %v9118 = vmul.f32 %v9093, %v9104
        %v9119 = vmul.f32 %v9095, %v9104
        %v9120 = vmul.f32 %v9098, %v9104
        %v9121 = vmul.f32 %v9100, %v9104
        %v9122 = vadd.f32 %v5016, %v9106
        %v9123 = vadd.f32 %v5017, %v9107
        %v9124 = vadd.f32 %v5018, %v9108
        %v9125 = vadd.f32 %v5019, %v9109
        %v9126 = vadd.f32 %v5020, %v9110
        %v9127 = vadd.f32 %v5021, %v9111
        %v9128 = vadd.f32 %v5022, %v9112
        %v9129 = vadd.f32 %v5023, %v9113
        %v9130 = vadd.f32 %v5024, %v9114
        %v9131 = vadd.f32 %v5025, %v9115
        %v9132 = vadd.f32 %v5026, %v9116
        %v9133 = vadd.f32 %v5027, %v9117
        %v9134 = vadd.f32 %v5028, %v9118
        %v9135 = vadd.f32 %v5029, %v9119
        %v9136 = vadd.f32 %v5030, %v9120
        %v9137 = vadd.f32 %v5031, %v9121
        %9138 = vst [vmem:[%s849] sm:$0xff] %v9122
        %9139 = vst [vmem:[%s849 + $0x8] sm:$0xff] %v9123
        %9140 = vst [vmem:[%s849 + $0x10] sm:$0xff] %v9124
        %9141 = vst [vmem:[%s849 + $0x18] sm:$0xff] %v9125
        %9142 = vst [vmem:[%s849 + $0x20] sm:$0xff] %v9126
        %9143 = vst [vmem:[%s849 + $0x28] sm:$0xff] %v9127
        %9144 = vst [vmem:[%s849 + $0x30] sm:$0xff] %v9128
        %9145 = vst [vmem:[%s849 + $0x38] sm:$0xff] %v9129
        %9146 = vst [vmem:[%s849 + $0x40] sm:$0xff] %v9130
        %9147 = vst [vmem:[%s849 + $0x48] sm:$0xff] %v9131
        %9148 = vst [vmem:[%s849 + $0x50] sm:$0xff] %v9132
        %9149 = vst [vmem:[%s849 + $0x58] sm:$0xff] %v9133
        %9150 = vst [vmem:[%s849 + $0x60] sm:$0xff] %v9134
        %9151 = vst [vmem:[%s849 + $0x68] sm:$0xff] %v9135
        %9152 = vst [vmem:[%s849 + $0x70] sm:$0xff] %v9136
        %9153 = vst [vmem:[%s849 + $0x78] sm:$0xff] %v9137
        %s9154 = sand.u32 %s498, 1
        %s9155 = scalar_lea.sflag [#allocation6], %s9154
        %s9156 = sand.u32 %s498, 1
        %s9157 = smul.addr %s9156, 128
        %s9158 = scalar_lea.vmem [#allocation22], %s9157
        // Predicated region
        $region149: #{tpu_custom_call.1} parent=99 // pred_check
          %p9159 = pneg %p508
        $region150: #{tpu_custom_call.1} parent=99 // pred_check_branch
          %9161 = sbr.rel (%p9159) target = $region152
        $region151: #{tpu_custom_call.1} parent=99 // pred_region
          %s9162 = smul.u32 16, %s49
          %9164 = vsyncadd %s9155, 0
          %s9165 = smul.addr %s48, 32
          %s9166 = sadd.s32 %s9162, %s9165
          %s9167 = smul.addr %s9166, 8
          %s9168 = scalar_lea.hbm %s20, %s9167
          %s9169 = sshll.u32 %s9158, 4
          %s9170 = int_to_ptr.vmem [resolvable:$true] %s9169
          %s9171 = sshll.u32 %s9168, 4
          %s9172 = int_to_ptr.hbm [resolvable:$true] %s9171
          %9177 = dma.vmem_to_hbm [thread:$0]  %s9170, 2048, %s9172, %s9155, 128, 128, 8
        $region152: #{tpu_custom_call.1} parent=99 // pred_fallthru
          _
      $region100: #{tpu_custom_call.1} parent=5 // pred_fallthru
        _
      %p9178 = scmp.le.s32.totalorder 2, %s39
      // Predicated region
      $region153: #{tpu_custom_call.1} parent=5 // pred_check
        %p9179 = pneg %p9178
      $region154: #{tpu_custom_call.1} parent=5 // pred_check_branch
        %9181 = sbr.rel (%p9179) target = $region156
      $region155: #{tpu_custom_call.1} parent=5 // pred_region
        %s9182 = ssub.s32 %s39, 2
        // Predicated region
        $region157: #{tpu_custom_call.1} parent=155 // pred_check
          %p9183 = pneg %p514
        $region158: #{tpu_custom_call.1} parent=155 // pred_check_branch
          %9185 = sbr.rel (%p9183) target = $region160
        $region159: #{tpu_custom_call.1} parent=155 // pred_region
          %s9186 = sand.u32 %s499, 1
          %s9187 = scalar_lea.sflag [#allocation6], %s9186
          %s9188 = sand.u32 %s499, 1
          %s9189 = smul.addr %s9188, 128
          %s9190 = scalar_lea.vmem [#allocation22], %s9189
          %9192 = dma.done %s9187, 2048
        $region160: #{tpu_custom_call.1} parent=155 // pred_fallthru
          _
      $region156: #{tpu_custom_call.1} parent=5 // pred_fallthru
        _
    $region6: #{tpu_custom_call.1} parent=1 // loop_footer
      %s43 = sadd.s32 1, %s39
    $region7: #{tpu_custom_call.1} parent=1 // loop_footer_branch
      %38 = sbr.rel target = $region3
    $region8: #{tpu_custom_call.1} parent=1 // loop_exit
      _
    %9193 = vsyncpa [#allocation5], 1
    %s9194 = scalar_lea.sflag [#allocation5], 1
    %9195 = vsyncpa %s9194, 1
    %9196 = vsyncpa [#allocation8], 1
    %s9197 = scalar_lea.sflag [#allocation8], 1
    %9198 = vsyncpa %s9197, 1
    %9199 = vsyncpa [#allocation11], 1
    %9200 = vsyncpa [#allocation14], 1
    %9201 = vsyncpa [#allocation17], 1
    %9202 = vsyncpa [#allocation20], 1
    %9203 = vsyncpa [#allocation6], 1
    %s9204 = scalar_lea.sflag [#allocation6], 1
    %9205 = vsyncpa %s9204, 1

</llo_original>
